<compile_context>
chip_gen: v7x
topology: tpu7x:2x2x1
jax: 0.10.0
libtpu: 0.0.40
codegen_flags: <defaults>
</compile_context>

<pallas_src>
import numpy as np

import jax
import jax.numpy as jnp
from jax.experimental import pallas as pl
from jax.experimental.pallas import tpu as pltpu


# ------------------------------ geometry (28x28 input) ----------------------

H1 = 28                      # input / final spatial size
L1 = H1 * H1                 # 784 conv1 output positions (exact, no pad rows)
PL1 = L1 - H1 - 1            # 755: pool-1 shifted-max width

W2 = 14                      # conv2 / deconv2 spatial size
G2 = W2 + 2                  # 16: zero-padded grid width
P2 = G2 + 1                  # 17: tap-shift lane extension
L2 = G2 * G2                 # 256 padded-grid positions
L2E = L2 + 2 * P2            # 290 lanes incl. extension
PL2 = L2 - G2 - 1            # 239: pool-2 shifted-max width

WD = 7                       # deconv1 spatial size
GD = WD + 2                  # 9
PD = GD + 1                  # 10
LD = GD * GD                 # 81
LDE = LD + 2 * PD            # 101

LATENT = 128
FEAT = 64 * 49               # 3136
DEC = 64 * LDE               # 6464


# ------------------------------- Pallas kernels ------------------------------

def _im2col_T(x, *, grid_w, pad, length):
    """Build the (9*Cin, length) im2col operand (channels-on-sublanes layout)
    from 9 static shifted lane-slices of x (Cin, length + 2*pad).  Pure vreg
    work: lane rotates (XLU) + an aligned sublane concat."""
    slices = []
    for kh in range(3):
        for kw in range(3):
            s = pad + (kh - 1) * grid_w + (kw - 1)          # static, in-bounds
            slices.append(x[:, s:s + length])
    return jnp.concatenate(slices, axis=0)


def _encoder_kernel(xc_ref, w1_ref, b1_ref, g1_ref, w2_ref, b2_ref, g2_ref,
                    o_ref):
    """conv1+ReLU+pool1 + conv2+ReLU+pool2 for one image (all K-fused matmuls).

    g1/g2 are constant 0/1 bf16 matrices: one MXU matmul gathers the pooled
    columns and scatters them straight into the next stage's zero-padded grid
    layout (unselected lanes stay exactly 0 and act as the conv padding;
    garbage border columns are never selected)."""
    # conv1: one K=27 bf16 matmul (im2col comes in pre-built), f32 epilogue.
    y1 = jnp.dot(w1_ref[...], xc_ref[...], preferred_element_type=jnp.float32)
    y1 = jnp.maximum(y1 + b1_ref[...], 0.0).astype(jnp.bfloat16)      # (32, 784)
    # MaxPool2d(2,2): 4 shifted lane-slice maxima, then gather/scatter matmul.
    m1 = jnp.maximum(jnp.maximum(y1[:, 0:PL1], y1[:, 1:PL1 + 1]),
                     jnp.maximum(y1[:, H1:H1 + PL1],
                                 y1[:, H1 + 1:H1 + 1 + PL1]))
    h1 = jnp.dot(m1, g1_ref[...],
                 preferred_element_type=jnp.float32).astype(jnp.bfloat16)  # (32, 290)
    # conv2: (288, 256) im2col in vregs + one K=288 bf16 matmul.
    c2 = _im2col_T(h1, grid_w=G2, pad=P2, length=L2)
    y2 = jnp.dot(w2_ref[...], c2, preferred_element_type=jnp.float32)
    y2 = jnp.maximum(y2 + b2_ref[...], 0.0).astype(jnp.bfloat16)      # (64, 256)
    m2 = jnp.maximum(jnp.maximum(y2[:, 0:PL2], y2[:, 1:PL2 + 1]),
                     jnp.maximum(y2[:, G2:G2 + PL2],
                                 y2[:, G2 + 1:G2 + 1 + PL2]))
    o_ref[...] = jnp.dot(m2, g2_ref[...],
                         preferred_element_type=jnp.float32).astype(o_ref.dtype)


def _fc_kernel(h_ref, eps_ref, wml_ref, bml_ref, wd_ref, bd_ref,
               mu_ref, lv_ref, d_ref):
    """fc_mu|fc_logvar as one lane-dense N=256 matmul (kept in vregs -- no
    scratch), reparameterization (f32), and fc_decode whose output columns are
    already the decoder's (channel, padded-position) layout."""
    ml = jnp.dot(h_ref[...], wml_ref[...],
                 preferred_element_type=jnp.float32) + bml_ref[...]   # (1, 256)
    mu = ml[:, :LATENT]
    lv = ml[:, LATENT:]
    mu_ref[...] = mu
    lv_ref[...] = lv
    z = mu + eps_ref[...] * jnp.exp(0.5 * lv)                         # f32
    d = jnp.dot(z.astype(jnp.bfloat16), wd_ref[...],
                preferred_element_type=jnp.float32) + bd_ref[...]     # (1, 6464)
    d_ref[...] = d.astype(d_ref.dtype)


def _decoder_kernel(d_ref, wd1_ref, bd1_ref, s1_ref, wd2_ref, bd2_ref, s2_ref,
                    o_ref):
    """deconv1+ReLU+upsample + deconv2+sigmoid+upsample for one image.
    s1/s2 are constant 0/1 bf16 matrices doing nearest-2x upsample (+ layout)
    as single MXU matmuls; the final store is the lane-dense (3, 784) NCHW
    slab."""
    # deconv1 (pre-flipped 'same' conv): (576, 81) im2col + one K=576 matmul.
    c1 = _im2col_T(d_ref[...], grid_w=GD, pad=PD, length=LD)
    y1 = jnp.dot(wd1_ref[...], c1, preferred_element_type=jnp.float32)
    y1 = jnp.maximum(y1 + bd1_ref[...], 0.0).astype(jnp.bfloat16)     # (32, 81)
    # nearest-2x upsample + scatter into deconv2's zero-padded grid layout.
    h = jnp.dot(y1, s1_ref[...],
                preferred_element_type=jnp.float32).astype(jnp.bfloat16)  # (32, 290)
    # deconv2: (288, 256) im2col + one K=288 matmul, f32 sigmoid epilogue.
    c2 = _im2col_T(h, grid_w=G2, pad=P2, length=L2)
    y2 = jnp.dot(wd2_ref[...], c2, preferred_element_type=jnp.float32)
    y2 = jax.nn.sigmoid(y2 + bd2_ref[...]).astype(jnp.bfloat16)       # (3, 256)
    # nearest-2x upsample straight to NCHW-flat (3, 784): lane-dense f32 store.
    o_ref[...] = jnp.dot(y2, s2_ref[...], preferred_element_type=jnp.float32)


# ------------------------------- kernel wrappers -----------------------------

def encoder(xc, w1, b1, g1, w2, b2, g2):
    """xc: (B, 27, 784) bf16 conv1-im2col -> (B, 64, 49) bf16 pooled features."""
    B = xc.shape[0]
    return pl.pallas_call(
        _encoder_kernel,
        out_shape=jax.ShapeDtypeStruct((B, 64, 49), jnp.bfloat16),
        grid=(B,),
        in_specs=[
            pl.BlockSpec((None, 27, L1), lambda b: (b, 0, 0)),
            pl.BlockSpec((32, 27), lambda b: (0, 0)),
            pl.BlockSpec((32, 1), lambda b: (0, 0)),
            pl.BlockSpec((PL1, L2E), lambda b: (0, 0)),
            pl.BlockSpec((64, 288), lambda b: (0, 0)),
            pl.BlockSpec((64, 1), lambda b: (0, 0)),
            pl.BlockSpec((PL2, 49), lambda b: (0, 0)),
        ],
        out_specs=pl.BlockSpec((None, 64, 49), lambda b: (b, 0, 0)),
        compiler_params=pltpu.CompilerParams(
            dimension_semantics=("parallel",)),        # v7x: one image per TC
    )(xc, w1, b1, g1, w2, b2, g2)


def fc(h, eps, wml, bml, wd, bd):
    """h: (B, 1, 3136) bf16 -> mu (B,1,128) f32, logvar (B,1,128) f32,
    decode features (B, 1, 6464) bf16 already in the decoder's layout."""
    B = h.shape[0]
    return pl.pallas_call(
        _fc_kernel,
        out_shape=(jax.ShapeDtypeStruct((B, 1, LATENT), jnp.float32),
                   jax.ShapeDtypeStruct((B, 1, LATENT), jnp.float32),
                   jax.ShapeDtypeStruct((B, 1, DEC), jnp.bfloat16)),
        grid=(B,),
        in_specs=[
            pl.BlockSpec((None, 1, FEAT), lambda b: (b, 0, 0)),
            pl.BlockSpec((None, 1, LATENT), lambda b: (b, 0, 0)),
            pl.BlockSpec((FEAT, 2 * LATENT), lambda b: (0, 0)),   # resident
            pl.BlockSpec((1, 2 * LATENT), lambda b: (0, 0)),
            pl.BlockSpec((LATENT, DEC), lambda b: (0, 0)),        # resident
            pl.BlockSpec((1, DEC), lambda b: (0, 0)),
        ],
        out_specs=(pl.BlockSpec((None, 1, LATENT), lambda b: (b, 0, 0)),
                   pl.BlockSpec((None, 1, LATENT), lambda b: (b, 0, 0)),
                   pl.BlockSpec((None, 1, DEC), lambda b: (b, 0, 0))),
        compiler_params=pltpu.CompilerParams(
            dimension_semantics=("parallel",)),
    )(h, eps, wml, bml, wd, bd)


def decoder(d, wd1, bd1, s1, wd2, bd2, s2):
    """d: (B, 64, 101) bf16 decode features -> (B, 3, 784) f32 reconstruction."""
    B = d.shape[0]
    return pl.pallas_call(
        _decoder_kernel,
        out_shape=jax.ShapeDtypeStruct((B, 3, L1), jnp.float32),
        grid=(B,),
        in_specs=[
            pl.BlockSpec((None, 64, LDE), lambda b: (b, 0, 0)),
            pl.BlockSpec((32, 576), lambda b: (0, 0)),
            pl.BlockSpec((32, 1), lambda b: (0, 0)),
            pl.BlockSpec((LD, L2E), lambda b: (0, 0)),
            pl.BlockSpec((3, 288), lambda b: (0, 0)),
            pl.BlockSpec((3, 1), lambda b: (0, 0)),
            pl.BlockSpec((L2, L1), lambda b: (0, 0)),
        ],
        out_specs=pl.BlockSpec((None, 3, L1), lambda b: (b, 0, 0)),
        compiler_params=pltpu.CompilerParams(
            dimension_semantics=("parallel",)),
    )(d, wd1, bd1, s1, wd2, bd2, s2)


# ---------------------------------- parameters -------------------------------

def init_params(key):
    """Torch-layout parameters, torch default (uniform +/- 1/sqrt(fan_in)) init."""
    ks = jax.random.split(key, 14)

    def u(k, shape, fan_in):
        bound = 1.0 / np.sqrt(float(fan_in))
        return jax.random.uniform(k, shape, jnp.float32, -bound, bound)

    p = {}
    p["conv1_w"] = u(ks[0], (32, 3, 3, 3), 3 * 9)         # Conv2d(3, 32, 3)
    p["conv1_b"] = u(ks[1], (32,), 3 * 9)
    p["conv2_w"] = u(ks[2], (64, 32, 3, 3), 32 * 9)       # Conv2d(32, 64, 3)
    p["conv2_b"] = u(ks[3], (64,), 32 * 9)
    p["fc_mu_w"] = u(ks[4], (LATENT, FEAT), FEAT)
    p["fc_mu_b"] = u(ks[5], (LATENT,), FEAT)
    p["fc_lv_w"] = u(ks[6], (LATENT, FEAT), FEAT)
    p["fc_lv_b"] = u(ks[7], (LATENT,), FEAT)
    p["fc_dec_w"] = u(ks[8], (FEAT, LATENT), LATENT)
    p["fc_dec_b"] = u(ks[9], (FEAT,), LATENT)
    p["deconv1_w"] = u(ks[10], (64, 32, 3, 3), 64 * 9)    # ConvTranspose2d(64,32,3): (in,out,kH,kW)
    p["deconv1_b"] = u(ks[11], (32,), 64 * 9)
    p["deconv2_w"] = u(ks[12], (32, 3, 3, 3), 32 * 9)     # ConvTranspose2d(32, 3, 3)
    p["deconv2_b"] = u(ks[13], (3,), 32 * 9)
    return p


def prepare_params(p):
    """One-time conversion to kernel-ready form: K-fused bf16 conv weights
    ((Cout, 9*Cin), channels-on-sublanes), flipped/channel-swapped deconv
    weights, layout-padded FC weights, and the constant 0/1 bf16 selection
    matrices for pool / upsample / layout."""
    bf = jnp.bfloat16
    k = {}

    def convT(w):          # Conv2d weight (O, I, 3, 3) -> (O, 9*I), col=(kh*3+kw)*I+i
        o, i = w.shape[0], w.shape[1]
        return jnp.transpose(w, (0, 2, 3, 1)).reshape(o, 9 * i).astype(bf)

    def deconvT(w):        # ConvTranspose2d weight (I, O, 3, 3): stride=1, pad=1
        i, o = w.shape[0], w.shape[1]
        # == 'same' conv with spatially flipped kernel and swapped in/out chans.
        return jnp.transpose(jnp.flip(w, axis=(2, 3)),
                             (1, 2, 3, 0)).reshape(o, 9 * i).astype(bf)

    k["w1"] = convT(p["conv1_w"]);   k["b1"] = p["conv1_b"].reshape(-1, 1)
    k["w2"] = convT(p["conv2_w"]);   k["b2"] = p["conv2_b"].reshape(-1, 1)
    k["wd1"] = deconvT(p["deconv1_w"]); k["bd1"] = p["deconv1_b"].reshape(-1, 1)
    k["wd2"] = deconvT(p["deconv2_w"]); k["bd2"] = p["deconv2_b"].reshape(-1, 1)

    # fc_mu | fc_logvar fused into one (3136, 256) matmul.  The encoder output
    # flattens in (channel, spatial) order == torch's (B,64,7,7).view(B,-1),
    # so no in-feature permutation is needed.
    k["wml"] = jnp.concatenate([p["fc_mu_w"].T, p["fc_lv_w"].T],
                               axis=1).astype(bf)
    k["bml"] = jnp.concatenate([p["fc_mu_b"],
                                p["fc_lv_b"]]).reshape(1, 2 * LATENT)

    # fc_decode: permute + zero-pad its output columns so the (B, 6464) result
    # reshapes for free into the decoder's (64, 101) channels-on-sublanes,
    # zero-padded + tap-extended layout (lane-dense 6464-wide store).
    wd = p["fc_dec_w"].T.reshape(LATENT, 64, WD, WD)          # (in, c, h, w)
    wd = jnp.pad(wd, ((0, 0), (0, 0), (1, 1), (1, 1)))        # 9x9 zero pad
    wd = wd.reshape(LATENT, 64, LD)
    wd = jnp.pad(wd, ((0, 0), (0, 0), (PD, PD)))              # tap extension
    k["wd"] = wd.reshape(LATENT, DEC).astype(bf)
    bd = jnp.pad(p["fc_dec_b"].reshape(64, WD, WD), ((0, 0), (1, 1), (1, 1)))
    bd = jnp.pad(bd.reshape(64, LD), ((0, 0), (PD, PD)))
    k["bd"] = bd.reshape(1, DEC)

    # 0/1 selection matrices (bf16 -- exact for 0/1).  Unselected destination
    # lanes stay 0 and double as the next conv's zero padding; garbage source
    # columns (border/extension positions) are simply never selected.
    g1 = np.zeros((PL1, L2E), np.float32)
    for ph in range(14):
        for pw in range(14):
            g1[2 * ph * H1 + 2 * pw, P2 + (ph + 1) * G2 + (pw + 1)] = 1.0
    g2 = np.zeros((PL2, 49), np.float32)
    for ph in range(7):
        for pw in range(7):
            g2[(2 * ph + 1) * G2 + (2 * pw + 1), ph * 7 + pw] = 1.0
    s1 = np.zeros((LD, L2E), np.float32)
    for h2 in range(14):
        for w2 in range(14):
            s1[(h2 // 2 + 1) * GD + (w2 // 2 + 1),
               P2 + (h2 + 1) * G2 + (w2 + 1)] = 1.0
    s2 = np.zeros((L2, L1), np.float32)
    for h2 in range(28):
        for w2 in range(28):
            s2[(h2 // 2 + 1) * G2 + (w2 // 2 + 1), h2 * H1 + w2] = 1.0
    k["g1"] = jnp.asarray(g1, bf)
    k["g2"] = jnp.asarray(g2, bf)
    k["s1"] = jnp.asarray(s1, bf)
    k["s2"] = jnp.asarray(s2, bf)
    return k


# ----------------------------------- forward ---------------------------------

def vae_conv_forward(kp, x_nchw, eps):
    B = x_nchw.shape[0]

    # conv1 im2col (channels-on-sublanes): tiny (27, 784) per image, built once
    # in XLA so the in-kernel conv1 is a single K=27 MXU matmul and no
    # non-aligned in-kernel concat is needed.
    xp = jnp.pad(x_nchw, ((0, 0), (0, 0), (1, 1), (1, 1)))
    xc = jnp.stack([xp[:, :, kh:kh + H1, kw:kw + H1]
                    for kh in range(3) for kw in range(3)], axis=1)
    xc = xc.reshape(B, 27, L1).astype(jnp.bfloat16)

    # ---- encode ----
    h = encoder(xc, kp["w1"], kp["b1"], kp["g1"],
                kp["w2"], kp["b2"], kp["g2"])                 # (B, 64, 49)

    # ---- fc_mu + fc_logvar + reparameterize + fc_decode ----
    # (B,64,49)->(B,1,3136) is a free contiguous reshape matching torch's
    # channel-major view(B, -1); the fc output reshapes for free into the
    # decoder's (64, 101) padded layout.
    mu, lv, d = fc(h.reshape(B, 1, FEAT), eps.reshape(B, 1, LATENT),
                   kp["wml"], kp["bml"], kp["wd"], kp["bd"])

    # ---- decode ----
    x_rec = decoder(d.reshape(B, 64, LDE),
                    kp["wd1"], kp["bd1"], kp["s1"],
                    kp["wd2"], kp["bd2"], kp["s2"])           # (B, 3, 784) f32

    # NCHW directly from the lane-dense kernel output -- no transpose.
    return (x_rec.reshape(B, 3, H1, H1),
            mu.reshape(B, LATENT), lv.reshape(B, LATENT))


# ------------------------------------- main -----------------------------------

if __name__ == "__main__":
    key = jax.random.PRNGKey(0)
    pkey, xkey, ekey = jax.random.split(key, 3)

    params = init_params(pkey)
    kparams = prepare_params(params)       # one-time weight prep, outside the jit

    # Spatial size must be 28 (two 2x maxpools -> 7x7, matching the 64*7*7 FCs).
    x = jax.random.normal(xkey, (2, 3, 28, 28), jnp.float32)
    eps = jax.random.normal(ekey, (2, LATENT), jnp.float32)  # stand-in for torch.randn_like

    fwd = jax.jit(vae_conv_forward)
    x_rec, mu, logvar = fwd(kparams, x, eps)
    jax.block_until_ready((x_rec, mu, logvar))

    assert x_rec.shape == (2, 3, 28, 28)
    assert mu.shape == (2, LATENT) and logvar.shape == (2, LATENT)
    assert bool(jnp.all(x_rec >= 0.0)) and bool(jnp.all(x_rec <= 1.0))  # sigmoid range
    print("KERNEL_OK")
</pallas_src>

<mosaic_0001>
module attributes {stable_mosaic.version = 11 : i64} {
  func.func @_encoder_kernel(%arg0: i32, %arg1: memref<1x27x784xbf16, #tpu.memory_space<vmem>>, %arg2: memref<32x27xbf16, #tpu.memory_space<vmem>>, %arg3: memref<32x1xf32, #tpu.memory_space<vmem>>, %arg4: memref<755x290xbf16, #tpu.memory_space<vmem>>, %arg5: memref<64x288xbf16, #tpu.memory_space<vmem>>, %arg6: memref<64x1xf32, #tpu.memory_space<vmem>>, %arg7: memref<239x49xbf16, #tpu.memory_space<vmem>>, %arg8: memref<1x64x49xbf16, #tpu.memory_space<vmem>>) attributes {dimension_semantics = [#tpu.dimension_semantics<parallel>], iteration_bounds = array<i64: 2>, scalar_prefetch = 0 : i64, scratch_operands = 0 : i64, tpu.core_type = #tpu.core_type<tc>, window_params = [{transform_indices = @transform_0, window_bounds = array<i64: 1, 27, 784>}, {pipeline_mode = #tpu.pipeline_mode<synchronous>, transform_indices = @transform_1, window_bounds = array<i64: 32, 27>}, {pipeline_mode = #tpu.pipeline_mode<synchronous>, transform_indices = @transform_2, window_bounds = array<i64: 32, 1>}, {pipeline_mode = #tpu.pipeline_mode<synchronous>, transform_indices = @transform_3, window_bounds = array<i64: 755, 290>}, {pipeline_mode = #tpu.pipeline_mode<synchronous>, transform_indices = @transform_4, window_bounds = array<i64: 64, 288>}, {pipeline_mode = #tpu.pipeline_mode<synchronous>, transform_indices = @transform_5, window_bounds = array<i64: 64, 1>}, {pipeline_mode = #tpu.pipeline_mode<synchronous>, transform_indices = @transform_6, window_bounds = array<i64: 239, 49>}, {transform_indices = @transform_7, window_bounds = array<i64: 1, 64, 49>}]} {
    %c0 = arith.constant 0 : index
    %c0_0 = arith.constant 0 : index
    %0 = vector.load %arg2[%c0, %c0_0] : memref<32x27xbf16, #tpu.memory_space<vmem>>, vector<32x27xbf16>
    %c0_1 = arith.constant 0 : index
    %c0_2 = arith.constant 0 : index
    %c0_3 = arith.constant 0 : index
    %1 = vector.load %arg1[%c0_1, %c0_2, %c0_3] : memref<1x27x784xbf16, #tpu.memory_space<vmem>>, vector<1x27x784xbf16>
    %2 = vector.shape_cast %1 : vector<1x27x784xbf16> to vector<27x784xbf16>
    %cst = arith.constant dense<0.000000e+00> : vector<32x784xf32>
    %3 = tpu.matmul %0, %2, %cst {dimension_numbers = #tpu.dot_dimension_numbers<[1], [0], [0], [1], [0, 0, 1, 1], [], []>} : vector<32x27xbf16>, vector<27x784xbf16>, vector<32x784xf32> -> vector<32x784xf32>
    %c0_4 = arith.constant 0 : index
    %c0_5 = arith.constant 0 : index
    %4 = vector.load %arg3[%c0_4, %c0_5] : memref<32x1xf32, #tpu.memory_space<vmem>>, vector<32x1xf32>
    %5 = vector.broadcast %4 : vector<32x1xf32> to vector<32x784xf32>
    %6 = arith.addf %3, %5 : vector<32x784xf32>
    %cst_6 = arith.constant 0.000000e+00 : f32
    %7 = vector.broadcast %cst_6 : f32 to vector<32x784xf32>
    %8 = arith.maximumf %6, %7 : vector<32x784xf32>
    %9 = arith.truncf %8 : vector<32x784xf32> to vector<32x784xbf16>
    %10 = vector.extract_strided_slice %9 {offsets = [0, 0], sizes = [32, 755], strides = [1, 1]} : vector<32x784xbf16> to vector<32x755xbf16>
    %11 = vector.extract_strided_slice %9 {offsets = [0, 1], sizes = [32, 755], strides = [1, 1]} : vector<32x784xbf16> to vector<32x755xbf16>
    %12 = arith.maximumf %10, %11 : vector<32x755xbf16>
    %13 = vector.extract_strided_slice %9 {offsets = [0, 28], sizes = [32, 755], strides = [1, 1]} : vector<32x784xbf16> to vector<32x755xbf16>
    %14 = vector.extract_strided_slice %9 {offsets = [0, 29], sizes = [32, 755], strides = [1, 1]} : vector<32x784xbf16> to vector<32x755xbf16>
    %15 = arith.maximumf %13, %14 : vector<32x755xbf16>
    %16 = arith.maximumf %12, %15 : vector<32x755xbf16>
    %c0_7 = arith.constant 0 : index
    %c0_8 = arith.constant 0 : index
    %17 = vector.load %arg4[%c0_7, %c0_8] : memref<755x290xbf16, #tpu.memory_space<vmem>>, vector<755x290xbf16>
    %cst_9 = arith.constant dense<0.000000e+00> : vector<32x290xf32>
    %18 = tpu.matmul %16, %17, %cst_9 {dimension_numbers = #tpu.dot_dimension_numbers<[1], [0], [0], [1], [0, 0, 1, 1], [], []>} : vector<32x755xbf16>, vector<755x290xbf16>, vector<32x290xf32> -> vector<32x290xf32>
    %19 = arith.truncf %18 : vector<32x290xf32> to vector<32x290xbf16>
    %20 = vector.extract_strided_slice %19 {offsets = [0, 0], sizes = [32, 256], strides = [1, 1]} : vector<32x290xbf16> to vector<32x256xbf16>
    %21 = vector.extract_strided_slice %19 {offsets = [0, 1], sizes = [32, 256], strides = [1, 1]} : vector<32x290xbf16> to vector<32x256xbf16>
    %22 = vector.extract_strided_slice %19 {offsets = [0, 2], sizes = [32, 256], strides = [1, 1]} : vector<32x290xbf16> to vector<32x256xbf16>
    %23 = vector.extract_strided_slice %19 {offsets = [0, 16], sizes = [32, 256], strides = [1, 1]} : vector<32x290xbf16> to vector<32x256xbf16>
    %24 = vector.extract_strided_slice %19 {offsets = [0, 17], sizes = [32, 256], strides = [1, 1]} : vector<32x290xbf16> to vector<32x256xbf16>
    %25 = vector.extract_strided_slice %19 {offsets = [0, 18], sizes = [32, 256], strides = [1, 1]} : vector<32x290xbf16> to vector<32x256xbf16>
    %26 = vector.extract_strided_slice %19 {offsets = [0, 32], sizes = [32, 256], strides = [1, 1]} : vector<32x290xbf16> to vector<32x256xbf16>
    %27 = vector.extract_strided_slice %19 {offsets = [0, 33], sizes = [32, 256], strides = [1, 1]} : vector<32x290xbf16> to vector<32x256xbf16>
    %28 = vector.extract_strided_slice %19 {offsets = [0, 34], sizes = [32, 256], strides = [1, 1]} : vector<32x290xbf16> to vector<32x256xbf16>
    %29 = tpu.concatenate %20, %21, %22, %23, %24, %25, %26, %27, %28 in 0 : vector<32x256xbf16>, vector<32x256xbf16>, vector<32x256xbf16>, vector<32x256xbf16>, vector<32x256xbf16>, vector<32x256xbf16>, vector<32x256xbf16>, vector<32x256xbf16>, vector<32x256xbf16> -> vector<288x256xbf16>
    %c0_10 = arith.constant 0 : index
    %c0_11 = arith.constant 0 : index
    %30 = vector.load %arg5[%c0_10, %c0_11] : memref<64x288xbf16, #tpu.memory_space<vmem>>, vector<64x288xbf16>
    %cst_12 = arith.constant dense<0.000000e+00> : vector<64x256xf32>
    %31 = tpu.matmul %30, %29, %cst_12 {dimension_numbers = #tpu.dot_dimension_numbers<[1], [0], [0], [1], [0, 0, 1, 1], [], []>} : vector<64x288xbf16>, vector<288x256xbf16>, vector<64x256xf32> -> vector<64x256xf32>
    %c0_13 = arith.constant 0 : index
    %c0_14 = arith.constant 0 : index
    %32 = vector.load %arg6[%c0_13, %c0_14] : memref<64x1xf32, #tpu.memory_space<vmem>>, vector<64x1xf32>
    %33 = vector.broadcast %32 : vector<64x1xf32> to vector<64x256xf32>
    %34 = arith.addf %31, %33 : vector<64x256xf32>
    %cst_15 = arith.constant 0.000000e+00 : f32
    %35 = vector.broadcast %cst_15 : f32 to vector<64x256xf32>
    %36 = arith.maximumf %34, %35 : vector<64x256xf32>
    %37 = arith.truncf %36 : vector<64x256xf32> to vector<64x256xbf16>
    %38 = vector.extract_strided_slice %37 {offsets = [0, 0], sizes = [64, 239], strides = [1, 1]} : vector<64x256xbf16> to vector<64x239xbf16>
    %39 = vector.extract_strided_slice %37 {offsets = [0, 1], sizes = [64, 239], strides = [1, 1]} : vector<64x256xbf16> to vector<64x239xbf16>
    %40 = arith.maximumf %38, %39 : vector<64x239xbf16>
    %41 = vector.extract_strided_slice %37 {offsets = [0, 16], sizes = [64, 239], strides = [1, 1]} : vector<64x256xbf16> to vector<64x239xbf16>
    %42 = vector.extract_strided_slice %37 {offsets = [0, 17], sizes = [64, 239], strides = [1, 1]} : vector<64x256xbf16> to vector<64x239xbf16>
    %43 = arith.maximumf %41, %42 : vector<64x239xbf16>
    %44 = arith.maximumf %40, %43 : vector<64x239xbf16>
    %c0_16 = arith.constant 0 : index
    %c0_17 = arith.constant 0 : index
    %45 = vector.load %arg7[%c0_16, %c0_17] : memref<239x49xbf16, #tpu.memory_space<vmem>>, vector<239x49xbf16>
    %cst_18 = arith.constant dense<0.000000e+00> : vector<64x49xf32>
    %46 = tpu.matmul %44, %45, %cst_18 {dimension_numbers = #tpu.dot_dimension_numbers<[1], [0], [0], [1], [0, 0, 1, 1], [], []>} : vector<64x239xbf16>, vector<239x49xbf16>, vector<64x49xf32> -> vector<64x49xf32>
    %47 = arith.truncf %46 : vector<64x49xf32> to vector<64x49xbf16>
    %c0_19 = arith.constant 0 : index
    %c0_20 = arith.constant 0 : index
    %c0_21 = arith.constant 0 : index
    %48 = vector.load %arg8[%c0_19, %c0_20, %c0_21] : memref<1x64x49xbf16, #tpu.memory_space<vmem>>, vector<1x64x49xbf16>
    %49 = vector.shape_cast %48 : vector<1x64x49xbf16> to vector<64x49xbf16>
    %50 = vector.shape_cast %47 : vector<64x49xbf16> to vector<1x64x49xbf16>
    tpu.vector_store %arg8[%c0_19, %c0_20, %c0_21], %50 {strides = array<i32>} : memref<1x64x49xbf16, #tpu.memory_space<vmem>>, vector<1x64x49xbf16>,
    return
  }
  func.func @transform_0(%arg0: i32) -> (i32, i32, i32) {
    %c0_i32 = arith.constant 0 : i32
    %c0_i32_0 = arith.constant 0 : i32
    %c0_i32_1 = arith.constant 0 : i32
    return %arg0, %c0_i32, %c0_i32_0 : i32, i32, i32
  }
  func.func @transform_1(%arg0: i32) -> (i32, i32) {
    %c0_i32 = arith.constant 0 : i32
    %c0_i32_0 = arith.constant 0 : i32
    %c0_i32_1 = arith.constant 0 : i32
    return %c0_i32, %c0_i32_0 : i32, i32
  }
  func.func @transform_2(%arg0: i32) -> (i32, i32) {
    %c0_i32 = arith.constant 0 : i32
    %c0_i32_0 = arith.constant 0 : i32
    %c0_i32_1 = arith.constant 0 : i32
    return %c0_i32, %c0_i32_0 : i32, i32
  }
  func.func @transform_3(%arg0: i32) -> (i32, i32) {
    %c0_i32 = arith.constant 0 : i32
    %c0_i32_0 = arith.constant 0 : i32
    %c0_i32_1 = arith.constant 0 : i32
    return %c0_i32, %c0_i32_0 : i32, i32
  }
  func.func @transform_4(%arg0: i32) -> (i32, i32) {
    %c0_i32 = arith.constant 0 : i32
    %c0_i32_0 = arith.constant 0 : i32
    %c0_i32_1 = arith.constant 0 : i32
    return %c0_i32, %c0_i32_0 : i32, i32
  }
  func.func @transform_5(%arg0: i32) -> (i32, i32) {
    %c0_i32 = arith.constant 0 : i32
    %c0_i32_0 = arith.constant 0 : i32
    %c0_i32_1 = arith.constant 0 : i32
    return %c0_i32, %c0_i32_0 : i32, i32
  }
  func.func @transform_6(%arg0: i32) -> (i32, i32) {
    %c0_i32 = arith.constant 0 : i32
    %c0_i32_0 = arith.constant 0 : i32
    %c0_i32_1 = arith.constant 0 : i32
    return %c0_i32, %c0_i32_0 : i32, i32
  }
  func.func @transform_7(%arg0: i32) -> (i32, i32, i32) {
    %c0_i32 = arith.constant 0 : i32
    %c0_i32_0 = arith.constant 0 : i32
    %c0_i32_1 = arith.constant 0 : i32
    return %arg0, %c0_i32, %c0_i32_0 : i32, i32, i32
  }
}

module attributes {stable_mosaic.version = 11 : i64} {
  func.func @_fc_kernel(%arg0: i32, %arg1: memref<1x1x3136xbf16, #tpu.memory_space<vmem>>, %arg2: memref<1x1x128xf32, #tpu.memory_space<vmem>>, %arg3: memref<3136x256xbf16, #tpu.memory_space<vmem>>, %arg4: memref<1x256xf32, #tpu.memory_space<vmem>>, %arg5: memref<128x6464xbf16, #tpu.memory_space<vmem>>, %arg6: memref<1x6464xf32, #tpu.memory_space<vmem>>, %arg7: memref<1x1x128xf32, #tpu.memory_space<vmem>>, %arg8: memref<1x1x128xf32, #tpu.memory_space<vmem>>, %arg9: memref<1x1x6464xbf16, #tpu.memory_space<vmem>>) attributes {dimension_semantics = [#tpu.dimension_semantics<parallel>], iteration_bounds = array<i64: 2>, scalar_prefetch = 0 : i64, scratch_operands = 0 : i64, tpu.core_type = #tpu.core_type<tc>, window_params = [{transform_indices = @transform_0, window_bounds = array<i64: 1, 1, 3136>}, {transform_indices = @transform_1, window_bounds = array<i64: 1, 1, 128>}, {pipeline_mode = #tpu.pipeline_mode<synchronous>, transform_indices = @transform_2, window_bounds = array<i64: 3136, 256>}, {pipeline_mode = #tpu.pipeline_mode<synchronous>, transform_indices = @transform_3, window_bounds = array<i64: 1, 256>}, {pipeline_mode = #tpu.pipeline_mode<synchronous>, transform_indices = @transform_4, window_bounds = array<i64: 128, 6464>}, {pipeline_mode = #tpu.pipeline_mode<synchronous>, transform_indices = @transform_5, window_bounds = array<i64: 1, 6464>}, {transform_indices = @transform_6, window_bounds = array<i64: 1, 1, 128>}, {transform_indices = @transform_7, window_bounds = array<i64: 1, 1, 128>}, {transform_indices = @transform_8, window_bounds = array<i64: 1, 1, 6464>}]} {
    %c0 = arith.constant 0 : index
    %c0_0 = arith.constant 0 : index
    %c0_1 = arith.constant 0 : index
    %0 = vector.load %arg1[%c0, %c0_0, %c0_1] : memref<1x1x3136xbf16, #tpu.memory_space<vmem>>, vector<1x1x3136xbf16>
    %1 = vector.shape_cast %0 : vector<1x1x3136xbf16> to vector<1x3136xbf16>
    %c0_2 = arith.constant 0 : index
    %c0_3 = arith.constant 0 : index
    %2 = vector.load %arg3[%c0_2, %c0_3] : memref<3136x256xbf16, #tpu.memory_space<vmem>>, vector<3136x256xbf16>
    %cst = arith.constant dense<0.000000e+00> : vector<1x256xf32>
    %3 = tpu.matmul %1, %2, %cst {dimension_numbers = #tpu.dot_dimension_numbers<[1], [0], [0], [1], [0, 0, 1, 1], [], []>} : vector<1x3136xbf16>, vector<3136x256xbf16>, vector<1x256xf32> -> vector<1x256xf32>
    %c0_4 = arith.constant 0 : index
    %c0_5 = arith.constant 0 : index
    %4 = vector.load %arg4[%c0_4, %c0_5] : memref<1x256xf32, #tpu.memory_space<vmem>>, vector<1x256xf32>
    %5 = arith.addf %3, %4 : vector<1x256xf32>
    %6 = vector.extract_strided_slice %5 {offsets = [0, 0], sizes = [1, 128], strides = [1, 1]} : vector<1x256xf32> to vector<1x128xf32>
    %7 = vector.extract_strided_slice %5 {offsets = [0, 128], sizes = [1, 128], strides = [1, 1]} : vector<1x256xf32> to vector<1x128xf32>
    %c0_6 = arith.constant 0 : index
    %c0_7 = arith.constant 0 : index
    %c0_8 = arith.constant 0 : index
    %8 = vector.load %arg7[%c0_6, %c0_7, %c0_8] : memref<1x1x128xf32, #tpu.memory_space<vmem>>, vector<1x1x128xf32>
    %9 = vector.shape_cast %8 : vector<1x1x128xf32> to vector<1x128xf32>
    %10 = vector.shape_cast %6 : vector<1x128xf32> to vector<1x1x128xf32>
    tpu.vector_store %arg7[%c0_6, %c0_7, %c0_8], %10 {strides = array<i32>} : memref<1x1x128xf32, #tpu.memory_space<vmem>>, vector<1x1x128xf32>,
    %c0_9 = arith.constant 0 : index
    %c0_10 = arith.constant 0 : index
    %c0_11 = arith.constant 0 : index
    %11 = vector.load %arg8[%c0_9, %c0_10, %c0_11] : memref<1x1x128xf32, #tpu.memory_space<vmem>>, vector<1x1x128xf32>
    %12 = vector.shape_cast %11 : vector<1x1x128xf32> to vector<1x128xf32>
    %13 = vector.shape_cast %7 : vector<1x128xf32> to vector<1x1x128xf32>
    tpu.vector_store %arg8[%c0_9, %c0_10, %c0_11], %13 {strides = array<i32>} : memref<1x1x128xf32, #tpu.memory_space<vmem>>, vector<1x1x128xf32>,
    %c0_12 = arith.constant 0 : index
    %c0_13 = arith.constant 0 : index
    %c0_14 = arith.constant 0 : index
    %14 = vector.load %arg2[%c0_12, %c0_13, %c0_14] : memref<1x1x128xf32, #tpu.memory_space<vmem>>, vector<1x1x128xf32>
    %15 = vector.shape_cast %14 : vector<1x1x128xf32> to vector<1x128xf32>
    %cst_15 = arith.constant 5.000000e-01 : f32
    %16 = vector.broadcast %cst_15 : f32 to vector<1x128xf32>
    %17 = arith.mulf %16, %7 : vector<1x128xf32>
    %18 = math.exp %17 : vector<1x128xf32>
    %19 = arith.mulf %15, %18 : vector<1x128xf32>
    %20 = arith.addf %6, %19 : vector<1x128xf32>
    %21 = arith.truncf %20 : vector<1x128xf32> to vector<1x128xbf16>
    %c0_16 = arith.constant 0 : index
    %c0_17 = arith.constant 0 : index
    %22 = vector.load %arg5[%c0_16, %c0_17] : memref<128x6464xbf16, #tpu.memory_space<vmem>>, vector<128x6464xbf16>
    %cst_18 = arith.constant dense<0.000000e+00> : vector<1x6464xf32>
    %23 = tpu.matmul %21, %22, %cst_18 {dimension_numbers = #tpu.dot_dimension_numbers<[1], [0], [0], [1], [0, 0, 1, 1], [], []>} : vector<1x128xbf16>, vector<128x6464xbf16>, vector<1x6464xf32> -> vector<1x6464xf32>
    %c0_19 = arith.constant 0 : index
    %c0_20 = arith.constant 0 : index
    %24 = vector.load %arg6[%c0_19, %c0_20] : memref<1x6464xf32, #tpu.memory_space<vmem>>, vector<1x6464xf32>
    %25 = arith.addf %23, %24 : vector<1x6464xf32>
    %26 = arith.truncf %25 : vector<1x6464xf32> to vector<1x6464xbf16>
    %c0_21 = arith.constant 0 : index
    %c0_22 = arith.constant 0 : index
    %c0_23 = arith.constant 0 : index
    %27 = vector.load %arg9[%c0_21, %c0_22, %c0_23] : memref<1x1x6464xbf16, #tpu.memory_space<vmem>>, vector<1x1x6464xbf16>
    %28 = vector.shape_cast %27 : vector<1x1x6464xbf16> to vector<1x6464xbf16>
    %29 = vector.shape_cast %26 : vector<1x6464xbf16> to vector<1x1x6464xbf16>
    tpu.vector_store %arg9[%c0_21, %c0_22, %c0_23], %29 {strides = array<i32>} : memref<1x1x6464xbf16, #tpu.memory_space<vmem>>, vector<1x1x6464xbf16>,
    return
  }
  func.func @transform_0(%arg0: i32) -> (i32, i32, i32) {
    %c0_i32 = arith.constant 0 : i32
    %c0_i32_0 = arith.constant 0 : i32
    %c0_i32_1 = arith.constant 0 : i32
    return %arg0, %c0_i32, %c0_i32_0 : i32, i32, i32
  }
  func.func @transform_1(%arg0: i32) -> (i32, i32, i32) {
    %c0_i32 = arith.constant 0 : i32
    %c0_i32_0 = arith.constant 0 : i32
    %c0_i32_1 = arith.constant 0 : i32
    return %arg0, %c0_i32, %c0_i32_0 : i32, i32, i32
  }
  func.func @transform_2(%arg0: i32) -> (i32, i32) {
    %c0_i32 = arith.constant 0 : i32
    %c0_i32_0 = arith.constant 0 : i32
    %c0_i32_1 = arith.constant 0 : i32
    return %c0_i32, %c0_i32_0 : i32, i32
  }
  func.func @transform_3(%arg0: i32) -> (i32, i32) {
    %c0_i32 = arith.constant 0 : i32
    %c0_i32_0 = arith.constant 0 : i32
    %c0_i32_1 = arith.constant 0 : i32
    return %c0_i32, %c0_i32_0 : i32, i32
  }
  func.func @transform_4(%arg0: i32) -> (i32, i32) {
    %c0_i32 = arith.constant 0 : i32
    %c0_i32_0 = arith.constant 0 : i32
    %c0_i32_1 = arith.constant 0 : i32
    return %c0_i32, %c0_i32_0 : i32, i32
  }
  func.func @transform_5(%arg0: i32) -> (i32, i32) {
    %c0_i32 = arith.constant 0 : i32
    %c0_i32_0 = arith.constant 0 : i32
    %c0_i32_1 = arith.constant 0 : i32
    return %c0_i32, %c0_i32_0 : i32, i32
  }
  func.func @transform_6(%arg0: i32) -> (i32, i32, i32) {
    %c0_i32 = arith.constant 0 : i32
    %c0_i32_0 = arith.constant 0 : i32
    %c0_i32_1 = arith.constant 0 : i32
    return %arg0, %c0_i32, %c0_i32_0 : i32, i32, i32
  }
  func.func @transform_7(%arg0: i32) -> (i32, i32, i32) {
    %c0_i32 = arith.constant 0 : i32
    %c0_i32_0 = arith.constant 0 : i32
    %c0_i32_1 = arith.constant 0 : i32
    return %arg0, %c0_i32, %c0_i32_0 : i32, i32, i32
  }
  func.func @transform_8(%arg0: i32) -> (i32, i32, i32) {
    %c0_i32 = arith.constant 0 : i32
    %c0_i32_0 = arith.constant 0 : i32
    %c0_i32_1 = arith.constant 0 : i32
    return %arg0, %c0_i32, %c0_i32_0 : i32, i32, i32
  }
}

module attributes {stable_mosaic.version = 11 : i64} {
  func.func @_decoder_kernel(%arg0: i32, %arg1: memref<1x64x101xbf16, #tpu.memory_space<vmem>>, %arg2: memref<32x576xbf16, #tpu.memory_space<vmem>>, %arg3: memref<32x1xf32, #tpu.memory_space<vmem>>, %arg4: memref<81x290xbf16, #tpu.memory_space<vmem>>, %arg5: memref<3x288xbf16, #tpu.memory_space<vmem>>, %arg6: memref<3x1xf32, #tpu.memory_space<vmem>>, %arg7: memref<256x784xbf16, #tpu.memory_space<vmem>>, %arg8: memref<1x3x784xf32, #tpu.memory_space<vmem>>) attributes {dimension_semantics = [#tpu.dimension_semantics<parallel>], iteration_bounds = array<i64: 2>, scalar_prefetch = 0 : i64, scratch_operands = 0 : i64, tpu.core_type = #tpu.core_type<tc>, window_params = [{transform_indices = @transform_0, window_bounds = array<i64: 1, 64, 101>}, {pipeline_mode = #tpu.pipeline_mode<synchronous>, transform_indices = @transform_1, window_bounds = array<i64: 32, 576>}, {pipeline_mode = #tpu.pipeline_mode<synchronous>, transform_indices = @transform_2, window_bounds = array<i64: 32, 1>}, {pipeline_mode = #tpu.pipeline_mode<synchronous>, transform_indices = @transform_3, window_bounds = array<i64: 81, 290>}, {pipeline_mode = #tpu.pipeline_mode<synchronous>, transform_indices = @transform_4, window_bounds = array<i64: 3, 288>}, {pipeline_mode = #tpu.pipeline_mode<synchronous>, transform_indices = @transform_5, window_bounds = array<i64: 3, 1>}, {pipeline_mode = #tpu.pipeline_mode<synchronous>, transform_indices = @transform_6, window_bounds = array<i64: 256, 784>}, {transform_indices = @transform_7, window_bounds = array<i64: 1, 3, 784>}]} {
    %c0 = arith.constant 0 : index
    %c0_0 = arith.constant 0 : index
    %c0_1 = arith.constant 0 : index
    %0 = vector.load %arg1[%c0, %c0_0, %c0_1] : memref<1x64x101xbf16, #tpu.memory_space<vmem>>, vector<1x64x101xbf16>
    %1 = vector.shape_cast %0 : vector<1x64x101xbf16> to vector<64x101xbf16>
    %2 = vector.extract_strided_slice %1 {offsets = [0, 0], sizes = [64, 81], strides = [1, 1]} : vector<64x101xbf16> to vector<64x81xbf16>
    %3 = vector.extract_strided_slice %1 {offsets = [0, 1], sizes = [64, 81], strides = [1, 1]} : vector<64x101xbf16> to vector<64x81xbf16>
    %4 = vector.extract_strided_slice %1 {offsets = [0, 2], sizes = [64, 81], strides = [1, 1]} : vector<64x101xbf16> to vector<64x81xbf16>
    %5 = vector.extract_strided_slice %1 {offsets = [0, 9], sizes = [64, 81], strides = [1, 1]} : vector<64x101xbf16> to vector<64x81xbf16>
    %6 = vector.extract_strided_slice %1 {offsets = [0, 10], sizes = [64, 81], strides = [1, 1]} : vector<64x101xbf16> to vector<64x81xbf16>
    %7 = vector.extract_strided_slice %1 {offsets = [0, 11], sizes = [64, 81], strides = [1, 1]} : vector<64x101xbf16> to vector<64x81xbf16>
    %8 = vector.extract_strided_slice %1 {offsets = [0, 18], sizes = [64, 81], strides = [1, 1]} : vector<64x101xbf16> to vector<64x81xbf16>
    %9 = vector.extract_strided_slice %1 {offsets = [0, 19], sizes = [64, 81], strides = [1, 1]} : vector<64x101xbf16> to vector<64x81xbf16>
    %10 = vector.extract_strided_slice %1 {offsets = [0, 20], sizes = [64, 81], strides = [1, 1]} : vector<64x101xbf16> to vector<64x81xbf16>
    %11 = tpu.concatenate %2, %3, %4, %5, %6, %7, %8, %9, %10 in 0 : vector<64x81xbf16>, vector<64x81xbf16>, vector<64x81xbf16>, vector<64x81xbf16>, vector<64x81xbf16>, vector<64x81xbf16>, vector<64x81xbf16>, vector<64x81xbf16>, vector<64x81xbf16> -> vector<576x81xbf16>
    %c0_2 = arith.constant 0 : index
    %c0_3 = arith.constant 0 : index
    %12 = vector.load %arg2[%c0_2, %c0_3] : memref<32x576xbf16, #tpu.memory_space<vmem>>, vector<32x576xbf16>
    %cst = arith.constant dense<0.000000e+00> : vector<32x81xf32>
    %13 = tpu.matmul %12, %11, %cst {dimension_numbers = #tpu.dot_dimension_numbers<[1], [0], [0], [1], [0, 0, 1, 1], [], []>} : vector<32x576xbf16>, vector<576x81xbf16>, vector<32x81xf32> -> vector<32x81xf32>
    %c0_4 = arith.constant 0 : index
    %c0_5 = arith.constant 0 : index
    %14 = vector.load %arg3[%c0_4, %c0_5] : memref<32x1xf32, #tpu.memory_space<vmem>>, vector<32x1xf32>
    %15 = vector.broadcast %14 : vector<32x1xf32> to vector<32x81xf32>
    %16 = arith.addf %13, %15 : vector<32x81xf32>
    %cst_6 = arith.constant 0.000000e+00 : f32
    %17 = vector.broadcast %cst_6 : f32 to vector<32x81xf32>
    %18 = arith.maximumf %16, %17 : vector<32x81xf32>
    %19 = arith.truncf %18 : vector<32x81xf32> to vector<32x81xbf16>
    %c0_7 = arith.constant 0 : index
    %c0_8 = arith.constant 0 : index
    %20 = vector.load %arg4[%c0_7, %c0_8] : memref<81x290xbf16, #tpu.memory_space<vmem>>, vector<81x290xbf16>
    %cst_9 = arith.constant dense<0.000000e+00> : vector<32x290xf32>
    %21 = tpu.matmul %19, %20, %cst_9 {dimension_numbers = #tpu.dot_dimension_numbers<[1], [0], [0], [1], [0, 0, 1, 1], [], []>} : vector<32x81xbf16>, vector<81x290xbf16>, vector<32x290xf32> -> vector<32x290xf32>
    %22 = arith.truncf %21 : vector<32x290xf32> to vector<32x290xbf16>
    %23 = vector.extract_strided_slice %22 {offsets = [0, 0], sizes = [32, 256], strides = [1, 1]} : vector<32x290xbf16> to vector<32x256xbf16>
    %24 = vector.extract_strided_slice %22 {offsets = [0, 1], sizes = [32, 256], strides = [1, 1]} : vector<32x290xbf16> to vector<32x256xbf16>
    %25 = vector.extract_strided_slice %22 {offsets = [0, 2], sizes = [32, 256], strides = [1, 1]} : vector<32x290xbf16> to vector<32x256xbf16>
    %26 = vector.extract_strided_slice %22 {offsets = [0, 16], sizes = [32, 256], strides = [1, 1]} : vector<32x290xbf16> to vector<32x256xbf16>
    %27 = vector.extract_strided_slice %22 {offsets = [0, 17], sizes = [32, 256], strides = [1, 1]} : vector<32x290xbf16> to vector<32x256xbf16>
    %28 = vector.extract_strided_slice %22 {offsets = [0, 18], sizes = [32, 256], strides = [1, 1]} : vector<32x290xbf16> to vector<32x256xbf16>
    %29 = vector.extract_strided_slice %22 {offsets = [0, 32], sizes = [32, 256], strides = [1, 1]} : vector<32x290xbf16> to vector<32x256xbf16>
    %30 = vector.extract_strided_slice %22 {offsets = [0, 33], sizes = [32, 256], strides = [1, 1]} : vector<32x290xbf16> to vector<32x256xbf16>
    %31 = vector.extract_strided_slice %22 {offsets = [0, 34], sizes = [32, 256], strides = [1, 1]} : vector<32x290xbf16> to vector<32x256xbf16>
    %32 = tpu.concatenate %23, %24, %25, %26, %27, %28, %29, %30, %31 in 0 : vector<32x256xbf16>, vector<32x256xbf16>, vector<32x256xbf16>, vector<32x256xbf16>, vector<32x256xbf16>, vector<32x256xbf16>, vector<32x256xbf16>, vector<32x256xbf16>, vector<32x256xbf16> -> vector<288x256xbf16>
    %c0_10 = arith.constant 0 : index
    %c0_11 = arith.constant 0 : index
    %33 = vector.load %arg5[%c0_10, %c0_11] : memref<3x288xbf16, #tpu.memory_space<vmem>>, vector<3x288xbf16>
    %cst_12 = arith.constant dense<0.000000e+00> : vector<3x256xf32>
    %34 = tpu.matmul %33, %32, %cst_12 {dimension_numbers = #tpu.dot_dimension_numbers<[1], [0], [0], [1], [0, 0, 1, 1], [], []>} : vector<3x288xbf16>, vector<288x256xbf16>, vector<3x256xf32> -> vector<3x256xf32>
    %c0_13 = arith.constant 0 : index
    %c0_14 = arith.constant 0 : index
    %35 = vector.load %arg6[%c0_13, %c0_14] : memref<3x1xf32, #tpu.memory_space<vmem>>, vector<3x1xf32>
    %36 = vector.broadcast %35 : vector<3x1xf32> to vector<3x256xf32>
    %37 = arith.addf %34, %36 : vector<3x256xf32>
    %38 = arith.negf %37 : vector<3x256xf32>
    %39 = math.exp %38 : vector<3x256xf32>
    %cst_15 = arith.constant 1.000000e+00 : f32
    %40 = vector.broadcast %cst_15 : f32 to vector<3x256xf32>
    %41 = arith.addf %40, %39 : vector<3x256xf32>
    %42 = arith.divf %40, %41 : vector<3x256xf32>
    %43 = arith.truncf %42 : vector<3x256xf32> to vector<3x256xbf16>
    %c0_16 = arith.constant 0 : index
    %c0_17 = arith.constant 0 : index
    %44 = vector.load %arg7[%c0_16, %c0_17] : memref<256x784xbf16, #tpu.memory_space<vmem>>, vector<256x784xbf16>
    %cst_18 = arith.constant dense<0.000000e+00> : vector<3x784xf32>
    %45 = tpu.matmul %43, %44, %cst_18 {dimension_numbers = #tpu.dot_dimension_numbers<[1], [0], [0], [1], [0, 0, 1, 1], [], []>} : vector<3x256xbf16>, vector<256x784xbf16>, vector<3x784xf32> -> vector<3x784xf32>
    %c0_19 = arith.constant 0 : index
    %c0_20 = arith.constant 0 : index
    %c0_21 = arith.constant 0 : index
    %46 = vector.load %arg8[%c0_19, %c0_20, %c0_21] : memref<1x3x784xf32, #tpu.memory_space<vmem>>, vector<1x3x784xf32>
    %47 = vector.shape_cast %46 : vector<1x3x784xf32> to vector<3x784xf32>
    %48 = vector.shape_cast %45 : vector<3x784xf32> to vector<1x3x784xf32>
    tpu.vector_store %arg8[%c0_19, %c0_20, %c0_21], %48 {strides = array<i32>} : memref<1x3x784xf32, #tpu.memory_space<vmem>>, vector<1x3x784xf32>,
    return
  }
  func.func @transform_0(%arg0: i32) -> (i32, i32, i32) {
    %c0_i32 = arith.constant 0 : i32
    %c0_i32_0 = arith.constant 0 : i32
    %c0_i32_1 = arith.constant 0 : i32
    return %arg0, %c0_i32, %c0_i32_0 : i32, i32, i32
  }
  func.func @transform_1(%arg0: i32) -> (i32, i32) {
    %c0_i32 = arith.constant 0 : i32
    %c0_i32_0 = arith.constant 0 : i32
    %c0_i32_1 = arith.constant 0 : i32
    return %c0_i32, %c0_i32_0 : i32, i32
  }
  func.func @transform_2(%arg0: i32) -> (i32, i32) {
    %c0_i32 = arith.constant 0 : i32
    %c0_i32_0 = arith.constant 0 : i32
    %c0_i32_1 = arith.constant 0 : i32
    return %c0_i32, %c0_i32_0 : i32, i32
  }
  func.func @transform_3(%arg0: i32) -> (i32, i32) {
    %c0_i32 = arith.constant 0 : i32
    %c0_i32_0 = arith.constant 0 : i32
    %c0_i32_1 = arith.constant 0 : i32
    return %c0_i32, %c0_i32_0 : i32, i32
  }
  func.func @transform_4(%arg0: i32) -> (i32, i32) {
    %c0_i32 = arith.constant 0 : i32
    %c0_i32_0 = arith.constant 0 : i32
    %c0_i32_1 = arith.constant 0 : i32
    return %c0_i32, %c0_i32_0 : i32, i32
  }
  func.func @transform_5(%arg0: i32) -> (i32, i32) {
    %c0_i32 = arith.constant 0 : i32
    %c0_i32_0 = arith.constant 0 : i32
    %c0_i32_1 = arith.constant 0 : i32
    return %c0_i32, %c0_i32_0 : i32, i32
  }
  func.func @transform_6(%arg0: i32) -> (i32, i32) {
    %c0_i32 = arith.constant 0 : i32
    %c0_i32_0 = arith.constant 0 : i32
    %c0_i32_1 = arith.constant 0 : i32
    return %c0_i32, %c0_i32_0 : i32, i32
  }
  func.func @transform_7(%arg0: i32) -> (i32, i32, i32) {
    %c0_i32 = arith.constant 0 : i32
    %c0_i32_0 = arith.constant 0 : i32
    %c0_i32_1 = arith.constant 0 : i32
    return %arg0, %c0_i32, %c0_i32_0 : i32, i32, i32
  }
}

</mosaic_0001>

<llo_original>
// kernel: vae_conv_forward.3
$region0: #{vae_conv_forward.3}
  #allocation0 [shape = 'u32[]', space=smem, size = 0x4, offset = 0x4, fixed_abs, tag = 'smem constant byte address 0x4 - core index']
  #allocation1 [shape = 'u32[144,128]{1,0:T(1,128)}', space=vmem, size = 0x12000, scoped, tag = 'internal scratch']
  %s0 = inlined_call_operand.vmem [shape: bf16[2,27,784], index: 0, kind: input, shape index: {}]
  %s1 = inlined_call_operand.vmem [shape: bf16[32,27], index: 1, kind: input, shape index: {}]
  %s2 = inlined_call_operand.vmem [shape: f32[32,1], index: 2, kind: input, shape index: {}]
  %s3 = inlined_call_operand.vmem [shape: bf16[755,290], index: 3, kind: input, shape index: {}]
  %s4 = inlined_call_operand.vmem [shape: bf16[64,288], index: 4, kind: input, shape index: {}]
  %s5 = inlined_call_operand.vmem [shape: f32[64,1], index: 5, kind: input, shape index: {}]
  %s6 = inlined_call_operand.vmem [shape: bf16[239,49], index: 6, kind: input, shape index: {}]
  %s7 = inlined_call_operand.vmem [shape: bf16[2,64,49], index: 7, kind: output, shape index: {}]
  %s8 = sld [smem:[#allocation0]]
  $region61: #{vae_conv_forward.3} parent=0
    _
  %s10 = ssub.s32 1, %s8
  %s11 = scalar_select 0, %s10, %s8
  loop: start=0, step=1, limit=4
  $region2: #{vae_conv_forward.3} parent=0 // loop_pre_header
    _
  $region3: #{vae_conv_forward.3} parent=0 // loop_header
    %s13 = sphi 0, %s17
    %p14 = scmp.ge.s32.totalorder %s13, 4
    %s23 = sphi 0, %s25
    %s26 = sphi 0, %s23
    %s27 = sphi 0, %s26
    %s43 = sphi 0, %s27
    %s47 = sphi 0, %s47
    %s49 = sphi 0, %s47
    %s50 = sphi 0, %s49
    %s64 = sphi 0, %s50
    %s68 = sphi 0, %s68
    %s70 = sphi 0, %s68
    %s71 = sphi 0, %s70
    %s85 = sphi 0, %s71
    %s89 = sphi 0, %s89
    %s91 = sphi 0, %s89
    %s92 = sphi 0, %s91
    %s106 = sphi 0, %s92
    %s110 = sphi 0, %s110
    %s112 = sphi 0, %s110
    %s113 = sphi 0, %s112
    %s127 = sphi 0, %s113
    %s131 = sphi 0, %s131
    %s133 = sphi 0, %s131
    %s134 = sphi 0, %s133
    %s148 = sphi 0, %s134
    %s152 = sphi 0, %s152
    %s154 = sphi 0, %s152
    %s155 = sphi 0, %s154
    %s169 = sphi 0, %s155
    %s175 = sphi 0, %s177
    %s178 = sphi 0, %s175
    %s179 = sphi 0, %s178
    %s195 = sphi 0, %s179
  $region4: #{vae_conv_forward.3} parent=0 // loop_header_branch
    %16 = sbr.rel (%p14) target = $region8
  $region5: #{vae_conv_forward.3} parent=0 // loop_body
    %s18 = ssub.s32 %s13, 1
    %s19 = ssub.s32 %s13, 2
    %s20 = sadd.s32 %s13, 1
    %s21 = ssub.s32 %s13, %s20
    %p22 = scmp.eq.s32.totalorder %s21, 0
    %s24 = sadd.s32 %s23, 1
    %s25 = scalar_select %p22, %s23, %s24
    %p28 = pneg %p22
    %p29 = scmp.eq.s32.totalorder %s13, 1
    %p30 = por %p28, %p29
    %p31 = scmp.ne.s32.totalorder %s23, %s26
    %p32 = scmp.eq.s32.totalorder %s13, 0
    %p33 = por %p31, %p32
    %p34 = scmp.ne.s32.totalorder %s23, %s26
    %p35 = scmp.eq.s32.totalorder %s18, 1
    %p36 = por %p34, %p35
    %p37 = scmp.ne.s32.totalorder %s26, %s27
    %p38 = scmp.eq.s32.totalorder %s18, 0
    %p39 = por %p37, %p38
    %p40 = scmp.ne.s32.totalorder %s26, %s27
    %p41 = scmp.eq.s32.totalorder %s19, 1
    %p42 = por %p40, %p41
    %p44 = scmp.ne.s32.totalorder %s27, %s43
    %p45 = scmp.eq.s32.totalorder %s19, 0
    %p46 = por %p44, %p45
    %s48 = sadd.s32 %s47, 1
    %p51 = scmp.eq.s32.totalorder %s13, 1
    %p52 = scmp.ne.s32.totalorder %s47, %s49
    %p53 = scmp.eq.s32.totalorder %s13, 0
    %p54 = por %p52, %p53
    %p55 = scmp.ne.s32.totalorder %s47, %s49
    %p56 = scmp.eq.s32.totalorder %s18, 1
    %p57 = por %p55, %p56
    %p58 = scmp.ne.s32.totalorder %s49, %s50
    %p59 = scmp.eq.s32.totalorder %s18, 0
    %p60 = por %p58, %p59
    %p61 = scmp.ne.s32.totalorder %s49, %s50
    %p62 = scmp.eq.s32.totalorder %s19, 1
    %p63 = por %p61, %p62
    %p65 = scmp.ne.s32.totalorder %s50, %s64
    %p66 = scmp.eq.s32.totalorder %s19, 0
    %p67 = por %p65, %p66
    %s69 = sadd.s32 %s68, 1
    %p72 = scmp.eq.s32.totalorder %s13, 1
    %p73 = scmp.ne.s32.totalorder %s68, %s70
    %p74 = scmp.eq.s32.totalorder %s13, 0
    %p75 = por %p73, %p74
    %p76 = scmp.ne.s32.totalorder %s68, %s70
    %p77 = scmp.eq.s32.totalorder %s18, 1
    %p78 = por %p76, %p77
    %p79 = scmp.ne.s32.totalorder %s70, %s71
    %p80 = scmp.eq.s32.totalorder %s18, 0
    %p81 = por %p79, %p80
    %p82 = scmp.ne.s32.totalorder %s70, %s71
    %p83 = scmp.eq.s32.totalorder %s19, 1
    %p84 = por %p82, %p83
    %p86 = scmp.ne.s32.totalorder %s71, %s85
    %p87 = scmp.eq.s32.totalorder %s19, 0
    %p88 = por %p86, %p87
    %s90 = sadd.s32 %s89, 1
    %p93 = scmp.eq.s32.totalorder %s13, 1
    %p94 = scmp.ne.s32.totalorder %s89, %s91
    %p95 = scmp.eq.s32.totalorder %s13, 0
    %p96 = por %p94, %p95
    %p97 = scmp.ne.s32.totalorder %s89, %s91
    %p98 = scmp.eq.s32.totalorder %s18, 1
    %p99 = por %p97, %p98
    %p100 = scmp.ne.s32.totalorder %s91, %s92
    %p101 = scmp.eq.s32.totalorder %s18, 0
    %p102 = por %p100, %p101
    %p103 = scmp.ne.s32.totalorder %s91, %s92
    %p104 = scmp.eq.s32.totalorder %s19, 1
    %p105 = por %p103, %p104
    %p107 = scmp.ne.s32.totalorder %s92, %s106
    %p108 = scmp.eq.s32.totalorder %s19, 0
    %p109 = por %p107, %p108
    %s111 = sadd.s32 %s110, 1
    %p114 = scmp.eq.s32.totalorder %s13, 1
    %p115 = scmp.ne.s32.totalorder %s110, %s112
    %p116 = scmp.eq.s32.totalorder %s13, 0
    %p117 = por %p115, %p116
    %p118 = scmp.ne.s32.totalorder %s110, %s112
    %p119 = scmp.eq.s32.totalorder %s18, 1
    %p120 = por %p118, %p119
    %p121 = scmp.ne.s32.totalorder %s112, %s113
    %p122 = scmp.eq.s32.totalorder %s18, 0
    %p123 = por %p121, %p122
    %p124 = scmp.ne.s32.totalorder %s112, %s113
    %p125 = scmp.eq.s32.totalorder %s19, 1
    %p126 = por %p124, %p125
    %p128 = scmp.ne.s32.totalorder %s113, %s127
    %p129 = scmp.eq.s32.totalorder %s19, 0
    %p130 = por %p128, %p129
    %s132 = sadd.s32 %s131, 1
    %p135 = scmp.eq.s32.totalorder %s13, 1
    %p136 = scmp.ne.s32.totalorder %s131, %s133
    %p137 = scmp.eq.s32.totalorder %s13, 0
    %p138 = por %p136, %p137
    %p139 = scmp.ne.s32.totalorder %s131, %s133
    %p140 = scmp.eq.s32.totalorder %s18, 1
    %p141 = por %p139, %p140
    %p142 = scmp.ne.s32.totalorder %s133, %s134
    %p143 = scmp.eq.s32.totalorder %s18, 0
    %p144 = por %p142, %p143
    %p145 = scmp.ne.s32.totalorder %s133, %s134
    %p146 = scmp.eq.s32.totalorder %s19, 1
    %p147 = por %p145, %p146
    %p149 = scmp.ne.s32.totalorder %s134, %s148
    %p150 = scmp.eq.s32.totalorder %s19, 0
    %p151 = por %p149, %p150
    %s153 = sadd.s32 %s152, 1
    %p156 = scmp.eq.s32.totalorder %s13, 1
    %p157 = scmp.ne.s32.totalorder %s152, %s154
    %p158 = scmp.eq.s32.totalorder %s13, 0
    %p159 = por %p157, %p158
    %p160 = scmp.ne.s32.totalorder %s152, %s154
    %p161 = scmp.eq.s32.totalorder %s18, 1
    %p162 = por %p160, %p161
    %p163 = scmp.ne.s32.totalorder %s154, %s155
    %p164 = scmp.eq.s32.totalorder %s18, 0
    %p165 = por %p163, %p164
    %p166 = scmp.ne.s32.totalorder %s154, %s155
    %p167 = scmp.eq.s32.totalorder %s19, 1
    %p168 = por %p166, %p167
    %p170 = scmp.ne.s32.totalorder %s155, %s169
    %p171 = scmp.eq.s32.totalorder %s19, 0
    %p172 = por %p170, %p171
    %s173 = ssub.s32 %s13, %s20
    %p174 = scmp.eq.s32.totalorder %s173, 0
    %s176 = sadd.s32 %s175, 1
    %s177 = scalar_select %p174, %s175, %s176
    %p180 = pneg %p174
    %p181 = scmp.eq.s32.totalorder %s13, 1
    %p182 = por %p180, %p181
    %p183 = scmp.ne.s32.totalorder %s175, %s178
    %p184 = scmp.eq.s32.totalorder %s13, 0
    %p185 = por %p183, %p184
    %p186 = scmp.ne.s32.totalorder %s175, %s178
    %p187 = scmp.eq.s32.totalorder %s18, 1
    %p188 = por %p186, %p187
    %p189 = scmp.ne.s32.totalorder %s178, %s179
    %p190 = scmp.eq.s32.totalorder %s18, 0
    %p191 = por %p189, %p190
    %p192 = scmp.ne.s32.totalorder %s178, %s179
    %p193 = scmp.eq.s32.totalorder %s19, 1
    %p194 = por %p192, %p193
    %p196 = scmp.ne.s32.totalorder %s179, %s195
    %p197 = scmp.eq.s32.totalorder %s19, 0
    %p198 = por %p196, %p197
    %p199 = scmp.le.s32.totalorder 1, %s13
    %p200 = scmp.lt.s32.totalorder %s13, 3
    %p201 = pnand %p199, %p200
    %p202 = pneg %p201
    // Predicated region
    $region9: #{vae_conv_forward.3} parent=5 // pred_check
      _
    $region10: #{vae_conv_forward.3} parent=5 // pred_check_branch
      %204 = sbr.rel (%p201) target = $region12
    $region11: #{vae_conv_forward.3} parent=5 // pred_region
      %s205 = ssub.s32 %s13, 1
      // Predicated region
      $region13: #{vae_conv_forward.3} parent=11 // pred_check
        %p206 = pneg %p60
      $region14: #{vae_conv_forward.3} parent=11 // pred_check_branch
        %208 = sbr.rel (%p206) target = $region16
      $region15: #{vae_conv_forward.3} parent=11 // pred_region
        _
      $region16: #{vae_conv_forward.3} parent=11 // pred_fallthru
        _
      // Predicated region
      $region17: #{vae_conv_forward.3} parent=11 // pred_check
        %p209 = pneg %p81
      $region18: #{vae_conv_forward.3} parent=11 // pred_check_branch
        %211 = sbr.rel (%p209) target = $region20
      $region19: #{vae_conv_forward.3} parent=11 // pred_region
        _
      $region20: #{vae_conv_forward.3} parent=11 // pred_fallthru
        _
      // Predicated region
      $region21: #{vae_conv_forward.3} parent=11 // pred_check
        %p212 = pneg %p102
      $region22: #{vae_conv_forward.3} parent=11 // pred_check_branch
        %214 = sbr.rel (%p212) target = $region24
      $region23: #{vae_conv_forward.3} parent=11 // pred_region
        _
      $region24: #{vae_conv_forward.3} parent=11 // pred_fallthru
        _
      // Predicated region
      $region25: #{vae_conv_forward.3} parent=11 // pred_check
        %p215 = pneg %p123
      $region26: #{vae_conv_forward.3} parent=11 // pred_check_branch
        %217 = sbr.rel (%p215) target = $region28
      $region27: #{vae_conv_forward.3} parent=11 // pred_region
        _
      $region28: #{vae_conv_forward.3} parent=11 // pred_fallthru
        _
      // Predicated region
      $region29: #{vae_conv_forward.3} parent=11 // pred_check
        %p218 = pneg %p144
      $region30: #{vae_conv_forward.3} parent=11 // pred_check_branch
        %220 = sbr.rel (%p218) target = $region32
      $region31: #{vae_conv_forward.3} parent=11 // pred_region
        _
      $region32: #{vae_conv_forward.3} parent=11 // pred_fallthru
        _
      // Predicated region
      $region33: #{vae_conv_forward.3} parent=11 // pred_check
        %p221 = pneg %p165
      $region34: #{vae_conv_forward.3} parent=11 // pred_check_branch
        %223 = sbr.rel (%p221) target = $region36
      $region35: #{vae_conv_forward.3} parent=11 // pred_region
        _
      $region36: #{vae_conv_forward.3} parent=11 // pred_fallthru
        _
    $region12: #{vae_conv_forward.3} parent=5 // pred_fallthru
      _
    %p224 = scmp.lt.s32.totalorder %s13, 2
    // Predicated region
    $region37: #{vae_conv_forward.3} parent=5 // pred_check
      %p225 = pneg %p224
    $region38: #{vae_conv_forward.3} parent=5 // pred_check_branch
      %227 = sbr.rel (%p225) target = $region40
    $region39: #{vae_conv_forward.3} parent=5 // pred_region
      // Predicated region
      $region41: #{vae_conv_forward.3} parent=39 // pred_check
        %p228 = pneg %p33
      $region42: #{vae_conv_forward.3} parent=39 // pred_check_branch
        %230 = sbr.rel (%p228) target = $region44
      $region43: #{vae_conv_forward.3} parent=39 // pred_region
        %p231 = scmp.lt.s32.totalorder %s13, 1
        %s232 = scalar_select %p231, %s13, 1
        %s233 = smul.addr %s232, 28
        %s234 = smul.addr %s233, 4
        %s235 = scalar_lea.vmem %s0, %s234
      $region44: #{vae_conv_forward.3} parent=39 // pred_fallthru
        _
    $region40: #{vae_conv_forward.3} parent=5 // pred_fallthru
      _
    %p236 = scmp.le.s32.totalorder 1, %s13
    %p237 = scmp.lt.s32.totalorder %s13, 3
    %p238 = pnand %p236, %p237
    %p239 = pneg %p238
    // Predicated region
    $region45: #{vae_conv_forward.3} parent=5 // pred_check
      _
    $region46: #{vae_conv_forward.3} parent=5 // pred_check_branch
      %241 = sbr.rel (%p238) target = $region48
    $region47: #{vae_conv_forward.3} parent=5 // pred_region
      %s242 = ssub.s32 %s13, 1
      %p243 = scmp.lt.s32.totalorder %s18, 1
      %s244 = scalar_select %p243, %s18, 1
      %s245 = smul.addr %s244, 28
      %s246 = smul.addr %s245, 4
      %s247 = scalar_lea.vmem %s0, %s246
      %p248 = pneg %p39
      %p249 = pneg %p36
      %p250 = pneg %p60
      %p251 = pneg %p57
      %p252 = pneg %p81
      %p253 = pneg %p78
      %p254 = pneg %p102
      %p255 = pneg %p99
      %p256 = pneg %p123
      %p257 = pneg %p120
      %p258 = pneg %p144
      %p259 = pneg %p141
      %p260 = pneg %p165
      %p261 = pneg %p162
      %p262 = pneg %p191
      %p263 = pneg %p188
      %p264 = scmp.lt.s32.totalorder %s18, 1
      %s265 = scalar_select %p264, %s18, 1
      %s266 = smul.addr %s265, 8
      %s267 = smul.addr %s266, 4
      %s268 = scalar_lea.vmem %s7, %s267
      %p269 = scmp.lt.s32.totalorder %s18, 1
      %s270 = scalar_select %p269, %s18, 1
      %s271 = smul.addr %s270, 28
      %s272 = smul.addr %s271, 4
      %s273 = scalar_lea.vmem %s0, %s272
      %p274 = scmp.lt.s32.totalorder %s18, 1
      %s275 = scalar_select %p274, %s18, 1
      %s276 = smul.addr %s275, 8
      %s277 = smul.addr %s276, 4
      %s278 = scalar_lea.vmem %s7, %s277
      %v280 = vld [vmem:[%s1] sm:$0xf]
      %v281 = vld [vmem:[%s1 + $0x4] sm:$0xf]
      %v282 = vld [vmem:[%s1 + $0x8] sm:$0xf]
      %v283 = vld [vmem:[%s1 + $0xc] sm:$0xf]
      %v284 = vld [vmem:[%s273] sm:$0xff]
      %v285 = vld [vmem:[%s273 + $0x8] sm:$0xff]
      %v286 = vld [vmem:[%s273 + $0x10] sm:$0xff]
      %v287 = vld [vmem:[%s273 + $0x18] sm:$0xf]
      %v288 = vld [vmem:[%s273 + $0x1c] sm:$0xff]
      %v289 = vld [vmem:[%s273 + $0x24] sm:$0xff]
      %v290 = vld [vmem:[%s273 + $0x2c] sm:$0xff]
      %v291 = vld [vmem:[%s273 + $0x34] sm:$0xf]
      %v292 = vld [vmem:[%s273 + $0x38] sm:$0xff]
      %v293 = vld [vmem:[%s273 + $0x40] sm:$0xff]
      %v294 = vld [vmem:[%s273 + $0x48] sm:$0xff]
      %v295 = vld [vmem:[%s273 + $0x50] sm:$0xf]
      %v296 = vld [vmem:[%s273 + $0x54] sm:$0x33]
      %v297 = vld [vmem:[%s273 + $0x5c] sm:$0x33]
      %v298 = vld [vmem:[%s273 + $0x64] sm:$0x33]
      %v299 = vld [vmem:[%s273 + $0x6c] sm:$0x3]
      %v300 = vld [vmem:[%s2] sm:$0xff]
      %v301 = vld [vmem:[%s2 + $0x8] sm:$0xff]
      %v302 = vld [vmem:[%s2 + $0x10] sm:$0xff]
      %v303 = vld [vmem:[%s2 + $0x18] sm:$0xff]
      %305 = vset.pattern.permute.xlu0 0
      %306 = vperm.xlu0 %305, %v300
      %v307 = vpop.permute.xlu0 %306
      %310 = vset.pattern.permute.xlu0 0
      %311 = vperm.xlu0 %310, %v301
      %v312 = vpop.permute.xlu0 %311
      %315 = vset.pattern.permute.xlu0 0
      %316 = vperm.xlu0 %315, %v302
      %v317 = vpop.permute.xlu0 %316
      %320 = vset.pattern.permute.xlu0 0
      %321 = vperm.xlu0 %320, %v303
      %v322 = vpop.permute.xlu0 %321
      %v328 = vunpack.c.l.b16 %v280
      %v329 = vunpack.c.l.b16 %v281
      %v330 = vunpack.c.l.b16 %v282
      %v331 = vunpack.c.l.b16 %v283
      %v332 = vpack.c.b16 %v329, %v328
      %v333 = vpack.c.b16 %v331, %v330
      %v350 = vunpack.c.l.b16 %v284
      %v351 = vunpack.c.h.b16 %v284
      %v352 = vunpack.c.l.b16 %v285
      %v353 = vunpack.c.h.b16 %v285
      %v354 = vunpack.c.l.b16 %v286
      %v355 = vunpack.c.h.b16 %v286
      %v356 = vunpack.c.l.b16 %v287
      %v357 = vunpack.c.l.b16 %v288
      %v358 = vunpack.c.h.b16 %v288
      %v359 = vunpack.c.l.b16 %v289
      %v360 = vunpack.c.h.b16 %v289
      %v361 = vunpack.c.l.b16 %v290
      %v362 = vunpack.c.h.b16 %v290
      %v363 = vunpack.c.l.b16 %v291
      %v364 = vunpack.c.l.b16 %v292
      %v365 = vunpack.c.h.b16 %v292
      %v366 = vunpack.c.l.b16 %v293
      %v367 = vunpack.c.h.b16 %v293
      %v368 = vunpack.c.l.b16 %v294
      %v369 = vunpack.c.h.b16 %v294
      %v370 = vunpack.c.l.b16 %v295
      %v371 = vunpack.c.l.b16 %v296
      %v372 = vunpack.c.h.b16 %v296
      %v373 = vunpack.c.l.b16 %v297
      %v374 = vunpack.c.h.b16 %v297
      %v375 = vunpack.c.l.b16 %v298
      %v376 = vunpack.c.h.b16 %v298
      %v377 = vunpack.c.l.b16 %v299
      %v378 = vpack.c.b16 %v357, %v350
      %v379 = vpack.c.b16 %v358, %v351
      %v380 = vpack.c.b16 %v359, %v352
      %v381 = vpack.c.b16 %v360, %v353
      %v382 = vpack.c.b16 %v361, %v354
      %v383 = vpack.c.b16 %v362, %v355
      %v384 = vpack.c.b16 %v363, %v356
      %v385 = vpack.c.b16 %v371, %v364
      %v386 = vpack.c.b16 %v372, %v365
      %v387 = vpack.c.b16 %v373, %v366
      %v388 = vpack.c.b16 %v374, %v367
      %v389 = vpack.c.b16 %v375, %v368
      %v390 = vpack.c.b16 %v376, %v369
      %v391 = vpack.c.b16 %v377, %v370
      %vm399 = vcmask 220160
      %v401 = vsel %vm399, %v332, 0
      %v404 = vsel %vm399, %v333, 0
      %vm406 = vcmask 1044480
      %vm407 = vcmask 1045504
      %v408 = vsel %vm406, 4294967295, 65535
      %v409 = vsel %vm407, %v408, 0
      %v411 = vand.u32 %v385, %v409
      %v414 = vand.u32 %v386, %v409
      %v417 = vand.u32 %v387, %v409
      %v420 = vand.u32 %v388, %v409
      %v423 = vand.u32 %v389, %v409
      %v426 = vand.u32 %v390, %v409
      %v429 = vand.u32 %v391, %v409
      %431 = vmatprep.subr.bf16.mxu0 %v379
      %432 = vmatpush1.bf16.msra.mxu0 %v378
      %433 = vmatprep.subr.bf16.mxu0 %v414
      %434 = vmatpush1.bf16.msra.mxu0 %v411
      %435 = vmatprep.subr.bf16.mxu0 0
      %436 = vmatpush1.bf16.msra.mxu0 0
      %437 = vmatprep.subr.bf16.mxu0 0
      %438 = vmatpush1.bf16.msra.mxu0 0
      %439 = vmatprep.subr.bf16.mxu0 0
      %440 = vmatpush1.bf16.msra.mxu0 0
      %441 = vmatprep.subr.bf16.mxu0 0
      %442 = vmatpush1.bf16.msra.mxu0 0
      %443 = vmatprep.subr.bf16.mxu0 0
      %444 = vmatpush1.bf16.msra.mxu0 0
      %445 = vmatprep.subr.bf16.mxu0 0
      %446 = vmatpush1.bf16.msra.mxu0 0
      %447 = vmatprep.subr.bf16.mxu0 0
      %448 = vmatpush1.bf16.msra.mxu0 0
      %449 = vmatprep.subr.bf16.mxu0 0
      %450 = vmatpush1.bf16.msra.mxu0 0
      %451 = vmatprep.subr.bf16.mxu0 0
      %452 = vmatpush1.bf16.msra.mxu0 0
      %453 = vmatprep.subr.bf16.mxu0 0
      %454 = vmatpush1.bf16.msra.mxu0 0
      %455 = vmatprep.subr.bf16.mxu0 0
      %456 = vmatpush1.bf16.msra.mxu0 0
      %457 = vmatprep.subr.bf16.mxu0 0
      %458 = vmatpush1.bf16.msra.mxu0 0
      %459 = vmatprep.subr.bf16.mxu0 0
      %460 = vmatpush1.bf16.msra.mxu0 0
      %461 = vmatprep.subr.bf16.mxu0 0
      %462 = vmatpush1.bf16.msra.mxu0 0
      %463 = vmatprep.mubr.bf16.mxu0 0
      %464 = vmatmul.mubr.bf16.gmra.mrb[0].mxu0 %v401
      %v465 = vpop.f32.mrb[0].mxu0
      %v466 = vadd.f32 %v307, %v465
      %v467 = vpop.f32.mrb[0].mxu0
      %v468 = vadd.f32 %v307, %v467
      %v469 = vpop.f32.mrb[0].mxu0
      %v470 = vadd.f32 %v312, %v469
      %v471 = vpop.f32.mrb[0].mxu0
      %v472 = vadd.f32 %v312, %v471
      %473 = vmatprep.mubr.bf16.mxu0 0
      %474 = vmatmul.mubr.bf16.gmra.mrb[0].mxu0 %v404
      %v475 = vpop.f32.mrb[0].mxu0
      %v476 = vadd.f32 %v317, %v475
      %v477 = vpop.f32.mrb[0].mxu0
      %v478 = vadd.f32 %v317, %v477
      %v479 = vpop.f32.mrb[0].mxu0
      %v480 = vadd.f32 %v322, %v479
      %v481 = vpop.f32.mrb[0].mxu0
      %v482 = vadd.f32 %v322, %v481
      %483 = vdwg.mxu0
      %484 = vmatprep.subr.bf16.mxu0 %v381
      %485 = vmatpush1.bf16.msra.mxu0 %v380
      %486 = vmatprep.subr.bf16.mxu0 %v420
      %487 = vmatpush1.bf16.msra.mxu0 %v417
      %488 = vmatprep.subr.bf16.mxu0 0
      %489 = vmatpush1.bf16.msra.mxu0 0
      %490 = vmatprep.subr.bf16.mxu0 0
      %491 = vmatpush1.bf16.msra.mxu0 0
      %492 = vmatprep.subr.bf16.mxu0 0
      %493 = vmatpush1.bf16.msra.mxu0 0
      %494 = vmatprep.subr.bf16.mxu0 0
      %495 = vmatpush1.bf16.msra.mxu0 0
      %496 = vmatprep.subr.bf16.mxu0 0
      %497 = vmatpush1.bf16.msra.mxu0 0
      %498 = vmatprep.subr.bf16.mxu0 0
      %499 = vmatpush1.bf16.msra.mxu0 0
      %500 = vmatprep.subr.bf16.mxu0 0
      %501 = vmatpush1.bf16.msra.mxu0 0
      %502 = vmatprep.subr.bf16.mxu0 0
      %503 = vmatpush1.bf16.msra.mxu0 0
      %504 = vmatprep.subr.bf16.mxu0 0
      %505 = vmatpush1.bf16.msra.mxu0 0
      %506 = vmatprep.subr.bf16.mxu0 0
      %507 = vmatpush1.bf16.msra.mxu0 0
      %508 = vmatprep.subr.bf16.mxu0 0
      %509 = vmatpush1.bf16.msra.mxu0 0
      %510 = vmatprep.subr.bf16.mxu0 0
      %511 = vmatpush1.bf16.msra.mxu0 0
      %512 = vmatprep.subr.bf16.mxu0 0
      %513 = vmatpush1.bf16.msra.mxu0 0
      %514 = vmatprep.subr.bf16.mxu0 0
      %515 = vmatpush1.bf16.msra.mxu0 0
      %516 = vmatprep.mubr.bf16.mxu0 0
      %517 = vmatmul.mubr.bf16.gmra.mrb[0].mxu0 %v401
      %v518 = vpop.f32.mrb[0].mxu0
      %v519 = vadd.f32 %v307, %v518
      %v520 = vpop.f32.mrb[0].mxu0
      %v521 = vadd.f32 %v307, %v520
      %v522 = vpop.f32.mrb[0].mxu0
      %v523 = vadd.f32 %v312, %v522
      %v524 = vpop.f32.mrb[0].mxu0
      %v525 = vadd.f32 %v312, %v524
      %526 = vmatprep.mubr.bf16.mxu0 0
      %527 = vmatmul.mubr.bf16.gmra.mrb[0].mxu0 %v404
      %v528 = vpop.f32.mrb[0].mxu0
      %v529 = vadd.f32 %v317, %v528
      %v530 = vpop.f32.mrb[0].mxu0
      %v531 = vadd.f32 %v317, %v530
      %v532 = vpop.f32.mrb[0].mxu0
      %v533 = vadd.f32 %v322, %v532
      %v534 = vpop.f32.mrb[0].mxu0
      %v535 = vadd.f32 %v322, %v534
      %536 = vdwg.mxu0
      %537 = vmatprep.subr.bf16.mxu0 %v383
      %538 = vmatpush1.bf16.msra.mxu0 %v382
      %539 = vmatprep.subr.bf16.mxu0 %v426
      %540 = vmatpush1.bf16.msra.mxu0 %v423
      %541 = vmatprep.subr.bf16.mxu0 0
      %542 = vmatpush1.bf16.msra.mxu0 0
      %543 = vmatprep.subr.bf16.mxu0 0
      %544 = vmatpush1.bf16.msra.mxu0 0
      %545 = vmatprep.subr.bf16.mxu0 0
      %546 = vmatpush1.bf16.msra.mxu0 0
      %547 = vmatprep.subr.bf16.mxu0 0
      %548 = vmatpush1.bf16.msra.mxu0 0
      %549 = vmatprep.subr.bf16.mxu0 0
      %550 = vmatpush1.bf16.msra.mxu0 0
      %551 = vmatprep.subr.bf16.mxu0 0
      %552 = vmatpush1.bf16.msra.mxu0 0
      %553 = vmatprep.subr.bf16.mxu0 0
      %554 = vmatpush1.bf16.msra.mxu0 0
      %555 = vmatprep.subr.bf16.mxu0 0
      %556 = vmatpush1.bf16.msra.mxu0 0
      %557 = vmatprep.subr.bf16.mxu0 0
      %558 = vmatpush1.bf16.msra.mxu0 0
      %559 = vmatprep.subr.bf16.mxu0 0
      %560 = vmatpush1.bf16.msra.mxu0 0
      %561 = vmatprep.subr.bf16.mxu0 0
      %562 = vmatpush1.bf16.msra.mxu0 0
      %563 = vmatprep.subr.bf16.mxu0 0
      %564 = vmatpush1.bf16.msra.mxu0 0
      %565 = vmatprep.subr.bf16.mxu0 0
      %566 = vmatpush1.bf16.msra.mxu0 0
      %567 = vmatprep.subr.bf16.mxu0 0
      %568 = vmatpush1.bf16.msra.mxu0 0
      %569 = vmatprep.mubr.bf16.mxu0 0
      %570 = vmatmul.mubr.bf16.gmra.mrb[0].mxu0 %v401
      %v571 = vpop.f32.mrb[0].mxu0
      %v572 = vadd.f32 %v307, %v571
      %v573 = vpop.f32.mrb[0].mxu0
      %v574 = vadd.f32 %v307, %v573
      %v575 = vpop.f32.mrb[0].mxu0
      %v576 = vadd.f32 %v312, %v575
      %v577 = vpop.f32.mrb[0].mxu0
      %v578 = vadd.f32 %v312, %v577
      %579 = vmatprep.mubr.bf16.mxu0 0
      %580 = vmatmul.mubr.bf16.gmra.mrb[0].mxu0 %v404
      %v581 = vpop.f32.mrb[0].mxu0
      %v582 = vadd.f32 %v317, %v581
      %v583 = vpop.f32.mrb[0].mxu0
      %v584 = vadd.f32 %v317, %v583
      %v585 = vpop.f32.mrb[0].mxu0
      %v586 = vadd.f32 %v322, %v585
      %v587 = vpop.f32.mrb[0].mxu0
      %v588 = vadd.f32 %v322, %v587
      %589 = vdwg.mxu0
      %590 = vmatprep.subr.bf16.mxu0 0
      %591 = vmatpush1.bf16.msra.mxu0 %v384
      %592 = vmatprep.subr.bf16.mxu0 0
      %593 = vmatpush1.bf16.msra.mxu0 %v429
      %594 = vmatprep.subr.bf16.mxu0 0
      %595 = vmatpush1.bf16.msra.mxu0 0
      %596 = vmatprep.subr.bf16.mxu0 0
      %597 = vmatpush1.bf16.msra.mxu0 0
      %598 = vmatprep.subr.bf16.mxu0 0
      %599 = vmatpush1.bf16.msra.mxu0 0
      %600 = vmatprep.subr.bf16.mxu0 0
      %601 = vmatpush1.bf16.msra.mxu0 0
      %602 = vmatprep.subr.bf16.mxu0 0
      %603 = vmatpush1.bf16.msra.mxu0 0
      %604 = vmatprep.subr.bf16.mxu0 0
      %605 = vmatpush1.bf16.msra.mxu0 0
      %606 = vmatprep.subr.bf16.mxu0 0
      %607 = vmatpush1.bf16.msra.mxu0 0
      %608 = vmatprep.subr.bf16.mxu0 0
      %609 = vmatpush1.bf16.msra.mxu0 0
      %610 = vmatprep.subr.bf16.mxu0 0
      %611 = vmatpush1.bf16.msra.mxu0 0
      %612 = vmatprep.subr.bf16.mxu0 0
      %613 = vmatpush1.bf16.msra.mxu0 0
      %614 = vmatprep.subr.bf16.mxu0 0
      %615 = vmatpush1.bf16.msra.mxu0 0
      %616 = vmatprep.subr.bf16.mxu0 0
      %617 = vmatpush1.bf16.msra.mxu0 0
      %618 = vmatprep.subr.bf16.mxu0 0
      %619 = vmatpush1.bf16.msra.mxu0 0
      %620 = vmatprep.subr.bf16.mxu0 0
      %621 = vmatpush1.bf16.msra.mxu0 0
      %622 = vmatprep.mubr.bf16.mxu0 0
      %623 = vmatmul.mubr.bf16.gmra.mrb[0].mxu0 %v401
      %v624 = vpop.f32.mrb[0].mxu0
      %v625 = vadd.f32 %v307, %v624
      %v626 = vpop.f32.mrb[0].mxu0
      %v627 = vpop.f32.mrb[0].mxu0
      %v628 = vadd.f32 %v312, %v627
      %v629 = vpop.f32.mrb[0].mxu0
      %630 = vmatprep.mubr.bf16.mxu0 0
      %631 = vmatmul.mubr.bf16.gmra.mrb[0].mxu0 %v404
      %v632 = vpop.f32.mrb[0].mxu0
      %v633 = vadd.f32 %v317, %v632
      %v634 = vpop.f32.mrb[0].mxu0
      %v635 = vpop.f32.mrb[0].mxu0
      %v636 = vadd.f32 %v322, %v635
      %v637 = vpop.f32.mrb[0].mxu0
      %638 = vdwg.mxu0
      %v639 = vmax.f32 %v466, 0.0
      %v640 = vmax.f32 %v468, 0.0
      %v641 = vmax.f32 %v519, 0.0
      %v642 = vmax.f32 %v521, 0.0
      %v643 = vmax.f32 %v572, 0.0
      %v644 = vmax.f32 %v574, 0.0
      %v645 = vmax.f32 %v625, 0.0
      %v646 = vmax.f32 %v470, 0.0
      %v647 = vmax.f32 %v472, 0.0
      %v648 = vmax.f32 %v523, 0.0
      %v649 = vmax.f32 %v525, 0.0
      %v650 = vmax.f32 %v576, 0.0
      %v651 = vmax.f32 %v578, 0.0
      %v652 = vmax.f32 %v628, 0.0
      %v653 = vmax.f32 %v476, 0.0
      %v654 = vmax.f32 %v478, 0.0
      %v655 = vmax.f32 %v529, 0.0
      %v656 = vmax.f32 %v531, 0.0
      %v657 = vmax.f32 %v582, 0.0
      %v658 = vmax.f32 %v584, 0.0
      %v659 = vmax.f32 %v633, 0.0
      %v660 = vmax.f32 %v480, 0.0
      %v661 = vmax.f32 %v482, 0.0
      %v662 = vmax.f32 %v533, 0.0
      %v663 = vmax.f32 %v535, 0.0
      %v664 = vmax.f32 %v586, 0.0
      %v665 = vmax.f32 %v588, 0.0
      %v666 = vmax.f32 %v636, 0.0
      %v667 = vpack.c.bf16 %v646, %v639
      %v668 = vpack.c.bf16 %v647, %v640
      %v669 = vpack.c.bf16 %v648, %v641
      %v670 = vpack.c.bf16 %v649, %v642
      %v671 = vpack.c.bf16 %v650, %v643
      %v672 = vpack.c.bf16 %v651, %v644
      %v673 = vpack.c.bf16 %v652, %v645
      %v674 = vpack.c.bf16 %v660, %v653
      %v675 = vpack.c.bf16 %v661, %v654
      %v676 = vpack.c.bf16 %v662, %v655
      %v677 = vpack.c.bf16 %v663, %v656
      %v678 = vpack.c.bf16 %v664, %v657
      %v679 = vpack.c.bf16 %v665, %v658
      %v680 = vpack.c.bf16 %v666, %v659
      %693 = vrot.lane.b32.xlu0 %v667, 127
      %v694 = vpop.permute.xlu0 %693
      %695 = vrot.lane.b32.xlu0 %v668, 127
      %v696 = vpop.permute.xlu0 %695
      %697 = vrot.lane.b32.xlu0 %v669, 127
      %v698 = vpop.permute.xlu0 %697
      %699 = vrot.lane.b32.xlu0 %v670, 127
      %v700 = vpop.permute.xlu0 %699
      %701 = vrot.lane.b32.xlu0 %v671, 127
      %v702 = vpop.permute.xlu0 %701
      %703 = vrot.lane.b32.xlu0 %v672, 127
      %v704 = vpop.permute.xlu0 %703
      %705 = vrot.lane.b32.xlu0 %v674, 127
      %v706 = vpop.permute.xlu0 %705
      %707 = vrot.lane.b32.xlu0 %v675, 127
      %v708 = vpop.permute.xlu0 %707
      %709 = vrot.lane.b32.xlu0 %v676, 127
      %v710 = vpop.permute.xlu0 %709
      %711 = vrot.lane.b32.xlu0 %v677, 127
      %v712 = vpop.permute.xlu0 %711
      %713 = vrot.lane.b32.xlu0 %v678, 127
      %v714 = vpop.permute.xlu0 %713
      %715 = vrot.lane.b32.xlu0 %v679, 127
      %v716 = vpop.permute.xlu0 %715
      %vm717 = vcmask 1039360
      %v718 = vsel %vm717, %v694, %v696
      %v719 = vsel %vm717, %v696, %v698
      %v720 = vsel %vm717, %v698, %v700
      %v721 = vsel %vm717, %v700, %v702
      %v722 = vsel %vm717, %v702, %v704
      %v723 = vsel %vm717, %v706, %v708
      %v724 = vsel %vm717, %v708, %v710
      %v725 = vsel %vm717, %v710, %v712
      %v726 = vsel %vm717, %v712, %v714
      %v727 = vsel %vm717, %v714, %v716
      %v740 = vmax.bf16 %v667, %v718
      %v741 = vmax.bf16 %v668, %v719
      %v742 = vmax.bf16 %v669, %v720
      %v743 = vmax.bf16 %v670, %v721
      %v744 = vmax.bf16 %v671, %v722
      %v745 = vmax.bf16 %v672, %v704
      %v746 = vmax.bf16 %v674, %v723
      %v747 = vmax.bf16 %v675, %v724
      %v748 = vmax.bf16 %v676, %v725
      %v749 = vmax.bf16 %v677, %v726
      %v750 = vmax.bf16 %v678, %v727
      %v751 = vmax.bf16 %v679, %v716
      %754 = vrot.lane.b32.xlu0 %v673, 127
      %v755 = vpop.permute.xlu0 %754
      %756 = vrot.lane.b32.xlu0 %v680, 127
      %v757 = vpop.permute.xlu0 %756
      %v758 = vsel %vm717, %v704, %v755
      %v759 = vsel %vm717, %v716, %v757
      %v764 = vmax.bf16 %v672, %v758
      %v765 = vmax.bf16 %v673, %v755
      %v766 = vmax.bf16 %v679, %v759
      %v767 = vmax.bf16 %v680, %v757
      %782 = vrot.lane.b32.xlu0 %v740, 100
      %v783 = vpop.permute.xlu0 %782
      %784 = vrot.lane.b32.xlu0 %v741, 100
      %v785 = vpop.permute.xlu0 %784
      %786 = vrot.lane.b32.xlu0 %v742, 100
      %v787 = vpop.permute.xlu0 %786
      %788 = vrot.lane.b32.xlu0 %v743, 100
      %v789 = vpop.permute.xlu0 %788
      %790 = vrot.lane.b32.xlu0 %v744, 100
      %v791 = vpop.permute.xlu0 %790
      %792 = vrot.lane.b32.xlu0 %v764, 100
      %v793 = vpop.permute.xlu0 %792
      %794 = vrot.lane.b32.xlu0 %v765, 100
      %v795 = vpop.permute.xlu0 %794
      %796 = vrot.lane.b32.xlu0 %v746, 100
      %v797 = vpop.permute.xlu0 %796
      %798 = vrot.lane.b32.xlu0 %v747, 100
      %v799 = vpop.permute.xlu0 %798
      %800 = vrot.lane.b32.xlu0 %v748, 100
      %v801 = vpop.permute.xlu0 %800
      %802 = vrot.lane.b32.xlu0 %v749, 100
      %v803 = vpop.permute.xlu0 %802
      %804 = vrot.lane.b32.xlu0 %v750, 100
      %v805 = vpop.permute.xlu0 %804
      %806 = vrot.lane.b32.xlu0 %v766, 100
      %v807 = vpop.permute.xlu0 %806
      %808 = vrot.lane.b32.xlu0 %v767, 100
      %v809 = vpop.permute.xlu0 %808
      %vm810 = vcmask 818176
      %v811 = vsel %vm810, %v783, %v785
      %v812 = vsel %vm810, %v785, %v787
      %v813 = vsel %vm810, %v787, %v789
      %v814 = vsel %vm810, %v789, %v791
      %v815 = vsel %vm810, %v791, %v793
      %v816 = vsel %vm810, %v793, %v795
      %v817 = vsel %vm810, %v797, %v799
      %v818 = vsel %vm810, %v799, %v801
      %v819 = vsel %vm810, %v801, %v803
      %v820 = vsel %vm810, %v803, %v805
      %v821 = vsel %vm810, %v805, %v807
      %v822 = vsel %vm810, %v807, %v809
      %v835 = vmax.bf16 %v740, %v811
      %v836 = vmax.bf16 %v741, %v812
      %v837 = vmax.bf16 %v742, %v813
      %v838 = vmax.bf16 %v743, %v814
      %v839 = vmax.bf16 %v744, %v815
      %v840 = vmax.bf16 %v745, %v816
      %v841 = vmax.bf16 %v746, %v817
      %v842 = vmax.bf16 %v747, %v818
      %v843 = vmax.bf16 %v748, %v819
      %v844 = vmax.bf16 %v749, %v820
      %v845 = vmax.bf16 %v750, %v821
      %v846 = vmax.bf16 %v751, %v822
      %v847 = vld [vmem:[%s3] sm:$0xff]
      %v848 = vld [vmem:[%s3 + $0x8] sm:$0xf]
      %v849 = vld [vmem:[%s3 + $0xc] sm:$0xff]
      %v850 = vld [vmem:[%s3 + $0x14] sm:$0xf]
      %v851 = vld [vmem:[%s3 + $0x18] sm:$0xff]
      %v852 = vld [vmem:[%s3 + $0x20] sm:$0xf]
      %v853 = vld [vmem:[%s3 + $0x24] sm:$0xff]
      %v854 = vld [vmem:[%s3 + $0x2c] sm:$0xf]
      %v855 = vld [vmem:[%s3 + $0x30] sm:$0xff]
      %v856 = vld [vmem:[%s3 + $0x38] sm:$0xf]
      %v857 = vld [vmem:[%s3 + $0x3c] sm:$0xff]
      %v858 = vld [vmem:[%s3 + $0x44] sm:$0xf]
      %v859 = vld [vmem:[%s3 + $0x48] sm:$0xff]
      %v860 = vld [vmem:[%s3 + $0x50] sm:$0xf]
      %v861 = vld [vmem:[%s3 + $0x54] sm:$0xff]
      %v862 = vld [vmem:[%s3 + $0x5c] sm:$0xf]
      %v863 = vld [vmem:[%s3 + $0x60] sm:$0xff]
      %v864 = vld [vmem:[%s3 + $0x68] sm:$0xf]
      %v865 = vld [vmem:[%s3 + $0x6c] sm:$0xff]
      %v866 = vld [vmem:[%s3 + $0x74] sm:$0xf]
      %v867 = vld [vmem:[%s3 + $0x78] sm:$0xff]
      %v868 = vld [vmem:[%s3 + $0x80] sm:$0xf]
      %v869 = vld [vmem:[%s3 + $0x84] sm:$0xff]
      %v870 = vld [vmem:[%s3 + $0x8c] sm:$0xf]
      %v871 = vld [vmem:[%s3 + $0x90] sm:$0xff]
      %v872 = vld [vmem:[%s3 + $0x98] sm:$0xf]
      %v873 = vld [vmem:[%s3 + $0x9c] sm:$0xff]
      %v874 = vld [vmem:[%s3 + $0xa4] sm:$0xf]
      %v875 = vld [vmem:[%s3 + $0xa8] sm:$0xff]
      %v876 = vld [vmem:[%s3 + $0xb0] sm:$0xf]
      %v877 = vld [vmem:[%s3 + $0xb4] sm:$0xff]
      %v878 = vld [vmem:[%s3 + $0xbc] sm:$0xf]
      %v879 = vld [vmem:[%s3 + $0xc0] sm:$0xff]
      %v880 = vld [vmem:[%s3 + $0xc8] sm:$0xf]
      %v881 = vld [vmem:[%s3 + $0xcc] sm:$0xff]
      %v882 = vld [vmem:[%s3 + $0xd4] sm:$0xf]
      %v883 = vld [vmem:[%s3 + $0xd8] sm:$0xff]
      %v884 = vld [vmem:[%s3 + $0xe0] sm:$0xf]
      %v885 = vld [vmem:[%s3 + $0xe4] sm:$0xff]
      %v886 = vld [vmem:[%s3 + $0xec] sm:$0xf]
      %v887 = vld [vmem:[%s3 + $0xf0] sm:$0xff]
      %v888 = vld [vmem:[%s3 + $0xf8] sm:$0xf]
      %v889 = vld [vmem:[%s3 + $0xfc] sm:$0xff]
      %v890 = vld [vmem:[%s3 + $0x104] sm:$0xf]
      %v891 = vld [vmem:[%s3 + $0x108] sm:$0xff]
      %v892 = vld [vmem:[%s3 + $0x110] sm:$0xf]
      %v893 = vld [vmem:[%s3 + $0x114] sm:$0xff]
      %v894 = vld [vmem:[%s3 + $0x11c] sm:$0xf]
      %v895 = vld [vmem:[%s3 + $0x120] sm:$0xff]
      %v896 = vld [vmem:[%s3 + $0x128] sm:$0xf]
      %v897 = vld [vmem:[%s3 + $0x12c] sm:$0xff]
      %v898 = vld [vmem:[%s3 + $0x134] sm:$0xf]
      %v899 = vld [vmem:[%s3 + $0x138] sm:$0xff]
      %v900 = vld [vmem:[%s3 + $0x140] sm:$0xf]
      %v901 = vld [vmem:[%s3 + $0x144] sm:$0xff]
      %v902 = vld [vmem:[%s3 + $0x14c] sm:$0xf]
      %v903 = vld [vmem:[%s3 + $0x150] sm:$0xff]
      %v904 = vld [vmem:[%s3 + $0x158] sm:$0xf]
      %v905 = vld [vmem:[%s3 + $0x15c] sm:$0xff]
      %v906 = vld [vmem:[%s3 + $0x164] sm:$0xf]
      %v907 = vld [vmem:[%s3 + $0x168] sm:$0xff]
      %v908 = vld [vmem:[%s3 + $0x170] sm:$0xf]
      %v909 = vld [vmem:[%s3 + $0x174] sm:$0xff]
      %v910 = vld [vmem:[%s3 + $0x17c] sm:$0xf]
      %v911 = vld [vmem:[%s3 + $0x180] sm:$0xff]
      %v912 = vld [vmem:[%s3 + $0x188] sm:$0xf]
      %v913 = vld [vmem:[%s3 + $0x18c] sm:$0xff]
      %v914 = vld [vmem:[%s3 + $0x194] sm:$0xf]
      %v915 = vld [vmem:[%s3 + $0x198] sm:$0xff]
      %v916 = vld [vmem:[%s3 + $0x1a0] sm:$0xf]
      %v917 = vld [vmem:[%s3 + $0x1a4] sm:$0xff]
      %v918 = vld [vmem:[%s3 + $0x1ac] sm:$0xf]
      %v919 = vld [vmem:[%s3 + $0x1b0] sm:$0xff]
      %v920 = vld [vmem:[%s3 + $0x1b8] sm:$0xf]
      %v921 = vld [vmem:[%s3 + $0x1bc] sm:$0xff]
      %v922 = vld [vmem:[%s3 + $0x1c4] sm:$0xf]
      %v923 = vld [vmem:[%s3 + $0x1c8] sm:$0xff]
      %v924 = vld [vmem:[%s3 + $0x1d0] sm:$0xf]
      %v925 = vld [vmem:[%s3 + $0x1d4] sm:$0xff]
      %v926 = vld [vmem:[%s3 + $0x1dc] sm:$0xf]
      %v927 = vld [vmem:[%s3 + $0x1e0] sm:$0xff]
      %v928 = vld [vmem:[%s3 + $0x1e8] sm:$0xf]
      %v929 = vld [vmem:[%s3 + $0x1ec] sm:$0xff]
      %v930 = vld [vmem:[%s3 + $0x1f4] sm:$0xf]
      %v931 = vld [vmem:[%s3 + $0x1f8] sm:$0xff]
      %v932 = vld [vmem:[%s3 + $0x200] sm:$0xf]
      %v933 = vld [vmem:[%s3 + $0x204] sm:$0xff]
      %v934 = vld [vmem:[%s3 + $0x20c] sm:$0xf]
      %v935 = vld [vmem:[%s3 + $0x210] sm:$0xff]
      %v936 = vld [vmem:[%s3 + $0x218] sm:$0xf]
      %v937 = vld [vmem:[%s3 + $0x21c] sm:$0xff]
      %v938 = vld [vmem:[%s3 + $0x224] sm:$0xf]
      %v939 = vld [vmem:[%s3 + $0x228] sm:$0xff]
      %v940 = vld [vmem:[%s3 + $0x230] sm:$0xf]
      %v941 = vld [vmem:[%s3 + $0x234] sm:$0xff]
      %v942 = vld [vmem:[%s3 + $0x23c] sm:$0xf]
      %v943 = vld [vmem:[%s3 + $0x240] sm:$0xff]
      %v944 = vld [vmem:[%s3 + $0x248] sm:$0xf]
      %v945 = vld [vmem:[%s3 + $0x24c] sm:$0xff]
      %v946 = vld [vmem:[%s3 + $0x254] sm:$0xf]
      %v947 = vld [vmem:[%s3 + $0x258] sm:$0xff]
      %v948 = vld [vmem:[%s3 + $0x260] sm:$0xf]
      %v949 = vld [vmem:[%s3 + $0x264] sm:$0xff]
      %v950 = vld [vmem:[%s3 + $0x26c] sm:$0xf]
      %v951 = vld [vmem:[%s3 + $0x270] sm:$0xff]
      %v952 = vld [vmem:[%s3 + $0x278] sm:$0xf]
      %v953 = vld [vmem:[%s3 + $0x27c] sm:$0xff]
      %v954 = vld [vmem:[%s3 + $0x284] sm:$0xf]
      %v955 = vld [vmem:[%s3 + $0x288] sm:$0xff]
      %v956 = vld [vmem:[%s3 + $0x290] sm:$0xf]
      %v957 = vld [vmem:[%s3 + $0x294] sm:$0xff]
      %v958 = vld [vmem:[%s3 + $0x29c] sm:$0xf]
      %v959 = vld [vmem:[%s3 + $0x2a0] sm:$0xff]
      %v960 = vld [vmem:[%s3 + $0x2a8] sm:$0xf]
      %v961 = vld [vmem:[%s3 + $0x2ac] sm:$0xff]
      %v962 = vld [vmem:[%s3 + $0x2b4] sm:$0xf]
      %v963 = vld [vmem:[%s3 + $0x2b8] sm:$0xff]
      %v964 = vld [vmem:[%s3 + $0x2c0] sm:$0xf]
      %v965 = vld [vmem:[%s3 + $0x2c4] sm:$0xff]
      %v966 = vld [vmem:[%s3 + $0x2cc] sm:$0xf]
      %v967 = vld [vmem:[%s3 + $0x2d0] sm:$0xff]
      %v968 = vld [vmem:[%s3 + $0x2d8] sm:$0xf]
      %v969 = vld [vmem:[%s3 + $0x2dc] sm:$0xff]
      %v970 = vld [vmem:[%s3 + $0x2e4] sm:$0xf]
      %v971 = vld [vmem:[%s3 + $0x2e8] sm:$0xff]
      %v972 = vld [vmem:[%s3 + $0x2f0] sm:$0xf]
      %v973 = vld [vmem:[%s3 + $0x2f4] sm:$0xff]
      %v974 = vld [vmem:[%s3 + $0x2fc] sm:$0xf]
      %v975 = vld [vmem:[%s3 + $0x300] sm:$0xff]
      %v976 = vld [vmem:[%s3 + $0x308] sm:$0xf]
      %v977 = vld [vmem:[%s3 + $0x30c] sm:$0xff]
      %v978 = vld [vmem:[%s3 + $0x314] sm:$0xf]
      %v979 = vld [vmem:[%s3 + $0x318] sm:$0xff]
      %v980 = vld [vmem:[%s3 + $0x320] sm:$0xf]
      %v981 = vld [vmem:[%s3 + $0x324] sm:$0xff]
      %v982 = vld [vmem:[%s3 + $0x32c] sm:$0xf]
      %v983 = vld [vmem:[%s3 + $0x330] sm:$0xff]
      %v984 = vld [vmem:[%s3 + $0x338] sm:$0xf]
      %v985 = vld [vmem:[%s3 + $0x33c] sm:$0xff]
      %v986 = vld [vmem:[%s3 + $0x344] sm:$0xf]
      %v987 = vld [vmem:[%s3 + $0x348] sm:$0xff]
      %v988 = vld [vmem:[%s3 + $0x350] sm:$0xf]
      %v989 = vld [vmem:[%s3 + $0x354] sm:$0xff]
      %v990 = vld [vmem:[%s3 + $0x35c] sm:$0xf]
      %v991 = vld [vmem:[%s3 + $0x360] sm:$0xff]
      %v992 = vld [vmem:[%s3 + $0x368] sm:$0xf]
      %v993 = vld [vmem:[%s3 + $0x36c] sm:$0xff]
      %v994 = vld [vmem:[%s3 + $0x374] sm:$0xf]
      %v995 = vld [vmem:[%s3 + $0x378] sm:$0xff]
      %v996 = vld [vmem:[%s3 + $0x380] sm:$0xf]
      %v997 = vld [vmem:[%s3 + $0x384] sm:$0xff]
      %v998 = vld [vmem:[%s3 + $0x38c] sm:$0xf]
      %v999 = vld [vmem:[%s3 + $0x390] sm:$0xff]
      %v1000 = vld [vmem:[%s3 + $0x398] sm:$0xf]
      %v1001 = vld [vmem:[%s3 + $0x39c] sm:$0xff]
      %v1002 = vld [vmem:[%s3 + $0x3a4] sm:$0xf]
      %v1003 = vld [vmem:[%s3 + $0x3a8] sm:$0xff]
      %v1004 = vld [vmem:[%s3 + $0x3b0] sm:$0xf]
      %v1005 = vld [vmem:[%s3 + $0x3b4] sm:$0xff]
      %v1006 = vld [vmem:[%s3 + $0x3bc] sm:$0xf]
      %v1007 = vld [vmem:[%s3 + $0x3c0] sm:$0xff]
      %v1008 = vld [vmem:[%s3 + $0x3c8] sm:$0xf]
      %v1009 = vld [vmem:[%s3 + $0x3cc] sm:$0xff]
      %v1010 = vld [vmem:[%s3 + $0x3d4] sm:$0xf]
      %v1011 = vld [vmem:[%s3 + $0x3d8] sm:$0xff]
      %v1012 = vld [vmem:[%s3 + $0x3e0] sm:$0xf]
      %v1013 = vld [vmem:[%s3 + $0x3e4] sm:$0xff]
      %v1014 = vld [vmem:[%s3 + $0x3ec] sm:$0xf]
      %v1015 = vld [vmem:[%s3 + $0x3f0] sm:$0xff]
      %v1016 = vld [vmem:[%s3 + $0x3f8] sm:$0xf]
      %v1017 = vld [vmem:[%s3 + $0x3fc] sm:$0xff]
      %v1018 = vld [vmem:[%s3 + $0x404] sm:$0xf]
      %v1019 = vld [vmem:[%s3 + $0x408] sm:$0xff]
      %v1020 = vld [vmem:[%s3 + $0x410] sm:$0xf]
      %v1021 = vld [vmem:[%s3 + $0x414] sm:$0xff]
      %v1022 = vld [vmem:[%s3 + $0x41c] sm:$0xf]
      %v1023 = vld [vmem:[%s3 + $0x420] sm:$0xff]
      %v1024 = vld [vmem:[%s3 + $0x428] sm:$0xf]
      %v1025 = vld [vmem:[%s3 + $0x42c] sm:$0xff]
      %v1026 = vld [vmem:[%s3 + $0x434] sm:$0xf]
      %v1027 = vld [vmem:[%s3 + $0x438] sm:$0xff]
      %v1028 = vld [vmem:[%s3 + $0x440] sm:$0xf]
      %v1029 = vld [vmem:[%s3 + $0x444] sm:$0xff]
      %v1030 = vld [vmem:[%s3 + $0x44c] sm:$0xf]
      %v1031 = vld [vmem:[%s3 + $0x450] sm:$0xff]
      %v1032 = vld [vmem:[%s3 + $0x458] sm:$0xf]
      %v1033 = vld [vmem:[%s3 + $0x45c] sm:$0xff]
      %v1034 = vld [vmem:[%s3 + $0x464] sm:$0xf]
      %v1035 = vld [vmem:[%s3 + $0x468] sm:$0x33]
      %v1036 = vld [vmem:[%s3 + $0x470] sm:$0x3]
      %v1227 = vunpack.c.l.b16 %v847
      %v1228 = vunpack.c.h.b16 %v847
      %v1229 = vunpack.c.l.b16 %v848
      %v1230 = vunpack.c.l.b16 %v849
      %v1231 = vunpack.c.h.b16 %v849
      %v1232 = vunpack.c.l.b16 %v850
      %v1233 = vunpack.c.l.b16 %v851
      %v1234 = vunpack.c.h.b16 %v851
      %v1235 = vunpack.c.l.b16 %v852
      %v1236 = vunpack.c.l.b16 %v853
      %v1237 = vunpack.c.h.b16 %v853
      %v1238 = vunpack.c.l.b16 %v854
      %v1239 = vunpack.c.l.b16 %v855
      %v1240 = vunpack.c.h.b16 %v855
      %v1241 = vunpack.c.l.b16 %v856
      %v1242 = vunpack.c.l.b16 %v857
      %v1243 = vunpack.c.h.b16 %v857
      %v1244 = vunpack.c.l.b16 %v858
      %v1245 = vunpack.c.l.b16 %v859
      %v1246 = vunpack.c.h.b16 %v859
      %v1247 = vunpack.c.l.b16 %v860
      %v1248 = vunpack.c.l.b16 %v861
      %v1249 = vunpack.c.h.b16 %v861
      %v1250 = vunpack.c.l.b16 %v862
      %v1251 = vunpack.c.l.b16 %v863
      %v1252 = vunpack.c.h.b16 %v863
      %v1253 = vunpack.c.l.b16 %v864
      %v1254 = vunpack.c.l.b16 %v865
      %v1255 = vunpack.c.h.b16 %v865
      %v1256 = vunpack.c.l.b16 %v866
      %v1257 = vunpack.c.l.b16 %v867
      %v1258 = vunpack.c.h.b16 %v867
      %v1259 = vunpack.c.l.b16 %v868
      %v1260 = vunpack.c.l.b16 %v869
      %v1261 = vunpack.c.h.b16 %v869
      %v1262 = vunpack.c.l.b16 %v870
      %v1263 = vunpack.c.l.b16 %v871
      %v1264 = vunpack.c.h.b16 %v871
      %v1265 = vunpack.c.l.b16 %v872
      %v1266 = vunpack.c.l.b16 %v873
      %v1267 = vunpack.c.h.b16 %v873
      %v1268 = vunpack.c.l.b16 %v874
      %v1269 = vunpack.c.l.b16 %v875
      %v1270 = vunpack.c.h.b16 %v875
      %v1271 = vunpack.c.l.b16 %v876
      %v1272 = vunpack.c.l.b16 %v877
      %v1273 = vunpack.c.h.b16 %v877
      %v1274 = vunpack.c.l.b16 %v878
      %v1275 = vunpack.c.l.b16 %v879
      %v1276 = vunpack.c.h.b16 %v879
      %v1277 = vunpack.c.l.b16 %v880
      %v1278 = vunpack.c.l.b16 %v881
      %v1279 = vunpack.c.h.b16 %v881
      %v1280 = vunpack.c.l.b16 %v882
      %v1281 = vunpack.c.l.b16 %v883
      %v1282 = vunpack.c.h.b16 %v883
      %v1283 = vunpack.c.l.b16 %v884
      %v1284 = vunpack.c.l.b16 %v885
      %v1285 = vunpack.c.h.b16 %v885
      %v1286 = vunpack.c.l.b16 %v886
      %v1287 = vunpack.c.l.b16 %v887
      %v1288 = vunpack.c.h.b16 %v887
      %v1289 = vunpack.c.l.b16 %v888
      %v1290 = vunpack.c.l.b16 %v889
      %v1291 = vunpack.c.h.b16 %v889
      %v1292 = vunpack.c.l.b16 %v890
      %v1293 = vunpack.c.l.b16 %v891
      %v1294 = vunpack.c.h.b16 %v891
      %v1295 = vunpack.c.l.b16 %v892
      %v1296 = vunpack.c.l.b16 %v893
      %v1297 = vunpack.c.h.b16 %v893
      %v1298 = vunpack.c.l.b16 %v894
      %v1299 = vunpack.c.l.b16 %v895
      %v1300 = vunpack.c.h.b16 %v895
      %v1301 = vunpack.c.l.b16 %v896
      %v1302 = vunpack.c.l.b16 %v897
      %v1303 = vunpack.c.h.b16 %v897
      %v1304 = vunpack.c.l.b16 %v898
      %v1305 = vunpack.c.l.b16 %v899
      %v1306 = vunpack.c.h.b16 %v899
      %v1307 = vunpack.c.l.b16 %v900
      %v1308 = vunpack.c.l.b16 %v901
      %v1309 = vunpack.c.h.b16 %v901
      %v1310 = vunpack.c.l.b16 %v902
      %v1311 = vunpack.c.l.b16 %v903
      %v1312 = vunpack.c.h.b16 %v903
      %v1313 = vunpack.c.l.b16 %v904
      %v1314 = vunpack.c.l.b16 %v905
      %v1315 = vunpack.c.h.b16 %v905
      %v1316 = vunpack.c.l.b16 %v906
      %v1317 = vunpack.c.l.b16 %v907
      %v1318 = vunpack.c.h.b16 %v907
      %v1319 = vunpack.c.l.b16 %v908
      %v1320 = vunpack.c.l.b16 %v909
      %v1321 = vunpack.c.h.b16 %v909
      %v1322 = vunpack.c.l.b16 %v910
      %v1323 = vunpack.c.l.b16 %v911
      %v1324 = vunpack.c.h.b16 %v911
      %v1325 = vunpack.c.l.b16 %v912
      %v1326 = vunpack.c.l.b16 %v913
      %v1327 = vunpack.c.h.b16 %v913
      %v1328 = vunpack.c.l.b16 %v914
      %v1329 = vunpack.c.l.b16 %v915
      %v1330 = vunpack.c.h.b16 %v915
      %v1331 = vunpack.c.l.b16 %v916
      %v1332 = vunpack.c.l.b16 %v917
      %v1333 = vunpack.c.h.b16 %v917
      %v1334 = vunpack.c.l.b16 %v918
      %v1335 = vunpack.c.l.b16 %v919
      %v1336 = vunpack.c.h.b16 %v919
      %v1337 = vunpack.c.l.b16 %v920
      %v1338 = vunpack.c.l.b16 %v921
      %v1339 = vunpack.c.h.b16 %v921
      %v1340 = vunpack.c.l.b16 %v922
      %v1341 = vunpack.c.l.b16 %v923
      %v1342 = vunpack.c.h.b16 %v923
      %v1343 = vunpack.c.l.b16 %v924
      %v1344 = vunpack.c.l.b16 %v925
      %v1345 = vunpack.c.h.b16 %v925
      %v1346 = vunpack.c.l.b16 %v926
      %v1347 = vunpack.c.l.b16 %v927
      %v1348 = vunpack.c.h.b16 %v927
      %v1349 = vunpack.c.l.b16 %v928
      %v1350 = vunpack.c.l.b16 %v929
      %v1351 = vunpack.c.h.b16 %v929
      %v1352 = vunpack.c.l.b16 %v930
      %v1353 = vunpack.c.l.b16 %v931
      %v1354 = vunpack.c.h.b16 %v931
      %v1355 = vunpack.c.l.b16 %v932
      %v1356 = vunpack.c.l.b16 %v933
      %v1357 = vunpack.c.h.b16 %v933
      %v1358 = vunpack.c.l.b16 %v934
      %v1359 = vunpack.c.l.b16 %v935
      %v1360 = vunpack.c.h.b16 %v935
      %v1361 = vunpack.c.l.b16 %v936
      %v1362 = vunpack.c.l.b16 %v937
      %v1363 = vunpack.c.h.b16 %v937
      %v1364 = vunpack.c.l.b16 %v938
      %v1365 = vunpack.c.l.b16 %v939
      %v1366 = vunpack.c.h.b16 %v939
      %v1367 = vunpack.c.l.b16 %v940
      %v1368 = vunpack.c.l.b16 %v941
      %v1369 = vunpack.c.h.b16 %v941
      %v1370 = vunpack.c.l.b16 %v942
      %v1371 = vunpack.c.l.b16 %v943
      %v1372 = vunpack.c.h.b16 %v943
      %v1373 = vunpack.c.l.b16 %v944
      %v1374 = vunpack.c.l.b16 %v945
      %v1375 = vunpack.c.h.b16 %v945
      %v1376 = vunpack.c.l.b16 %v946
      %v1377 = vunpack.c.l.b16 %v947
      %v1378 = vunpack.c.h.b16 %v947
      %v1379 = vunpack.c.l.b16 %v948
      %v1380 = vunpack.c.l.b16 %v949
      %v1381 = vunpack.c.h.b16 %v949
      %v1382 = vunpack.c.l.b16 %v950
      %v1383 = vunpack.c.l.b16 %v951
      %v1384 = vunpack.c.h.b16 %v951
      %v1385 = vunpack.c.l.b16 %v952
      %v1386 = vunpack.c.l.b16 %v953
      %v1387 = vunpack.c.h.b16 %v953
      %v1388 = vunpack.c.l.b16 %v954
      %v1389 = vunpack.c.l.b16 %v955
      %v1390 = vunpack.c.h.b16 %v955
      %v1391 = vunpack.c.l.b16 %v956
      %v1392 = vunpack.c.l.b16 %v957
      %v1393 = vunpack.c.h.b16 %v957
      %v1394 = vunpack.c.l.b16 %v958
      %v1395 = vunpack.c.l.b16 %v959
      %v1396 = vunpack.c.h.b16 %v959
      %v1397 = vunpack.c.l.b16 %v960
      %v1398 = vunpack.c.l.b16 %v961
      %v1399 = vunpack.c.h.b16 %v961
      %v1400 = vunpack.c.l.b16 %v962
      %v1401 = vunpack.c.l.b16 %v963
      %v1402 = vunpack.c.h.b16 %v963
      %v1403 = vunpack.c.l.b16 %v964
      %v1404 = vunpack.c.l.b16 %v965
      %v1405 = vunpack.c.h.b16 %v965
      %v1406 = vunpack.c.l.b16 %v966
      %v1407 = vunpack.c.l.b16 %v967
      %v1408 = vunpack.c.h.b16 %v967
      %v1409 = vunpack.c.l.b16 %v968
      %v1410 = vunpack.c.l.b16 %v969
      %v1411 = vunpack.c.h.b16 %v969
      %v1412 = vunpack.c.l.b16 %v970
      %v1413 = vunpack.c.l.b16 %v971
      %v1414 = vunpack.c.h.b16 %v971
      %v1415 = vunpack.c.l.b16 %v972
      %v1416 = vunpack.c.l.b16 %v973
      %v1417 = vunpack.c.h.b16 %v973
      %v1418 = vunpack.c.l.b16 %v974
      %v1419 = vunpack.c.l.b16 %v975
      %v1420 = vunpack.c.h.b16 %v975
      %v1421 = vunpack.c.l.b16 %v976
      %v1422 = vunpack.c.l.b16 %v977
      %v1423 = vunpack.c.h.b16 %v977
      %v1424 = vunpack.c.l.b16 %v978
      %v1425 = vunpack.c.l.b16 %v979
      %v1426 = vunpack.c.h.b16 %v979
      %v1427 = vunpack.c.l.b16 %v980
      %v1428 = vunpack.c.l.b16 %v981
      %v1429 = vunpack.c.h.b16 %v981
      %v1430 = vunpack.c.l.b16 %v982
      %v1431 = vunpack.c.l.b16 %v983
      %v1432 = vunpack.c.h.b16 %v983
      %v1433 = vunpack.c.l.b16 %v984
      %v1434 = vunpack.c.l.b16 %v985
      %v1435 = vunpack.c.h.b16 %v985
      %v1436 = vunpack.c.l.b16 %v986
      %v1437 = vunpack.c.l.b16 %v987
      %v1438 = vunpack.c.h.b16 %v987
      %v1439 = vunpack.c.l.b16 %v988
      %v1440 = vunpack.c.l.b16 %v989
      %v1441 = vunpack.c.h.b16 %v989
      %v1442 = vunpack.c.l.b16 %v990
      %v1443 = vunpack.c.l.b16 %v991
      %v1444 = vunpack.c.h.b16 %v991
      %v1445 = vunpack.c.l.b16 %v992
      %v1446 = vunpack.c.l.b16 %v993
      %v1447 = vunpack.c.h.b16 %v993
      %v1448 = vunpack.c.l.b16 %v994
      %v1449 = vunpack.c.l.b16 %v995
      %v1450 = vunpack.c.h.b16 %v995
      %v1451 = vunpack.c.l.b16 %v996
      %v1452 = vunpack.c.l.b16 %v997
      %v1453 = vunpack.c.h.b16 %v997
      %v1454 = vunpack.c.l.b16 %v998
      %v1455 = vunpack.c.l.b16 %v999
      %v1456 = vunpack.c.h.b16 %v999
      %v1457 = vunpack.c.l.b16 %v1000
      %v1458 = vunpack.c.l.b16 %v1001
      %v1459 = vunpack.c.h.b16 %v1001
      %v1460 = vunpack.c.l.b16 %v1002
      %v1461 = vunpack.c.l.b16 %v1003
      %v1462 = vunpack.c.h.b16 %v1003
      %v1463 = vunpack.c.l.b16 %v1004
      %v1464 = vunpack.c.l.b16 %v1005
      %v1465 = vunpack.c.h.b16 %v1005
      %v1466 = vunpack.c.l.b16 %v1006
      %v1467 = vunpack.c.l.b16 %v1007
      %v1468 = vunpack.c.h.b16 %v1007
      %v1469 = vunpack.c.l.b16 %v1008
      %v1470 = vunpack.c.l.b16 %v1009
      %v1471 = vunpack.c.h.b16 %v1009
      %v1472 = vunpack.c.l.b16 %v1010
      %v1473 = vunpack.c.l.b16 %v1011
      %v1474 = vunpack.c.h.b16 %v1011
      %v1475 = vunpack.c.l.b16 %v1012
      %v1476 = vunpack.c.l.b16 %v1013
      %v1477 = vunpack.c.h.b16 %v1013
      %v1478 = vunpack.c.l.b16 %v1014
      %v1479 = vunpack.c.l.b16 %v1015
      %v1480 = vunpack.c.h.b16 %v1015
      %v1481 = vunpack.c.l.b16 %v1016
      %v1482 = vunpack.c.l.b16 %v1017
      %v1483 = vunpack.c.h.b16 %v1017
      %v1484 = vunpack.c.l.b16 %v1018
      %v1485 = vunpack.c.l.b16 %v1019
      %v1486 = vunpack.c.h.b16 %v1019
      %v1487 = vunpack.c.l.b16 %v1020
      %v1488 = vunpack.c.l.b16 %v1021
      %v1489 = vunpack.c.h.b16 %v1021
      %v1490 = vunpack.c.l.b16 %v1022
      %v1491 = vunpack.c.l.b16 %v1023
      %v1492 = vunpack.c.h.b16 %v1023
      %v1493 = vunpack.c.l.b16 %v1024
      %v1494 = vunpack.c.l.b16 %v1025
      %v1495 = vunpack.c.h.b16 %v1025
      %v1496 = vunpack.c.l.b16 %v1026
      %v1497 = vunpack.c.l.b16 %v1027
      %v1498 = vunpack.c.h.b16 %v1027
      %v1499 = vunpack.c.l.b16 %v1028
      %v1500 = vunpack.c.l.b16 %v1029
      %v1501 = vunpack.c.h.b16 %v1029
      %v1502 = vunpack.c.l.b16 %v1030
      %v1503 = vunpack.c.l.b16 %v1031
      %v1504 = vunpack.c.h.b16 %v1031
      %v1505 = vunpack.c.l.b16 %v1032
      %v1506 = vunpack.c.l.b16 %v1033
      %v1507 = vunpack.c.h.b16 %v1033
      %v1508 = vunpack.c.l.b16 %v1034
      %v1509 = vunpack.c.l.b16 %v1035
      %v1510 = vunpack.c.h.b16 %v1035
      %v1511 = vunpack.c.l.b16 %v1036
      %v1512 = vpack.c.b16 %v1230, %v1227
      %v1513 = vpack.c.b16 %v1231, %v1228
      %v1514 = vpack.c.b16 %v1232, %v1229
      %v1515 = vpack.c.b16 %v1236, %v1233
      %v1516 = vpack.c.b16 %v1237, %v1234
      %v1517 = vpack.c.b16 %v1238, %v1235
      %v1518 = vpack.c.b16 %v1242, %v1239
      %v1519 = vpack.c.b16 %v1243, %v1240
      %v1520 = vpack.c.b16 %v1244, %v1241
      %v1521 = vpack.c.b16 %v1248, %v1245
      %v1522 = vpack.c.b16 %v1249, %v1246
      %v1523 = vpack.c.b16 %v1250, %v1247
      %v1524 = vpack.c.b16 %v1254, %v1251
      %v1525 = vpack.c.b16 %v1255, %v1252
      %v1526 = vpack.c.b16 %v1256, %v1253
      %v1527 = vpack.c.b16 %v1260, %v1257
      %v1528 = vpack.c.b16 %v1261, %v1258
      %v1529 = vpack.c.b16 %v1262, %v1259
      %v1530 = vpack.c.b16 %v1266, %v1263
      %v1531 = vpack.c.b16 %v1267, %v1264
      %v1532 = vpack.c.b16 %v1268, %v1265
      %v1533 = vpack.c.b16 %v1272, %v1269
      %v1534 = vpack.c.b16 %v1273, %v1270
      %v1535 = vpack.c.b16 %v1274, %v1271
      %v1536 = vpack.c.b16 %v1278, %v1275
      %v1537 = vpack.c.b16 %v1279, %v1276
      %v1538 = vpack.c.b16 %v1280, %v1277
      %v1539 = vpack.c.b16 %v1284, %v1281
      %v1540 = vpack.c.b16 %v1285, %v1282
      %v1541 = vpack.c.b16 %v1286, %v1283
      %v1542 = vpack.c.b16 %v1290, %v1287
      %v1543 = vpack.c.b16 %v1291, %v1288
      %v1544 = vpack.c.b16 %v1292, %v1289
      %v1545 = vpack.c.b16 %v1296, %v1293
      %v1546 = vpack.c.b16 %v1297, %v1294
      %v1547 = vpack.c.b16 %v1298, %v1295
      %v1548 = vpack.c.b16 %v1302, %v1299
      %v1549 = vpack.c.b16 %v1303, %v1300
      %v1550 = vpack.c.b16 %v1304, %v1301
      %v1551 = vpack.c.b16 %v1308, %v1305
      %v1552 = vpack.c.b16 %v1309, %v1306
      %v1553 = vpack.c.b16 %v1310, %v1307
      %v1554 = vpack.c.b16 %v1314, %v1311
      %v1555 = vpack.c.b16 %v1315, %v1312
      %v1556 = vpack.c.b16 %v1316, %v1313
      %v1557 = vpack.c.b16 %v1320, %v1317
      %v1558 = vpack.c.b16 %v1321, %v1318
      %v1559 = vpack.c.b16 %v1322, %v1319
      %v1560 = vpack.c.b16 %v1326, %v1323
      %v1561 = vpack.c.b16 %v1327, %v1324
      %v1562 = vpack.c.b16 %v1328, %v1325
      %v1563 = vpack.c.b16 %v1332, %v1329
      %v1564 = vpack.c.b16 %v1333, %v1330
      %v1565 = vpack.c.b16 %v1334, %v1331
      %v1566 = vpack.c.b16 %v1338, %v1335
      %v1567 = vpack.c.b16 %v1339, %v1336
      %v1568 = vpack.c.b16 %v1340, %v1337
      %v1569 = vpack.c.b16 %v1344, %v1341
      %v1570 = vpack.c.b16 %v1345, %v1342
      %v1571 = vpack.c.b16 %v1346, %v1343
      %v1572 = vpack.c.b16 %v1350, %v1347
      %v1573 = vpack.c.b16 %v1351, %v1348
      %v1574 = vpack.c.b16 %v1352, %v1349
      %v1575 = vpack.c.b16 %v1356, %v1353
      %v1576 = vpack.c.b16 %v1357, %v1354
      %v1577 = vpack.c.b16 %v1358, %v1355
      %v1578 = vpack.c.b16 %v1362, %v1359
      %v1579 = vpack.c.b16 %v1363, %v1360
      %v1580 = vpack.c.b16 %v1364, %v1361
      %v1581 = vpack.c.b16 %v1368, %v1365
      %v1582 = vpack.c.b16 %v1369, %v1366
      %v1583 = vpack.c.b16 %v1370, %v1367
      %v1584 = vpack.c.b16 %v1374, %v1371
      %v1585 = vpack.c.b16 %v1375, %v1372
      %v1586 = vpack.c.b16 %v1376, %v1373
      %v1587 = vpack.c.b16 %v1380, %v1377
      %v1588 = vpack.c.b16 %v1381, %v1378
      %v1589 = vpack.c.b16 %v1382, %v1379
      %v1590 = vpack.c.b16 %v1386, %v1383
      %v1591 = vpack.c.b16 %v1387, %v1384
      %v1592 = vpack.c.b16 %v1388, %v1385
      %v1593 = vpack.c.b16 %v1392, %v1389
      %v1594 = vpack.c.b16 %v1393, %v1390
      %v1595 = vpack.c.b16 %v1394, %v1391
      %v1596 = vpack.c.b16 %v1398, %v1395
      %v1597 = vpack.c.b16 %v1399, %v1396
      %v1598 = vpack.c.b16 %v1400, %v1397
      %v1599 = vpack.c.b16 %v1404, %v1401
      %v1600 = vpack.c.b16 %v1405, %v1402
      %v1601 = vpack.c.b16 %v1406, %v1403
      %v1602 = vpack.c.b16 %v1410, %v1407
      %v1603 = vpack.c.b16 %v1411, %v1408
      %v1604 = vpack.c.b16 %v1412, %v1409
      %v1605 = vpack.c.b16 %v1416, %v1413
      %v1606 = vpack.c.b16 %v1417, %v1414
      %v1607 = vpack.c.b16 %v1418, %v1415
      %v1608 = vpack.c.b16 %v1422, %v1419
      %v1609 = vpack.c.b16 %v1423, %v1420
      %v1610 = vpack.c.b16 %v1424, %v1421
      %v1611 = vpack.c.b16 %v1428, %v1425
      %v1612 = vpack.c.b16 %v1429, %v1426
      %v1613 = vpack.c.b16 %v1430, %v1427
      %v1614 = vpack.c.b16 %v1434, %v1431
      %v1615 = vpack.c.b16 %v1435, %v1432
      %v1616 = vpack.c.b16 %v1436, %v1433
      %v1617 = vpack.c.b16 %v1440, %v1437
      %v1618 = vpack.c.b16 %v1441, %v1438
      %v1619 = vpack.c.b16 %v1442, %v1439
      %v1620 = vpack.c.b16 %v1446, %v1443
      %v1621 = vpack.c.b16 %v1447, %v1444
      %v1622 = vpack.c.b16 %v1448, %v1445
      %v1623 = vpack.c.b16 %v1452, %v1449
      %v1624 = vpack.c.b16 %v1453, %v1450
      %v1625 = vpack.c.b16 %v1454, %v1451
      %v1626 = vpack.c.b16 %v1458, %v1455
      %v1627 = vpack.c.b16 %v1459, %v1456
      %v1628 = vpack.c.b16 %v1460, %v1457
      %v1629 = vpack.c.b16 %v1464, %v1461
      %v1630 = vpack.c.b16 %v1465, %v1462
      %v1631 = vpack.c.b16 %v1466, %v1463
      %v1632 = vpack.c.b16 %v1470, %v1467
      %v1633 = vpack.c.b16 %v1471, %v1468
      %v1634 = vpack.c.b16 %v1472, %v1469
      %v1635 = vpack.c.b16 %v1476, %v1473
      %v1636 = vpack.c.b16 %v1477, %v1474
      %v1637 = vpack.c.b16 %v1478, %v1475
      %v1638 = vpack.c.b16 %v1482, %v1479
      %v1639 = vpack.c.b16 %v1483, %v1480
      %v1640 = vpack.c.b16 %v1484, %v1481
      %v1641 = vpack.c.b16 %v1488, %v1485
      %v1642 = vpack.c.b16 %v1489, %v1486
      %v1643 = vpack.c.b16 %v1490, %v1487
      %v1644 = vpack.c.b16 %v1494, %v1491
      %v1645 = vpack.c.b16 %v1495, %v1492
      %v1646 = vpack.c.b16 %v1496, %v1493
      %v1647 = vpack.c.b16 %v1500, %v1497
      %v1648 = vpack.c.b16 %v1501, %v1498
      %v1649 = vpack.c.b16 %v1502, %v1499
      %v1650 = vpack.c.b16 %v1506, %v1503
      %v1651 = vpack.c.b16 %v1507, %v1504
      %v1652 = vpack.c.b16 %v1508, %v1505
      %v1653 = vpack.c.b16 %v1509, %v1509
      %v1654 = vpack.c.b16 %v1510, %v1510
      %v1655 = vpack.c.b16 %v1511, %v1511
      %vm1797 = vcmask 941056
      %v1799 = vsel %vm1797, %v840, 0
      %v1802 = vsel %vm1797, %v846, 0
      %vm1804 = vcmask 1040384
      %vm1805 = vcmask 1041408
      %v1806 = vsel %vm1804, 4294967295, 65535
      %v1807 = vsel %vm1805, %v1806, 0
      %v1809 = vand.u32 %v1653, %v1807
      %v1812 = vand.u32 %v1654, %v1807
      %v1815 = vand.u32 %v1655, %v1807
      %1817 = vmatprep.subr.bf16.mxu0 %v1513
      %1818 = vmatpush1.bf16.msra.mxu0 %v1512
      %1819 = vmatprep.subr.bf16.mxu0 %v1516
      %1820 = vmatpush1.bf16.msra.mxu0 %v1515
      %1821 = vmatprep.subr.bf16.mxu0 %v1519
      %1822 = vmatpush1.bf16.msra.mxu0 %v1518
      %1823 = vmatprep.subr.bf16.mxu0 %v1522
      %1824 = vmatpush1.bf16.msra.mxu0 %v1521
      %1825 = vmatprep.subr.bf16.mxu0 %v1525
      %1826 = vmatpush1.bf16.msra.mxu0 %v1524
      %1827 = vmatprep.subr.bf16.mxu0 %v1528
      %1828 = vmatpush1.bf16.msra.mxu0 %v1527
      %1829 = vmatprep.subr.bf16.mxu0 %v1531
      %1830 = vmatpush1.bf16.msra.mxu0 %v1530
      %1831 = vmatprep.subr.bf16.mxu0 %v1534
      %1832 = vmatpush1.bf16.msra.mxu0 %v1533
      %1833 = vmatprep.subr.bf16.mxu0 %v1537
      %1834 = vmatpush1.bf16.msra.mxu0 %v1536
      %1835 = vmatprep.subr.bf16.mxu0 %v1540
      %1836 = vmatpush1.bf16.msra.mxu0 %v1539
      %1837 = vmatprep.subr.bf16.mxu0 %v1543
      %1838 = vmatpush1.bf16.msra.mxu0 %v1542
      %1839 = vmatprep.subr.bf16.mxu0 %v1546
      %1840 = vmatpush1.bf16.msra.mxu0 %v1545
      %1841 = vmatprep.subr.bf16.mxu0 %v1549
      %1842 = vmatpush1.bf16.msra.mxu0 %v1548
      %1843 = vmatprep.subr.bf16.mxu0 %v1552
      %1844 = vmatpush1.bf16.msra.mxu0 %v1551
      %1845 = vmatprep.subr.bf16.mxu0 %v1555
      %1846 = vmatpush1.bf16.msra.mxu0 %v1554
      %1847 = vmatprep.subr.bf16.mxu0 %v1558
      %1848 = vmatpush1.bf16.msra.mxu0 %v1557
      %1849 = vmatprep.mubr.bf16.mxu0 %v836
      %1850 = vmatmul.mubr.bf16.gmra.mrb[0].mxu0 %v835
      %v1851 = vpop.f32.mrb[0].mxu0
      %v1852 = vadd.f32 0.0, %v1851
      %v1853 = vpop.f32.mrb[0].mxu0
      %v1854 = vadd.f32 0.0, %v1853
      %v1855 = vpop.f32.mrb[0].mxu0
      %v1856 = vadd.f32 0.0, %v1855
      %v1857 = vpop.f32.mrb[0].mxu0
      %v1858 = vadd.f32 0.0, %v1857
      %1859 = vmatprep.mubr.bf16.mxu0 %v842
      %1860 = vmatmul.mubr.bf16.gmra.mrb[0].mxu0 %v841
      %v1861 = vpop.f32.mrb[0].mxu0
      %v1862 = vadd.f32 0.0, %v1861
      %v1863 = vpop.f32.mrb[0].mxu0
      %v1864 = vadd.f32 0.0, %v1863
      %v1865 = vpop.f32.mrb[0].mxu0
      %v1866 = vadd.f32 0.0, %v1865
      %v1867 = vpop.f32.mrb[0].mxu0
      %v1868 = vadd.f32 0.0, %v1867
      %1869 = vdwg.mxu0
      %1870 = vmatprep.subr.bf16.mxu0 %v1561
      %1871 = vmatpush1.bf16.msra.mxu0 %v1560
      %1872 = vmatprep.subr.bf16.mxu0 %v1564
      %1873 = vmatpush1.bf16.msra.mxu0 %v1563
      %1874 = vmatprep.subr.bf16.mxu0 %v1567
      %1875 = vmatpush1.bf16.msra.mxu0 %v1566
      %1876 = vmatprep.subr.bf16.mxu0 %v1570
      %1877 = vmatpush1.bf16.msra.mxu0 %v1569
      %1878 = vmatprep.subr.bf16.mxu0 %v1573
      %1879 = vmatpush1.bf16.msra.mxu0 %v1572
      %1880 = vmatprep.subr.bf16.mxu0 %v1576
      %1881 = vmatpush1.bf16.msra.mxu0 %v1575
      %1882 = vmatprep.subr.bf16.mxu0 %v1579
      %1883 = vmatpush1.bf16.msra.mxu0 %v1578
      %1884 = vmatprep.subr.bf16.mxu0 %v1582
      %1885 = vmatpush1.bf16.msra.mxu0 %v1581
      %1886 = vmatprep.subr.bf16.mxu0 %v1585
      %1887 = vmatpush1.bf16.msra.mxu0 %v1584
      %1888 = vmatprep.subr.bf16.mxu0 %v1588
      %1889 = vmatpush1.bf16.msra.mxu0 %v1587
      %1890 = vmatprep.subr.bf16.mxu0 %v1591
      %1891 = vmatpush1.bf16.msra.mxu0 %v1590
      %1892 = vmatprep.subr.bf16.mxu0 %v1594
      %1893 = vmatpush1.bf16.msra.mxu0 %v1593
      %1894 = vmatprep.subr.bf16.mxu0 %v1597
      %1895 = vmatpush1.bf16.msra.mxu0 %v1596
      %1896 = vmatprep.subr.bf16.mxu0 %v1600
      %1897 = vmatpush1.bf16.msra.mxu0 %v1599
      %1898 = vmatprep.subr.bf16.mxu0 %v1603
      %1899 = vmatpush1.bf16.msra.mxu0 %v1602
      %1900 = vmatprep.subr.bf16.mxu0 %v1606
      %1901 = vmatpush1.bf16.msra.mxu0 %v1605
      %1902 = vmatprep.mubr.bf16.mxu0 %v838
      %1903 = vmatmul.mubr.bf16.gmra.mrb[0].mxu0 %v837
      %v1904 = vpop.f32.mrb[0].mxu0
      %v1905 = vadd.f32 %v1852, %v1904
      %v1906 = vpop.f32.mrb[0].mxu0
      %v1907 = vadd.f32 %v1854, %v1906
      %v1908 = vpop.f32.mrb[0].mxu0
      %v1909 = vadd.f32 %v1856, %v1908
      %v1910 = vpop.f32.mrb[0].mxu0
      %v1911 = vadd.f32 %v1858, %v1910
      %1912 = vmatprep.mubr.bf16.mxu0 %v844
      %1913 = vmatmul.mubr.bf16.gmra.mrb[0].mxu0 %v843
      %v1914 = vpop.f32.mrb[0].mxu0
      %v1915 = vadd.f32 %v1862, %v1914
      %v1916 = vpop.f32.mrb[0].mxu0
      %v1917 = vadd.f32 %v1864, %v1916
      %v1918 = vpop.f32.mrb[0].mxu0
      %v1919 = vadd.f32 %v1866, %v1918
      %v1920 = vpop.f32.mrb[0].mxu0
      %v1921 = vadd.f32 %v1868, %v1920
      %1922 = vdwg.mxu0
      %1923 = vmatprep.subr.bf16.mxu0 %v1609
      %1924 = vmatpush1.bf16.msra.mxu0 %v1608
      %1925 = vmatprep.subr.bf16.mxu0 %v1612
      %1926 = vmatpush1.bf16.msra.mxu0 %v1611
      %1927 = vmatprep.subr.bf16.mxu0 %v1615
      %1928 = vmatpush1.bf16.msra.mxu0 %v1614
      %1929 = vmatprep.subr.bf16.mxu0 %v1618
      %1930 = vmatpush1.bf16.msra.mxu0 %v1617
      %1931 = vmatprep.subr.bf16.mxu0 %v1621
      %1932 = vmatpush1.bf16.msra.mxu0 %v1620
      %1933 = vmatprep.subr.bf16.mxu0 %v1624
      %1934 = vmatpush1.bf16.msra.mxu0 %v1623
      %1935 = vmatprep.subr.bf16.mxu0 %v1627
      %1936 = vmatpush1.bf16.msra.mxu0 %v1626
      %1937 = vmatprep.subr.bf16.mxu0 %v1630
      %1938 = vmatpush1.bf16.msra.mxu0 %v1629
      %1939 = vmatprep.subr.bf16.mxu0 %v1633
      %1940 = vmatpush1.bf16.msra.mxu0 %v1632
      %1941 = vmatprep.subr.bf16.mxu0 %v1636
      %1942 = vmatpush1.bf16.msra.mxu0 %v1635
      %1943 = vmatprep.subr.bf16.mxu0 %v1639
      %1944 = vmatpush1.bf16.msra.mxu0 %v1638
      %1945 = vmatprep.subr.bf16.mxu0 %v1642
      %1946 = vmatpush1.bf16.msra.mxu0 %v1641
      %1947 = vmatprep.subr.bf16.mxu0 %v1645
      %1948 = vmatpush1.bf16.msra.mxu0 %v1644
      %1949 = vmatprep.subr.bf16.mxu0 %v1648
      %1950 = vmatpush1.bf16.msra.mxu0 %v1647
      %1951 = vmatprep.subr.bf16.mxu0 %v1651
      %1952 = vmatpush1.bf16.msra.mxu0 %v1650
      %1953 = vmatprep.subr.bf16.mxu0 %v1812
      %1954 = vmatpush1.bf16.msra.mxu0 %v1809
      %1955 = vmatprep.mubr.bf16.mxu0 %v1799
      %1956 = vmatmul.mubr.bf16.gmra.mrb[0].mxu0 %v839
      %v1957 = vpop.f32.mrb[0].mxu0
      %v1958 = vadd.f32 %v1905, %v1957
      %v1959 = vpop.f32.mrb[0].mxu0
      %v1960 = vadd.f32 %v1907, %v1959
      %v1961 = vpop.f32.mrb[0].mxu0
      %v1962 = vadd.f32 %v1909, %v1961
      %v1963 = vpop.f32.mrb[0].mxu0
      %v1964 = vadd.f32 %v1911, %v1963
      %1965 = vmatprep.mubr.bf16.mxu0 %v1802
      %1966 = vmatmul.mubr.bf16.gmra.mrb[0].mxu0 %v845
      %v1967 = vpop.f32.mrb[0].mxu0
      %v1968 = vadd.f32 %v1915, %v1967
      %v1969 = vpop.f32.mrb[0].mxu0
      %v1970 = vadd.f32 %v1917, %v1969
      %v1971 = vpop.f32.mrb[0].mxu0
      %v1972 = vadd.f32 %v1919, %v1971
      %v1973 = vpop.f32.mrb[0].mxu0
      %v1974 = vadd.f32 %v1921, %v1973
      %1975 = vdwg.mxu0
      %1976 = vmatprep.subr.bf16.mxu0 0
      %1977 = vmatpush1.bf16.msra.mxu0 %v1514
      %1978 = vmatprep.subr.bf16.mxu0 0
      %1979 = vmatpush1.bf16.msra.mxu0 %v1517
      %1980 = vmatprep.subr.bf16.mxu0 0
      %1981 = vmatpush1.bf16.msra.mxu0 %v1520
      %1982 = vmatprep.subr.bf16.mxu0 0
      %1983 = vmatpush1.bf16.msra.mxu0 %v1523
      %1984 = vmatprep.subr.bf16.mxu0 0
      %1985 = vmatpush1.bf16.msra.mxu0 %v1526
      %1986 = vmatprep.subr.bf16.mxu0 0
      %1987 = vmatpush1.bf16.msra.mxu0 %v1529
      %1988 = vmatprep.subr.bf16.mxu0 0
      %1989 = vmatpush1.bf16.msra.mxu0 %v1532
      %1990 = vmatprep.subr.bf16.mxu0 0
      %1991 = vmatpush1.bf16.msra.mxu0 %v1535
      %1992 = vmatprep.subr.bf16.mxu0 0
      %1993 = vmatpush1.bf16.msra.mxu0 %v1538
      %1994 = vmatprep.subr.bf16.mxu0 0
      %1995 = vmatpush1.bf16.msra.mxu0 %v1541
      %1996 = vmatprep.subr.bf16.mxu0 0
      %1997 = vmatpush1.bf16.msra.mxu0 %v1544
      %1998 = vmatprep.subr.bf16.mxu0 0
      %1999 = vmatpush1.bf16.msra.mxu0 %v1547
      %2000 = vmatprep.subr.bf16.mxu0 0
      %2001 = vmatpush1.bf16.msra.mxu0 %v1550
      %2002 = vmatprep.subr.bf16.mxu0 0
      %2003 = vmatpush1.bf16.msra.mxu0 %v1553
      %2004 = vmatprep.subr.bf16.mxu0 0
      %2005 = vmatpush1.bf16.msra.mxu0 %v1556
      %2006 = vmatprep.subr.bf16.mxu0 0
      %2007 = vmatpush1.bf16.msra.mxu0 %v1559
      %2008 = vmatprep.mubr.bf16.mxu0 %v836
      %2009 = vmatmul.mubr.bf16.gmra.mrb[0].mxu0 %v835
      %v2010 = vpop.f32.mrb[0].mxu0
      %v2011 = vadd.f32 0.0, %v2010
      %v2012 = vpop.f32.mrb[0].mxu0
      %v2013 = vpop.f32.mrb[0].mxu0
      %v2014 = vadd.f32 0.0, %v2013
      %v2015 = vpop.f32.mrb[0].mxu0
      %2016 = vmatprep.mubr.bf16.mxu0 %v842
      %2017 = vmatmul.mubr.bf16.gmra.mrb[0].mxu0 %v841
      %v2018 = vpop.f32.mrb[0].mxu0
      %v2019 = vadd.f32 0.0, %v2018
      %v2020 = vpop.f32.mrb[0].mxu0
      %v2021 = vpop.f32.mrb[0].mxu0
      %v2022 = vadd.f32 0.0, %v2021
      %v2023 = vpop.f32.mrb[0].mxu0
      %2024 = vdwg.mxu0
      %2025 = vmatprep.subr.bf16.mxu0 0
      %2026 = vmatpush1.bf16.msra.mxu0 %v1562
      %2027 = vmatprep.subr.bf16.mxu0 0
      %2028 = vmatpush1.bf16.msra.mxu0 %v1565
      %2029 = vmatprep.subr.bf16.mxu0 0
      %2030 = vmatpush1.bf16.msra.mxu0 %v1568
      %2031 = vmatprep.subr.bf16.mxu0 0
      %2032 = vmatpush1.bf16.msra.mxu0 %v1571
      %2033 = vmatprep.subr.bf16.mxu0 0
      %2034 = vmatpush1.bf16.msra.mxu0 %v1574
      %2035 = vmatprep.subr.bf16.mxu0 0
      %2036 = vmatpush1.bf16.msra.mxu0 %v1577
      %2037 = vmatprep.subr.bf16.mxu0 0
      %2038 = vmatpush1.bf16.msra.mxu0 %v1580
      %2039 = vmatprep.subr.bf16.mxu0 0
      %2040 = vmatpush1.bf16.msra.mxu0 %v1583
      %2041 = vmatprep.subr.bf16.mxu0 0
      %2042 = vmatpush1.bf16.msra.mxu0 %v1586
      %2043 = vmatprep.subr.bf16.mxu0 0
      %2044 = vmatpush1.bf16.msra.mxu0 %v1589
      %2045 = vmatprep.subr.bf16.mxu0 0
      %2046 = vmatpush1.bf16.msra.mxu0 %v1592
      %2047 = vmatprep.subr.bf16.mxu0 0
      %2048 = vmatpush1.bf16.msra.mxu0 %v1595
      %2049 = vmatprep.subr.bf16.mxu0 0
      %2050 = vmatpush1.bf16.msra.mxu0 %v1598
      %2051 = vmatprep.subr.bf16.mxu0 0
      %2052 = vmatpush1.bf16.msra.mxu0 %v1601
      %2053 = vmatprep.subr.bf16.mxu0 0
      %2054 = vmatpush1.bf16.msra.mxu0 %v1604
      %2055 = vmatprep.subr.bf16.mxu0 0
      %2056 = vmatpush1.bf16.msra.mxu0 %v1607
      %2057 = vmatprep.mubr.bf16.mxu0 %v838
      %2058 = vmatmul.mubr.bf16.gmra.mrb[0].mxu0 %v837
      %v2059 = vpop.f32.mrb[0].mxu0
      %v2060 = vadd.f32 %v2011, %v2059
      %v2061 = vpop.f32.mrb[0].mxu0
      %v2062 = vpop.f32.mrb[0].mxu0
      %v2063 = vadd.f32 %v2014, %v2062
      %v2064 = vpop.f32.mrb[0].mxu0
      %2065 = vmatprep.mubr.bf16.mxu0 %v844
      %2066 = vmatmul.mubr.bf16.gmra.mrb[0].mxu0 %v843
      %v2067 = vpop.f32.mrb[0].mxu0
      %v2068 = vadd.f32 %v2019, %v2067
      %v2069 = vpop.f32.mrb[0].mxu0
      %v2070 = vpop.f32.mrb[0].mxu0
      %v2071 = vadd.f32 %v2022, %v2070
      %v2072 = vpop.f32.mrb[0].mxu0
      %2073 = vdwg.mxu0
      %2074 = vmatprep.subr.bf16.mxu0 0
      %2075 = vmatpush1.bf16.msra.mxu0 %v1610
      %2076 = vmatprep.subr.bf16.mxu0 0
      %2077 = vmatpush1.bf16.msra.mxu0 %v1613
      %2078 = vmatprep.subr.bf16.mxu0 0
      %2079 = vmatpush1.bf16.msra.mxu0 %v1616
      %2080 = vmatprep.subr.bf16.mxu0 0
      %2081 = vmatpush1.bf16.msra.mxu0 %v1619
      %2082 = vmatprep.subr.bf16.mxu0 0
      %2083 = vmatpush1.bf16.msra.mxu0 %v1622
      %2084 = vmatprep.subr.bf16.mxu0 0
      %2085 = vmatpush1.bf16.msra.mxu0 %v1625
      %2086 = vmatprep.subr.bf16.mxu0 0
      %2087 = vmatpush1.bf16.msra.mxu0 %v1628
      %2088 = vmatprep.subr.bf16.mxu0 0
      %2089 = vmatpush1.bf16.msra.mxu0 %v1631
      %2090 = vmatprep.subr.bf16.mxu0 0
      %2091 = vmatpush1.bf16.msra.mxu0 %v1634
      %2092 = vmatprep.subr.bf16.mxu0 0
      %2093 = vmatpush1.bf16.msra.mxu0 %v1637
      %2094 = vmatprep.subr.bf16.mxu0 0
      %2095 = vmatpush1.bf16.msra.mxu0 %v1640
      %2096 = vmatprep.subr.bf16.mxu0 0
      %2097 = vmatpush1.bf16.msra.mxu0 %v1643
      %2098 = vmatprep.subr.bf16.mxu0 0
      %2099 = vmatpush1.bf16.msra.mxu0 %v1646
      %2100 = vmatprep.subr.bf16.mxu0 0
      %2101 = vmatpush1.bf16.msra.mxu0 %v1649
      %2102 = vmatprep.subr.bf16.mxu0 0
      %2103 = vmatpush1.bf16.msra.mxu0 %v1652
      %2104 = vmatprep.subr.bf16.mxu0 0
      %2105 = vmatpush1.bf16.msra.mxu0 %v1815
      %2106 = vmatprep.mubr.bf16.mxu0 %v1799
      %2107 = vmatmul.mubr.bf16.gmra.mrb[0].mxu0 %v839
      %v2108 = vpop.f32.mrb[0].mxu0
      %v2109 = vadd.f32 %v2060, %v2108
      %v2110 = vpop.f32.mrb[0].mxu0
      %v2111 = vpop.f32.mrb[0].mxu0
      %v2112 = vadd.f32 %v2063, %v2111
      %v2113 = vpop.f32.mrb[0].mxu0
      %2114 = vmatprep.mubr.bf16.mxu0 %v1802
      %2115 = vmatmul.mubr.bf16.gmra.mrb[0].mxu0 %v845
      %v2116 = vpop.f32.mrb[0].mxu0
      %v2117 = vadd.f32 %v2068, %v2116
      %v2118 = vpop.f32.mrb[0].mxu0
      %v2119 = vpop.f32.mrb[0].mxu0
      %v2120 = vadd.f32 %v2071, %v2119
      %v2121 = vpop.f32.mrb[0].mxu0
      %2122 = vdwg.mxu0
      %v2123 = vpack.c.bf16 %v1962, %v1958
      %v2124 = vpack.c.bf16 %v1964, %v1960
      %v2125 = vpack.c.bf16 %v2112, %v2109
      %v2126 = vpack.c.bf16 %v1972, %v1968
      %v2127 = vpack.c.bf16 %v1974, %v1970
      %v2128 = vpack.c.bf16 %v2120, %v2117
      %2135 = vrot.lane.b32.xlu0 %v2123, 127
      %v2136 = vpop.permute.xlu0 %2135
      %2137 = vrot.lane.b32.xlu0 %v2124, 127
      %v2138 = vpop.permute.xlu0 %2137
      %2139 = vrot.lane.b32.xlu0 %v2125, 127
      %v2140 = vpop.permute.xlu0 %2139
      %2141 = vrot.lane.b32.xlu0 %v2126, 127
      %v2142 = vpop.permute.xlu0 %2141
      %2143 = vrot.lane.b32.xlu0 %v2127, 127
      %v2144 = vpop.permute.xlu0 %2143
      %2145 = vrot.lane.b32.xlu0 %v2128, 127
      %v2146 = vpop.permute.xlu0 %2145
      %v2147 = vsel %vm717, %v2136, %v2138
      %v2148 = vsel %vm717, %v2138, %v2140
      %v2149 = vsel %vm717, %v2142, %v2144
      %v2150 = vsel %vm717, %v2144, %v2146
      %2155 = vrot.lane.b32.xlu0 %v2123, 126
      %v2156 = vpop.permute.xlu0 %2155
      %2157 = vrot.lane.b32.xlu0 %v2124, 126
      %v2158 = vpop.permute.xlu0 %2157
      %2159 = vrot.lane.b32.xlu0 %v2125, 126
      %v2160 = vpop.permute.xlu0 %2159
      %2161 = vrot.lane.b32.xlu0 %v2126, 126
      %v2162 = vpop.permute.xlu0 %2161
      %2163 = vrot.lane.b32.xlu0 %v2127, 126
      %v2164 = vpop.permute.xlu0 %2163
      %2165 = vrot.lane.b32.xlu0 %v2128, 126
      %v2166 = vpop.permute.xlu0 %2165
      %vm2167 = vcmask 1031168
      %v2168 = vsel %vm2167, %v2156, %v2158
      %v2169 = vsel %vm2167, %v2158, %v2160
      %v2170 = vsel %vm2167, %v2162, %v2164
      %v2171 = vsel %vm2167, %v2164, %v2166
      %2176 = vrot.lane.b32.xlu0 %v2123, 112
      %v2177 = vpop.permute.xlu0 %2176
      %2178 = vrot.lane.b32.xlu0 %v2124, 112
      %v2179 = vpop.permute.xlu0 %2178
      %2180 = vrot.lane.b32.xlu0 %v2125, 112
      %v2181 = vpop.permute.xlu0 %2180
      %2182 = vrot.lane.b32.xlu0 %v2126, 112
      %v2183 = vpop.permute.xlu0 %2182
      %2184 = vrot.lane.b32.xlu0 %v2127, 112
      %v2185 = vpop.permute.xlu0 %2184
      %2186 = vrot.lane.b32.xlu0 %v2128, 112
      %v2187 = vpop.permute.xlu0 %2186
      %vm2188 = vcmask 916480
      %v2189 = vsel %vm2188, %v2177, %v2179
      %v2190 = vsel %vm2188, %v2179, %v2181
      %v2191 = vsel %vm2188, %v2183, %v2185
      %v2192 = vsel %vm2188, %v2185, %v2187
      %2197 = vrot.lane.b32.xlu0 %v2123, 111
      %v2198 = vpop.permute.xlu0 %2197
      %2199 = vrot.lane.b32.xlu0 %v2124, 111
      %v2200 = vpop.permute.xlu0 %2199
      %2201 = vrot.lane.b32.xlu0 %v2125, 111
      %v2202 = vpop.permute.xlu0 %2201
      %2203 = vrot.lane.b32.xlu0 %v2126, 111
      %v2204 = vpop.permute.xlu0 %2203
      %2205 = vrot.lane.b32.xlu0 %v2127, 111
      %v2206 = vpop.permute.xlu0 %2205
      %2207 = vrot.lane.b32.xlu0 %v2128, 111
      %v2208 = vpop.permute.xlu0 %2207
      %vm2209 = vcmask 908288
      %v2210 = vsel %vm2209, %v2198, %v2200
      %v2211 = vsel %vm2209, %v2200, %v2202
      %v2212 = vsel %vm2209, %v2204, %v2206
      %v2213 = vsel %vm2209, %v2206, %v2208
      %2218 = vrot.lane.b32.xlu0 %v2123, 110
      %v2219 = vpop.permute.xlu0 %2218
      %2220 = vrot.lane.b32.xlu0 %v2124, 110
      %v2221 = vpop.permute.xlu0 %2220
      %2222 = vrot.lane.b32.xlu0 %v2125, 110
      %v2223 = vpop.permute.xlu0 %2222
      %2224 = vrot.lane.b32.xlu0 %v2126, 110
      %v2225 = vpop.permute.xlu0 %2224
      %2226 = vrot.lane.b32.xlu0 %v2127, 110
      %v2227 = vpop.permute.xlu0 %2226
      %2228 = vrot.lane.b32.xlu0 %v2128, 110
      %v2229 = vpop.permute.xlu0 %2228
      %vm2230 = vcmask 900096
      %v2231 = vsel %vm2230, %v2219, %v2221
      %v2232 = vsel %vm2230, %v2221, %v2223
      %v2233 = vsel %vm2230, %v2225, %v2227
      %v2234 = vsel %vm2230, %v2227, %v2229
      %2239 = vrot.lane.b32.xlu0 %v2123, 96
      %v2240 = vpop.permute.xlu0 %2239
      %2241 = vrot.lane.b32.xlu0 %v2124, 96
      %v2242 = vpop.permute.xlu0 %2241
      %2243 = vrot.lane.b32.xlu0 %v2125, 96
      %v2244 = vpop.permute.xlu0 %2243
      %2245 = vrot.lane.b32.xlu0 %v2126, 96
      %v2246 = vpop.permute.xlu0 %2245
      %2247 = vrot.lane.b32.xlu0 %v2127, 96
      %v2248 = vpop.permute.xlu0 %2247
      %2249 = vrot.lane.b32.xlu0 %v2128, 96
      %v2250 = vpop.permute.xlu0 %2249
      %vm2251 = vcmask 785408
      %v2252 = vsel %vm2251, %v2240, %v2242
      %v2253 = vsel %vm2251, %v2242, %v2244
      %v2254 = vsel %vm2251, %v2246, %v2248
      %v2255 = vsel %vm2251, %v2248, %v2250
      %2260 = vrot.lane.b32.xlu0 %v2123, 95
      %v2261 = vpop.permute.xlu0 %2260
      %2262 = vrot.lane.b32.xlu0 %v2124, 95
      %v2263 = vpop.permute.xlu0 %2262
      %2264 = vrot.lane.b32.xlu0 %v2125, 95
      %v2265 = vpop.permute.xlu0 %2264
      %2266 = vrot.lane.b32.xlu0 %v2126, 95
      %v2267 = vpop.permute.xlu0 %2266
      %2268 = vrot.lane.b32.xlu0 %v2127, 95
      %v2269 = vpop.permute.xlu0 %2268
      %2270 = vrot.lane.b32.xlu0 %v2128, 95
      %v2271 = vpop.permute.xlu0 %2270
      %vm2272 = vcmask 777216
      %v2273 = vsel %vm2272, %v2261, %v2263
      %v2274 = vsel %vm2272, %v2263, %v2265
      %v2275 = vsel %vm2272, %v2267, %v2269
      %v2276 = vsel %vm2272, %v2269, %v2271
      %2281 = vrot.lane.b32.xlu0 %v2123, 94
      %v2282 = vpop.permute.xlu0 %2281
      %2283 = vrot.lane.b32.xlu0 %v2124, 94
      %v2284 = vpop.permute.xlu0 %2283
      %2285 = vrot.lane.b32.xlu0 %v2125, 94
      %v2286 = vpop.permute.xlu0 %2285
      %2287 = vrot.lane.b32.xlu0 %v2126, 94
      %v2288 = vpop.permute.xlu0 %2287
      %2289 = vrot.lane.b32.xlu0 %v2127, 94
      %v2290 = vpop.permute.xlu0 %2289
      %2291 = vrot.lane.b32.xlu0 %v2128, 94
      %v2292 = vpop.permute.xlu0 %2291
      %vm2293 = vcmask 769024
      %v2294 = vsel %vm2293, %v2282, %v2284
      %v2295 = vsel %vm2293, %v2284, %v2286
      %v2296 = vsel %vm2293, %v2288, %v2290
      %v2297 = vsel %vm2293, %v2290, %v2292
      %v2302 = vld [vmem:[%s4] sm:$0xff]
      %v2303 = vld [vmem:[%s4 + $0x8] sm:$0xf]
      %v2304 = vld [vmem:[%s4 + $0xc] sm:$0xff]
      %v2305 = vld [vmem:[%s4 + $0x14] sm:$0xf]
      %v2306 = vld [vmem:[%s4 + $0x18] sm:$0xff]
      %v2307 = vld [vmem:[%s4 + $0x20] sm:$0xf]
      %v2308 = vld [vmem:[%s4 + $0x24] sm:$0xff]
      %v2309 = vld [vmem:[%s4 + $0x2c] sm:$0xf]
      %v2310 = vld [vmem:[%s4 + $0x30] sm:$0xff]
      %v2311 = vld [vmem:[%s4 + $0x38] sm:$0xf]
      %v2312 = vld [vmem:[%s4 + $0x3c] sm:$0xff]
      %v2313 = vld [vmem:[%s4 + $0x44] sm:$0xf]
      %v2314 = vld [vmem:[%s4 + $0x48] sm:$0xff]
      %v2315 = vld [vmem:[%s4 + $0x50] sm:$0xf]
      %v2316 = vld [vmem:[%s4 + $0x54] sm:$0xff]
      %v2317 = vld [vmem:[%s4 + $0x5c] sm:$0xf]
      %v2318 = vld [vmem:[%s5] sm:$0xff]
      %v2319 = vld [vmem:[%s5 + $0x8] sm:$0xff]
      %v2320 = vld [vmem:[%s5 + $0x10] sm:$0xff]
      %v2321 = vld [vmem:[%s5 + $0x18] sm:$0xff]
      %v2322 = vld [vmem:[%s5 + $0x20] sm:$0xff]
      %v2323 = vld [vmem:[%s5 + $0x28] sm:$0xff]
      %v2324 = vld [vmem:[%s5 + $0x30] sm:$0xff]
      %v2325 = vld [vmem:[%s5 + $0x38] sm:$0xff]
      %2327 = vset.pattern.permute.xlu0 0
      %2328 = vperm.xlu0 %2327, %v2318
      %v2329 = vpop.permute.xlu0 %2328
      %2332 = vset.pattern.permute.xlu0 0
      %2333 = vperm.xlu0 %2332, %v2319
      %v2334 = vpop.permute.xlu0 %2333
      %2337 = vset.pattern.permute.xlu0 0
      %2338 = vperm.xlu0 %2337, %v2320
      %v2339 = vpop.permute.xlu0 %2338
      %2342 = vset.pattern.permute.xlu0 0
      %2343 = vperm.xlu0 %2342, %v2321
      %v2344 = vpop.permute.xlu0 %2343
      %2347 = vset.pattern.permute.xlu0 0
      %2348 = vperm.xlu0 %2347, %v2322
      %v2349 = vpop.permute.xlu0 %2348
      %2352 = vset.pattern.permute.xlu0 0
      %2353 = vperm.xlu0 %2352, %v2323
      %v2354 = vpop.permute.xlu0 %2353
      %2357 = vset.pattern.permute.xlu0 0
      %2358 = vperm.xlu0 %2357, %v2324
      %v2359 = vpop.permute.xlu0 %2358
      %2362 = vset.pattern.permute.xlu0 0
      %2363 = vperm.xlu0 %2362, %v2325
      %v2364 = vpop.permute.xlu0 %2363
      %v2382 = vunpack.c.l.b16 %v2302
      %v2383 = vunpack.c.h.b16 %v2302
      %v2384 = vunpack.c.l.b16 %v2303
      %v2385 = vunpack.c.l.b16 %v2304
      %v2386 = vunpack.c.h.b16 %v2304
      %v2387 = vunpack.c.l.b16 %v2305
      %v2388 = vunpack.c.l.b16 %v2306
      %v2389 = vunpack.c.h.b16 %v2306
      %v2390 = vunpack.c.l.b16 %v2307
      %v2391 = vunpack.c.l.b16 %v2308
      %v2392 = vunpack.c.h.b16 %v2308
      %v2393 = vunpack.c.l.b16 %v2309
      %v2394 = vunpack.c.l.b16 %v2310
      %v2395 = vunpack.c.h.b16 %v2310
      %v2396 = vunpack.c.l.b16 %v2311
      %v2397 = vunpack.c.l.b16 %v2312
      %v2398 = vunpack.c.h.b16 %v2312
      %v2399 = vunpack.c.l.b16 %v2313
      %v2400 = vunpack.c.l.b16 %v2314
      %v2401 = vunpack.c.h.b16 %v2314
      %v2402 = vunpack.c.l.b16 %v2315
      %v2403 = vunpack.c.l.b16 %v2316
      %v2404 = vunpack.c.h.b16 %v2316
      %v2405 = vunpack.c.l.b16 %v2317
      %v2406 = vpack.c.b16 %v2385, %v2382
      %v2407 = vpack.c.b16 %v2386, %v2383
      %v2408 = vpack.c.b16 %v2387, %v2384
      %v2409 = vpack.c.b16 %v2391, %v2388
      %v2410 = vpack.c.b16 %v2392, %v2389
      %v2411 = vpack.c.b16 %v2393, %v2390
      %v2412 = vpack.c.b16 %v2397, %v2394
      %v2413 = vpack.c.b16 %v2398, %v2395
      %v2414 = vpack.c.b16 %v2399, %v2396
      %v2415 = vpack.c.b16 %v2403, %v2400
      %v2416 = vpack.c.b16 %v2404, %v2401
      %v2417 = vpack.c.b16 %v2405, %v2402
      %vm2426 = vcmask 261120
      %v2428 = vsel %vm2426, %v2408, 0
      %v2431 = vsel %vm2426, %v2411, 0
      %v2434 = vsel %vm2426, %v2414, 0
      %v2437 = vsel %vm2426, %v2417, 0
      %2439 = vmatprep.subr.bf16.mxu0 %v2124
      %2440 = vmatpush1.bf16.msra.mxu0 %v2123
      %2441 = vmatprep.subr.bf16.mxu0 %v2127
      %2442 = vmatpush1.bf16.msra.mxu0 %v2126
      %2443 = vmatprep.subr.bf16.mxu0 %v2148
      %2444 = vmatpush1.bf16.msra.mxu0 %v2147
      %2445 = vmatprep.subr.bf16.mxu0 %v2150
      %2446 = vmatpush1.bf16.msra.mxu0 %v2149
      %2447 = vmatprep.subr.bf16.mxu0 %v2169
      %2448 = vmatpush1.bf16.msra.mxu0 %v2168
      %2449 = vmatprep.subr.bf16.mxu0 %v2171
      %2450 = vmatpush1.bf16.msra.mxu0 %v2170
      %2451 = vmatprep.subr.bf16.mxu0 %v2190
      %2452 = vmatpush1.bf16.msra.mxu0 %v2189
      %2453 = vmatprep.subr.bf16.mxu0 %v2192
      %2454 = vmatpush1.bf16.msra.mxu0 %v2191
      %2455 = vmatprep.subr.bf16.mxu0 %v2211
      %2456 = vmatpush1.bf16.msra.mxu0 %v2210
      %2457 = vmatprep.subr.bf16.mxu0 %v2213
      %2458 = vmatpush1.bf16.msra.mxu0 %v2212
      %2459 = vmatprep.subr.bf16.mxu0 %v2232
      %2460 = vmatpush1.bf16.msra.mxu0 %v2231
      %2461 = vmatprep.subr.bf16.mxu0 %v2234
      %2462 = vmatpush1.bf16.msra.mxu0 %v2233
      %2463 = vmatprep.subr.bf16.mxu0 %v2253
      %2464 = vmatpush1.bf16.msra.mxu0 %v2252
      %2465 = vmatprep.subr.bf16.mxu0 %v2255
      %2466 = vmatpush1.bf16.msra.mxu0 %v2254
      %2467 = vmatprep.subr.bf16.mxu0 %v2274
      %2468 = vmatpush1.bf16.msra.mxu0 %v2273
      %2469 = vmatprep.subr.bf16.mxu0 %v2276
      %2470 = vmatpush1.bf16.msra.mxu0 %v2275
      %2471 = vmatprep.mubr.bf16.mxu0 %v2407
      %2472 = vmatmul.mubr.bf16.gmra.mrb[0].mxu0 %v2406
      %v2473 = vpop.f32.mrb[0].mxu0
      %v2474 = vadd.f32 %v2329, %v2473
      %v2475 = vpop.f32.mrb[0].mxu0
      %v2476 = vadd.f32 %v2329, %v2475
      %v2477 = vpop.f32.mrb[0].mxu0
      %v2478 = vadd.f32 %v2334, %v2477
      %v2479 = vpop.f32.mrb[0].mxu0
      %v2480 = vadd.f32 %v2334, %v2479
      %2481 = vmatprep.mubr.bf16.mxu0 %v2410
      %2482 = vmatmul.mubr.bf16.gmra.mrb[0].mxu0 %v2409
      %v2483 = vpop.f32.mrb[0].mxu0
      %v2484 = vadd.f32 %v2339, %v2483
      %v2485 = vpop.f32.mrb[0].mxu0
      %v2486 = vadd.f32 %v2339, %v2485
      %v2487 = vpop.f32.mrb[0].mxu0
      %v2488 = vadd.f32 %v2344, %v2487
      %v2489 = vpop.f32.mrb[0].mxu0
      %v2490 = vadd.f32 %v2344, %v2489
      %2491 = vmatprep.mubr.bf16.mxu0 %v2413
      %2492 = vmatmul.mubr.bf16.gmra.mrb[0].mxu0 %v2412
      %v2493 = vpop.f32.mrb[0].mxu0
      %v2494 = vadd.f32 %v2349, %v2493
      %v2495 = vpop.f32.mrb[0].mxu0
      %v2496 = vadd.f32 %v2349, %v2495
      %v2497 = vpop.f32.mrb[0].mxu0
      %v2498 = vadd.f32 %v2354, %v2497
      %v2499 = vpop.f32.mrb[0].mxu0
      %v2500 = vadd.f32 %v2354, %v2499
      %2501 = vmatprep.mubr.bf16.mxu0 %v2416
      %2502 = vmatmul.mubr.bf16.gmra.mrb[0].mxu0 %v2415
      %v2503 = vpop.f32.mrb[0].mxu0
      %v2504 = vadd.f32 %v2359, %v2503
      %v2505 = vpop.f32.mrb[0].mxu0
      %v2506 = vadd.f32 %v2359, %v2505
      %v2507 = vpop.f32.mrb[0].mxu0
      %v2508 = vadd.f32 %v2364, %v2507
      %v2509 = vpop.f32.mrb[0].mxu0
      %v2510 = vadd.f32 %v2364, %v2509
      %2511 = vdwg.mxu0
      %2512 = vmatprep.subr.bf16.mxu0 %v2295
      %2513 = vmatpush1.bf16.msra.mxu0 %v2294
      %2514 = vmatprep.subr.bf16.mxu0 %v2297
      %2515 = vmatpush1.bf16.msra.mxu0 %v2296
      %2516 = vmatprep.subr.bf16.mxu0 0
      %2517 = vmatpush1.bf16.msra.mxu0 0
      %2518 = vmatprep.subr.bf16.mxu0 0
      %2519 = vmatpush1.bf16.msra.mxu0 0
      %2520 = vmatprep.subr.bf16.mxu0 0
      %2521 = vmatpush1.bf16.msra.mxu0 0
      %2522 = vmatprep.subr.bf16.mxu0 0
      %2523 = vmatpush1.bf16.msra.mxu0 0
      %2524 = vmatprep.subr.bf16.mxu0 0
      %2525 = vmatpush1.bf16.msra.mxu0 0
      %2526 = vmatprep.subr.bf16.mxu0 0
      %2527 = vmatpush1.bf16.msra.mxu0 0
      %2528 = vmatprep.subr.bf16.mxu0 0
      %2529 = vmatpush1.bf16.msra.mxu0 0
      %2530 = vmatprep.subr.bf16.mxu0 0
      %2531 = vmatpush1.bf16.msra.mxu0 0
      %2532 = vmatprep.subr.bf16.mxu0 0
      %2533 = vmatpush1.bf16.msra.mxu0 0
      %2534 = vmatprep.subr.bf16.mxu0 0
      %2535 = vmatpush1.bf16.msra.mxu0 0
      %2536 = vmatprep.subr.bf16.mxu0 0
      %2537 = vmatpush1.bf16.msra.mxu0 0
      %2538 = vmatprep.subr.bf16.mxu0 0
      %2539 = vmatpush1.bf16.msra.mxu0 0
      %2540 = vmatprep.subr.bf16.mxu0 0
      %2541 = vmatpush1.bf16.msra.mxu0 0
      %2542 = vmatprep.subr.bf16.mxu0 0
      %2543 = vmatpush1.bf16.msra.mxu0 0
      %2544 = vmatprep.mubr.bf16.mxu0 0
      %2545 = vmatmul.mubr.bf16.gmra.mrb[0].mxu0 %v2428
      %v2546 = vpop.f32.mrb[0].mxu0
      %v2547 = vadd.f32 %v2474, %v2546
      %v2548 = vpop.f32.mrb[0].mxu0
      %v2549 = vadd.f32 %v2476, %v2548
      %v2550 = vpop.f32.mrb[0].mxu0
      %v2551 = vadd.f32 %v2478, %v2550
      %v2552 = vpop.f32.mrb[0].mxu0
      %v2553 = vadd.f32 %v2480, %v2552
      %2554 = vmatprep.mubr.bf16.mxu0 0
      %2555 = vmatmul.mubr.bf16.gmra.mrb[0].mxu0 %v2431
      %v2556 = vpop.f32.mrb[0].mxu0
      %v2557 = vadd.f32 %v2484, %v2556
      %v2558 = vpop.f32.mrb[0].mxu0
      %v2559 = vadd.f32 %v2486, %v2558
      %v2560 = vpop.f32.mrb[0].mxu0
      %v2561 = vadd.f32 %v2488, %v2560
      %v2562 = vpop.f32.mrb[0].mxu0
      %v2563 = vadd.f32 %v2490, %v2562
      %2564 = vmatprep.mubr.bf16.mxu0 0
      %2565 = vmatmul.mubr.bf16.gmra.mrb[0].mxu0 %v2434
      %v2566 = vpop.f32.mrb[0].mxu0
      %v2567 = vadd.f32 %v2494, %v2566
      %v2568 = vpop.f32.mrb[0].mxu0
      %v2569 = vadd.f32 %v2496, %v2568
      %v2570 = vpop.f32.mrb[0].mxu0
      %v2571 = vadd.f32 %v2498, %v2570
      %v2572 = vpop.f32.mrb[0].mxu0
      %v2573 = vadd.f32 %v2500, %v2572
      %2574 = vmatprep.mubr.bf16.mxu0 0
      %2575 = vmatmul.mubr.bf16.gmra.mrb[0].mxu0 %v2437
      %v2576 = vpop.f32.mrb[0].mxu0
      %v2577 = vadd.f32 %v2504, %v2576
      %v2578 = vpop.f32.mrb[0].mxu0
      %v2579 = vadd.f32 %v2506, %v2578
      %v2580 = vpop.f32.mrb[0].mxu0
      %v2581 = vadd.f32 %v2508, %v2580
      %v2582 = vpop.f32.mrb[0].mxu0
      %v2583 = vadd.f32 %v2510, %v2582
      %2584 = vdwg.mxu0
      %v2585 = vmax.f32 %v2547, 0.0
      %v2586 = vmax.f32 %v2549, 0.0
      %v2587 = vmax.f32 %v2551, 0.0
      %v2588 = vmax.f32 %v2553, 0.0
      %v2589 = vmax.f32 %v2557, 0.0
      %v2590 = vmax.f32 %v2559, 0.0
      %v2591 = vmax.f32 %v2561, 0.0
      %v2592 = vmax.f32 %v2563, 0.0
      %v2593 = vmax.f32 %v2567, 0.0
      %v2594 = vmax.f32 %v2569, 0.0
      %v2595 = vmax.f32 %v2571, 0.0
      %v2596 = vmax.f32 %v2573, 0.0
      %v2597 = vmax.f32 %v2577, 0.0
      %v2598 = vmax.f32 %v2579, 0.0
      %v2599 = vmax.f32 %v2581, 0.0
      %v2600 = vmax.f32 %v2583, 0.0
      %v2601 = vpack.c.bf16 %v2587, %v2585
      %v2602 = vpack.c.bf16 %v2588, %v2586
      %v2603 = vpack.c.bf16 %v2591, %v2589
      %v2604 = vpack.c.bf16 %v2592, %v2590
      %v2605 = vpack.c.bf16 %v2595, %v2593
      %v2606 = vpack.c.bf16 %v2596, %v2594
      %v2607 = vpack.c.bf16 %v2599, %v2597
      %v2608 = vpack.c.bf16 %v2600, %v2598
      %2617 = vrot.lane.b32.xlu0 %v2601, 127
      %v2618 = vpop.permute.xlu0 %2617
      %2619 = vrot.lane.b32.xlu0 %v2602, 127
      %v2620 = vpop.permute.xlu0 %2619
      %2621 = vrot.lane.b32.xlu0 %v2603, 127
      %v2622 = vpop.permute.xlu0 %2621
      %2623 = vrot.lane.b32.xlu0 %v2604, 127
      %v2624 = vpop.permute.xlu0 %2623
      %2625 = vrot.lane.b32.xlu0 %v2605, 127
      %v2626 = vpop.permute.xlu0 %2625
      %2627 = vrot.lane.b32.xlu0 %v2606, 127
      %v2628 = vpop.permute.xlu0 %2627
      %2629 = vrot.lane.b32.xlu0 %v2607, 127
      %v2630 = vpop.permute.xlu0 %2629
      %2631 = vrot.lane.b32.xlu0 %v2608, 127
      %v2632 = vpop.permute.xlu0 %2631
      %v2633 = vsel %vm717, %v2618, %v2620
      %v2634 = vsel %vm717, %v2622, %v2624
      %v2635 = vsel %vm717, %v2626, %v2628
      %v2636 = vsel %vm717, %v2630, %v2632
      %v2645 = vmax.bf16 %v2601, %v2633
      %v2646 = vmax.bf16 %v2602, %v2620
      %v2647 = vmax.bf16 %v2603, %v2634
      %v2648 = vmax.bf16 %v2604, %v2624
      %v2649 = vmax.bf16 %v2605, %v2635
      %v2650 = vmax.bf16 %v2606, %v2628
      %v2651 = vmax.bf16 %v2607, %v2636
      %v2652 = vmax.bf16 %v2608, %v2632
      %2661 = vrot.lane.b32.xlu0 %v2645, 112
      %v2662 = vpop.permute.xlu0 %2661
      %2663 = vrot.lane.b32.xlu0 %v2646, 112
      %v2664 = vpop.permute.xlu0 %2663
      %2665 = vrot.lane.b32.xlu0 %v2647, 112
      %v2666 = vpop.permute.xlu0 %2665
      %2667 = vrot.lane.b32.xlu0 %v2648, 112
      %v2668 = vpop.permute.xlu0 %2667
      %2669 = vrot.lane.b32.xlu0 %v2649, 112
      %v2670 = vpop.permute.xlu0 %2669
      %2671 = vrot.lane.b32.xlu0 %v2650, 112
      %v2672 = vpop.permute.xlu0 %2671
      %2673 = vrot.lane.b32.xlu0 %v2651, 112
      %v2674 = vpop.permute.xlu0 %2673
      %2675 = vrot.lane.b32.xlu0 %v2652, 112
      %v2676 = vpop.permute.xlu0 %2675
      %v2677 = vsel %vm2188, %v2662, %v2664
      %v2678 = vsel %vm2188, %v2666, %v2668
      %v2679 = vsel %vm2188, %v2670, %v2672
      %v2680 = vsel %vm2188, %v2674, %v2676
      %v2689 = vmax.bf16 %v2645, %v2677
      %v2690 = vmax.bf16 %v2646, %v2664
      %v2691 = vmax.bf16 %v2647, %v2678
      %v2692 = vmax.bf16 %v2648, %v2668
      %v2693 = vmax.bf16 %v2649, %v2679
      %v2694 = vmax.bf16 %v2650, %v2672
      %v2695 = vmax.bf16 %v2651, %v2680
      %v2696 = vmax.bf16 %v2652, %v2676
      %v2697 = vld [vmem:[%s6] sm:$0xf]
      %v2698 = vld [vmem:[%s6 + $0x4] sm:$0xf]
      %v2699 = vld [vmem:[%s6 + $0x8] sm:$0xf]
      %v2700 = vld [vmem:[%s6 + $0xc] sm:$0xf]
      %v2701 = vld [vmem:[%s6 + $0x10] sm:$0xf]
      %v2702 = vld [vmem:[%s6 + $0x14] sm:$0xf]
      %v2703 = vld [vmem:[%s6 + $0x18] sm:$0xf]
      %v2704 = vld [vmem:[%s6 + $0x1c] sm:$0xf]
      %v2705 = vld [vmem:[%s6 + $0x20] sm:$0xf]
      %v2706 = vld [vmem:[%s6 + $0x24] sm:$0xf]
      %v2707 = vld [vmem:[%s6 + $0x28] sm:$0xf]
      %v2708 = vld [vmem:[%s6 + $0x2c] sm:$0xf]
      %v2709 = vld [vmem:[%s6 + $0x30] sm:$0xf]
      %v2710 = vld [vmem:[%s6 + $0x34] sm:$0xf]
      %v2711 = vld [vmem:[%s6 + $0x38] sm:$0xf]
      %v2712 = vld [vmem:[%s6 + $0x3c] sm:$0xf]
      %v2713 = vld [vmem:[%s6 + $0x40] sm:$0xf]
      %v2714 = vld [vmem:[%s6 + $0x44] sm:$0xf]
      %v2715 = vld [vmem:[%s6 + $0x48] sm:$0xf]
      %v2716 = vld [vmem:[%s6 + $0x4c] sm:$0xf]
      %v2717 = vld [vmem:[%s6 + $0x50] sm:$0xf]
      %v2718 = vld [vmem:[%s6 + $0x54] sm:$0xf]
      %v2719 = vld [vmem:[%s6 + $0x58] sm:$0xf]
      %v2720 = vld [vmem:[%s6 + $0x5c] sm:$0xf]
      %v2721 = vld [vmem:[%s6 + $0x60] sm:$0xf]
      %v2722 = vld [vmem:[%s6 + $0x64] sm:$0xf]
      %v2723 = vld [vmem:[%s6 + $0x68] sm:$0xf]
      %v2724 = vld [vmem:[%s6 + $0x6c] sm:$0xf]
      %v2725 = vld [vmem:[%s6 + $0x70] sm:$0xf]
      %v2726 = vld [vmem:[%s6 + $0x74] sm:$0xf]
      %v2757 = vunpack.c.l.b16 %v2697
      %v2758 = vunpack.c.l.b16 %v2698
      %v2759 = vunpack.c.l.b16 %v2699
      %v2760 = vunpack.c.l.b16 %v2700
      %v2761 = vunpack.c.l.b16 %v2701
      %v2762 = vunpack.c.l.b16 %v2702
      %v2763 = vunpack.c.l.b16 %v2703
      %v2764 = vunpack.c.l.b16 %v2704
      %v2765 = vunpack.c.l.b16 %v2705
      %v2766 = vunpack.c.l.b16 %v2706
      %v2767 = vunpack.c.l.b16 %v2707
      %v2768 = vunpack.c.l.b16 %v2708
      %v2769 = vunpack.c.l.b16 %v2709
      %v2770 = vunpack.c.l.b16 %v2710
      %v2771 = vunpack.c.l.b16 %v2711
      %v2772 = vunpack.c.l.b16 %v2712
      %v2773 = vunpack.c.l.b16 %v2713
      %v2774 = vunpack.c.l.b16 %v2714
      %v2775 = vunpack.c.l.b16 %v2715
      %v2776 = vunpack.c.l.b16 %v2716
      %v2777 = vunpack.c.l.b16 %v2717
      %v2778 = vunpack.c.l.b16 %v2718
      %v2779 = vunpack.c.l.b16 %v2719
      %v2780 = vunpack.c.l.b16 %v2720
      %v2781 = vunpack.c.l.b16 %v2721
      %v2782 = vunpack.c.l.b16 %v2722
      %v2783 = vunpack.c.l.b16 %v2723
      %v2784 = vunpack.c.l.b16 %v2724
      %v2785 = vunpack.c.l.b16 %v2725
      %v2786 = vunpack.c.l.b16 %v2726
      %v2787 = vpack.c.b16 %v2758, %v2757
      %v2788 = vpack.c.b16 %v2760, %v2759
      %v2789 = vpack.c.b16 %v2762, %v2761
      %v2790 = vpack.c.b16 %v2764, %v2763
      %v2791 = vpack.c.b16 %v2766, %v2765
      %v2792 = vpack.c.b16 %v2768, %v2767
      %v2793 = vpack.c.b16 %v2770, %v2769
      %v2794 = vpack.c.b16 %v2772, %v2771
      %v2795 = vpack.c.b16 %v2774, %v2773
      %v2796 = vpack.c.b16 %v2776, %v2775
      %v2797 = vpack.c.b16 %v2778, %v2777
      %v2798 = vpack.c.b16 %v2780, %v2779
      %v2799 = vpack.c.b16 %v2782, %v2781
      %v2800 = vpack.c.b16 %v2784, %v2783
      %v2801 = vpack.c.b16 %v2786, %v2785
      %vm2816 = vcmask 908288
      %v2818 = vsel %vm2816, %v2690, 0
      %v2821 = vsel %vm2816, %v2692, 0
      %v2824 = vsel %vm2816, %v2694, 0
      %v2827 = vsel %vm2816, %v2696, 0
      %vm2829 = vcmask 1046528
      %vm2830 = vcmask 1047552
      %v2831 = vsel %vm2829, 4294967295, 65535
      %v2832 = vsel %vm2830, %v2831, 0
      %v2834 = vand.u32 %v2801, %v2832
      %2836 = vmatprep.subr.bf16.mxu0 0
      %2837 = vmatpush1.bf16.msra.mxu0 %v2787
      %2838 = vmatprep.subr.bf16.mxu0 0
      %2839 = vmatpush1.bf16.msra.mxu0 %v2788
      %2840 = vmatprep.subr.bf16.mxu0 0
      %2841 = vmatpush1.bf16.msra.mxu0 %v2789
      %2842 = vmatprep.subr.bf16.mxu0 0
      %2843 = vmatpush1.bf16.msra.mxu0 %v2790
      %2844 = vmatprep.subr.bf16.mxu0 0
      %2845 = vmatpush1.bf16.msra.mxu0 %v2791
      %2846 = vmatprep.subr.bf16.mxu0 0
      %2847 = vmatpush1.bf16.msra.mxu0 %v2792
      %2848 = vmatprep.subr.bf16.mxu0 0
      %2849 = vmatpush1.bf16.msra.mxu0 %v2793
      %2850 = vmatprep.subr.bf16.mxu0 0
      %2851 = vmatpush1.bf16.msra.mxu0 %v2794
      %2852 = vmatprep.subr.bf16.mxu0 0
      %2853 = vmatpush1.bf16.msra.mxu0 %v2795
      %2854 = vmatprep.subr.bf16.mxu0 0
      %2855 = vmatpush1.bf16.msra.mxu0 %v2796
      %2856 = vmatprep.subr.bf16.mxu0 0
      %2857 = vmatpush1.bf16.msra.mxu0 %v2797
      %2858 = vmatprep.subr.bf16.mxu0 0
      %2859 = vmatpush1.bf16.msra.mxu0 %v2798
      %2860 = vmatprep.subr.bf16.mxu0 0
      %2861 = vmatpush1.bf16.msra.mxu0 %v2799
      %2862 = vmatprep.subr.bf16.mxu0 0
      %2863 = vmatpush1.bf16.msra.mxu0 %v2800
      %2864 = vmatprep.subr.bf16.mxu0 0
      %2865 = vmatpush1.bf16.msra.mxu0 %v2834
      %2866 = vmatprep.subr.bf16.mxu0 0
      %2867 = vmatpush1.bf16.msra.mxu0 0
      %2868 = vmatprep.mubr.bf16.mxu0 %v2818
      %2869 = vmatmul.mubr.bf16.gmra.mrb[0].mxu0 %v2689
      %v2870 = vpop.f32.mrb[0].mxu0
      %v2871 = vadd.f32 0.0, %v2870
      %v2872 = vpop.f32.mrb[0].mxu0
      %v2873 = vpop.f32.mrb[0].mxu0
      %v2874 = vadd.f32 0.0, %v2873
      %v2875 = vpop.f32.mrb[0].mxu0
      %2876 = vmatprep.mubr.bf16.mxu0 %v2821
      %2877 = vmatmul.mubr.bf16.gmra.mrb[0].mxu0 %v2691
      %v2878 = vpop.f32.mrb[0].mxu0
      %v2879 = vadd.f32 0.0, %v2878
      %v2880 = vpop.f32.mrb[0].mxu0
      %v2881 = vpop.f32.mrb[0].mxu0
      %v2882 = vadd.f32 0.0, %v2881
      %v2883 = vpop.f32.mrb[0].mxu0
      %2884 = vmatprep.mubr.bf16.mxu0 %v2824
      %2885 = vmatmul.mubr.bf16.gmra.mrb[0].mxu0 %v2693
      %v2886 = vpop.f32.mrb[0].mxu0
      %v2887 = vadd.f32 0.0, %v2886
      %v2888 = vpop.f32.mrb[0].mxu0
      %v2889 = vpop.f32.mrb[0].mxu0
      %v2890 = vadd.f32 0.0, %v2889
      %v2891 = vpop.f32.mrb[0].mxu0
      %2892 = vmatprep.mubr.bf16.mxu0 %v2827
      %2893 = vmatmul.mubr.bf16.gmra.mrb[0].mxu0 %v2695
      %v2894 = vpop.f32.mrb[0].mxu0
      %v2895 = vadd.f32 0.0, %v2894
      %v2896 = vpop.f32.mrb[0].mxu0
      %v2897 = vpop.f32.mrb[0].mxu0
      %v2898 = vadd.f32 0.0, %v2897
      %v2899 = vpop.f32.mrb[0].mxu0
      %2900 = vdwg.mxu0
      %v2901 = vpack.c.bf16 %v2874, %v2871
      %v2902 = vpack.c.bf16 %v2882, %v2879
      %v2903 = vpack.c.bf16 %v2890, %v2887
      %v2904 = vpack.c.bf16 %v2898, %v2895
      %v2909 = vunpack.c.l.b16 %v2901
      %v2910 = vunpack.c.h.b16 %v2901
      %v2911 = vunpack.c.l.b16 %v2902
      %v2912 = vunpack.c.h.b16 %v2902
      %v2913 = vunpack.c.l.b16 %v2903
      %v2914 = vunpack.c.h.b16 %v2903
      %v2915 = vunpack.c.l.b16 %v2904
      %v2916 = vunpack.c.h.b16 %v2904
      %v2917 = vpack.c.b16 %v2909, %v2909
      %v2918 = vpack.c.b16 %v2910, %v2910
      %v2919 = vpack.c.b16 %v2911, %v2911
      %v2920 = vpack.c.b16 %v2912, %v2912
      %v2921 = vpack.c.b16 %v2913, %v2913
      %v2922 = vpack.c.b16 %v2914, %v2914
      %v2923 = vpack.c.b16 %v2915, %v2915
      %v2924 = vpack.c.b16 %v2916, %v2916
      %vm2933 = vcmask 396288
      %2934 = vst.msk [vmem:[%s278] sm:$0xf] %vm2933, %v2917
      %2935 = vst.msk [vmem:[%s278 + $0x4] sm:$0xf] %vm2933, %v2918
      %2936 = vst.msk [vmem:[%s278 + $0x8] sm:$0xf] %vm2933, %v2919
      %2937 = vst.msk [vmem:[%s278 + $0xc] sm:$0xf] %vm2933, %v2920
      %2938 = vst.msk [vmem:[%s278 + $0x10] sm:$0xf] %vm2933, %v2921
      %2939 = vst.msk [vmem:[%s278 + $0x14] sm:$0xf] %vm2933, %v2922
      %2940 = vst.msk [vmem:[%s278 + $0x18] sm:$0xf] %vm2933, %v2923
      %2941 = vst.msk [vmem:[%s278 + $0x1c] sm:$0xf] %vm2933, %v2924
      %p2942 = scmp.lt.s32.totalorder %s18, 1
      %s2943 = scalar_select %p2942, %s18, 1
      %s2944 = smul.addr %s2943, 8
      %s2945 = smul.addr %s2944, 4
      %s2946 = scalar_lea.vmem %s7, %s2945
      // Predicated region
      $region49: #{vae_conv_forward.3} parent=47 // pred_check
        %p2947 = pneg %p188
      $region50: #{vae_conv_forward.3} parent=47 // pred_check_branch
        %2949 = sbr.rel (%p2947) target = $region52
      $region51: #{vae_conv_forward.3} parent=47 // pred_region
        _
      $region52: #{vae_conv_forward.3} parent=47 // pred_fallthru
        _
    $region48: #{vae_conv_forward.3} parent=5 // pred_fallthru
      _
    %p2950 = scmp.le.s32.totalorder 2, %s13
    // Predicated region
    $region53: #{vae_conv_forward.3} parent=5 // pred_check
      %p2951 = pneg %p2950
    $region54: #{vae_conv_forward.3} parent=5 // pred_check_branch
      %2953 = sbr.rel (%p2951) target = $region56
    $region55: #{vae_conv_forward.3} parent=5 // pred_region
      %s2954 = ssub.s32 %s13, 2
      // Predicated region
      $region57: #{vae_conv_forward.3} parent=55 // pred_check
        %p2955 = pneg %p194
      $region58: #{vae_conv_forward.3} parent=55 // pred_check_branch
        %2957 = sbr.rel (%p2955) target = $region60
      $region59: #{vae_conv_forward.3} parent=55 // pred_region
        %p2958 = scmp.lt.s32.totalorder %s19, 1
        %s2959 = scalar_select %p2958, %s19, 1
        %s2960 = smul.addr %s2959, 8
        %s2961 = smul.addr %s2960, 4
        %s2962 = scalar_lea.vmem %s7, %s2961
      $region60: #{vae_conv_forward.3} parent=55 // pred_fallthru
        _
    $region56: #{vae_conv_forward.3} parent=5 // pred_fallthru
      _
  $region6: #{vae_conv_forward.3} parent=0 // loop_footer
    %s17 = sadd.s32 1, %s13
  $region7: #{vae_conv_forward.3} parent=0 // loop_footer_branch
    %12 = sbr.rel target = $region3
  $region8: #{vae_conv_forward.3} parent=0 // loop_exit
    _

// kernel: vae_conv_forward.5
$region0: #{vae_conv_forward.5}
  #allocation0 [shape = 'u32[]', space=smem, size = 0x4, offset = 0x4, fixed_abs, tag = 'smem constant byte address 0x4 - core index']
  #allocation1 [shape = 'u32[144,128]{1,0:T(1,128)}', space=vmem, size = 0x12000, scoped, tag = 'internal scratch']
  %s0 = inlined_call_operand.vmem [shape: bf16[2,64,101], index: 0, kind: input, shape index: {}]
  %s1 = inlined_call_operand.vmem [shape: bf16[32,576], index: 1, kind: input, shape index: {}]
  %s2 = inlined_call_operand.vmem [shape: f32[32,1], index: 2, kind: input, shape index: {}]
  %s3 = inlined_call_operand.vmem [shape: bf16[81,290], index: 3, kind: input, shape index: {}]
  %s4 = inlined_call_operand.vmem [shape: bf16[3,288], index: 4, kind: input, shape index: {}]
  %s5 = inlined_call_operand.vmem [shape: f32[3,1], index: 5, kind: input, shape index: {}]
  %s6 = inlined_call_operand.vmem [shape: bf16[256,784], index: 6, kind: input, shape index: {}]
  %s7 = inlined_call_operand.vmem [shape: f32[2,3,784], index: 7, kind: output, shape index: {}]
  %s8 = sld [smem:[#allocation0]]
  $region61: #{vae_conv_forward.5} parent=0
    _
  %s10 = ssub.s32 1, %s8
  %s11 = scalar_select 0, %s10, %s8
  loop: start=0, step=1, limit=4
  $region2: #{vae_conv_forward.5} parent=0 // loop_pre_header
    _
  $region3: #{vae_conv_forward.5} parent=0 // loop_header
    %s13 = sphi 0, %s17
    %p14 = scmp.ge.s32.totalorder %s13, 4
    %s23 = sphi 0, %s25
    %s26 = sphi 0, %s23
    %s27 = sphi 0, %s26
    %s43 = sphi 0, %s27
    %s47 = sphi 0, %s47
    %s49 = sphi 0, %s47
    %s50 = sphi 0, %s49
    %s64 = sphi 0, %s50
    %s68 = sphi 0, %s68
    %s70 = sphi 0, %s68
    %s71 = sphi 0, %s70
    %s85 = sphi 0, %s71
    %s89 = sphi 0, %s89
    %s91 = sphi 0, %s89
    %s92 = sphi 0, %s91
    %s106 = sphi 0, %s92
    %s110 = sphi 0, %s110
    %s112 = sphi 0, %s110
    %s113 = sphi 0, %s112
    %s127 = sphi 0, %s113
    %s131 = sphi 0, %s131
    %s133 = sphi 0, %s131
    %s134 = sphi 0, %s133
    %s148 = sphi 0, %s134
    %s152 = sphi 0, %s152
    %s154 = sphi 0, %s152
    %s155 = sphi 0, %s154
    %s169 = sphi 0, %s155
    %s175 = sphi 0, %s177
    %s178 = sphi 0, %s175
    %s179 = sphi 0, %s178
    %s195 = sphi 0, %s179
  $region4: #{vae_conv_forward.5} parent=0 // loop_header_branch
    %16 = sbr.rel (%p14) target = $region8
  $region5: #{vae_conv_forward.5} parent=0 // loop_body
    %s18 = ssub.s32 %s13, 1
    %s19 = ssub.s32 %s13, 2
    %s20 = sadd.s32 %s13, 1
    %s21 = ssub.s32 %s13, %s20
    %p22 = scmp.eq.s32.totalorder %s21, 0
    %s24 = sadd.s32 %s23, 1
    %s25 = scalar_select %p22, %s23, %s24
    %p28 = pneg %p22
    %p29 = scmp.eq.s32.totalorder %s13, 1
    %p30 = por %p28, %p29
    %p31 = scmp.ne.s32.totalorder %s23, %s26
    %p32 = scmp.eq.s32.totalorder %s13, 0
    %p33 = por %p31, %p32
    %p34 = scmp.ne.s32.totalorder %s23, %s26
    %p35 = scmp.eq.s32.totalorder %s18, 1
    %p36 = por %p34, %p35
    %p37 = scmp.ne.s32.totalorder %s26, %s27
    %p38 = scmp.eq.s32.totalorder %s18, 0
    %p39 = por %p37, %p38
    %p40 = scmp.ne.s32.totalorder %s26, %s27
    %p41 = scmp.eq.s32.totalorder %s19, 1
    %p42 = por %p40, %p41
    %p44 = scmp.ne.s32.totalorder %s27, %s43
    %p45 = scmp.eq.s32.totalorder %s19, 0
    %p46 = por %p44, %p45
    %s48 = sadd.s32 %s47, 1
    %p51 = scmp.eq.s32.totalorder %s13, 1
    %p52 = scmp.ne.s32.totalorder %s47, %s49
    %p53 = scmp.eq.s32.totalorder %s13, 0
    %p54 = por %p52, %p53
    %p55 = scmp.ne.s32.totalorder %s47, %s49
    %p56 = scmp.eq.s32.totalorder %s18, 1
    %p57 = por %p55, %p56
    %p58 = scmp.ne.s32.totalorder %s49, %s50
    %p59 = scmp.eq.s32.totalorder %s18, 0
    %p60 = por %p58, %p59
    %p61 = scmp.ne.s32.totalorder %s49, %s50
    %p62 = scmp.eq.s32.totalorder %s19, 1
    %p63 = por %p61, %p62
    %p65 = scmp.ne.s32.totalorder %s50, %s64
    %p66 = scmp.eq.s32.totalorder %s19, 0
    %p67 = por %p65, %p66
    %s69 = sadd.s32 %s68, 1
    %p72 = scmp.eq.s32.totalorder %s13, 1
    %p73 = scmp.ne.s32.totalorder %s68, %s70
    %p74 = scmp.eq.s32.totalorder %s13, 0
    %p75 = por %p73, %p74
    %p76 = scmp.ne.s32.totalorder %s68, %s70
    %p77 = scmp.eq.s32.totalorder %s18, 1
    %p78 = por %p76, %p77
    %p79 = scmp.ne.s32.totalorder %s70, %s71
    %p80 = scmp.eq.s32.totalorder %s18, 0
    %p81 = por %p79, %p80
    %p82 = scmp.ne.s32.totalorder %s70, %s71
    %p83 = scmp.eq.s32.totalorder %s19, 1
    %p84 = por %p82, %p83
    %p86 = scmp.ne.s32.totalorder %s71, %s85
    %p87 = scmp.eq.s32.totalorder %s19, 0
    %p88 = por %p86, %p87
    %s90 = sadd.s32 %s89, 1
    %p93 = scmp.eq.s32.totalorder %s13, 1
    %p94 = scmp.ne.s32.totalorder %s89, %s91
    %p95 = scmp.eq.s32.totalorder %s13, 0
    %p96 = por %p94, %p95
    %p97 = scmp.ne.s32.totalorder %s89, %s91
    %p98 = scmp.eq.s32.totalorder %s18, 1
    %p99 = por %p97, %p98
    %p100 = scmp.ne.s32.totalorder %s91, %s92
    %p101 = scmp.eq.s32.totalorder %s18, 0
    %p102 = por %p100, %p101
    %p103 = scmp.ne.s32.totalorder %s91, %s92
    %p104 = scmp.eq.s32.totalorder %s19, 1
    %p105 = por %p103, %p104
    %p107 = scmp.ne.s32.totalorder %s92, %s106
    %p108 = scmp.eq.s32.totalorder %s19, 0
    %p109 = por %p107, %p108
    %s111 = sadd.s32 %s110, 1
    %p114 = scmp.eq.s32.totalorder %s13, 1
    %p115 = scmp.ne.s32.totalorder %s110, %s112
    %p116 = scmp.eq.s32.totalorder %s13, 0
    %p117 = por %p115, %p116
    %p118 = scmp.ne.s32.totalorder %s110, %s112
    %p119 = scmp.eq.s32.totalorder %s18, 1
    %p120 = por %p118, %p119
    %p121 = scmp.ne.s32.totalorder %s112, %s113
    %p122 = scmp.eq.s32.totalorder %s18, 0
    %p123 = por %p121, %p122
    %p124 = scmp.ne.s32.totalorder %s112, %s113
    %p125 = scmp.eq.s32.totalorder %s19, 1
    %p126 = por %p124, %p125
    %p128 = scmp.ne.s32.totalorder %s113, %s127
    %p129 = scmp.eq.s32.totalorder %s19, 0
    %p130 = por %p128, %p129
    %s132 = sadd.s32 %s131, 1
    %p135 = scmp.eq.s32.totalorder %s13, 1
    %p136 = scmp.ne.s32.totalorder %s131, %s133
    %p137 = scmp.eq.s32.totalorder %s13, 0
    %p138 = por %p136, %p137
    %p139 = scmp.ne.s32.totalorder %s131, %s133
    %p140 = scmp.eq.s32.totalorder %s18, 1
    %p141 = por %p139, %p140
    %p142 = scmp.ne.s32.totalorder %s133, %s134
    %p143 = scmp.eq.s32.totalorder %s18, 0
    %p144 = por %p142, %p143
    %p145 = scmp.ne.s32.totalorder %s133, %s134
    %p146 = scmp.eq.s32.totalorder %s19, 1
    %p147 = por %p145, %p146
    %p149 = scmp.ne.s32.totalorder %s134, %s148
    %p150 = scmp.eq.s32.totalorder %s19, 0
    %p151 = por %p149, %p150
    %s153 = sadd.s32 %s152, 1
    %p156 = scmp.eq.s32.totalorder %s13, 1
    %p157 = scmp.ne.s32.totalorder %s152, %s154
    %p158 = scmp.eq.s32.totalorder %s13, 0
    %p159 = por %p157, %p158
    %p160 = scmp.ne.s32.totalorder %s152, %s154
    %p161 = scmp.eq.s32.totalorder %s18, 1
    %p162 = por %p160, %p161
    %p163 = scmp.ne.s32.totalorder %s154, %s155
    %p164 = scmp.eq.s32.totalorder %s18, 0
    %p165 = por %p163, %p164
    %p166 = scmp.ne.s32.totalorder %s154, %s155
    %p167 = scmp.eq.s32.totalorder %s19, 1
    %p168 = por %p166, %p167
    %p170 = scmp.ne.s32.totalorder %s155, %s169
    %p171 = scmp.eq.s32.totalorder %s19, 0
    %p172 = por %p170, %p171
    %s173 = ssub.s32 %s13, %s20
    %p174 = scmp.eq.s32.totalorder %s173, 0
    %s176 = sadd.s32 %s175, 1
    %s177 = scalar_select %p174, %s175, %s176
    %p180 = pneg %p174
    %p181 = scmp.eq.s32.totalorder %s13, 1
    %p182 = por %p180, %p181
    %p183 = scmp.ne.s32.totalorder %s175, %s178
    %p184 = scmp.eq.s32.totalorder %s13, 0
    %p185 = por %p183, %p184
    %p186 = scmp.ne.s32.totalorder %s175, %s178
    %p187 = scmp.eq.s32.totalorder %s18, 1
    %p188 = por %p186, %p187
    %p189 = scmp.ne.s32.totalorder %s178, %s179
    %p190 = scmp.eq.s32.totalorder %s18, 0
    %p191 = por %p189, %p190
    %p192 = scmp.ne.s32.totalorder %s178, %s179
    %p193 = scmp.eq.s32.totalorder %s19, 1
    %p194 = por %p192, %p193
    %p196 = scmp.ne.s32.totalorder %s179, %s195
    %p197 = scmp.eq.s32.totalorder %s19, 0
    %p198 = por %p196, %p197
    %p199 = scmp.le.s32.totalorder 1, %s13
    %p200 = scmp.lt.s32.totalorder %s13, 3
    %p201 = pnand %p199, %p200
    %p202 = pneg %p201
    // Predicated region
    $region9: #{vae_conv_forward.5} parent=5 // pred_check
      _
    $region10: #{vae_conv_forward.5} parent=5 // pred_check_branch
      %204 = sbr.rel (%p201) target = $region12
    $region11: #{vae_conv_forward.5} parent=5 // pred_region
      %s205 = ssub.s32 %s13, 1
      // Predicated region
      $region13: #{vae_conv_forward.5} parent=11 // pred_check
        %p206 = pneg %p60
      $region14: #{vae_conv_forward.5} parent=11 // pred_check_branch
        %208 = sbr.rel (%p206) target = $region16
      $region15: #{vae_conv_forward.5} parent=11 // pred_region
        _
      $region16: #{vae_conv_forward.5} parent=11 // pred_fallthru
        _
      // Predicated region
      $region17: #{vae_conv_forward.5} parent=11 // pred_check
        %p209 = pneg %p81
      $region18: #{vae_conv_forward.5} parent=11 // pred_check_branch
        %211 = sbr.rel (%p209) target = $region20
      $region19: #{vae_conv_forward.5} parent=11 // pred_region
        _
      $region20: #{vae_conv_forward.5} parent=11 // pred_fallthru
        _
      // Predicated region
      $region21: #{vae_conv_forward.5} parent=11 // pred_check
        %p212 = pneg %p102
      $region22: #{vae_conv_forward.5} parent=11 // pred_check_branch
        %214 = sbr.rel (%p212) target = $region24
      $region23: #{vae_conv_forward.5} parent=11 // pred_region
        _
      $region24: #{vae_conv_forward.5} parent=11 // pred_fallthru
        _
      // Predicated region
      $region25: #{vae_conv_forward.5} parent=11 // pred_check
        %p215 = pneg %p123
      $region26: #{vae_conv_forward.5} parent=11 // pred_check_branch
        %217 = sbr.rel (%p215) target = $region28
      $region27: #{vae_conv_forward.5} parent=11 // pred_region
        _
      $region28: #{vae_conv_forward.5} parent=11 // pred_fallthru
        _
      // Predicated region
      $region29: #{vae_conv_forward.5} parent=11 // pred_check
        %p218 = pneg %p144
      $region30: #{vae_conv_forward.5} parent=11 // pred_check_branch
        %220 = sbr.rel (%p218) target = $region32
      $region31: #{vae_conv_forward.5} parent=11 // pred_region
        _
      $region32: #{vae_conv_forward.5} parent=11 // pred_fallthru
        _
      // Predicated region
      $region33: #{vae_conv_forward.5} parent=11 // pred_check
        %p221 = pneg %p165
      $region34: #{vae_conv_forward.5} parent=11 // pred_check_branch
        %223 = sbr.rel (%p221) target = $region36
      $region35: #{vae_conv_forward.5} parent=11 // pred_region
        _
      $region36: #{vae_conv_forward.5} parent=11 // pred_fallthru
        _
    $region12: #{vae_conv_forward.5} parent=5 // pred_fallthru
      _
    %p224 = scmp.lt.s32.totalorder %s13, 2
    // Predicated region
    $region37: #{vae_conv_forward.5} parent=5 // pred_check
      %p225 = pneg %p224
    $region38: #{vae_conv_forward.5} parent=5 // pred_check_branch
      %227 = sbr.rel (%p225) target = $region40
    $region39: #{vae_conv_forward.5} parent=5 // pred_region
      // Predicated region
      $region41: #{vae_conv_forward.5} parent=39 // pred_check
        %p228 = pneg %p33
      $region42: #{vae_conv_forward.5} parent=39 // pred_check_branch
        %230 = sbr.rel (%p228) target = $region44
      $region43: #{vae_conv_forward.5} parent=39 // pred_region
        %p231 = scmp.lt.s32.totalorder %s13, 1
        %s232 = scalar_select %p231, %s13, 1
        %s233 = smul.addr %s232, 8
        %s234 = smul.addr %s233, 4
        %s235 = scalar_lea.vmem %s0, %s234
      $region44: #{vae_conv_forward.5} parent=39 // pred_fallthru
        _
    $region40: #{vae_conv_forward.5} parent=5 // pred_fallthru
      _
    %p236 = scmp.le.s32.totalorder 1, %s13
    %p237 = scmp.lt.s32.totalorder %s13, 3
    %p238 = pnand %p236, %p237
    %p239 = pneg %p238
    // Predicated region
    $region45: #{vae_conv_forward.5} parent=5 // pred_check
      _
    $region46: #{vae_conv_forward.5} parent=5 // pred_check_branch
      %241 = sbr.rel (%p238) target = $region48
    $region47: #{vae_conv_forward.5} parent=5 // pred_region
      %s242 = ssub.s32 %s13, 1
      %p243 = scmp.lt.s32.totalorder %s18, 1
      %s244 = scalar_select %p243, %s18, 1
      %s245 = smul.addr %s244, 8
      %s246 = smul.addr %s245, 4
      %s247 = scalar_lea.vmem %s0, %s246
      %p248 = pneg %p39
      %p249 = pneg %p36
      %p250 = pneg %p60
      %p251 = pneg %p57
      %p252 = pneg %p81
      %p253 = pneg %p78
      %p254 = pneg %p102
      %p255 = pneg %p99
      %p256 = pneg %p123
      %p257 = pneg %p120
      %p258 = pneg %p144
      %p259 = pneg %p141
      %p260 = pneg %p165
      %p261 = pneg %p162
      %p262 = pneg %p191
      %p263 = pneg %p188
      %p264 = scmp.lt.s32.totalorder %s18, 1
      %s265 = scalar_select %p264, %s18, 1
      %s266 = smul.addr %s265, 7
      %s267 = smul.addr %s266, 4
      %s268 = scalar_lea.vmem %s7, %s267
      %p269 = scmp.lt.s32.totalorder %s18, 1
      %s270 = scalar_select %p269, %s18, 1
      %s271 = smul.addr %s270, 8
      %s272 = smul.addr %s271, 4
      %s273 = scalar_lea.vmem %s0, %s272
      %p274 = scmp.lt.s32.totalorder %s18, 1
      %s275 = scalar_select %p274, %s18, 1
      %s276 = smul.addr %s275, 7
      %s277 = smul.addr %s276, 4
      %s278 = scalar_lea.vmem %s7, %s277
      %v280 = vld [vmem:[%s273] sm:$0xf]
      %v281 = vld [vmem:[%s273 + $0x4] sm:$0xf]
      %v282 = vld [vmem:[%s273 + $0x8] sm:$0xf]
      %v283 = vld [vmem:[%s273 + $0xc] sm:$0xf]
      %v284 = vld [vmem:[%s273 + $0x10] sm:$0xf]
      %v285 = vld [vmem:[%s273 + $0x14] sm:$0xf]
      %v286 = vld [vmem:[%s273 + $0x18] sm:$0xf]
      %v287 = vld [vmem:[%s273 + $0x1c] sm:$0xf]
      %v296 = vunpack.c.l.b16 %v280
      %v297 = vunpack.c.l.b16 %v281
      %v298 = vunpack.c.l.b16 %v282
      %v299 = vunpack.c.l.b16 %v283
      %v300 = vunpack.c.l.b16 %v284
      %v301 = vunpack.c.l.b16 %v285
      %v302 = vunpack.c.l.b16 %v286
      %v303 = vunpack.c.l.b16 %v287
      %v304 = vpack.c.b16 %v297, %v296
      %v305 = vpack.c.b16 %v299, %v298
      %v306 = vpack.c.b16 %v301, %v300
      %v307 = vpack.c.b16 %v303, %v302
      %312 = vrot.lane.b32.xlu0 %v304, 127
      %v313 = vpop.permute.xlu0 %312
      %314 = vrot.lane.b32.xlu0 %v305, 127
      %v315 = vpop.permute.xlu0 %314
      %316 = vrot.lane.b32.xlu0 %v306, 127
      %v317 = vpop.permute.xlu0 %316
      %318 = vrot.lane.b32.xlu0 %v307, 127
      %v319 = vpop.permute.xlu0 %318
      %324 = vrot.lane.b32.xlu0 %v304, 126
      %v325 = vpop.permute.xlu0 %324
      %326 = vrot.lane.b32.xlu0 %v305, 126
      %v327 = vpop.permute.xlu0 %326
      %328 = vrot.lane.b32.xlu0 %v306, 126
      %v329 = vpop.permute.xlu0 %328
      %330 = vrot.lane.b32.xlu0 %v307, 126
      %v331 = vpop.permute.xlu0 %330
      %336 = vrot.lane.b32.xlu0 %v304, 119
      %v337 = vpop.permute.xlu0 %336
      %338 = vrot.lane.b32.xlu0 %v305, 119
      %v339 = vpop.permute.xlu0 %338
      %340 = vrot.lane.b32.xlu0 %v306, 119
      %v341 = vpop.permute.xlu0 %340
      %342 = vrot.lane.b32.xlu0 %v307, 119
      %v343 = vpop.permute.xlu0 %342
      %348 = vrot.lane.b32.xlu0 %v304, 118
      %v349 = vpop.permute.xlu0 %348
      %350 = vrot.lane.b32.xlu0 %v305, 118
      %v351 = vpop.permute.xlu0 %350
      %352 = vrot.lane.b32.xlu0 %v306, 118
      %v353 = vpop.permute.xlu0 %352
      %354 = vrot.lane.b32.xlu0 %v307, 118
      %v355 = vpop.permute.xlu0 %354
      %360 = vrot.lane.b32.xlu0 %v304, 117
      %v361 = vpop.permute.xlu0 %360
      %362 = vrot.lane.b32.xlu0 %v305, 117
      %v363 = vpop.permute.xlu0 %362
      %364 = vrot.lane.b32.xlu0 %v306, 117
      %v365 = vpop.permute.xlu0 %364
      %366 = vrot.lane.b32.xlu0 %v307, 117
      %v367 = vpop.permute.xlu0 %366
      %372 = vrot.lane.b32.xlu0 %v304, 110
      %v373 = vpop.permute.xlu0 %372
      %374 = vrot.lane.b32.xlu0 %v305, 110
      %v375 = vpop.permute.xlu0 %374
      %376 = vrot.lane.b32.xlu0 %v306, 110
      %v377 = vpop.permute.xlu0 %376
      %378 = vrot.lane.b32.xlu0 %v307, 110
      %v379 = vpop.permute.xlu0 %378
      %384 = vrot.lane.b32.xlu0 %v304, 109
      %v385 = vpop.permute.xlu0 %384
      %386 = vrot.lane.b32.xlu0 %v305, 109
      %v387 = vpop.permute.xlu0 %386
      %388 = vrot.lane.b32.xlu0 %v306, 109
      %v389 = vpop.permute.xlu0 %388
      %390 = vrot.lane.b32.xlu0 %v307, 109
      %v391 = vpop.permute.xlu0 %390
      %396 = vrot.lane.b32.xlu0 %v304, 108
      %v397 = vpop.permute.xlu0 %396
      %398 = vrot.lane.b32.xlu0 %v305, 108
      %v399 = vpop.permute.xlu0 %398
      %400 = vrot.lane.b32.xlu0 %v306, 108
      %v401 = vpop.permute.xlu0 %400
      %402 = vrot.lane.b32.xlu0 %v307, 108
      %v403 = vpop.permute.xlu0 %402
      %v408 = vld [vmem:[%s1] sm:$0xff]
      %v409 = vld [vmem:[%s1 + $0x8] sm:$0xff]
      %v410 = vld [vmem:[%s1 + $0x10] sm:$0xf]
      %v411 = vld [vmem:[%s1 + $0x14] sm:$0xff]
      %v412 = vld [vmem:[%s1 + $0x1c] sm:$0xff]
      %v413 = vld [vmem:[%s1 + $0x24] sm:$0xf]
      %v414 = vld [vmem:[%s1 + $0x28] sm:$0xff]
      %v415 = vld [vmem:[%s1 + $0x30] sm:$0xff]
      %v416 = vld [vmem:[%s1 + $0x38] sm:$0xf]
      %v417 = vld [vmem:[%s1 + $0x3c] sm:$0xff]
      %v418 = vld [vmem:[%s1 + $0x44] sm:$0xff]
      %v419 = vld [vmem:[%s1 + $0x4c] sm:$0xf]
      %v420 = vld [vmem:[%s2] sm:$0xff]
      %v421 = vld [vmem:[%s2 + $0x8] sm:$0xff]
      %v422 = vld [vmem:[%s2 + $0x10] sm:$0xff]
      %v423 = vld [vmem:[%s2 + $0x18] sm:$0xff]
      %425 = vset.pattern.permute.xlu0 0
      %426 = vperm.xlu0 %425, %v420
      %v427 = vpop.permute.xlu0 %426
      %430 = vset.pattern.permute.xlu0 0
      %431 = vperm.xlu0 %430, %v421
      %v432 = vpop.permute.xlu0 %431
      %435 = vset.pattern.permute.xlu0 0
      %436 = vperm.xlu0 %435, %v422
      %v437 = vpop.permute.xlu0 %436
      %440 = vset.pattern.permute.xlu0 0
      %441 = vperm.xlu0 %440, %v423
      %v442 = vpop.permute.xlu0 %441
      %v456 = vunpack.c.l.b16 %v408
      %v457 = vunpack.c.h.b16 %v408
      %v458 = vunpack.c.l.b16 %v409
      %v459 = vunpack.c.h.b16 %v409
      %v460 = vunpack.c.l.b16 %v410
      %v461 = vunpack.c.l.b16 %v411
      %v462 = vunpack.c.h.b16 %v411
      %v463 = vunpack.c.l.b16 %v412
      %v464 = vunpack.c.h.b16 %v412
      %v465 = vunpack.c.l.b16 %v413
      %v466 = vunpack.c.l.b16 %v414
      %v467 = vunpack.c.h.b16 %v414
      %v468 = vunpack.c.l.b16 %v415
      %v469 = vunpack.c.h.b16 %v415
      %v470 = vunpack.c.l.b16 %v416
      %v471 = vunpack.c.l.b16 %v417
      %v472 = vunpack.c.h.b16 %v417
      %v473 = vunpack.c.l.b16 %v418
      %v474 = vunpack.c.h.b16 %v418
      %v475 = vunpack.c.l.b16 %v419
      %v476 = vpack.c.b16 %v461, %v456
      %v477 = vpack.c.b16 %v462, %v457
      %v478 = vpack.c.b16 %v463, %v458
      %v479 = vpack.c.b16 %v464, %v459
      %v480 = vpack.c.b16 %v465, %v460
      %v481 = vpack.c.b16 %v471, %v466
      %v482 = vpack.c.b16 %v472, %v467
      %v483 = vpack.c.b16 %v473, %v468
      %v484 = vpack.c.b16 %v474, %v469
      %v485 = vpack.c.b16 %v475, %v470
      %vm494 = vcmask 523264
      %v496 = vsel %vm494, %v480, 0
      %v499 = vsel %vm494, %v485, 0
      %501 = vmatprep.subr.bf16.mxu0 0
      %502 = vmatpush1.bf16.msra.mxu0 %v304
      %503 = vmatprep.subr.bf16.mxu0 0
      %504 = vmatpush1.bf16.msra.mxu0 %v305
      %505 = vmatprep.subr.bf16.mxu0 0
      %506 = vmatpush1.bf16.msra.mxu0 %v306
      %507 = vmatprep.subr.bf16.mxu0 0
      %508 = vmatpush1.bf16.msra.mxu0 %v307
      %509 = vmatprep.subr.bf16.mxu0 0
      %510 = vmatpush1.bf16.msra.mxu0 %v313
      %511 = vmatprep.subr.bf16.mxu0 0
      %512 = vmatpush1.bf16.msra.mxu0 %v315
      %513 = vmatprep.subr.bf16.mxu0 0
      %514 = vmatpush1.bf16.msra.mxu0 %v317
      %515 = vmatprep.subr.bf16.mxu0 0
      %516 = vmatpush1.bf16.msra.mxu0 %v319
      %517 = vmatprep.subr.bf16.mxu0 0
      %518 = vmatpush1.bf16.msra.mxu0 %v325
      %519 = vmatprep.subr.bf16.mxu0 0
      %520 = vmatpush1.bf16.msra.mxu0 %v327
      %521 = vmatprep.subr.bf16.mxu0 0
      %522 = vmatpush1.bf16.msra.mxu0 %v329
      %523 = vmatprep.subr.bf16.mxu0 0
      %524 = vmatpush1.bf16.msra.mxu0 %v331
      %525 = vmatprep.subr.bf16.mxu0 0
      %526 = vmatpush1.bf16.msra.mxu0 %v337
      %527 = vmatprep.subr.bf16.mxu0 0
      %528 = vmatpush1.bf16.msra.mxu0 %v339
      %529 = vmatprep.subr.bf16.mxu0 0
      %530 = vmatpush1.bf16.msra.mxu0 %v341
      %531 = vmatprep.subr.bf16.mxu0 0
      %532 = vmatpush1.bf16.msra.mxu0 %v343
      %533 = vmatprep.mubr.bf16.mxu0 %v477
      %534 = vmatmul.mubr.bf16.gmra.mrb[0].mxu0 %v476
      %v535 = vpop.f32.mrb[0].mxu0
      %v536 = vadd.f32 %v427, %v535
      %v537 = vpop.f32.mrb[0].mxu0
      %v538 = vpop.f32.mrb[0].mxu0
      %v539 = vadd.f32 %v432, %v538
      %v540 = vpop.f32.mrb[0].mxu0
      %541 = vmatprep.mubr.bf16.mxu0 %v482
      %542 = vmatmul.mubr.bf16.gmra.mrb[0].mxu0 %v481
      %v543 = vpop.f32.mrb[0].mxu0
      %v544 = vadd.f32 %v437, %v543
      %v545 = vpop.f32.mrb[0].mxu0
      %v546 = vpop.f32.mrb[0].mxu0
      %v547 = vadd.f32 %v442, %v546
      %v548 = vpop.f32.mrb[0].mxu0
      %549 = vdwg.mxu0
      %550 = vmatprep.subr.bf16.mxu0 0
      %551 = vmatpush1.bf16.msra.mxu0 %v349
      %552 = vmatprep.subr.bf16.mxu0 0
      %553 = vmatpush1.bf16.msra.mxu0 %v351
      %554 = vmatprep.subr.bf16.mxu0 0
      %555 = vmatpush1.bf16.msra.mxu0 %v353
      %556 = vmatprep.subr.bf16.mxu0 0
      %557 = vmatpush1.bf16.msra.mxu0 %v355
      %558 = vmatprep.subr.bf16.mxu0 0
      %559 = vmatpush1.bf16.msra.mxu0 %v361
      %560 = vmatprep.subr.bf16.mxu0 0
      %561 = vmatpush1.bf16.msra.mxu0 %v363
      %562 = vmatprep.subr.bf16.mxu0 0
      %563 = vmatpush1.bf16.msra.mxu0 %v365
      %564 = vmatprep.subr.bf16.mxu0 0
      %565 = vmatpush1.bf16.msra.mxu0 %v367
      %566 = vmatprep.subr.bf16.mxu0 0
      %567 = vmatpush1.bf16.msra.mxu0 %v373
      %568 = vmatprep.subr.bf16.mxu0 0
      %569 = vmatpush1.bf16.msra.mxu0 %v375
      %570 = vmatprep.subr.bf16.mxu0 0
      %571 = vmatpush1.bf16.msra.mxu0 %v377
      %572 = vmatprep.subr.bf16.mxu0 0
      %573 = vmatpush1.bf16.msra.mxu0 %v379
      %574 = vmatprep.subr.bf16.mxu0 0
      %575 = vmatpush1.bf16.msra.mxu0 %v385
      %576 = vmatprep.subr.bf16.mxu0 0
      %577 = vmatpush1.bf16.msra.mxu0 %v387
      %578 = vmatprep.subr.bf16.mxu0 0
      %579 = vmatpush1.bf16.msra.mxu0 %v389
      %580 = vmatprep.subr.bf16.mxu0 0
      %581 = vmatpush1.bf16.msra.mxu0 %v391
      %582 = vmatprep.mubr.bf16.mxu0 %v479
      %583 = vmatmul.mubr.bf16.gmra.mrb[0].mxu0 %v478
      %v584 = vpop.f32.mrb[0].mxu0
      %v585 = vadd.f32 %v536, %v584
      %v586 = vpop.f32.mrb[0].mxu0
      %v587 = vpop.f32.mrb[0].mxu0
      %v588 = vadd.f32 %v539, %v587
      %v589 = vpop.f32.mrb[0].mxu0
      %590 = vmatprep.mubr.bf16.mxu0 %v484
      %591 = vmatmul.mubr.bf16.gmra.mrb[0].mxu0 %v483
      %v592 = vpop.f32.mrb[0].mxu0
      %v593 = vadd.f32 %v544, %v592
      %v594 = vpop.f32.mrb[0].mxu0
      %v595 = vpop.f32.mrb[0].mxu0
      %v596 = vadd.f32 %v547, %v595
      %v597 = vpop.f32.mrb[0].mxu0
      %598 = vdwg.mxu0
      %599 = vmatprep.subr.bf16.mxu0 0
      %600 = vmatpush1.bf16.msra.mxu0 %v397
      %601 = vmatprep.subr.bf16.mxu0 0
      %602 = vmatpush1.bf16.msra.mxu0 %v399
      %603 = vmatprep.subr.bf16.mxu0 0
      %604 = vmatpush1.bf16.msra.mxu0 %v401
      %605 = vmatprep.subr.bf16.mxu0 0
      %606 = vmatpush1.bf16.msra.mxu0 %v403
      %607 = vmatprep.subr.bf16.mxu0 0
      %608 = vmatpush1.bf16.msra.mxu0 0
      %609 = vmatprep.subr.bf16.mxu0 0
      %610 = vmatpush1.bf16.msra.mxu0 0
      %611 = vmatprep.subr.bf16.mxu0 0
      %612 = vmatpush1.bf16.msra.mxu0 0
      %613 = vmatprep.subr.bf16.mxu0 0
      %614 = vmatpush1.bf16.msra.mxu0 0
      %615 = vmatprep.subr.bf16.mxu0 0
      %616 = vmatpush1.bf16.msra.mxu0 0
      %617 = vmatprep.subr.bf16.mxu0 0
      %618 = vmatpush1.bf16.msra.mxu0 0
      %619 = vmatprep.subr.bf16.mxu0 0
      %620 = vmatpush1.bf16.msra.mxu0 0
      %621 = vmatprep.subr.bf16.mxu0 0
      %622 = vmatpush1.bf16.msra.mxu0 0
      %623 = vmatprep.subr.bf16.mxu0 0
      %624 = vmatpush1.bf16.msra.mxu0 0
      %625 = vmatprep.subr.bf16.mxu0 0
      %626 = vmatpush1.bf16.msra.mxu0 0
      %627 = vmatprep.subr.bf16.mxu0 0
      %628 = vmatpush1.bf16.msra.mxu0 0
      %629 = vmatprep.subr.bf16.mxu0 0
      %630 = vmatpush1.bf16.msra.mxu0 0
      %631 = vmatprep.mubr.bf16.mxu0 0
      %632 = vmatmul.mubr.bf16.gmra.mrb[0].mxu0 %v496
      %v633 = vpop.f32.mrb[0].mxu0
      %v634 = vadd.f32 %v585, %v633
      %v635 = vpop.f32.mrb[0].mxu0
      %v636 = vpop.f32.mrb[0].mxu0
      %v637 = vadd.f32 %v588, %v636
      %v638 = vpop.f32.mrb[0].mxu0
      %639 = vmatprep.mubr.bf16.mxu0 0
      %640 = vmatmul.mubr.bf16.gmra.mrb[0].mxu0 %v499
      %v641 = vpop.f32.mrb[0].mxu0
      %v642 = vadd.f32 %v593, %v641
      %v643 = vpop.f32.mrb[0].mxu0
      %v644 = vpop.f32.mrb[0].mxu0
      %v645 = vadd.f32 %v596, %v644
      %v646 = vpop.f32.mrb[0].mxu0
      %647 = vdwg.mxu0
      %v648 = vmax.f32 %v634, 0.0
      %v649 = vmax.f32 %v637, 0.0
      %v650 = vmax.f32 %v642, 0.0
      %v651 = vmax.f32 %v645, 0.0
      %v652 = vpack.c.bf16 %v649, %v648
      %v653 = vpack.c.bf16 %v651, %v650
      %v654 = vld [vmem:[%s3] sm:$0xff]
      %v655 = vld [vmem:[%s3 + $0x8] sm:$0xf]
      %v656 = vld [vmem:[%s3 + $0xc] sm:$0xff]
      %v657 = vld [vmem:[%s3 + $0x14] sm:$0xf]
      %v658 = vld [vmem:[%s3 + $0x18] sm:$0xff]
      %v659 = vld [vmem:[%s3 + $0x20] sm:$0xf]
      %v660 = vld [vmem:[%s3 + $0x24] sm:$0xff]
      %v661 = vld [vmem:[%s3 + $0x2c] sm:$0xf]
      %v662 = vld [vmem:[%s3 + $0x30] sm:$0xff]
      %v663 = vld [vmem:[%s3 + $0x38] sm:$0xf]
      %v664 = vld [vmem:[%s3 + $0x3c] sm:$0xff]
      %v665 = vld [vmem:[%s3 + $0x44] sm:$0xf]
      %v666 = vld [vmem:[%s3 + $0x48] sm:$0xff]
      %v667 = vld [vmem:[%s3 + $0x50] sm:$0xf]
      %v668 = vld [vmem:[%s3 + $0x54] sm:$0xff]
      %v669 = vld [vmem:[%s3 + $0x5c] sm:$0xf]
      %v670 = vld [vmem:[%s3 + $0x60] sm:$0xff]
      %v671 = vld [vmem:[%s3 + $0x68] sm:$0xf]
      %v672 = vld [vmem:[%s3 + $0x6c] sm:$0xff]
      %v673 = vld [vmem:[%s3 + $0x74] sm:$0xf]
      %v674 = vld [vmem:[%s3 + $0x78] sm:$0x11]
      %v675 = vld [vmem:[%s3 + $0x80] sm:$0x1]
      %v698 = vunpack.c.l.b16 %v654
      %v699 = vunpack.c.h.b16 %v654
      %v700 = vunpack.c.l.b16 %v655
      %v701 = vunpack.c.l.b16 %v656
      %v702 = vunpack.c.h.b16 %v656
      %v703 = vunpack.c.l.b16 %v657
      %v704 = vunpack.c.l.b16 %v658
      %v705 = vunpack.c.h.b16 %v658
      %v706 = vunpack.c.l.b16 %v659
      %v707 = vunpack.c.l.b16 %v660
      %v708 = vunpack.c.h.b16 %v660
      %v709 = vunpack.c.l.b16 %v661
      %v710 = vunpack.c.l.b16 %v662
      %v711 = vunpack.c.h.b16 %v662
      %v712 = vunpack.c.l.b16 %v663
      %v713 = vunpack.c.l.b16 %v664
      %v714 = vunpack.c.h.b16 %v664
      %v715 = vunpack.c.l.b16 %v665
      %v716 = vunpack.c.l.b16 %v666
      %v717 = vunpack.c.h.b16 %v666
      %v718 = vunpack.c.l.b16 %v667
      %v719 = vunpack.c.l.b16 %v668
      %v720 = vunpack.c.h.b16 %v668
      %v721 = vunpack.c.l.b16 %v669
      %v722 = vunpack.c.l.b16 %v670
      %v723 = vunpack.c.h.b16 %v670
      %v724 = vunpack.c.l.b16 %v671
      %v725 = vunpack.c.l.b16 %v672
      %v726 = vunpack.c.h.b16 %v672
      %v727 = vunpack.c.l.b16 %v673
      %v728 = vunpack.c.l.b16 %v674
      %v729 = vunpack.c.h.b16 %v674
      %v730 = vunpack.c.l.b16 %v675
      %v731 = vpack.c.b16 %v701, %v698
      %v732 = vpack.c.b16 %v702, %v699
      %v733 = vpack.c.b16 %v703, %v700
      %v734 = vpack.c.b16 %v707, %v704
      %v735 = vpack.c.b16 %v708, %v705
      %v736 = vpack.c.b16 %v709, %v706
      %v737 = vpack.c.b16 %v713, %v710
      %v738 = vpack.c.b16 %v714, %v711
      %v739 = vpack.c.b16 %v715, %v712
      %v740 = vpack.c.b16 %v719, %v716
      %v741 = vpack.c.b16 %v720, %v717
      %v742 = vpack.c.b16 %v721, %v718
      %v743 = vpack.c.b16 %v725, %v722
      %v744 = vpack.c.b16 %v726, %v723
      %v745 = vpack.c.b16 %v727, %v724
      %v746 = vpack.c.b16 %v728, %v728
      %v747 = vpack.c.b16 %v729, %v729
      %v748 = vpack.c.b16 %v730, %v730
      %vm764 = vcmask 662528
      %v766 = vsel %vm764, %v652, 0
      %v769 = vsel %vm764, %v653, 0
      %vm771 = vcmask 1040384
      %v772 = vsel 0, 4294967295, 65535
      %v773 = vsel %vm771, %v772, 0
      %v775 = vand.u32 %v746, %v773
      %v778 = vand.u32 %v747, %v773
      %v781 = vand.u32 %v748, %v773
      %783 = vmatprep.subr.bf16.mxu0 %v732
      %784 = vmatpush1.bf16.msra.mxu0 %v731
      %785 = vmatprep.subr.bf16.mxu0 %v735
      %786 = vmatpush1.bf16.msra.mxu0 %v734
      %787 = vmatprep.subr.bf16.mxu0 %v738
      %788 = vmatpush1.bf16.msra.mxu0 %v737
      %789 = vmatprep.subr.bf16.mxu0 %v741
      %790 = vmatpush1.bf16.msra.mxu0 %v740
      %791 = vmatprep.subr.bf16.mxu0 %v744
      %792 = vmatpush1.bf16.msra.mxu0 %v743
      %793 = vmatprep.subr.bf16.mxu0 %v778
      %794 = vmatpush1.bf16.msra.mxu0 %v775
      %795 = vmatprep.subr.bf16.mxu0 0
      %796 = vmatpush1.bf16.msra.mxu0 0
      %797 = vmatprep.subr.bf16.mxu0 0
      %798 = vmatpush1.bf16.msra.mxu0 0
      %799 = vmatprep.subr.bf16.mxu0 0
      %800 = vmatpush1.bf16.msra.mxu0 0
      %801 = vmatprep.subr.bf16.mxu0 0
      %802 = vmatpush1.bf16.msra.mxu0 0
      %803 = vmatprep.subr.bf16.mxu0 0
      %804 = vmatpush1.bf16.msra.mxu0 0
      %805 = vmatprep.subr.bf16.mxu0 0
      %806 = vmatpush1.bf16.msra.mxu0 0
      %807 = vmatprep.subr.bf16.mxu0 0
      %808 = vmatpush1.bf16.msra.mxu0 0
      %809 = vmatprep.subr.bf16.mxu0 0
      %810 = vmatpush1.bf16.msra.mxu0 0
      %811 = vmatprep.subr.bf16.mxu0 0
      %812 = vmatpush1.bf16.msra.mxu0 0
      %813 = vmatprep.subr.bf16.mxu0 0
      %814 = vmatpush1.bf16.msra.mxu0 0
      %815 = vmatprep.mubr.bf16.mxu0 0
      %816 = vmatmul.mubr.bf16.gmra.mrb[0].mxu0 %v766
      %v817 = vpop.f32.mrb[0].mxu0
      %v818 = vadd.f32 0.0, %v817
      %v819 = vpop.f32.mrb[0].mxu0
      %v820 = vadd.f32 0.0, %v819
      %v821 = vpop.f32.mrb[0].mxu0
      %v822 = vadd.f32 0.0, %v821
      %v823 = vpop.f32.mrb[0].mxu0
      %v824 = vadd.f32 0.0, %v823
      %825 = vmatprep.mubr.bf16.mxu0 0
      %826 = vmatmul.mubr.bf16.gmra.mrb[0].mxu0 %v769
      %v827 = vpop.f32.mrb[0].mxu0
      %v828 = vadd.f32 0.0, %v827
      %v829 = vpop.f32.mrb[0].mxu0
      %v830 = vadd.f32 0.0, %v829
      %v831 = vpop.f32.mrb[0].mxu0
      %v832 = vadd.f32 0.0, %v831
      %v833 = vpop.f32.mrb[0].mxu0
      %v834 = vadd.f32 0.0, %v833
      %835 = vdwg.mxu0
      %836 = vmatprep.subr.bf16.mxu0 0
      %837 = vmatpush1.bf16.msra.mxu0 %v733
      %838 = vmatprep.subr.bf16.mxu0 0
      %839 = vmatpush1.bf16.msra.mxu0 %v736
      %840 = vmatprep.subr.bf16.mxu0 0
      %841 = vmatpush1.bf16.msra.mxu0 %v739
      %842 = vmatprep.subr.bf16.mxu0 0
      %843 = vmatpush1.bf16.msra.mxu0 %v742
      %844 = vmatprep.subr.bf16.mxu0 0
      %845 = vmatpush1.bf16.msra.mxu0 %v745
      %846 = vmatprep.subr.bf16.mxu0 0
      %847 = vmatpush1.bf16.msra.mxu0 %v781
      %848 = vmatprep.subr.bf16.mxu0 0
      %849 = vmatpush1.bf16.msra.mxu0 0
      %850 = vmatprep.subr.bf16.mxu0 0
      %851 = vmatpush1.bf16.msra.mxu0 0
      %852 = vmatprep.subr.bf16.mxu0 0
      %853 = vmatpush1.bf16.msra.mxu0 0
      %854 = vmatprep.subr.bf16.mxu0 0
      %855 = vmatpush1.bf16.msra.mxu0 0
      %856 = vmatprep.subr.bf16.mxu0 0
      %857 = vmatpush1.bf16.msra.mxu0 0
      %858 = vmatprep.subr.bf16.mxu0 0
      %859 = vmatpush1.bf16.msra.mxu0 0
      %860 = vmatprep.subr.bf16.mxu0 0
      %861 = vmatpush1.bf16.msra.mxu0 0
      %862 = vmatprep.subr.bf16.mxu0 0
      %863 = vmatpush1.bf16.msra.mxu0 0
      %864 = vmatprep.subr.bf16.mxu0 0
      %865 = vmatpush1.bf16.msra.mxu0 0
      %866 = vmatprep.subr.bf16.mxu0 0
      %867 = vmatpush1.bf16.msra.mxu0 0
      %868 = vmatprep.mubr.bf16.mxu0 0
      %869 = vmatmul.mubr.bf16.gmra.mrb[0].mxu0 %v766
      %v870 = vpop.f32.mrb[0].mxu0
      %v871 = vadd.f32 0.0, %v870
      %v872 = vpop.f32.mrb[0].mxu0
      %v873 = vpop.f32.mrb[0].mxu0
      %v874 = vadd.f32 0.0, %v873
      %v875 = vpop.f32.mrb[0].mxu0
      %876 = vmatprep.mubr.bf16.mxu0 0
      %877 = vmatmul.mubr.bf16.gmra.mrb[0].mxu0 %v769
      %v878 = vpop.f32.mrb[0].mxu0
      %v879 = vadd.f32 0.0, %v878
      %v880 = vpop.f32.mrb[0].mxu0
      %v881 = vpop.f32.mrb[0].mxu0
      %v882 = vadd.f32 0.0, %v881
      %v883 = vpop.f32.mrb[0].mxu0
      %884 = vdwg.mxu0
      %v885 = vpack.c.bf16 %v822, %v818
      %v886 = vpack.c.bf16 %v824, %v820
      %v887 = vpack.c.bf16 %v874, %v871
      %v888 = vpack.c.bf16 %v832, %v828
      %v889 = vpack.c.bf16 %v834, %v830
      %v890 = vpack.c.bf16 %v882, %v879
      %897 = vrot.lane.b32.xlu0 %v885, 127
      %v898 = vpop.permute.xlu0 %897
      %899 = vrot.lane.b32.xlu0 %v886, 127
      %v900 = vpop.permute.xlu0 %899
      %901 = vrot.lane.b32.xlu0 %v887, 127
      %v902 = vpop.permute.xlu0 %901
      %903 = vrot.lane.b32.xlu0 %v888, 127
      %v904 = vpop.permute.xlu0 %903
      %905 = vrot.lane.b32.xlu0 %v889, 127
      %v906 = vpop.permute.xlu0 %905
      %907 = vrot.lane.b32.xlu0 %v890, 127
      %v908 = vpop.permute.xlu0 %907
      %vm909 = vcmask 1039360
      %v910 = vsel %vm909, %v898, %v900
      %v911 = vsel %vm909, %v900, %v902
      %v912 = vsel %vm909, %v904, %v906
      %v913 = vsel %vm909, %v906, %v908
      %918 = vrot.lane.b32.xlu0 %v885, 126
      %v919 = vpop.permute.xlu0 %918
      %920 = vrot.lane.b32.xlu0 %v886, 126
      %v921 = vpop.permute.xlu0 %920
      %922 = vrot.lane.b32.xlu0 %v887, 126
      %v923 = vpop.permute.xlu0 %922
      %924 = vrot.lane.b32.xlu0 %v888, 126
      %v925 = vpop.permute.xlu0 %924
      %926 = vrot.lane.b32.xlu0 %v889, 126
      %v927 = vpop.permute.xlu0 %926
      %928 = vrot.lane.b32.xlu0 %v890, 126
      %v929 = vpop.permute.xlu0 %928
      %vm930 = vcmask 1031168
      %v931 = vsel %vm930, %v919, %v921
      %v932 = vsel %vm930, %v921, %v923
      %v933 = vsel %vm930, %v925, %v927
      %v934 = vsel %vm930, %v927, %v929
      %939 = vrot.lane.b32.xlu0 %v885, 112
      %v940 = vpop.permute.xlu0 %939
      %941 = vrot.lane.b32.xlu0 %v886, 112
      %v942 = vpop.permute.xlu0 %941
      %943 = vrot.lane.b32.xlu0 %v887, 112
      %v944 = vpop.permute.xlu0 %943
      %945 = vrot.lane.b32.xlu0 %v888, 112
      %v946 = vpop.permute.xlu0 %945
      %947 = vrot.lane.b32.xlu0 %v889, 112
      %v948 = vpop.permute.xlu0 %947
      %949 = vrot.lane.b32.xlu0 %v890, 112
      %v950 = vpop.permute.xlu0 %949
      %vm951 = vcmask 916480
      %v952 = vsel %vm951, %v940, %v942
      %v953 = vsel %vm951, %v942, %v944
      %v954 = vsel %vm951, %v946, %v948
      %v955 = vsel %vm951, %v948, %v950
      %960 = vrot.lane.b32.xlu0 %v885, 111
      %v961 = vpop.permute.xlu0 %960
      %962 = vrot.lane.b32.xlu0 %v886, 111
      %v963 = vpop.permute.xlu0 %962
      %964 = vrot.lane.b32.xlu0 %v887, 111
      %v965 = vpop.permute.xlu0 %964
      %966 = vrot.lane.b32.xlu0 %v888, 111
      %v967 = vpop.permute.xlu0 %966
      %968 = vrot.lane.b32.xlu0 %v889, 111
      %v969 = vpop.permute.xlu0 %968
      %970 = vrot.lane.b32.xlu0 %v890, 111
      %v971 = vpop.permute.xlu0 %970
      %vm972 = vcmask 908288
      %v973 = vsel %vm972, %v961, %v963
      %v974 = vsel %vm972, %v963, %v965
      %v975 = vsel %vm972, %v967, %v969
      %v976 = vsel %vm972, %v969, %v971
      %981 = vrot.lane.b32.xlu0 %v885, 110
      %v982 = vpop.permute.xlu0 %981
      %983 = vrot.lane.b32.xlu0 %v886, 110
      %v984 = vpop.permute.xlu0 %983
      %985 = vrot.lane.b32.xlu0 %v887, 110
      %v986 = vpop.permute.xlu0 %985
      %987 = vrot.lane.b32.xlu0 %v888, 110
      %v988 = vpop.permute.xlu0 %987
      %989 = vrot.lane.b32.xlu0 %v889, 110
      %v990 = vpop.permute.xlu0 %989
      %991 = vrot.lane.b32.xlu0 %v890, 110
      %v992 = vpop.permute.xlu0 %991
      %vm993 = vcmask 900096
      %v994 = vsel %vm993, %v982, %v984
      %v995 = vsel %vm993, %v984, %v986
      %v996 = vsel %vm993, %v988, %v990
      %v997 = vsel %vm993, %v990, %v992
      %1002 = vrot.lane.b32.xlu0 %v885, 96
      %v1003 = vpop.permute.xlu0 %1002
      %1004 = vrot.lane.b32.xlu0 %v886, 96
      %v1005 = vpop.permute.xlu0 %1004
      %1006 = vrot.lane.b32.xlu0 %v887, 96
      %v1007 = vpop.permute.xlu0 %1006
      %1008 = vrot.lane.b32.xlu0 %v888, 96
      %v1009 = vpop.permute.xlu0 %1008
      %1010 = vrot.lane.b32.xlu0 %v889, 96
      %v1011 = vpop.permute.xlu0 %1010
      %1012 = vrot.lane.b32.xlu0 %v890, 96
      %v1013 = vpop.permute.xlu0 %1012
      %vm1014 = vcmask 785408
      %v1015 = vsel %vm1014, %v1003, %v1005
      %v1016 = vsel %vm1014, %v1005, %v1007
      %v1017 = vsel %vm1014, %v1009, %v1011
      %v1018 = vsel %vm1014, %v1011, %v1013
      %1023 = vrot.lane.b32.xlu0 %v885, 95
      %v1024 = vpop.permute.xlu0 %1023
      %1025 = vrot.lane.b32.xlu0 %v886, 95
      %v1026 = vpop.permute.xlu0 %1025
      %1027 = vrot.lane.b32.xlu0 %v887, 95
      %v1028 = vpop.permute.xlu0 %1027
      %1029 = vrot.lane.b32.xlu0 %v888, 95
      %v1030 = vpop.permute.xlu0 %1029
      %1031 = vrot.lane.b32.xlu0 %v889, 95
      %v1032 = vpop.permute.xlu0 %1031
      %1033 = vrot.lane.b32.xlu0 %v890, 95
      %v1034 = vpop.permute.xlu0 %1033
      %vm1035 = vcmask 777216
      %v1036 = vsel %vm1035, %v1024, %v1026
      %v1037 = vsel %vm1035, %v1026, %v1028
      %v1038 = vsel %vm1035, %v1030, %v1032
      %v1039 = vsel %vm1035, %v1032, %v1034
      %1044 = vrot.lane.b32.xlu0 %v885, 94
      %v1045 = vpop.permute.xlu0 %1044
      %1046 = vrot.lane.b32.xlu0 %v886, 94
      %v1047 = vpop.permute.xlu0 %1046
      %1048 = vrot.lane.b32.xlu0 %v887, 94
      %v1049 = vpop.permute.xlu0 %1048
      %1050 = vrot.lane.b32.xlu0 %v888, 94
      %v1051 = vpop.permute.xlu0 %1050
      %1052 = vrot.lane.b32.xlu0 %v889, 94
      %v1053 = vpop.permute.xlu0 %1052
      %1054 = vrot.lane.b32.xlu0 %v890, 94
      %v1055 = vpop.permute.xlu0 %1054
      %vm1056 = vcmask 769024
      %v1057 = vsel %vm1056, %v1045, %v1047
      %v1058 = vsel %vm1056, %v1047, %v1049
      %v1059 = vsel %vm1056, %v1051, %v1053
      %v1060 = vsel %vm1056, %v1053, %v1055
      %v1065 = vld [vmem:[%s4] sm:$0x3f]
      %v1066 = vld [vmem:[%s5] sm:$0x7]
      %1068 = vset.pattern.permute.xlu0 0
      %1069 = vperm.xlu0 %1068, %v1066
      %v1070 = vpop.permute.xlu0 %1069
      %v1073 = vcombine.high %v1065, %v1065
      %v1075 = vunpack.c.l.s4 1983009808
      %v1076 = vunpack.c.0.s8 %v1075
      %v1077 = vlaneseq
      %v1078 = vshrl.u32 %v1077, 7
      %v1079 = vsub.s32 %v1076, %v1078
      %v1080 = vrot.slane %v1065, %v1079
      %v1082 = vunpack.c.l.s4 1983009808
      %v1083 = vunpack.c.0.s8 %v1082
      %v1084 = vlaneseq
      %v1085 = vshrl.u32 %v1084, 7
      %v1086 = vsub.s32 %v1083, %v1085
      %v1087 = vrot.slane %v1073, %v1086
      %v1088 = vcombine.high %v1080, %v1080
      %vm1091 = vcmask 261120
      %v1093 = vsel %vm1091, %v1087, 0
      %1095 = vmatprep.subr.bf16.mxu0 %v886
      %1096 = vmatpush1.bf16.msra.mxu0 %v885
      %1097 = vmatprep.subr.bf16.mxu0 %v889
      %1098 = vmatpush1.bf16.msra.mxu0 %v888
      %1099 = vmatprep.subr.bf16.mxu0 %v911
      %1100 = vmatpush1.bf16.msra.mxu0 %v910
      %1101 = vmatprep.subr.bf16.mxu0 %v913
      %1102 = vmatpush1.bf16.msra.mxu0 %v912
      %1103 = vmatprep.subr.bf16.mxu0 %v932
      %1104 = vmatpush1.bf16.msra.mxu0 %v931
      %1105 = vmatprep.subr.bf16.mxu0 %v934
      %1106 = vmatpush1.bf16.msra.mxu0 %v933
      %1107 = vmatprep.subr.bf16.mxu0 %v953
      %1108 = vmatpush1.bf16.msra.mxu0 %v952
      %1109 = vmatprep.subr.bf16.mxu0 %v955
      %1110 = vmatpush1.bf16.msra.mxu0 %v954
      %1111 = vmatprep.subr.bf16.mxu0 %v974
      %1112 = vmatpush1.bf16.msra.mxu0 %v973
      %1113 = vmatprep.subr.bf16.mxu0 %v976
      %1114 = vmatpush1.bf16.msra.mxu0 %v975
      %1115 = vmatprep.subr.bf16.mxu0 %v995
      %1116 = vmatpush1.bf16.msra.mxu0 %v994
      %1117 = vmatprep.subr.bf16.mxu0 %v997
      %1118 = vmatpush1.bf16.msra.mxu0 %v996
      %1119 = vmatprep.subr.bf16.mxu0 %v1016
      %1120 = vmatpush1.bf16.msra.mxu0 %v1015
      %1121 = vmatprep.subr.bf16.mxu0 %v1018
      %1122 = vmatpush1.bf16.msra.mxu0 %v1017
      %1123 = vmatprep.subr.bf16.mxu0 %v1037
      %1124 = vmatpush1.bf16.msra.mxu0 %v1036
      %1125 = vmatprep.subr.bf16.mxu0 %v1039
      %1126 = vmatpush1.bf16.msra.mxu0 %v1038
      %1127 = vmatprep.mubr.bf16.mxu0 %v1088
      %1128 = vmatmul.mubr.bf16.gmra.mrb[0].mxu0 %v1080
      %v1129 = vpop.f32.mrb[0].mxu0
      %v1130 = vadd.f32 %v1070, %v1129
      %v1131 = vpop.f32.mrb[0].mxu0
      %v1132 = vadd.f32 %v1070, %v1131
      %v1133 = vpop.f32.mrb[0].mxu0
      %v1134 = vpop.f32.mrb[0].mxu0
      %1135 = vdwg.mxu0
      %1136 = vmatprep.subr.bf16.mxu0 %v1058
      %1137 = vmatpush1.bf16.msra.mxu0 %v1057
      %1138 = vmatprep.subr.bf16.mxu0 %v1060
      %1139 = vmatpush1.bf16.msra.mxu0 %v1059
      %1140 = vmatprep.subr.bf16.mxu0 0
      %1141 = vmatpush1.bf16.msra.mxu0 0
      %1142 = vmatprep.subr.bf16.mxu0 0
      %1143 = vmatpush1.bf16.msra.mxu0 0
      %1144 = vmatprep.subr.bf16.mxu0 0
      %1145 = vmatpush1.bf16.msra.mxu0 0
      %1146 = vmatprep.subr.bf16.mxu0 0
      %1147 = vmatpush1.bf16.msra.mxu0 0
      %1148 = vmatprep.subr.bf16.mxu0 0
      %1149 = vmatpush1.bf16.msra.mxu0 0
      %1150 = vmatprep.subr.bf16.mxu0 0
      %1151 = vmatpush1.bf16.msra.mxu0 0
      %1152 = vmatprep.subr.bf16.mxu0 0
      %1153 = vmatpush1.bf16.msra.mxu0 0
      %1154 = vmatprep.subr.bf16.mxu0 0
      %1155 = vmatpush1.bf16.msra.mxu0 0
      %1156 = vmatprep.subr.bf16.mxu0 0
      %1157 = vmatpush1.bf16.msra.mxu0 0
      %1158 = vmatprep.subr.bf16.mxu0 0
      %1159 = vmatpush1.bf16.msra.mxu0 0
      %1160 = vmatprep.subr.bf16.mxu0 0
      %1161 = vmatpush1.bf16.msra.mxu0 0
      %1162 = vmatprep.subr.bf16.mxu0 0
      %1163 = vmatpush1.bf16.msra.mxu0 0
      %1164 = vmatprep.subr.bf16.mxu0 0
      %1165 = vmatpush1.bf16.msra.mxu0 0
      %1166 = vmatprep.subr.bf16.mxu0 0
      %1167 = vmatpush1.bf16.msra.mxu0 0
      %1168 = vmatprep.mubr.bf16.mxu0 0
      %1169 = vmatmul.mubr.bf16.gmra.mrb[0].mxu0 %v1093
      %v1170 = vpop.f32.mrb[0].mxu0
      %v1171 = vadd.f32 %v1130, %v1170
      %v1172 = vpop.f32.mrb[0].mxu0
      %v1173 = vadd.f32 %v1132, %v1172
      %v1174 = vpop.f32.mrb[0].mxu0
      %v1175 = vpop.f32.mrb[0].mxu0
      %1176 = vdwg.mxu0
      %v1177 = vxor.u32 %v1171, 2147483648
      %v1178 = vxor.u32 %v1173, 2147483648
      %v1179 = vmul.f32 %v1177, 1.442695
      %v1180 = vpow.pop %v1179
      %v1181 = vmul.f32 %v1178, 1.442695
      %v1182 = vpow.pop %v1181
      %v1183 = vadd.f32 %v1180, 1.0
      %v1184 = vadd.f32 %v1182, 1.0
      %v1185 = vrcp.pop %v1183
      %v1186 = vmul.f32 1.0, %v1185
      %v1187 = vrcp.pop %v1184
      %v1188 = vmul.f32 1.0, %v1187
      %v1189 = vpack.c.bf16 %v1186, %v1186
      %v1190 = vpack.c.bf16 %v1188, %v1188
      %v1191 = vld [vmem:[%s6] sm:$0xff]
      %v1192 = vld [vmem:[%s6 + $0x8] sm:$0xff]
      %v1193 = vld [vmem:[%s6 + $0x10] sm:$0xff]
      %v1194 = vld [vmem:[%s6 + $0x18] sm:$0xf]
      %v1195 = vld [vmem:[%s6 + $0x1c] sm:$0xff]
      %v1196 = vld [vmem:[%s6 + $0x24] sm:$0xff]
      %v1197 = vld [vmem:[%s6 + $0x2c] sm:$0xff]
      %v1198 = vld [vmem:[%s6 + $0x34] sm:$0xf]
      %v1199 = vld [vmem:[%s6 + $0x38] sm:$0xff]
      %v1200 = vld [vmem:[%s6 + $0x40] sm:$0xff]
      %v1201 = vld [vmem:[%s6 + $0x48] sm:$0xff]
      %v1202 = vld [vmem:[%s6 + $0x50] sm:$0xf]
      %v1203 = vld [vmem:[%s6 + $0x54] sm:$0xff]
      %v1204 = vld [vmem:[%s6 + $0x5c] sm:$0xff]
      %v1205 = vld [vmem:[%s6 + $0x64] sm:$0xff]
      %v1206 = vld [vmem:[%s6 + $0x6c] sm:$0xf]
      %v1207 = vld [vmem:[%s6 + $0x70] sm:$0xff]
      %v1208 = vld [vmem:[%s6 + $0x78] sm:$0xff]
      %v1209 = vld [vmem:[%s6 + $0x80] sm:$0xff]
      %v1210 = vld [vmem:[%s6 + $0x88] sm:$0xf]
      %v1211 = vld [vmem:[%s6 + $0x8c] sm:$0xff]
      %v1212 = vld [vmem:[%s6 + $0x94] sm:$0xff]
      %v1213 = vld [vmem:[%s6 + $0x9c] sm:$0xff]
      %v1214 = vld [vmem:[%s6 + $0xa4] sm:$0xf]
      %v1215 = vld [vmem:[%s6 + $0xa8] sm:$0xff]
      %v1216 = vld [vmem:[%s6 + $0xb0] sm:$0xff]
      %v1217 = vld [vmem:[%s6 + $0xb8] sm:$0xff]
      %v1218 = vld [vmem:[%s6 + $0xc0] sm:$0xf]
      %v1219 = vld [vmem:[%s6 + $0xc4] sm:$0xff]
      %v1220 = vld [vmem:[%s6 + $0xcc] sm:$0xff]
      %v1221 = vld [vmem:[%s6 + $0xd4] sm:$0xff]
      %v1222 = vld [vmem:[%s6 + $0xdc] sm:$0xf]
      %v1223 = vld [vmem:[%s6 + $0xe0] sm:$0xff]
      %v1224 = vld [vmem:[%s6 + $0xe8] sm:$0xff]
      %v1225 = vld [vmem:[%s6 + $0xf0] sm:$0xff]
      %v1226 = vld [vmem:[%s6 + $0xf8] sm:$0xf]
      %v1227 = vld [vmem:[%s6 + $0xfc] sm:$0xff]
      %v1228 = vld [vmem:[%s6 + $0x104] sm:$0xff]
      %v1229 = vld [vmem:[%s6 + $0x10c] sm:$0xff]
      %v1230 = vld [vmem:[%s6 + $0x114] sm:$0xf]
      %v1231 = vld [vmem:[%s6 + $0x118] sm:$0xff]
      %v1232 = vld [vmem:[%s6 + $0x120] sm:$0xff]
      %v1233 = vld [vmem:[%s6 + $0x128] sm:$0xff]
      %v1234 = vld [vmem:[%s6 + $0x130] sm:$0xf]
      %v1235 = vld [vmem:[%s6 + $0x134] sm:$0xff]
      %v1236 = vld [vmem:[%s6 + $0x13c] sm:$0xff]
      %v1237 = vld [vmem:[%s6 + $0x144] sm:$0xff]
      %v1238 = vld [vmem:[%s6 + $0x14c] sm:$0xf]
      %v1239 = vld [vmem:[%s6 + $0x150] sm:$0xff]
      %v1240 = vld [vmem:[%s6 + $0x158] sm:$0xff]
      %v1241 = vld [vmem:[%s6 + $0x160] sm:$0xff]
      %v1242 = vld [vmem:[%s6 + $0x168] sm:$0xf]
      %v1243 = vld [vmem:[%s6 + $0x16c] sm:$0xff]
      %v1244 = vld [vmem:[%s6 + $0x174] sm:$0xff]
      %v1245 = vld [vmem:[%s6 + $0x17c] sm:$0xff]
      %v1246 = vld [vmem:[%s6 + $0x184] sm:$0xf]
      %v1247 = vld [vmem:[%s6 + $0x188] sm:$0xff]
      %v1248 = vld [vmem:[%s6 + $0x190] sm:$0xff]
      %v1249 = vld [vmem:[%s6 + $0x198] sm:$0xff]
      %v1250 = vld [vmem:[%s6 + $0x1a0] sm:$0xf]
      %v1251 = vld [vmem:[%s6 + $0x1a4] sm:$0xff]
      %v1252 = vld [vmem:[%s6 + $0x1ac] sm:$0xff]
      %v1253 = vld [vmem:[%s6 + $0x1b4] sm:$0xff]
      %v1254 = vld [vmem:[%s6 + $0x1bc] sm:$0xf]
      %v1255 = vld [vmem:[%s6 + $0x1c0] sm:$0xff]
      %v1256 = vld [vmem:[%s6 + $0x1c8] sm:$0xff]
      %v1257 = vld [vmem:[%s6 + $0x1d0] sm:$0xff]
      %v1258 = vld [vmem:[%s6 + $0x1d8] sm:$0xf]
      %v1259 = vld [vmem:[%s6 + $0x1dc] sm:$0xff]
      %v1260 = vld [vmem:[%s6 + $0x1e4] sm:$0xff]
      %v1261 = vld [vmem:[%s6 + $0x1ec] sm:$0xff]
      %v1262 = vld [vmem:[%s6 + $0x1f4] sm:$0xf]
      %v1263 = vld [vmem:[%s6 + $0x1f8] sm:$0xff]
      %v1264 = vld [vmem:[%s6 + $0x200] sm:$0xff]
      %v1265 = vld [vmem:[%s6 + $0x208] sm:$0xff]
      %v1266 = vld [vmem:[%s6 + $0x210] sm:$0xf]
      %v1267 = vld [vmem:[%s6 + $0x214] sm:$0xff]
      %v1268 = vld [vmem:[%s6 + $0x21c] sm:$0xff]
      %v1269 = vld [vmem:[%s6 + $0x224] sm:$0xff]
      %v1270 = vld [vmem:[%s6 + $0x22c] sm:$0xf]
      %v1271 = vld [vmem:[%s6 + $0x230] sm:$0xff]
      %v1272 = vld [vmem:[%s6 + $0x238] sm:$0xff]
      %v1273 = vld [vmem:[%s6 + $0x240] sm:$0xff]
      %v1274 = vld [vmem:[%s6 + $0x248] sm:$0xf]
      %v1275 = vld [vmem:[%s6 + $0x24c] sm:$0xff]
      %v1276 = vld [vmem:[%s6 + $0x254] sm:$0xff]
      %v1277 = vld [vmem:[%s6 + $0x25c] sm:$0xff]
      %v1278 = vld [vmem:[%s6 + $0x264] sm:$0xf]
      %v1279 = vld [vmem:[%s6 + $0x268] sm:$0xff]
      %v1280 = vld [vmem:[%s6 + $0x270] sm:$0xff]
      %v1281 = vld [vmem:[%s6 + $0x278] sm:$0xff]
      %v1282 = vld [vmem:[%s6 + $0x280] sm:$0xf]
      %v1283 = vld [vmem:[%s6 + $0x284] sm:$0xff]
      %v1284 = vld [vmem:[%s6 + $0x28c] sm:$0xff]
      %v1285 = vld [vmem:[%s6 + $0x294] sm:$0xff]
      %v1286 = vld [vmem:[%s6 + $0x29c] sm:$0xf]
      %v1287 = vld [vmem:[%s6 + $0x2a0] sm:$0xff]
      %v1288 = vld [vmem:[%s6 + $0x2a8] sm:$0xff]
      %v1289 = vld [vmem:[%s6 + $0x2b0] sm:$0xff]
      %v1290 = vld [vmem:[%s6 + $0x2b8] sm:$0xf]
      %v1291 = vld [vmem:[%s6 + $0x2bc] sm:$0xff]
      %v1292 = vld [vmem:[%s6 + $0x2c4] sm:$0xff]
      %v1293 = vld [vmem:[%s6 + $0x2cc] sm:$0xff]
      %v1294 = vld [vmem:[%s6 + $0x2d4] sm:$0xf]
      %v1295 = vld [vmem:[%s6 + $0x2d8] sm:$0xff]
      %v1296 = vld [vmem:[%s6 + $0x2e0] sm:$0xff]
      %v1297 = vld [vmem:[%s6 + $0x2e8] sm:$0xff]
      %v1298 = vld [vmem:[%s6 + $0x2f0] sm:$0xf]
      %v1299 = vld [vmem:[%s6 + $0x2f4] sm:$0xff]
      %v1300 = vld [vmem:[%s6 + $0x2fc] sm:$0xff]
      %v1301 = vld [vmem:[%s6 + $0x304] sm:$0xff]
      %v1302 = vld [vmem:[%s6 + $0x30c] sm:$0xf]
      %v1303 = vld [vmem:[%s6 + $0x310] sm:$0xff]
      %v1304 = vld [vmem:[%s6 + $0x318] sm:$0xff]
      %v1305 = vld [vmem:[%s6 + $0x320] sm:$0xff]
      %v1306 = vld [vmem:[%s6 + $0x328] sm:$0xf]
      %v1307 = vld [vmem:[%s6 + $0x32c] sm:$0xff]
      %v1308 = vld [vmem:[%s6 + $0x334] sm:$0xff]
      %v1309 = vld [vmem:[%s6 + $0x33c] sm:$0xff]
      %v1310 = vld [vmem:[%s6 + $0x344] sm:$0xf]
      %v1311 = vld [vmem:[%s6 + $0x348] sm:$0xff]
      %v1312 = vld [vmem:[%s6 + $0x350] sm:$0xff]
      %v1313 = vld [vmem:[%s6 + $0x358] sm:$0xff]
      %v1314 = vld [vmem:[%s6 + $0x360] sm:$0xf]
      %v1315 = vld [vmem:[%s6 + $0x364] sm:$0xff]
      %v1316 = vld [vmem:[%s6 + $0x36c] sm:$0xff]
      %v1317 = vld [vmem:[%s6 + $0x374] sm:$0xff]
      %v1318 = vld [vmem:[%s6 + $0x37c] sm:$0xf]
      %v1447 = vunpack.c.l.b16 %v1191
      %v1448 = vunpack.c.h.b16 %v1191
      %v1449 = vunpack.c.l.b16 %v1192
      %v1450 = vunpack.c.h.b16 %v1192
      %v1451 = vunpack.c.l.b16 %v1193
      %v1452 = vunpack.c.h.b16 %v1193
      %v1453 = vunpack.c.l.b16 %v1194
      %v1454 = vunpack.c.l.b16 %v1195
      %v1455 = vunpack.c.h.b16 %v1195
      %v1456 = vunpack.c.l.b16 %v1196
      %v1457 = vunpack.c.h.b16 %v1196
      %v1458 = vunpack.c.l.b16 %v1197
      %v1459 = vunpack.c.h.b16 %v1197
      %v1460 = vunpack.c.l.b16 %v1198
      %v1461 = vunpack.c.l.b16 %v1199
      %v1462 = vunpack.c.h.b16 %v1199
      %v1463 = vunpack.c.l.b16 %v1200
      %v1464 = vunpack.c.h.b16 %v1200
      %v1465 = vunpack.c.l.b16 %v1201
      %v1466 = vunpack.c.h.b16 %v1201
      %v1467 = vunpack.c.l.b16 %v1202
      %v1468 = vunpack.c.l.b16 %v1203
      %v1469 = vunpack.c.h.b16 %v1203
      %v1470 = vunpack.c.l.b16 %v1204
      %v1471 = vunpack.c.h.b16 %v1204
      %v1472 = vunpack.c.l.b16 %v1205
      %v1473 = vunpack.c.h.b16 %v1205
      %v1474 = vunpack.c.l.b16 %v1206
      %v1475 = vunpack.c.l.b16 %v1207
      %v1476 = vunpack.c.h.b16 %v1207
      %v1477 = vunpack.c.l.b16 %v1208
      %v1478 = vunpack.c.h.b16 %v1208
      %v1479 = vunpack.c.l.b16 %v1209
      %v1480 = vunpack.c.h.b16 %v1209
      %v1481 = vunpack.c.l.b16 %v1210
      %v1482 = vunpack.c.l.b16 %v1211
      %v1483 = vunpack.c.h.b16 %v1211
      %v1484 = vunpack.c.l.b16 %v1212
      %v1485 = vunpack.c.h.b16 %v1212
      %v1486 = vunpack.c.l.b16 %v1213
      %v1487 = vunpack.c.h.b16 %v1213
      %v1488 = vunpack.c.l.b16 %v1214
      %v1489 = vunpack.c.l.b16 %v1215
      %v1490 = vunpack.c.h.b16 %v1215
      %v1491 = vunpack.c.l.b16 %v1216
      %v1492 = vunpack.c.h.b16 %v1216
      %v1493 = vunpack.c.l.b16 %v1217
      %v1494 = vunpack.c.h.b16 %v1217
      %v1495 = vunpack.c.l.b16 %v1218
      %v1496 = vunpack.c.l.b16 %v1219
      %v1497 = vunpack.c.h.b16 %v1219
      %v1498 = vunpack.c.l.b16 %v1220
      %v1499 = vunpack.c.h.b16 %v1220
      %v1500 = vunpack.c.l.b16 %v1221
      %v1501 = vunpack.c.h.b16 %v1221
      %v1502 = vunpack.c.l.b16 %v1222
      %v1503 = vunpack.c.l.b16 %v1223
      %v1504 = vunpack.c.h.b16 %v1223
      %v1505 = vunpack.c.l.b16 %v1224
      %v1506 = vunpack.c.h.b16 %v1224
      %v1507 = vunpack.c.l.b16 %v1225
      %v1508 = vunpack.c.h.b16 %v1225
      %v1509 = vunpack.c.l.b16 %v1226
      %v1510 = vunpack.c.l.b16 %v1227
      %v1511 = vunpack.c.h.b16 %v1227
      %v1512 = vunpack.c.l.b16 %v1228
      %v1513 = vunpack.c.h.b16 %v1228
      %v1514 = vunpack.c.l.b16 %v1229
      %v1515 = vunpack.c.h.b16 %v1229
      %v1516 = vunpack.c.l.b16 %v1230
      %v1517 = vunpack.c.l.b16 %v1231
      %v1518 = vunpack.c.h.b16 %v1231
      %v1519 = vunpack.c.l.b16 %v1232
      %v1520 = vunpack.c.h.b16 %v1232
      %v1521 = vunpack.c.l.b16 %v1233
      %v1522 = vunpack.c.h.b16 %v1233
      %v1523 = vunpack.c.l.b16 %v1234
      %v1524 = vunpack.c.l.b16 %v1235
      %v1525 = vunpack.c.h.b16 %v1235
      %v1526 = vunpack.c.l.b16 %v1236
      %v1527 = vunpack.c.h.b16 %v1236
      %v1528 = vunpack.c.l.b16 %v1237
      %v1529 = vunpack.c.h.b16 %v1237
      %v1530 = vunpack.c.l.b16 %v1238
      %v1531 = vunpack.c.l.b16 %v1239
      %v1532 = vunpack.c.h.b16 %v1239
      %v1533 = vunpack.c.l.b16 %v1240
      %v1534 = vunpack.c.h.b16 %v1240
      %v1535 = vunpack.c.l.b16 %v1241
      %v1536 = vunpack.c.h.b16 %v1241
      %v1537 = vunpack.c.l.b16 %v1242
      %v1538 = vunpack.c.l.b16 %v1243
      %v1539 = vunpack.c.h.b16 %v1243
      %v1540 = vunpack.c.l.b16 %v1244
      %v1541 = vunpack.c.h.b16 %v1244
      %v1542 = vunpack.c.l.b16 %v1245
      %v1543 = vunpack.c.h.b16 %v1245
      %v1544 = vunpack.c.l.b16 %v1246
      %v1545 = vunpack.c.l.b16 %v1247
      %v1546 = vunpack.c.h.b16 %v1247
      %v1547 = vunpack.c.l.b16 %v1248
      %v1548 = vunpack.c.h.b16 %v1248
      %v1549 = vunpack.c.l.b16 %v1249
      %v1550 = vunpack.c.h.b16 %v1249
      %v1551 = vunpack.c.l.b16 %v1250
      %v1552 = vunpack.c.l.b16 %v1251
      %v1553 = vunpack.c.h.b16 %v1251
      %v1554 = vunpack.c.l.b16 %v1252
      %v1555 = vunpack.c.h.b16 %v1252
      %v1556 = vunpack.c.l.b16 %v1253
      %v1557 = vunpack.c.h.b16 %v1253
      %v1558 = vunpack.c.l.b16 %v1254
      %v1559 = vunpack.c.l.b16 %v1255
      %v1560 = vunpack.c.h.b16 %v1255
      %v1561 = vunpack.c.l.b16 %v1256
      %v1562 = vunpack.c.h.b16 %v1256
      %v1563 = vunpack.c.l.b16 %v1257
      %v1564 = vunpack.c.h.b16 %v1257
      %v1565 = vunpack.c.l.b16 %v1258
      %v1566 = vunpack.c.l.b16 %v1259
      %v1567 = vunpack.c.h.b16 %v1259
      %v1568 = vunpack.c.l.b16 %v1260
      %v1569 = vunpack.c.h.b16 %v1260
      %v1570 = vunpack.c.l.b16 %v1261
      %v1571 = vunpack.c.h.b16 %v1261
      %v1572 = vunpack.c.l.b16 %v1262
      %v1573 = vunpack.c.l.b16 %v1263
      %v1574 = vunpack.c.h.b16 %v1263
      %v1575 = vunpack.c.l.b16 %v1264
      %v1576 = vunpack.c.h.b16 %v1264
      %v1577 = vunpack.c.l.b16 %v1265
      %v1578 = vunpack.c.h.b16 %v1265
      %v1579 = vunpack.c.l.b16 %v1266
      %v1580 = vunpack.c.l.b16 %v1267
      %v1581 = vunpack.c.h.b16 %v1267
      %v1582 = vunpack.c.l.b16 %v1268
      %v1583 = vunpack.c.h.b16 %v1268
      %v1584 = vunpack.c.l.b16 %v1269
      %v1585 = vunpack.c.h.b16 %v1269
      %v1586 = vunpack.c.l.b16 %v1270
      %v1587 = vunpack.c.l.b16 %v1271
      %v1588 = vunpack.c.h.b16 %v1271
      %v1589 = vunpack.c.l.b16 %v1272
      %v1590 = vunpack.c.h.b16 %v1272
      %v1591 = vunpack.c.l.b16 %v1273
      %v1592 = vunpack.c.h.b16 %v1273
      %v1593 = vunpack.c.l.b16 %v1274
      %v1594 = vunpack.c.l.b16 %v1275
      %v1595 = vunpack.c.h.b16 %v1275
      %v1596 = vunpack.c.l.b16 %v1276
      %v1597 = vunpack.c.h.b16 %v1276
      %v1598 = vunpack.c.l.b16 %v1277
      %v1599 = vunpack.c.h.b16 %v1277
      %v1600 = vunpack.c.l.b16 %v1278
      %v1601 = vunpack.c.l.b16 %v1279
      %v1602 = vunpack.c.h.b16 %v1279
      %v1603 = vunpack.c.l.b16 %v1280
      %v1604 = vunpack.c.h.b16 %v1280
      %v1605 = vunpack.c.l.b16 %v1281
      %v1606 = vunpack.c.h.b16 %v1281
      %v1607 = vunpack.c.l.b16 %v1282
      %v1608 = vunpack.c.l.b16 %v1283
      %v1609 = vunpack.c.h.b16 %v1283
      %v1610 = vunpack.c.l.b16 %v1284
      %v1611 = vunpack.c.h.b16 %v1284
      %v1612 = vunpack.c.l.b16 %v1285
      %v1613 = vunpack.c.h.b16 %v1285
      %v1614 = vunpack.c.l.b16 %v1286
      %v1615 = vunpack.c.l.b16 %v1287
      %v1616 = vunpack.c.h.b16 %v1287
      %v1617 = vunpack.c.l.b16 %v1288
      %v1618 = vunpack.c.h.b16 %v1288
      %v1619 = vunpack.c.l.b16 %v1289
      %v1620 = vunpack.c.h.b16 %v1289
      %v1621 = vunpack.c.l.b16 %v1290
      %v1622 = vunpack.c.l.b16 %v1291
      %v1623 = vunpack.c.h.b16 %v1291
      %v1624 = vunpack.c.l.b16 %v1292
      %v1625 = vunpack.c.h.b16 %v1292
      %v1626 = vunpack.c.l.b16 %v1293
      %v1627 = vunpack.c.h.b16 %v1293
      %v1628 = vunpack.c.l.b16 %v1294
      %v1629 = vunpack.c.l.b16 %v1295
      %v1630 = vunpack.c.h.b16 %v1295
      %v1631 = vunpack.c.l.b16 %v1296
      %v1632 = vunpack.c.h.b16 %v1296
      %v1633 = vunpack.c.l.b16 %v1297
      %v1634 = vunpack.c.h.b16 %v1297
      %v1635 = vunpack.c.l.b16 %v1298
      %v1636 = vunpack.c.l.b16 %v1299
      %v1637 = vunpack.c.h.b16 %v1299
      %v1638 = vunpack.c.l.b16 %v1300
      %v1639 = vunpack.c.h.b16 %v1300
      %v1640 = vunpack.c.l.b16 %v1301
      %v1641 = vunpack.c.h.b16 %v1301
      %v1642 = vunpack.c.l.b16 %v1302
      %v1643 = vunpack.c.l.b16 %v1303
      %v1644 = vunpack.c.h.b16 %v1303
      %v1645 = vunpack.c.l.b16 %v1304
      %v1646 = vunpack.c.h.b16 %v1304
      %v1647 = vunpack.c.l.b16 %v1305
      %v1648 = vunpack.c.h.b16 %v1305
      %v1649 = vunpack.c.l.b16 %v1306
      %v1650 = vunpack.c.l.b16 %v1307
      %v1651 = vunpack.c.h.b16 %v1307
      %v1652 = vunpack.c.l.b16 %v1308
      %v1653 = vunpack.c.h.b16 %v1308
      %v1654 = vunpack.c.l.b16 %v1309
      %v1655 = vunpack.c.h.b16 %v1309
      %v1656 = vunpack.c.l.b16 %v1310
      %v1657 = vunpack.c.l.b16 %v1311
      %v1658 = vunpack.c.h.b16 %v1311
      %v1659 = vunpack.c.l.b16 %v1312
      %v1660 = vunpack.c.h.b16 %v1312
      %v1661 = vunpack.c.l.b16 %v1313
      %v1662 = vunpack.c.h.b16 %v1313
      %v1663 = vunpack.c.l.b16 %v1314
      %v1664 = vunpack.c.l.b16 %v1315
      %v1665 = vunpack.c.h.b16 %v1315
      %v1666 = vunpack.c.l.b16 %v1316
      %v1667 = vunpack.c.h.b16 %v1316
      %v1668 = vunpack.c.l.b16 %v1317
      %v1669 = vunpack.c.h.b16 %v1317
      %v1670 = vunpack.c.l.b16 %v1318
      %v1671 = vpack.c.b16 %v1454, %v1447
      %v1672 = vpack.c.b16 %v1455, %v1448
      %v1673 = vpack.c.b16 %v1456, %v1449
      %v1674 = vpack.c.b16 %v1457, %v1450
      %v1675 = vpack.c.b16 %v1458, %v1451
      %v1676 = vpack.c.b16 %v1459, %v1452
      %v1677 = vpack.c.b16 %v1460, %v1453
      %v1678 = vpack.c.b16 %v1468, %v1461
      %v1679 = vpack.c.b16 %v1469, %v1462
      %v1680 = vpack.c.b16 %v1470, %v1463
      %v1681 = vpack.c.b16 %v1471, %v1464
      %v1682 = vpack.c.b16 %v1472, %v1465
      %v1683 = vpack.c.b16 %v1473, %v1466
      %v1684 = vpack.c.b16 %v1474, %v1467
      %v1685 = vpack.c.b16 %v1482, %v1475
      %v1686 = vpack.c.b16 %v1483, %v1476
      %v1687 = vpack.c.b16 %v1484, %v1477
      %v1688 = vpack.c.b16 %v1485, %v1478
      %v1689 = vpack.c.b16 %v1486, %v1479
      %v1690 = vpack.c.b16 %v1487, %v1480
      %v1691 = vpack.c.b16 %v1488, %v1481
      %v1692 = vpack.c.b16 %v1496, %v1489
      %v1693 = vpack.c.b16 %v1497, %v1490
      %v1694 = vpack.c.b16 %v1498, %v1491
      %v1695 = vpack.c.b16 %v1499, %v1492
      %v1696 = vpack.c.b16 %v1500, %v1493
      %v1697 = vpack.c.b16 %v1501, %v1494
      %v1698 = vpack.c.b16 %v1502, %v1495
      %v1699 = vpack.c.b16 %v1510, %v1503
      %v1700 = vpack.c.b16 %v1511, %v1504
      %v1701 = vpack.c.b16 %v1512, %v1505
      %v1702 = vpack.c.b16 %v1513, %v1506
      %v1703 = vpack.c.b16 %v1514, %v1507
      %v1704 = vpack.c.b16 %v1515, %v1508
      %v1705 = vpack.c.b16 %v1516, %v1509
      %v1706 = vpack.c.b16 %v1524, %v1517
      %v1707 = vpack.c.b16 %v1525, %v1518
      %v1708 = vpack.c.b16 %v1526, %v1519
      %v1709 = vpack.c.b16 %v1527, %v1520
      %v1710 = vpack.c.b16 %v1528, %v1521
      %v1711 = vpack.c.b16 %v1529, %v1522
      %v1712 = vpack.c.b16 %v1530, %v1523
      %v1713 = vpack.c.b16 %v1538, %v1531
      %v1714 = vpack.c.b16 %v1539, %v1532
      %v1715 = vpack.c.b16 %v1540, %v1533
      %v1716 = vpack.c.b16 %v1541, %v1534
      %v1717 = vpack.c.b16 %v1542, %v1535
      %v1718 = vpack.c.b16 %v1543, %v1536
      %v1719 = vpack.c.b16 %v1544, %v1537
      %v1720 = vpack.c.b16 %v1552, %v1545
      %v1721 = vpack.c.b16 %v1553, %v1546
      %v1722 = vpack.c.b16 %v1554, %v1547
      %v1723 = vpack.c.b16 %v1555, %v1548
      %v1724 = vpack.c.b16 %v1556, %v1549
      %v1725 = vpack.c.b16 %v1557, %v1550
      %v1726 = vpack.c.b16 %v1558, %v1551
      %v1727 = vpack.c.b16 %v1566, %v1559
      %v1728 = vpack.c.b16 %v1567, %v1560
      %v1729 = vpack.c.b16 %v1568, %v1561
      %v1730 = vpack.c.b16 %v1569, %v1562
      %v1731 = vpack.c.b16 %v1570, %v1563
      %v1732 = vpack.c.b16 %v1571, %v1564
      %v1733 = vpack.c.b16 %v1572, %v1565
      %v1734 = vpack.c.b16 %v1580, %v1573
      %v1735 = vpack.c.b16 %v1581, %v1574
      %v1736 = vpack.c.b16 %v1582, %v1575
      %v1737 = vpack.c.b16 %v1583, %v1576
      %v1738 = vpack.c.b16 %v1584, %v1577
      %v1739 = vpack.c.b16 %v1585, %v1578
      %v1740 = vpack.c.b16 %v1586, %v1579
      %v1741 = vpack.c.b16 %v1594, %v1587
      %v1742 = vpack.c.b16 %v1595, %v1588
      %v1743 = vpack.c.b16 %v1596, %v1589
      %v1744 = vpack.c.b16 %v1597, %v1590
      %v1745 = vpack.c.b16 %v1598, %v1591
      %v1746 = vpack.c.b16 %v1599, %v1592
      %v1747 = vpack.c.b16 %v1600, %v1593
      %v1748 = vpack.c.b16 %v1608, %v1601
      %v1749 = vpack.c.b16 %v1609, %v1602
      %v1750 = vpack.c.b16 %v1610, %v1603
      %v1751 = vpack.c.b16 %v1611, %v1604
      %v1752 = vpack.c.b16 %v1612, %v1605
      %v1753 = vpack.c.b16 %v1613, %v1606
      %v1754 = vpack.c.b16 %v1614, %v1607
      %v1755 = vpack.c.b16 %v1622, %v1615
      %v1756 = vpack.c.b16 %v1623, %v1616
      %v1757 = vpack.c.b16 %v1624, %v1617
      %v1758 = vpack.c.b16 %v1625, %v1618
      %v1759 = vpack.c.b16 %v1626, %v1619
      %v1760 = vpack.c.b16 %v1627, %v1620
      %v1761 = vpack.c.b16 %v1628, %v1621
      %v1762 = vpack.c.b16 %v1636, %v1629
      %v1763 = vpack.c.b16 %v1637, %v1630
      %v1764 = vpack.c.b16 %v1638, %v1631
      %v1765 = vpack.c.b16 %v1639, %v1632
      %v1766 = vpack.c.b16 %v1640, %v1633
      %v1767 = vpack.c.b16 %v1641, %v1634
      %v1768 = vpack.c.b16 %v1642, %v1635
      %v1769 = vpack.c.b16 %v1650, %v1643
      %v1770 = vpack.c.b16 %v1651, %v1644
      %v1771 = vpack.c.b16 %v1652, %v1645
      %v1772 = vpack.c.b16 %v1653, %v1646
      %v1773 = vpack.c.b16 %v1654, %v1647
      %v1774 = vpack.c.b16 %v1655, %v1648
      %v1775 = vpack.c.b16 %v1656, %v1649
      %v1776 = vpack.c.b16 %v1664, %v1657
      %v1777 = vpack.c.b16 %v1665, %v1658
      %v1778 = vpack.c.b16 %v1666, %v1659
      %v1779 = vpack.c.b16 %v1667, %v1660
      %v1780 = vpack.c.b16 %v1668, %v1661
      %v1781 = vpack.c.b16 %v1669, %v1662
      %v1782 = vpack.c.b16 %v1670, %v1663
      %1895 = vmatprep.subr.bf16.mxu0 %v1672
      %1896 = vmatpush1.bf16.msra.mxu0 %v1671
      %1897 = vmatprep.subr.bf16.mxu0 %v1679
      %1898 = vmatpush1.bf16.msra.mxu0 %v1678
      %1899 = vmatprep.subr.bf16.mxu0 %v1686
      %1900 = vmatpush1.bf16.msra.mxu0 %v1685
      %1901 = vmatprep.subr.bf16.mxu0 %v1693
      %1902 = vmatpush1.bf16.msra.mxu0 %v1692
      %1903 = vmatprep.subr.bf16.mxu0 %v1700
      %1904 = vmatpush1.bf16.msra.mxu0 %v1699
      %1905 = vmatprep.subr.bf16.mxu0 %v1707
      %1906 = vmatpush1.bf16.msra.mxu0 %v1706
      %1907 = vmatprep.subr.bf16.mxu0 %v1714
      %1908 = vmatpush1.bf16.msra.mxu0 %v1713
      %1909 = vmatprep.subr.bf16.mxu0 %v1721
      %1910 = vmatpush1.bf16.msra.mxu0 %v1720
      %1911 = vmatprep.subr.bf16.mxu0 %v1728
      %1912 = vmatpush1.bf16.msra.mxu0 %v1727
      %1913 = vmatprep.subr.bf16.mxu0 %v1735
      %1914 = vmatpush1.bf16.msra.mxu0 %v1734
      %1915 = vmatprep.subr.bf16.mxu0 %v1742
      %1916 = vmatpush1.bf16.msra.mxu0 %v1741
      %1917 = vmatprep.subr.bf16.mxu0 %v1749
      %1918 = vmatpush1.bf16.msra.mxu0 %v1748
      %1919 = vmatprep.subr.bf16.mxu0 %v1756
      %1920 = vmatpush1.bf16.msra.mxu0 %v1755
      %1921 = vmatprep.subr.bf16.mxu0 %v1763
      %1922 = vmatpush1.bf16.msra.mxu0 %v1762
      %1923 = vmatprep.subr.bf16.mxu0 %v1770
      %1924 = vmatpush1.bf16.msra.mxu0 %v1769
      %1925 = vmatprep.subr.bf16.mxu0 %v1777
      %1926 = vmatpush1.bf16.msra.mxu0 %v1776
      %1927 = vmatprep.mubr.bf16.mxu0 %v1190
      %1928 = vmatmul.mubr.bf16.gmra.mrb[0].mxu0 %v1189
      %v1929 = vpop.f32.mrb[0].mxu0
      %v1930 = vadd.f32 0.0, %v1929
      %v1931 = vpop.f32.mrb[0].mxu0
      %v1932 = vadd.f32 0.0, %v1931
      %v1933 = vpop.f32.mrb[0].mxu0
      %v1934 = vpop.f32.mrb[0].mxu0
      %1935 = vdwg.mxu0
      %1936 = vmatprep.subr.bf16.mxu0 %v1674
      %1937 = vmatpush1.bf16.msra.mxu0 %v1673
      %1938 = vmatprep.subr.bf16.mxu0 %v1681
      %1939 = vmatpush1.bf16.msra.mxu0 %v1680
      %1940 = vmatprep.subr.bf16.mxu0 %v1688
      %1941 = vmatpush1.bf16.msra.mxu0 %v1687
      %1942 = vmatprep.subr.bf16.mxu0 %v1695
      %1943 = vmatpush1.bf16.msra.mxu0 %v1694
      %1944 = vmatprep.subr.bf16.mxu0 %v1702
      %1945 = vmatpush1.bf16.msra.mxu0 %v1701
      %1946 = vmatprep.subr.bf16.mxu0 %v1709
      %1947 = vmatpush1.bf16.msra.mxu0 %v1708
      %1948 = vmatprep.subr.bf16.mxu0 %v1716
      %1949 = vmatpush1.bf16.msra.mxu0 %v1715
      %1950 = vmatprep.subr.bf16.mxu0 %v1723
      %1951 = vmatpush1.bf16.msra.mxu0 %v1722
      %1952 = vmatprep.subr.bf16.mxu0 %v1730
      %1953 = vmatpush1.bf16.msra.mxu0 %v1729
      %1954 = vmatprep.subr.bf16.mxu0 %v1737
      %1955 = vmatpush1.bf16.msra.mxu0 %v1736
      %1956 = vmatprep.subr.bf16.mxu0 %v1744
      %1957 = vmatpush1.bf16.msra.mxu0 %v1743
      %1958 = vmatprep.subr.bf16.mxu0 %v1751
      %1959 = vmatpush1.bf16.msra.mxu0 %v1750
      %1960 = vmatprep.subr.bf16.mxu0 %v1758
      %1961 = vmatpush1.bf16.msra.mxu0 %v1757
      %1962 = vmatprep.subr.bf16.mxu0 %v1765
      %1963 = vmatpush1.bf16.msra.mxu0 %v1764
      %1964 = vmatprep.subr.bf16.mxu0 %v1772
      %1965 = vmatpush1.bf16.msra.mxu0 %v1771
      %1966 = vmatprep.subr.bf16.mxu0 %v1779
      %1967 = vmatpush1.bf16.msra.mxu0 %v1778
      %1968 = vmatprep.mubr.bf16.mxu0 %v1190
      %1969 = vmatmul.mubr.bf16.gmra.mrb[0].mxu0 %v1189
      %v1970 = vpop.f32.mrb[0].mxu0
      %v1971 = vadd.f32 0.0, %v1970
      %v1972 = vpop.f32.mrb[0].mxu0
      %v1973 = vadd.f32 0.0, %v1972
      %v1974 = vpop.f32.mrb[0].mxu0
      %v1975 = vpop.f32.mrb[0].mxu0
      %1976 = vdwg.mxu0
      %1977 = vmatprep.subr.bf16.mxu0 %v1676
      %1978 = vmatpush1.bf16.msra.mxu0 %v1675
      %1979 = vmatprep.subr.bf16.mxu0 %v1683
      %1980 = vmatpush1.bf16.msra.mxu0 %v1682
      %1981 = vmatprep.subr.bf16.mxu0 %v1690
      %1982 = vmatpush1.bf16.msra.mxu0 %v1689
      %1983 = vmatprep.subr.bf16.mxu0 %v1697
      %1984 = vmatpush1.bf16.msra.mxu0 %v1696
      %1985 = vmatprep.subr.bf16.mxu0 %v1704
      %1986 = vmatpush1.bf16.msra.mxu0 %v1703
      %1987 = vmatprep.subr.bf16.mxu0 %v1711
      %1988 = vmatpush1.bf16.msra.mxu0 %v1710
      %1989 = vmatprep.subr.bf16.mxu0 %v1718
      %1990 = vmatpush1.bf16.msra.mxu0 %v1717
      %1991 = vmatprep.subr.bf16.mxu0 %v1725
      %1992 = vmatpush1.bf16.msra.mxu0 %v1724
      %1993 = vmatprep.subr.bf16.mxu0 %v1732
      %1994 = vmatpush1.bf16.msra.mxu0 %v1731
      %1995 = vmatprep.subr.bf16.mxu0 %v1739
      %1996 = vmatpush1.bf16.msra.mxu0 %v1738
      %1997 = vmatprep.subr.bf16.mxu0 %v1746
      %1998 = vmatpush1.bf16.msra.mxu0 %v1745
      %1999 = vmatprep.subr.bf16.mxu0 %v1753
      %2000 = vmatpush1.bf16.msra.mxu0 %v1752
      %2001 = vmatprep.subr.bf16.mxu0 %v1760
      %2002 = vmatpush1.bf16.msra.mxu0 %v1759
      %2003 = vmatprep.subr.bf16.mxu0 %v1767
      %2004 = vmatpush1.bf16.msra.mxu0 %v1766
      %2005 = vmatprep.subr.bf16.mxu0 %v1774
      %2006 = vmatpush1.bf16.msra.mxu0 %v1773
      %2007 = vmatprep.subr.bf16.mxu0 %v1781
      %2008 = vmatpush1.bf16.msra.mxu0 %v1780
      %2009 = vmatprep.mubr.bf16.mxu0 %v1190
      %2010 = vmatmul.mubr.bf16.gmra.mrb[0].mxu0 %v1189
      %v2011 = vpop.f32.mrb[0].mxu0
      %v2012 = vadd.f32 0.0, %v2011
      %v2013 = vpop.f32.mrb[0].mxu0
      %v2014 = vadd.f32 0.0, %v2013
      %v2015 = vpop.f32.mrb[0].mxu0
      %v2016 = vpop.f32.mrb[0].mxu0
      %2017 = vdwg.mxu0
      %2018 = vmatprep.subr.bf16.mxu0 0
      %2019 = vmatpush1.bf16.msra.mxu0 %v1677
      %2020 = vmatprep.subr.bf16.mxu0 0
      %2021 = vmatpush1.bf16.msra.mxu0 %v1684
      %2022 = vmatprep.subr.bf16.mxu0 0
      %2023 = vmatpush1.bf16.msra.mxu0 %v1691
      %2024 = vmatprep.subr.bf16.mxu0 0
      %2025 = vmatpush1.bf16.msra.mxu0 %v1698
      %2026 = vmatprep.subr.bf16.mxu0 0
      %2027 = vmatpush1.bf16.msra.mxu0 %v1705
      %2028 = vmatprep.subr.bf16.mxu0 0
      %2029 = vmatpush1.bf16.msra.mxu0 %v1712
      %2030 = vmatprep.subr.bf16.mxu0 0
      %2031 = vmatpush1.bf16.msra.mxu0 %v1719
      %2032 = vmatprep.subr.bf16.mxu0 0
      %2033 = vmatpush1.bf16.msra.mxu0 %v1726
      %2034 = vmatprep.subr.bf16.mxu0 0
      %2035 = vmatpush1.bf16.msra.mxu0 %v1733
      %2036 = vmatprep.subr.bf16.mxu0 0
      %2037 = vmatpush1.bf16.msra.mxu0 %v1740
      %2038 = vmatprep.subr.bf16.mxu0 0
      %2039 = vmatpush1.bf16.msra.mxu0 %v1747
      %2040 = vmatprep.subr.bf16.mxu0 0
      %2041 = vmatpush1.bf16.msra.mxu0 %v1754
      %2042 = vmatprep.subr.bf16.mxu0 0
      %2043 = vmatpush1.bf16.msra.mxu0 %v1761
      %2044 = vmatprep.subr.bf16.mxu0 0
      %2045 = vmatpush1.bf16.msra.mxu0 %v1768
      %2046 = vmatprep.subr.bf16.mxu0 0
      %2047 = vmatpush1.bf16.msra.mxu0 %v1775
      %2048 = vmatprep.subr.bf16.mxu0 0
      %2049 = vmatpush1.bf16.msra.mxu0 %v1782
      %2050 = vmatprep.mubr.bf16.mxu0 %v1190
      %2051 = vmatmul.mubr.bf16.gmra.mrb[0].mxu0 %v1189
      %v2052 = vpop.f32.mrb[0].mxu0
      %v2053 = vadd.f32 0.0, %v2052
      %v2054 = vpop.f32.mrb[0].mxu0
      %v2055 = vpop.f32.mrb[0].mxu0
      %v2056 = vpop.f32.mrb[0].mxu0
      %2057 = vdwg.mxu0
      %v2064 = vcombine.low %v1930, %v1932
      %v2065 = vcombine.low %v1971, %v1973
      %v2066 = vcombine.low %v2012, %v2014
      %2070 = vst [vmem:[%s278] sm:$0x77] %v2064
      %2071 = vst [vmem:[%s278 + $0x8] sm:$0x77] %v2065
      %2072 = vst [vmem:[%s278 + $0x10] sm:$0x77] %v2066
      %vm2073 = vcmask 124928
      %2074 = vst.msk [vmem:[%s278 + $0x18] sm:$0x7] %vm2073, %v2053
      %p2075 = scmp.lt.s32.totalorder %s18, 1
      %s2076 = scalar_select %p2075, %s18, 1
      %s2077 = smul.addr %s2076, 7
      %s2078 = smul.addr %s2077, 4
      %s2079 = scalar_lea.vmem %s7, %s2078
      // Predicated region
      $region49: #{vae_conv_forward.5} parent=47 // pred_check
        %p2080 = pneg %p188
      $region50: #{vae_conv_forward.5} parent=47 // pred_check_branch
        %2082 = sbr.rel (%p2080) target = $region52
      $region51: #{vae_conv_forward.5} parent=47 // pred_region
        _
      $region52: #{vae_conv_forward.5} parent=47 // pred_fallthru
        _
    $region48: #{vae_conv_forward.5} parent=5 // pred_fallthru
      _
    %p2083 = scmp.le.s32.totalorder 2, %s13
    // Predicated region
    $region53: #{vae_conv_forward.5} parent=5 // pred_check
      %p2084 = pneg %p2083
    $region54: #{vae_conv_forward.5} parent=5 // pred_check_branch
      %2086 = sbr.rel (%p2084) target = $region56
    $region55: #{vae_conv_forward.5} parent=5 // pred_region
      %s2087 = ssub.s32 %s13, 2
      // Predicated region
      $region57: #{vae_conv_forward.5} parent=55 // pred_check
        %p2088 = pneg %p194
      $region58: #{vae_conv_forward.5} parent=55 // pred_check_branch
        %2090 = sbr.rel (%p2088) target = $region60
      $region59: #{vae_conv_forward.5} parent=55 // pred_region
        %p2091 = scmp.lt.s32.totalorder %s19, 1
        %s2092 = scalar_select %p2091, %s19, 1
        %s2093 = smul.addr %s2092, 7
        %s2094 = smul.addr %s2093, 4
        %s2095 = scalar_lea.vmem %s7, %s2094
      $region60: #{vae_conv_forward.5} parent=55 // pred_fallthru
        _
    $region56: #{vae_conv_forward.5} parent=5 // pred_fallthru
      _
  $region6: #{vae_conv_forward.5} parent=0 // loop_footer
    %s17 = sadd.s32 1, %s13
  $region7: #{vae_conv_forward.5} parent=0 // loop_footer_branch
    %12 = sbr.rel target = $region3
  $region8: #{vae_conv_forward.5} parent=0 // loop_exit
    _

// kernel: vae_conv_forward.4
$region0: #{vae_conv_forward.4}
  #allocation0 [shape = 'u32[]', space=smem, size = 0x4, offset = 0x4, fixed_abs, tag = 'smem constant byte address 0x4 - core index']
  #allocation1 [shape = 'u32[144,128]{1,0:T(1,128)}', space=vmem, size = 0x12000, scoped, tag = 'internal scratch']
  %s0 = inlined_call_operand.vmem [shape: bf16[2,1,3136], index: 0, kind: input, shape index: {}]
  %s1 = inlined_call_operand.vmem [shape: f32[2,1,128], index: 1, kind: input, shape index: {}]
  %s2 = inlined_call_operand.vmem [shape: bf16[3136,256], index: 2, kind: input, shape index: {}]
  %s3 = inlined_call_operand.vmem [shape: f32[1,256], index: 3, kind: input, shape index: {}]
  %s4 = inlined_call_operand.vmem [shape: bf16[128,6464], index: 4, kind: input, shape index: {}]
  %s5 = inlined_call_operand.vmem [shape: f32[1,6464], index: 5, kind: input, shape index: {}]
  %s6 = inlined_call_operand.hbm [shape: f32[2,1,128], index: 6, kind: output, shape index: {0}]
  %s7 = inlined_call_operand.hbm [shape: f32[2,1,128], index: 7, kind: output, shape index: {1}]
  %s8 = inlined_call_operand.vmem [shape: bf16[2,1,6464], index: 8, kind: output, shape index: {2}]
  %9 = xla_tuple %s6, %s7, %s8
  %s10 = sld [smem:[#allocation0]]
  $region73: #{vae_conv_forward.4} parent=0
    _
  %s12 = ssub.s32 1, %s10
  %s13 = scalar_select 0, %s12, %s10
  $region1: #{vae_conv_forward.4} parent=0
    #allocation2 [shape = 'u8[1024]{0}', space=vmem, size = 0x400, scoped, tag = 'output window, operand 0']
    #allocation3 [shape = 's32[2]{0}', space=sflag, size = 0x8, scoped, tag = 'scoped memory for vae_conv_forward.4']
    #allocation4 [shape = 'u8[1024]{0}', space=vmem, size = 0x400, scoped, tag = 'output window, operand 1']
    #allocation5 [shape = 's32[2]{0}', space=sflag, size = 0x8, scoped, tag = 'scoped memory for vae_conv_forward.4']
    %14 = vsyncpa [#allocation3], 0
    %s15 = scalar_lea.sflag [#allocation3], 1
    %16 = vsyncpa %s15, 0
    %17 = vsyncpa [#allocation5], 0
    %s18 = scalar_lea.sflag [#allocation5], 1
    %19 = vsyncpa %s18, 0
    loop: start=0, step=1, limit=4
    $region2: #{vae_conv_forward.4} parent=1 // loop_pre_header
      _
    $region3: #{vae_conv_forward.4} parent=1 // loop_header
      %s21 = sphi 0, %s25
      %p22 = scmp.ge.s32.totalorder %s21, 4
      %s31 = sphi 0, %s33
      %s34 = sphi 0, %s31
      %s35 = sphi 0, %s34
      %s51 = sphi 0, %s35
      %s57 = sphi 0, %s59
      %s60 = sphi 0, %s57
      %s61 = sphi 0, %s60
      %s77 = sphi 0, %s61
      %s81 = sphi 0, %s81
      %s83 = sphi 0, %s81
      %s84 = sphi 0, %s83
      %s98 = sphi 0, %s84
      %s102 = sphi 0, %s102
      %s104 = sphi 0, %s102
      %s105 = sphi 0, %s104
      %s119 = sphi 0, %s105
      %s123 = sphi 0, %s123
      %s125 = sphi 0, %s123
      %s126 = sphi 0, %s125
      %s140 = sphi 0, %s126
      %s144 = sphi 0, %s144
      %s146 = sphi 0, %s144
      %s147 = sphi 0, %s146
      %s161 = sphi 0, %s147
      %s167 = sphi 0, %s169
      %s170 = sphi 0, %s167
      %s171 = sphi 0, %s170
      %s187 = sphi 0, %s171
      %s193 = sphi 0, %s195
      %s196 = sphi 0, %s193
      %s197 = sphi 0, %s196
      %s213 = sphi 0, %s197
      %s219 = sphi 0, %s221
      %s222 = sphi 0, %s219
      %s223 = sphi 0, %s222
      %s239 = sphi 0, %s223
    $region4: #{vae_conv_forward.4} parent=1 // loop_header_branch
      %24 = sbr.rel (%p22) target = $region8
    $region5: #{vae_conv_forward.4} parent=1 // loop_body
      %s26 = ssub.s32 %s21, 1
      %s27 = ssub.s32 %s21, 2
      %s28 = sadd.s32 %s21, 1
      %s29 = ssub.s32 %s21, %s28
      %p30 = scmp.eq.s32.totalorder %s29, 0
      %s32 = sadd.s32 %s31, 1
      %s33 = scalar_select %p30, %s31, %s32
      %p36 = pneg %p30
      %p37 = scmp.eq.s32.totalorder %s21, 1
      %p38 = por %p36, %p37
      %p39 = scmp.ne.s32.totalorder %s31, %s34
      %p40 = scmp.eq.s32.totalorder %s21, 0
      %p41 = por %p39, %p40
      %p42 = scmp.ne.s32.totalorder %s31, %s34
      %p43 = scmp.eq.s32.totalorder %s26, 1
      %p44 = por %p42, %p43
      %p45 = scmp.ne.s32.totalorder %s34, %s35
      %p46 = scmp.eq.s32.totalorder %s26, 0
      %p47 = por %p45, %p46
      %p48 = scmp.ne.s32.totalorder %s34, %s35
      %p49 = scmp.eq.s32.totalorder %s27, 1
      %p50 = por %p48, %p49
      %p52 = scmp.ne.s32.totalorder %s35, %s51
      %p53 = scmp.eq.s32.totalorder %s27, 0
      %p54 = por %p52, %p53
      %s55 = ssub.s32 %s21, %s28
      %p56 = scmp.eq.s32.totalorder %s55, 0
      %s58 = sadd.s32 %s57, 1
      %s59 = scalar_select %p56, %s57, %s58
      %p62 = pneg %p56
      %p63 = scmp.eq.s32.totalorder %s21, 1
      %p64 = por %p62, %p63
      %p65 = scmp.ne.s32.totalorder %s57, %s60
      %p66 = scmp.eq.s32.totalorder %s21, 0
      %p67 = por %p65, %p66
      %p68 = scmp.ne.s32.totalorder %s57, %s60
      %p69 = scmp.eq.s32.totalorder %s26, 1
      %p70 = por %p68, %p69
      %p71 = scmp.ne.s32.totalorder %s60, %s61
      %p72 = scmp.eq.s32.totalorder %s26, 0
      %p73 = por %p71, %p72
      %p74 = scmp.ne.s32.totalorder %s60, %s61
      %p75 = scmp.eq.s32.totalorder %s27, 1
      %p76 = por %p74, %p75
      %p78 = scmp.ne.s32.totalorder %s61, %s77
      %p79 = scmp.eq.s32.totalorder %s27, 0
      %p80 = por %p78, %p79
      %s82 = sadd.s32 %s81, 1
      %p85 = scmp.eq.s32.totalorder %s21, 1
      %p86 = scmp.ne.s32.totalorder %s81, %s83
      %p87 = scmp.eq.s32.totalorder %s21, 0
      %p88 = por %p86, %p87
      %p89 = scmp.ne.s32.totalorder %s81, %s83
      %p90 = scmp.eq.s32.totalorder %s26, 1
      %p91 = por %p89, %p90
      %p92 = scmp.ne.s32.totalorder %s83, %s84
      %p93 = scmp.eq.s32.totalorder %s26, 0
      %p94 = por %p92, %p93
      %p95 = scmp.ne.s32.totalorder %s83, %s84
      %p96 = scmp.eq.s32.totalorder %s27, 1
      %p97 = por %p95, %p96
      %p99 = scmp.ne.s32.totalorder %s84, %s98
      %p100 = scmp.eq.s32.totalorder %s27, 0
      %p101 = por %p99, %p100
      %s103 = sadd.s32 %s102, 1
      %p106 = scmp.eq.s32.totalorder %s21, 1
      %p107 = scmp.ne.s32.totalorder %s102, %s104
      %p108 = scmp.eq.s32.totalorder %s21, 0
      %p109 = por %p107, %p108
      %p110 = scmp.ne.s32.totalorder %s102, %s104
      %p111 = scmp.eq.s32.totalorder %s26, 1
      %p112 = por %p110, %p111
      %p113 = scmp.ne.s32.totalorder %s104, %s105
      %p114 = scmp.eq.s32.totalorder %s26, 0
      %p115 = por %p113, %p114
      %p116 = scmp.ne.s32.totalorder %s104, %s105
      %p117 = scmp.eq.s32.totalorder %s27, 1
      %p118 = por %p116, %p117
      %p120 = scmp.ne.s32.totalorder %s105, %s119
      %p121 = scmp.eq.s32.totalorder %s27, 0
      %p122 = por %p120, %p121
      %s124 = sadd.s32 %s123, 1
      %p127 = scmp.eq.s32.totalorder %s21, 1
      %p128 = scmp.ne.s32.totalorder %s123, %s125
      %p129 = scmp.eq.s32.totalorder %s21, 0
      %p130 = por %p128, %p129
      %p131 = scmp.ne.s32.totalorder %s123, %s125
      %p132 = scmp.eq.s32.totalorder %s26, 1
      %p133 = por %p131, %p132
      %p134 = scmp.ne.s32.totalorder %s125, %s126
      %p135 = scmp.eq.s32.totalorder %s26, 0
      %p136 = por %p134, %p135
      %p137 = scmp.ne.s32.totalorder %s125, %s126
      %p138 = scmp.eq.s32.totalorder %s27, 1
      %p139 = por %p137, %p138
      %p141 = scmp.ne.s32.totalorder %s126, %s140
      %p142 = scmp.eq.s32.totalorder %s27, 0
      %p143 = por %p141, %p142
      %s145 = sadd.s32 %s144, 1
      %p148 = scmp.eq.s32.totalorder %s21, 1
      %p149 = scmp.ne.s32.totalorder %s144, %s146
      %p150 = scmp.eq.s32.totalorder %s21, 0
      %p151 = por %p149, %p150
      %p152 = scmp.ne.s32.totalorder %s144, %s146
      %p153 = scmp.eq.s32.totalorder %s26, 1
      %p154 = por %p152, %p153
      %p155 = scmp.ne.s32.totalorder %s146, %s147
      %p156 = scmp.eq.s32.totalorder %s26, 0
      %p157 = por %p155, %p156
      %p158 = scmp.ne.s32.totalorder %s146, %s147
      %p159 = scmp.eq.s32.totalorder %s27, 1
      %p160 = por %p158, %p159
      %p162 = scmp.ne.s32.totalorder %s147, %s161
      %p163 = scmp.eq.s32.totalorder %s27, 0
      %p164 = por %p162, %p163
      %s165 = ssub.s32 %s21, %s28
      %p166 = scmp.eq.s32.totalorder %s165, 0
      %s168 = sadd.s32 %s167, 1
      %s169 = scalar_select %p166, %s167, %s168
      %p172 = pneg %p166
      %p173 = scmp.eq.s32.totalorder %s21, 1
      %p174 = por %p172, %p173
      %p175 = scmp.ne.s32.totalorder %s167, %s170
      %p176 = scmp.eq.s32.totalorder %s21, 0
      %p177 = por %p175, %p176
      %p178 = scmp.ne.s32.totalorder %s167, %s170
      %p179 = scmp.eq.s32.totalorder %s26, 1
      %p180 = por %p178, %p179
      %p181 = scmp.ne.s32.totalorder %s170, %s171
      %p182 = scmp.eq.s32.totalorder %s26, 0
      %p183 = por %p181, %p182
      %p184 = scmp.ne.s32.totalorder %s170, %s171
      %p185 = scmp.eq.s32.totalorder %s27, 1
      %p186 = por %p184, %p185
      %p188 = scmp.ne.s32.totalorder %s171, %s187
      %p189 = scmp.eq.s32.totalorder %s27, 0
      %p190 = por %p188, %p189
      %s191 = ssub.s32 %s21, %s28
      %p192 = scmp.eq.s32.totalorder %s191, 0
      %s194 = sadd.s32 %s193, 1
      %s195 = scalar_select %p192, %s193, %s194
      %p198 = pneg %p192
      %p199 = scmp.eq.s32.totalorder %s21, 1
      %p200 = por %p198, %p199
      %p201 = scmp.ne.s32.totalorder %s193, %s196
      %p202 = scmp.eq.s32.totalorder %s21, 0
      %p203 = por %p201, %p202
      %p204 = scmp.ne.s32.totalorder %s193, %s196
      %p205 = scmp.eq.s32.totalorder %s26, 1
      %p206 = por %p204, %p205
      %p207 = scmp.ne.s32.totalorder %s196, %s197
      %p208 = scmp.eq.s32.totalorder %s26, 0
      %p209 = por %p207, %p208
      %p210 = scmp.ne.s32.totalorder %s196, %s197
      %p211 = scmp.eq.s32.totalorder %s27, 1
      %p212 = por %p210, %p211
      %p214 = scmp.ne.s32.totalorder %s197, %s213
      %p215 = scmp.eq.s32.totalorder %s27, 0
      %p216 = por %p214, %p215
      %s217 = ssub.s32 %s21, %s28
      %p218 = scmp.eq.s32.totalorder %s217, 0
      %s220 = sadd.s32 %s219, 1
      %s221 = scalar_select %p218, %s219, %s220
      %p224 = pneg %p218
      %p225 = scmp.eq.s32.totalorder %s21, 1
      %p226 = por %p224, %p225
      %p227 = scmp.ne.s32.totalorder %s219, %s222
      %p228 = scmp.eq.s32.totalorder %s21, 0
      %p229 = por %p227, %p228
      %p230 = scmp.ne.s32.totalorder %s219, %s222
      %p231 = scmp.eq.s32.totalorder %s26, 1
      %p232 = por %p230, %p231
      %p233 = scmp.ne.s32.totalorder %s222, %s223
      %p234 = scmp.eq.s32.totalorder %s26, 0
      %p235 = por %p233, %p234
      %p236 = scmp.ne.s32.totalorder %s222, %s223
      %p237 = scmp.eq.s32.totalorder %s27, 1
      %p238 = por %p236, %p237
      %p240 = scmp.ne.s32.totalorder %s223, %s239
      %p241 = scmp.eq.s32.totalorder %s27, 0
      %p242 = por %p240, %p241
      %p243 = scmp.le.s32.totalorder 1, %s21
      %p244 = scmp.lt.s32.totalorder %s21, 3
      %p245 = pnand %p243, %p244
      %p246 = pneg %p245
      // Predicated region
      $region9: #{vae_conv_forward.4} parent=5 // pred_check
        _
      $region10: #{vae_conv_forward.4} parent=5 // pred_check_branch
        %248 = sbr.rel (%p245) target = $region12
      $region11: #{vae_conv_forward.4} parent=5 // pred_region
        %s249 = ssub.s32 %s21, 1
        // Predicated region
        $region13: #{vae_conv_forward.4} parent=11 // pred_check
          %p250 = pneg %p94
        $region14: #{vae_conv_forward.4} parent=11 // pred_check_branch
          %252 = sbr.rel (%p250) target = $region16
        $region15: #{vae_conv_forward.4} parent=11 // pred_region
          _
        $region16: #{vae_conv_forward.4} parent=11 // pred_fallthru
          _
        // Predicated region
        $region17: #{vae_conv_forward.4} parent=11 // pred_check
          %p253 = pneg %p115
        $region18: #{vae_conv_forward.4} parent=11 // pred_check_branch
          %255 = sbr.rel (%p253) target = $region20
        $region19: #{vae_conv_forward.4} parent=11 // pred_region
          _
        $region20: #{vae_conv_forward.4} parent=11 // pred_fallthru
          _
        // Predicated region
        $region21: #{vae_conv_forward.4} parent=11 // pred_check
          %p256 = pneg %p136
        $region22: #{vae_conv_forward.4} parent=11 // pred_check_branch
          %258 = sbr.rel (%p256) target = $region24
        $region23: #{vae_conv_forward.4} parent=11 // pred_region
          _
        $region24: #{vae_conv_forward.4} parent=11 // pred_fallthru
          _
        // Predicated region
        $region25: #{vae_conv_forward.4} parent=11 // pred_check
          %p259 = pneg %p157
        $region26: #{vae_conv_forward.4} parent=11 // pred_check_branch
          %261 = sbr.rel (%p259) target = $region28
        $region27: #{vae_conv_forward.4} parent=11 // pred_region
          _
        $region28: #{vae_conv_forward.4} parent=11 // pred_fallthru
          _
      $region12: #{vae_conv_forward.4} parent=5 // pred_fallthru
        _
      %p262 = scmp.lt.s32.totalorder %s21, 2
      // Predicated region
      $region29: #{vae_conv_forward.4} parent=5 // pred_check
        %p263 = pneg %p262
      $region30: #{vae_conv_forward.4} parent=5 // pred_check_branch
        %265 = sbr.rel (%p263) target = $region32
      $region31: #{vae_conv_forward.4} parent=5 // pred_region
        // Predicated region
        $region33: #{vae_conv_forward.4} parent=31 // pred_check
          %p266 = pneg %p41
        $region34: #{vae_conv_forward.4} parent=31 // pred_check_branch
          %268 = sbr.rel (%p266) target = $region36
        $region35: #{vae_conv_forward.4} parent=31 // pred_region
          %p269 = scmp.lt.s32.totalorder %s21, 1
          %s270 = scalar_select %p269, %s21, 1
          %s271 = smul.addr %s270, 25
          %s272 = scalar_lea.vmem %s0, %s271
        $region36: #{vae_conv_forward.4} parent=31 // pred_fallthru
          _
        // Predicated region
        $region37: #{vae_conv_forward.4} parent=31 // pred_check
          %p273 = pneg %p67
        $region38: #{vae_conv_forward.4} parent=31 // pred_check_branch
          %275 = sbr.rel (%p273) target = $region40
        $region39: #{vae_conv_forward.4} parent=31 // pred_region
          %p276 = scmp.lt.s32.totalorder %s21, 1
          %s277 = scalar_select %p276, %s21, 1
          %s278 = scalar_lea.vmem %s1, %s277
        $region40: #{vae_conv_forward.4} parent=31 // pred_fallthru
          _
      $region32: #{vae_conv_forward.4} parent=5 // pred_fallthru
        _
      %p279 = scmp.le.s32.totalorder 1, %s21
      %p280 = scmp.lt.s32.totalorder %s21, 3
      %p281 = pnand %p279, %p280
      %p282 = pneg %p281
      // Predicated region
      $region41: #{vae_conv_forward.4} parent=5 // pred_check
        _
      $region42: #{vae_conv_forward.4} parent=5 // pred_check_branch
        %284 = sbr.rel (%p281) target = $region44
      $region43: #{vae_conv_forward.4} parent=5 // pred_region
        %s285 = ssub.s32 %s21, 1
        %p286 = scmp.lt.s32.totalorder %s26, 1
        %s287 = scalar_select %p286, %s26, 1
        %s288 = smul.addr %s287, 25
        %s289 = scalar_lea.vmem %s0, %s288
        %p290 = pneg %p47
        %p291 = pneg %p44
        %p292 = scmp.lt.s32.totalorder %s26, 1
        %s293 = scalar_select %p292, %s26, 1
        %s294 = scalar_lea.vmem %s1, %s293
        %p295 = pneg %p73
        %p296 = pneg %p70
        %p297 = pneg %p94
        %p298 = pneg %p91
        %p299 = pneg %p115
        %p300 = pneg %p112
        %p301 = pneg %p136
        %p302 = pneg %p133
        %p303 = pneg %p157
        %p304 = pneg %p154
        %p305 = pneg %p183
        %p306 = pneg %p180
        %s307 = sand.u32 %s170, 1
        %s308 = scalar_lea.sflag [#allocation3], %s307
        %s309 = sand.u32 %s170, 1
        %s310 = scalar_lea.vmem [#allocation2], %s309
        %p311 = pneg %p209
        %p312 = pneg %p206
        %s313 = sand.u32 %s196, 1
        %s314 = scalar_lea.sflag [#allocation5], %s313
        %s315 = sand.u32 %s196, 1
        %s316 = scalar_lea.vmem [#allocation4], %s315
        %p317 = pneg %p235
        %p318 = pneg %p232
        %p319 = scmp.lt.s32.totalorder %s26, 1
        %s320 = scalar_select %p319, %s26, 1
        %s321 = smul.addr %s320, 51
        %s322 = scalar_lea.vmem %s8, %s321
        %p323 = scmp.lt.s32.totalorder %s26, 1
        %s324 = scalar_select %p323, %s26, 1
        %s325 = smul.addr %s324, 25
        %s326 = scalar_lea.vmem %s0, %s325
        %p327 = scmp.lt.s32.totalorder %s26, 1
        %s328 = scalar_select %p327, %s26, 1
        %s329 = scalar_lea.vmem %s1, %s328
        %p330 = scmp.lt.s32.totalorder %s26, 1
        %s331 = scalar_select %p330, %s26, 1
        %s332 = smul.addr %s331, 51
        %s333 = scalar_lea.vmem %s8, %s332
        %v335 = vld [vmem:[%s326] sm:$0xff]
        %v336 = vld [vmem:[%s326 + $0x8] sm:$0xff]
        %v337 = vld [vmem:[%s326 + $0x10] sm:$0xff]
        %v338 = vld [vmem:[%s326 + $0x18] sm:$0x1]
        %v339 = vld [vmem:[%s2] sm:$0xff]
        %v340 = vld [vmem:[%s2 + $0x8] sm:$0xff]
        %v341 = vld [vmem:[%s2 + $0x10] sm:$0xff]
        %v342 = vld [vmem:[%s2 + $0x18] sm:$0xff]
        %v343 = vld [vmem:[%s2 + $0x20] sm:$0xff]
        %v344 = vld [vmem:[%s2 + $0x28] sm:$0xff]
        %v345 = vld [vmem:[%s2 + $0x30] sm:$0xff]
        %v346 = vld [vmem:[%s2 + $0x38] sm:$0xff]
        %v347 = vld [vmem:[%s2 + $0x40] sm:$0xff]
        %v348 = vld [vmem:[%s2 + $0x48] sm:$0xff]
        %v349 = vld [vmem:[%s2 + $0x50] sm:$0xff]
        %v350 = vld [vmem:[%s2 + $0x58] sm:$0xff]
        %v351 = vld [vmem:[%s2 + $0x60] sm:$0xff]
        %v352 = vld [vmem:[%s2 + $0x68] sm:$0xff]
        %v353 = vld [vmem:[%s2 + $0x70] sm:$0xff]
        %v354 = vld [vmem:[%s2 + $0x78] sm:$0xff]
        %v355 = vld [vmem:[%s2 + $0x80] sm:$0xff]
        %v356 = vld [vmem:[%s2 + $0x88] sm:$0xff]
        %v357 = vld [vmem:[%s2 + $0x90] sm:$0xff]
        %v358 = vld [vmem:[%s2 + $0x98] sm:$0xff]
        %v359 = vld [vmem:[%s2 + $0xa0] sm:$0xff]
        %v360 = vld [vmem:[%s2 + $0xa8] sm:$0xff]
        %v361 = vld [vmem:[%s2 + $0xb0] sm:$0xff]
        %v362 = vld [vmem:[%s2 + $0xb8] sm:$0xff]
        %v363 = vld [vmem:[%s2 + $0xc0] sm:$0xff]
        %v364 = vld [vmem:[%s2 + $0xc8] sm:$0xff]
        %v365 = vld [vmem:[%s2 + $0xd0] sm:$0xff]
        %v366 = vld [vmem:[%s2 + $0xd8] sm:$0xff]
        %v367 = vld [vmem:[%s2 + $0xe0] sm:$0xff]
        %v368 = vld [vmem:[%s2 + $0xe8] sm:$0xff]
        %v369 = vld [vmem:[%s2 + $0xf0] sm:$0xff]
        %v370 = vld [vmem:[%s2 + $0xf8] sm:$0xff]
        %v371 = vld [vmem:[%s2 + $0x100] sm:$0xff]
        %v372 = vld [vmem:[%s2 + $0x108] sm:$0xff]
        %v373 = vld [vmem:[%s2 + $0x110] sm:$0xff]
        %v374 = vld [vmem:[%s2 + $0x118] sm:$0xff]
        %v375 = vld [vmem:[%s2 + $0x120] sm:$0xff]
        %v376 = vld [vmem:[%s2 + $0x128] sm:$0xff]
        %v377 = vld [vmem:[%s2 + $0x130] sm:$0xff]
        %v378 = vld [vmem:[%s2 + $0x138] sm:$0xff]
        %v379 = vld [vmem:[%s2 + $0x140] sm:$0xff]
        %v380 = vld [vmem:[%s2 + $0x148] sm:$0xff]
        %v381 = vld [vmem:[%s2 + $0x150] sm:$0xff]
        %v382 = vld [vmem:[%s2 + $0x158] sm:$0xff]
        %v383 = vld [vmem:[%s2 + $0x160] sm:$0xff]
        %v384 = vld [vmem:[%s2 + $0x168] sm:$0xff]
        %v385 = vld [vmem:[%s2 + $0x170] sm:$0xff]
        %v386 = vld [vmem:[%s2 + $0x178] sm:$0xff]
        %v387 = vld [vmem:[%s2 + $0x180] sm:$0xff]
        %v388 = vld [vmem:[%s2 + $0x188] sm:$0xff]
        %v389 = vld [vmem:[%s2 + $0x190] sm:$0xff]
        %v390 = vld [vmem:[%s2 + $0x198] sm:$0xff]
        %v391 = vld [vmem:[%s2 + $0x1a0] sm:$0xff]
        %v392 = vld [vmem:[%s2 + $0x1a8] sm:$0xff]
        %v393 = vld [vmem:[%s2 + $0x1b0] sm:$0xff]
        %v394 = vld [vmem:[%s2 + $0x1b8] sm:$0xff]
        %v395 = vld [vmem:[%s2 + $0x1c0] sm:$0xff]
        %v396 = vld [vmem:[%s2 + $0x1c8] sm:$0xff]
        %v397 = vld [vmem:[%s2 + $0x1d0] sm:$0xff]
        %v398 = vld [vmem:[%s2 + $0x1d8] sm:$0xff]
        %v399 = vld [vmem:[%s2 + $0x1e0] sm:$0xff]
        %v400 = vld [vmem:[%s2 + $0x1e8] sm:$0xff]
        %v401 = vld [vmem:[%s2 + $0x1f0] sm:$0xff]
        %v402 = vld [vmem:[%s2 + $0x1f8] sm:$0xff]
        %v403 = vld [vmem:[%s2 + $0x200] sm:$0xff]
        %v404 = vld [vmem:[%s2 + $0x208] sm:$0xff]
        %v405 = vld [vmem:[%s2 + $0x210] sm:$0xff]
        %v406 = vld [vmem:[%s2 + $0x218] sm:$0xff]
        %v407 = vld [vmem:[%s2 + $0x220] sm:$0xff]
        %v408 = vld [vmem:[%s2 + $0x228] sm:$0xff]
        %v409 = vld [vmem:[%s2 + $0x230] sm:$0xff]
        %v410 = vld [vmem:[%s2 + $0x238] sm:$0xff]
        %v411 = vld [vmem:[%s2 + $0x240] sm:$0xff]
        %v412 = vld [vmem:[%s2 + $0x248] sm:$0xff]
        %v413 = vld [vmem:[%s2 + $0x250] sm:$0xff]
        %v414 = vld [vmem:[%s2 + $0x258] sm:$0xff]
        %v415 = vld [vmem:[%s2 + $0x260] sm:$0xff]
        %v416 = vld [vmem:[%s2 + $0x268] sm:$0xff]
        %v417 = vld [vmem:[%s2 + $0x270] sm:$0xff]
        %v418 = vld [vmem:[%s2 + $0x278] sm:$0xff]
        %v419 = vld [vmem:[%s2 + $0x280] sm:$0xff]
        %v420 = vld [vmem:[%s2 + $0x288] sm:$0xff]
        %v421 = vld [vmem:[%s2 + $0x290] sm:$0xff]
        %v422 = vld [vmem:[%s2 + $0x298] sm:$0xff]
        %v423 = vld [vmem:[%s2 + $0x2a0] sm:$0xff]
        %v424 = vld [vmem:[%s2 + $0x2a8] sm:$0xff]
        %v425 = vld [vmem:[%s2 + $0x2b0] sm:$0xff]
        %v426 = vld [vmem:[%s2 + $0x2b8] sm:$0xff]
        %v427 = vld [vmem:[%s2 + $0x2c0] sm:$0xff]
        %v428 = vld [vmem:[%s2 + $0x2c8] sm:$0xff]
        %v429 = vld [vmem:[%s2 + $0x2d0] sm:$0xff]
        %v430 = vld [vmem:[%s2 + $0x2d8] sm:$0xff]
        %v431 = vld [vmem:[%s2 + $0x2e0] sm:$0xff]
        %v432 = vld [vmem:[%s2 + $0x2e8] sm:$0xff]
        %v433 = vld [vmem:[%s2 + $0x2f0] sm:$0xff]
        %v434 = vld [vmem:[%s2 + $0x2f8] sm:$0xff]
        %v435 = vld [vmem:[%s2 + $0x300] sm:$0xff]
        %v436 = vld [vmem:[%s2 + $0x308] sm:$0xff]
        %v437 = vld [vmem:[%s2 + $0x310] sm:$0xff]
        %v438 = vld [vmem:[%s2 + $0x318] sm:$0xff]
        %v439 = vld [vmem:[%s2 + $0x320] sm:$0xff]
        %v440 = vld [vmem:[%s2 + $0x328] sm:$0xff]
        %v441 = vld [vmem:[%s2 + $0x330] sm:$0xff]
        %v442 = vld [vmem:[%s2 + $0x338] sm:$0xff]
        %v443 = vld [vmem:[%s2 + $0x340] sm:$0xff]
        %v444 = vld [vmem:[%s2 + $0x348] sm:$0xff]
        %v445 = vld [vmem:[%s2 + $0x350] sm:$0xff]
        %v446 = vld [vmem:[%s2 + $0x358] sm:$0xff]
        %v447 = vld [vmem:[%s2 + $0x360] sm:$0xff]
        %v448 = vld [vmem:[%s2 + $0x368] sm:$0xff]
        %v449 = vld [vmem:[%s2 + $0x370] sm:$0xff]
        %v450 = vld [vmem:[%s2 + $0x378] sm:$0xff]
        %v451 = vld [vmem:[%s2 + $0x380] sm:$0xff]
        %v452 = vld [vmem:[%s2 + $0x388] sm:$0xff]
        %v453 = vld [vmem:[%s2 + $0x390] sm:$0xff]
        %v454 = vld [vmem:[%s2 + $0x398] sm:$0xff]
        %v455 = vld [vmem:[%s2 + $0x3a0] sm:$0xff]
        %v456 = vld [vmem:[%s2 + $0x3a8] sm:$0xff]
        %v457 = vld [vmem:[%s2 + $0x3b0] sm:$0xff]
        %v458 = vld [vmem:[%s2 + $0x3b8] sm:$0xff]
        %v459 = vld [vmem:[%s2 + $0x3c0] sm:$0xff]
        %v460 = vld [vmem:[%s2 + $0x3c8] sm:$0xff]
        %v461 = vld [vmem:[%s2 + $0x3d0] sm:$0xff]
        %v462 = vld [vmem:[%s2 + $0x3d8] sm:$0xff]
        %v463 = vld [vmem:[%s2 + $0x3e0] sm:$0xff]
        %v464 = vld [vmem:[%s2 + $0x3e8] sm:$0xff]
        %v465 = vld [vmem:[%s2 + $0x3f0] sm:$0xff]
        %v466 = vld [vmem:[%s2 + $0x3f8] sm:$0xff]
        %v467 = vld [vmem:[%s2 + $0x400] sm:$0xff]
        %v468 = vld [vmem:[%s2 + $0x408] sm:$0xff]
        %v469 = vld [vmem:[%s2 + $0x410] sm:$0xff]
        %v470 = vld [vmem:[%s2 + $0x418] sm:$0xff]
        %v471 = vld [vmem:[%s2 + $0x420] sm:$0xff]
        %v472 = vld [vmem:[%s2 + $0x428] sm:$0xff]
        %v473 = vld [vmem:[%s2 + $0x430] sm:$0xff]
        %v474 = vld [vmem:[%s2 + $0x438] sm:$0xff]
        %v475 = vld [vmem:[%s2 + $0x440] sm:$0xff]
        %v476 = vld [vmem:[%s2 + $0x448] sm:$0xff]
        %v477 = vld [vmem:[%s2 + $0x450] sm:$0xff]
        %v478 = vld [vmem:[%s2 + $0x458] sm:$0xff]
        %v479 = vld [vmem:[%s2 + $0x460] sm:$0xff]
        %v480 = vld [vmem:[%s2 + $0x468] sm:$0xff]
        %v481 = vld [vmem:[%s2 + $0x470] sm:$0xff]
        %v482 = vld [vmem:[%s2 + $0x478] sm:$0xff]
        %v483 = vld [vmem:[%s2 + $0x480] sm:$0xff]
        %v484 = vld [vmem:[%s2 + $0x488] sm:$0xff]
        %v485 = vld [vmem:[%s2 + $0x490] sm:$0xff]
        %v486 = vld [vmem:[%s2 + $0x498] sm:$0xff]
        %v487 = vld [vmem:[%s2 + $0x4a0] sm:$0xff]
        %v488 = vld [vmem:[%s2 + $0x4a8] sm:$0xff]
        %v489 = vld [vmem:[%s2 + $0x4b0] sm:$0xff]
        %v490 = vld [vmem:[%s2 + $0x4b8] sm:$0xff]
        %v491 = vld [vmem:[%s2 + $0x4c0] sm:$0xff]
        %v492 = vld [vmem:[%s2 + $0x4c8] sm:$0xff]
        %v493 = vld [vmem:[%s2 + $0x4d0] sm:$0xff]
        %v494 = vld [vmem:[%s2 + $0x4d8] sm:$0xff]
        %v495 = vld [vmem:[%s2 + $0x4e0] sm:$0xff]
        %v496 = vld [vmem:[%s2 + $0x4e8] sm:$0xff]
        %v497 = vld [vmem:[%s2 + $0x4f0] sm:$0xff]
        %v498 = vld [vmem:[%s2 + $0x4f8] sm:$0xff]
        %v499 = vld [vmem:[%s2 + $0x500] sm:$0xff]
        %v500 = vld [vmem:[%s2 + $0x508] sm:$0xff]
        %v501 = vld [vmem:[%s2 + $0x510] sm:$0xff]
        %v502 = vld [vmem:[%s2 + $0x518] sm:$0xff]
        %v503 = vld [vmem:[%s2 + $0x520] sm:$0xff]
        %v504 = vld [vmem:[%s2 + $0x528] sm:$0xff]
        %v505 = vld [vmem:[%s2 + $0x530] sm:$0xff]
        %v506 = vld [vmem:[%s2 + $0x538] sm:$0xff]
        %v507 = vld [vmem:[%s2 + $0x540] sm:$0xff]
        %v508 = vld [vmem:[%s2 + $0x548] sm:$0xff]
        %v509 = vld [vmem:[%s2 + $0x550] sm:$0xff]
        %v510 = vld [vmem:[%s2 + $0x558] sm:$0xff]
        %v511 = vld [vmem:[%s2 + $0x560] sm:$0xff]
        %v512 = vld [vmem:[%s2 + $0x568] sm:$0xff]
        %v513 = vld [vmem:[%s2 + $0x570] sm:$0xff]
        %v514 = vld [vmem:[%s2 + $0x578] sm:$0xff]
        %v515 = vld [vmem:[%s2 + $0x580] sm:$0xff]
        %v516 = vld [vmem:[%s2 + $0x588] sm:$0xff]
        %v517 = vld [vmem:[%s2 + $0x590] sm:$0xff]
        %v518 = vld [vmem:[%s2 + $0x598] sm:$0xff]
        %v519 = vld [vmem:[%s2 + $0x5a0] sm:$0xff]
        %v520 = vld [vmem:[%s2 + $0x5a8] sm:$0xff]
        %v521 = vld [vmem:[%s2 + $0x5b0] sm:$0xff]
        %v522 = vld [vmem:[%s2 + $0x5b8] sm:$0xff]
        %v523 = vld [vmem:[%s2 + $0x5c0] sm:$0xff]
        %v524 = vld [vmem:[%s2 + $0x5c8] sm:$0xff]
        %v525 = vld [vmem:[%s2 + $0x5d0] sm:$0xff]
        %v526 = vld [vmem:[%s2 + $0x5d8] sm:$0xff]
        %v527 = vld [vmem:[%s2 + $0x5e0] sm:$0xff]
        %v528 = vld [vmem:[%s2 + $0x5e8] sm:$0xff]
        %v529 = vld [vmem:[%s2 + $0x5f0] sm:$0xff]
        %v530 = vld [vmem:[%s2 + $0x5f8] sm:$0xff]
        %v531 = vld [vmem:[%s2 + $0x600] sm:$0xff]
        %v532 = vld [vmem:[%s2 + $0x608] sm:$0xff]
        %v533 = vld [vmem:[%s2 + $0x610] sm:$0xff]
        %v534 = vld [vmem:[%s2 + $0x618] sm:$0xff]
        %v535 = vld [vmem:[%s2 + $0x620] sm:$0xff]
        %v536 = vld [vmem:[%s2 + $0x628] sm:$0xff]
        %v537 = vld [vmem:[%s2 + $0x630] sm:$0xff]
        %v538 = vld [vmem:[%s2 + $0x638] sm:$0xff]
        %v539 = vld [vmem:[%s2 + $0x640] sm:$0xff]
        %v540 = vld [vmem:[%s2 + $0x648] sm:$0xff]
        %v541 = vld [vmem:[%s2 + $0x650] sm:$0xff]
        %v542 = vld [vmem:[%s2 + $0x658] sm:$0xff]
        %v543 = vld [vmem:[%s2 + $0x660] sm:$0xff]
        %v544 = vld [vmem:[%s2 + $0x668] sm:$0xff]
        %v545 = vld [vmem:[%s2 + $0x670] sm:$0xff]
        %v546 = vld [vmem:[%s2 + $0x678] sm:$0xff]
        %v547 = vld [vmem:[%s2 + $0x680] sm:$0xff]
        %v548 = vld [vmem:[%s2 + $0x688] sm:$0xff]
        %v549 = vld [vmem:[%s2 + $0x690] sm:$0xff]
        %v550 = vld [vmem:[%s2 + $0x698] sm:$0xff]
        %v551 = vld [vmem:[%s2 + $0x6a0] sm:$0xff]
        %v552 = vld [vmem:[%s2 + $0x6a8] sm:$0xff]
        %v553 = vld [vmem:[%s2 + $0x6b0] sm:$0xff]
        %v554 = vld [vmem:[%s2 + $0x6b8] sm:$0xff]
        %v555 = vld [vmem:[%s2 + $0x6c0] sm:$0xff]
        %v556 = vld [vmem:[%s2 + $0x6c8] sm:$0xff]
        %v557 = vld [vmem:[%s2 + $0x6d0] sm:$0xff]
        %v558 = vld [vmem:[%s2 + $0x6d8] sm:$0xff]
        %v559 = vld [vmem:[%s2 + $0x6e0] sm:$0xff]
        %v560 = vld [vmem:[%s2 + $0x6e8] sm:$0xff]
        %v561 = vld [vmem:[%s2 + $0x6f0] sm:$0xff]
        %v562 = vld [vmem:[%s2 + $0x6f8] sm:$0xff]
        %v563 = vld [vmem:[%s2 + $0x700] sm:$0xff]
        %v564 = vld [vmem:[%s2 + $0x708] sm:$0xff]
        %v565 = vld [vmem:[%s2 + $0x710] sm:$0xff]
        %v566 = vld [vmem:[%s2 + $0x718] sm:$0xff]
        %v567 = vld [vmem:[%s2 + $0x720] sm:$0xff]
        %v568 = vld [vmem:[%s2 + $0x728] sm:$0xff]
        %v569 = vld [vmem:[%s2 + $0x730] sm:$0xff]
        %v570 = vld [vmem:[%s2 + $0x738] sm:$0xff]
        %v571 = vld [vmem:[%s2 + $0x740] sm:$0xff]
        %v572 = vld [vmem:[%s2 + $0x748] sm:$0xff]
        %v573 = vld [vmem:[%s2 + $0x750] sm:$0xff]
        %v574 = vld [vmem:[%s2 + $0x758] sm:$0xff]
        %v575 = vld [vmem:[%s2 + $0x760] sm:$0xff]
        %v576 = vld [vmem:[%s2 + $0x768] sm:$0xff]
        %v577 = vld [vmem:[%s2 + $0x770] sm:$0xff]
        %v578 = vld [vmem:[%s2 + $0x778] sm:$0xff]
        %v579 = vld [vmem:[%s2 + $0x780] sm:$0xff]
        %v580 = vld [vmem:[%s2 + $0x788] sm:$0xff]
        %v581 = vld [vmem:[%s2 + $0x790] sm:$0xff]
        %v582 = vld [vmem:[%s2 + $0x798] sm:$0xff]
        %v583 = vld [vmem:[%s2 + $0x7a0] sm:$0xff]
        %v584 = vld [vmem:[%s2 + $0x7a8] sm:$0xff]
        %v585 = vld [vmem:[%s2 + $0x7b0] sm:$0xff]
        %v586 = vld [vmem:[%s2 + $0x7b8] sm:$0xff]
        %v587 = vld [vmem:[%s2 + $0x7c0] sm:$0xff]
        %v588 = vld [vmem:[%s2 + $0x7c8] sm:$0xff]
        %v589 = vld [vmem:[%s2 + $0x7d0] sm:$0xff]
        %v590 = vld [vmem:[%s2 + $0x7d8] sm:$0xff]
        %v591 = vld [vmem:[%s2 + $0x7e0] sm:$0xff]
        %v592 = vld [vmem:[%s2 + $0x7e8] sm:$0xff]
        %v593 = vld [vmem:[%s2 + $0x7f0] sm:$0xff]
        %v594 = vld [vmem:[%s2 + $0x7f8] sm:$0xff]
        %v595 = vld [vmem:[%s2 + $0x800] sm:$0xff]
        %v596 = vld [vmem:[%s2 + $0x808] sm:$0xff]
        %v597 = vld [vmem:[%s2 + $0x810] sm:$0xff]
        %v598 = vld [vmem:[%s2 + $0x818] sm:$0xff]
        %v599 = vld [vmem:[%s2 + $0x820] sm:$0xff]
        %v600 = vld [vmem:[%s2 + $0x828] sm:$0xff]
        %v601 = vld [vmem:[%s2 + $0x830] sm:$0xff]
        %v602 = vld [vmem:[%s2 + $0x838] sm:$0xff]
        %v603 = vld [vmem:[%s2 + $0x840] sm:$0xff]
        %v604 = vld [vmem:[%s2 + $0x848] sm:$0xff]
        %v605 = vld [vmem:[%s2 + $0x850] sm:$0xff]
        %v606 = vld [vmem:[%s2 + $0x858] sm:$0xff]
        %v607 = vld [vmem:[%s2 + $0x860] sm:$0xff]
        %v608 = vld [vmem:[%s2 + $0x868] sm:$0xff]
        %v609 = vld [vmem:[%s2 + $0x870] sm:$0xff]
        %v610 = vld [vmem:[%s2 + $0x878] sm:$0xff]
        %v611 = vld [vmem:[%s2 + $0x880] sm:$0xff]
        %v612 = vld [vmem:[%s2 + $0x888] sm:$0xff]
        %v613 = vld [vmem:[%s2 + $0x890] sm:$0xff]
        %v614 = vld [vmem:[%s2 + $0x898] sm:$0xff]
        %v615 = vld [vmem:[%s2 + $0x8a0] sm:$0xff]
        %v616 = vld [vmem:[%s2 + $0x8a8] sm:$0xff]
        %v617 = vld [vmem:[%s2 + $0x8b0] sm:$0xff]
        %v618 = vld [vmem:[%s2 + $0x8b8] sm:$0xff]
        %v619 = vld [vmem:[%s2 + $0x8c0] sm:$0xff]
        %v620 = vld [vmem:[%s2 + $0x8c8] sm:$0xff]
        %v621 = vld [vmem:[%s2 + $0x8d0] sm:$0xff]
        %v622 = vld [vmem:[%s2 + $0x8d8] sm:$0xff]
        %v623 = vld [vmem:[%s2 + $0x8e0] sm:$0xff]
        %v624 = vld [vmem:[%s2 + $0x8e8] sm:$0xff]
        %v625 = vld [vmem:[%s2 + $0x8f0] sm:$0xff]
        %v626 = vld [vmem:[%s2 + $0x8f8] sm:$0xff]
        %v627 = vld [vmem:[%s2 + $0x900] sm:$0xff]
        %v628 = vld [vmem:[%s2 + $0x908] sm:$0xff]
        %v629 = vld [vmem:[%s2 + $0x910] sm:$0xff]
        %v630 = vld [vmem:[%s2 + $0x918] sm:$0xff]
        %v631 = vld [vmem:[%s2 + $0x920] sm:$0xff]
        %v632 = vld [vmem:[%s2 + $0x928] sm:$0xff]
        %v633 = vld [vmem:[%s2 + $0x930] sm:$0xff]
        %v634 = vld [vmem:[%s2 + $0x938] sm:$0xff]
        %v635 = vld [vmem:[%s2 + $0x940] sm:$0xff]
        %v636 = vld [vmem:[%s2 + $0x948] sm:$0xff]
        %v637 = vld [vmem:[%s2 + $0x950] sm:$0xff]
        %v638 = vld [vmem:[%s2 + $0x958] sm:$0xff]
        %v639 = vld [vmem:[%s2 + $0x960] sm:$0xff]
        %v640 = vld [vmem:[%s2 + $0x968] sm:$0xff]
        %v641 = vld [vmem:[%s2 + $0x970] sm:$0xff]
        %v642 = vld [vmem:[%s2 + $0x978] sm:$0xff]
        %v643 = vld [vmem:[%s2 + $0x980] sm:$0xff]
        %v644 = vld [vmem:[%s2 + $0x988] sm:$0xff]
        %v645 = vld [vmem:[%s2 + $0x990] sm:$0xff]
        %v646 = vld [vmem:[%s2 + $0x998] sm:$0xff]
        %v647 = vld [vmem:[%s2 + $0x9a0] sm:$0xff]
        %v648 = vld [vmem:[%s2 + $0x9a8] sm:$0xff]
        %v649 = vld [vmem:[%s2 + $0x9b0] sm:$0xff]
        %v650 = vld [vmem:[%s2 + $0x9b8] sm:$0xff]
        %v651 = vld [vmem:[%s2 + $0x9c0] sm:$0xff]
        %v652 = vld [vmem:[%s2 + $0x9c8] sm:$0xff]
        %v653 = vld [vmem:[%s2 + $0x9d0] sm:$0xff]
        %v654 = vld [vmem:[%s2 + $0x9d8] sm:$0xff]
        %v655 = vld [vmem:[%s2 + $0x9e0] sm:$0xff]
        %v656 = vld [vmem:[%s2 + $0x9e8] sm:$0xff]
        %v657 = vld [vmem:[%s2 + $0x9f0] sm:$0xff]
        %v658 = vld [vmem:[%s2 + $0x9f8] sm:$0xff]
        %v659 = vld [vmem:[%s2 + $0xa00] sm:$0xff]
        %v660 = vld [vmem:[%s2 + $0xa08] sm:$0xff]
        %v661 = vld [vmem:[%s2 + $0xa10] sm:$0xff]
        %v662 = vld [vmem:[%s2 + $0xa18] sm:$0xff]
        %v663 = vld [vmem:[%s2 + $0xa20] sm:$0xff]
        %v664 = vld [vmem:[%s2 + $0xa28] sm:$0xff]
        %v665 = vld [vmem:[%s2 + $0xa30] sm:$0xff]
        %v666 = vld [vmem:[%s2 + $0xa38] sm:$0xff]
        %v667 = vld [vmem:[%s2 + $0xa40] sm:$0xff]
        %v668 = vld [vmem:[%s2 + $0xa48] sm:$0xff]
        %v669 = vld [vmem:[%s2 + $0xa50] sm:$0xff]
        %v670 = vld [vmem:[%s2 + $0xa58] sm:$0xff]
        %v671 = vld [vmem:[%s2 + $0xa60] sm:$0xff]
        %v672 = vld [vmem:[%s2 + $0xa68] sm:$0xff]
        %v673 = vld [vmem:[%s2 + $0xa70] sm:$0xff]
        %v674 = vld [vmem:[%s2 + $0xa78] sm:$0xff]
        %v675 = vld [vmem:[%s2 + $0xa80] sm:$0xff]
        %v676 = vld [vmem:[%s2 + $0xa88] sm:$0xff]
        %v677 = vld [vmem:[%s2 + $0xa90] sm:$0xff]
        %v678 = vld [vmem:[%s2 + $0xa98] sm:$0xff]
        %v679 = vld [vmem:[%s2 + $0xaa0] sm:$0xff]
        %v680 = vld [vmem:[%s2 + $0xaa8] sm:$0xff]
        %v681 = vld [vmem:[%s2 + $0xab0] sm:$0xff]
        %v682 = vld [vmem:[%s2 + $0xab8] sm:$0xff]
        %v683 = vld [vmem:[%s2 + $0xac0] sm:$0xff]
        %v684 = vld [vmem:[%s2 + $0xac8] sm:$0xff]
        %v685 = vld [vmem:[%s2 + $0xad0] sm:$0xff]
        %v686 = vld [vmem:[%s2 + $0xad8] sm:$0xff]
        %v687 = vld [vmem:[%s2 + $0xae0] sm:$0xff]
        %v688 = vld [vmem:[%s2 + $0xae8] sm:$0xff]
        %v689 = vld [vmem:[%s2 + $0xaf0] sm:$0xff]
        %v690 = vld [vmem:[%s2 + $0xaf8] sm:$0xff]
        %v691 = vld [vmem:[%s2 + $0xb00] sm:$0xff]
        %v692 = vld [vmem:[%s2 + $0xb08] sm:$0xff]
        %v693 = vld [vmem:[%s2 + $0xb10] sm:$0xff]
        %v694 = vld [vmem:[%s2 + $0xb18] sm:$0xff]
        %v695 = vld [vmem:[%s2 + $0xb20] sm:$0xff]
        %v696 = vld [vmem:[%s2 + $0xb28] sm:$0xff]
        %v697 = vld [vmem:[%s2 + $0xb30] sm:$0xff]
        %v698 = vld [vmem:[%s2 + $0xb38] sm:$0xff]
        %v699 = vld [vmem:[%s2 + $0xb40] sm:$0xff]
        %v700 = vld [vmem:[%s2 + $0xb48] sm:$0xff]
        %v701 = vld [vmem:[%s2 + $0xb50] sm:$0xff]
        %v702 = vld [vmem:[%s2 + $0xb58] sm:$0xff]
        %v703 = vld [vmem:[%s2 + $0xb60] sm:$0xff]
        %v704 = vld [vmem:[%s2 + $0xb68] sm:$0xff]
        %v705 = vld [vmem:[%s2 + $0xb70] sm:$0xff]
        %v706 = vld [vmem:[%s2 + $0xb78] sm:$0xff]
        %v707 = vld [vmem:[%s2 + $0xb80] sm:$0xff]
        %v708 = vld [vmem:[%s2 + $0xb88] sm:$0xff]
        %v709 = vld [vmem:[%s2 + $0xb90] sm:$0xff]
        %v710 = vld [vmem:[%s2 + $0xb98] sm:$0xff]
        %v711 = vld [vmem:[%s2 + $0xba0] sm:$0xff]
        %v712 = vld [vmem:[%s2 + $0xba8] sm:$0xff]
        %v713 = vld [vmem:[%s2 + $0xbb0] sm:$0xff]
        %v714 = vld [vmem:[%s2 + $0xbb8] sm:$0xff]
        %v715 = vld [vmem:[%s2 + $0xbc0] sm:$0xff]
        %v716 = vld [vmem:[%s2 + $0xbc8] sm:$0xff]
        %v717 = vld [vmem:[%s2 + $0xbd0] sm:$0xff]
        %v718 = vld [vmem:[%s2 + $0xbd8] sm:$0xff]
        %v719 = vld [vmem:[%s2 + $0xbe0] sm:$0xff]
        %v720 = vld [vmem:[%s2 + $0xbe8] sm:$0xff]
        %v721 = vld [vmem:[%s2 + $0xbf0] sm:$0xff]
        %v722 = vld [vmem:[%s2 + $0xbf8] sm:$0xff]
        %v723 = vld [vmem:[%s2 + $0xc00] sm:$0xff]
        %v724 = vld [vmem:[%s2 + $0xc08] sm:$0xff]
        %v725 = vld [vmem:[%s2 + $0xc10] sm:$0xff]
        %v726 = vld [vmem:[%s2 + $0xc18] sm:$0xff]
        %v727 = vld [vmem:[%s2 + $0xc20] sm:$0xff]
        %v728 = vld [vmem:[%s2 + $0xc28] sm:$0xff]
        %v729 = vld [vmem:[%s2 + $0xc30] sm:$0xff]
        %v730 = vld [vmem:[%s2 + $0xc38] sm:$0xff]
        %v731 = vld [vmem:[%s3] sm:$0x3]
        %v736 = vcombine.high %v335, %v335
        %v738 = vunpack.c.l.s4 1966171168
        %v739 = vunpack.c.0.s8 %v738
        %v740 = vlaneseq
        %v741 = vshrl.u32 %v740, 7
        %v742 = vsub.s32 %v739, %v741
        %v743 = vrot.slane %v335, %v742
        %v745 = vunpack.c.l.s4 1966171168
        %v746 = vunpack.c.0.s8 %v745
        %v747 = vlaneseq
        %v748 = vshrl.u32 %v747, 7
        %v749 = vsub.s32 %v746, %v748
        %v750 = vrot.slane %v736, %v749
        %v751 = vcombine.high %v743, %v743
        %v752 = vcombine.high %v750, %v750
        %v754 = vunpack.c.l.s4 1966171168
        %v755 = vunpack.c.0.s8 %v754
        %v756 = vlaneseq
        %v757 = vshrl.u32 %v756, 7
        %v758 = vsub.s32 %v755, %v757
        %v759 = vrot.slane %v743, %v758
        %v761 = vunpack.c.l.s4 1966171168
        %v762 = vunpack.c.0.s8 %v761
        %v763 = vlaneseq
        %v764 = vshrl.u32 %v763, 7
        %v765 = vsub.s32 %v762, %v764
        %v766 = vrot.slane %v750, %v765
        %v768 = vunpack.c.l.s4 1966171168
        %v769 = vunpack.c.0.s8 %v768
        %v770 = vlaneseq
        %v771 = vshrl.u32 %v770, 7
        %v772 = vsub.s32 %v769, %v771
        %v773 = vrot.slane %v751, %v772
        %v775 = vunpack.c.l.s4 1966171168
        %v776 = vunpack.c.0.s8 %v775
        %v777 = vlaneseq
        %v778 = vshrl.u32 %v777, 7
        %v779 = vsub.s32 %v776, %v778
        %v780 = vrot.slane %v752, %v779
        %v781 = vcombine.high %v759, %v759
        %v782 = vcombine.high %v766, %v766
        %v783 = vcombine.high %v773, %v773
        %v784 = vcombine.high %v780, %v780
        %v785 = vcombine.high %v336, %v336
        %v787 = vunpack.c.l.s4 1966171168
        %v788 = vunpack.c.0.s8 %v787
        %v789 = vlaneseq
        %v790 = vshrl.u32 %v789, 7
        %v791 = vsub.s32 %v788, %v790
        %v792 = vrot.slane %v336, %v791
        %v794 = vunpack.c.l.s4 1966171168
        %v795 = vunpack.c.0.s8 %v794
        %v796 = vlaneseq
        %v797 = vshrl.u32 %v796, 7
        %v798 = vsub.s32 %v795, %v797
        %v799 = vrot.slane %v785, %v798
        %v800 = vcombine.high %v792, %v792
        %v801 = vcombine.high %v799, %v799
        %v803 = vunpack.c.l.s4 1966171168
        %v804 = vunpack.c.0.s8 %v803
        %v805 = vlaneseq
        %v806 = vshrl.u32 %v805, 7
        %v807 = vsub.s32 %v804, %v806
        %v808 = vrot.slane %v792, %v807
        %v810 = vunpack.c.l.s4 1966171168
        %v811 = vunpack.c.0.s8 %v810
        %v812 = vlaneseq
        %v813 = vshrl.u32 %v812, 7
        %v814 = vsub.s32 %v811, %v813
        %v815 = vrot.slane %v799, %v814
        %v817 = vunpack.c.l.s4 1966171168
        %v818 = vunpack.c.0.s8 %v817
        %v819 = vlaneseq
        %v820 = vshrl.u32 %v819, 7
        %v821 = vsub.s32 %v818, %v820
        %v822 = vrot.slane %v800, %v821
        %v824 = vunpack.c.l.s4 1966171168
        %v825 = vunpack.c.0.s8 %v824
        %v826 = vlaneseq
        %v827 = vshrl.u32 %v826, 7
        %v828 = vsub.s32 %v825, %v827
        %v829 = vrot.slane %v801, %v828
        %v830 = vcombine.high %v808, %v808
        %v831 = vcombine.high %v815, %v815
        %v832 = vcombine.high %v822, %v822
        %v833 = vcombine.high %v829, %v829
        %v834 = vcombine.high %v337, %v337
        %v836 = vunpack.c.l.s4 1966171168
        %v837 = vunpack.c.0.s8 %v836
        %v838 = vlaneseq
        %v839 = vshrl.u32 %v838, 7
        %v840 = vsub.s32 %v837, %v839
        %v841 = vrot.slane %v337, %v840
        %v843 = vunpack.c.l.s4 1966171168
        %v844 = vunpack.c.0.s8 %v843
        %v845 = vlaneseq
        %v846 = vshrl.u32 %v845, 7
        %v847 = vsub.s32 %v844, %v846
        %v848 = vrot.slane %v834, %v847
        %v849 = vcombine.high %v841, %v841
        %v850 = vcombine.high %v848, %v848
        %v852 = vunpack.c.l.s4 1966171168
        %v853 = vunpack.c.0.s8 %v852
        %v854 = vlaneseq
        %v855 = vshrl.u32 %v854, 7
        %v856 = vsub.s32 %v853, %v855
        %v857 = vrot.slane %v841, %v856
        %v859 = vunpack.c.l.s4 1966171168
        %v860 = vunpack.c.0.s8 %v859
        %v861 = vlaneseq
        %v862 = vshrl.u32 %v861, 7
        %v863 = vsub.s32 %v860, %v862
        %v864 = vrot.slane %v848, %v863
        %v866 = vunpack.c.l.s4 1966171168
        %v867 = vunpack.c.0.s8 %v866
        %v868 = vlaneseq
        %v869 = vshrl.u32 %v868, 7
        %v870 = vsub.s32 %v867, %v869
        %v871 = vrot.slane %v849, %v870
        %v873 = vunpack.c.l.s4 1966171168
        %v874 = vunpack.c.0.s8 %v873
        %v875 = vlaneseq
        %v876 = vshrl.u32 %v875, 7
        %v877 = vsub.s32 %v874, %v876
        %v878 = vrot.slane %v850, %v877
        %v879 = vcombine.high %v857, %v857
        %v880 = vcombine.high %v864, %v864
        %v881 = vcombine.high %v871, %v871
        %v882 = vcombine.high %v878, %v878
        %v884 = vunpack.c.l.s4 1966171168
        %v885 = vunpack.c.0.s8 %v884
        %v886 = vlaneseq
        %v887 = vshrl.u32 %v886, 7
        %v888 = vsub.s32 %v885, %v887
        %v889 = vrot.slane %v338, %v888
        %v891 = vunpack.c.l.s4 1966171168
        %v892 = vunpack.c.0.s8 %v891
        %v893 = vlaneseq
        %v894 = vshrl.u32 %v893, 7
        %v895 = vsub.s32 %v892, %v894
        %v896 = vrot.slane %v889, %v895
        %v1313 = vunpack.c.l.b16 %v339
        %v1314 = vunpack.c.h.b16 %v339
        %v1315 = vunpack.c.l.b16 %v340
        %v1316 = vunpack.c.h.b16 %v340
        %v1317 = vunpack.c.l.b16 %v341
        %v1318 = vunpack.c.h.b16 %v341
        %v1319 = vunpack.c.l.b16 %v342
        %v1320 = vunpack.c.h.b16 %v342
        %v1321 = vunpack.c.l.b16 %v343
        %v1322 = vunpack.c.h.b16 %v343
        %v1323 = vunpack.c.l.b16 %v344
        %v1324 = vunpack.c.h.b16 %v344
        %v1325 = vunpack.c.l.b16 %v345
        %v1326 = vunpack.c.h.b16 %v345
        %v1327 = vunpack.c.l.b16 %v346
        %v1328 = vunpack.c.h.b16 %v346
        %v1329 = vunpack.c.l.b16 %v347
        %v1330 = vunpack.c.h.b16 %v347
        %v1331 = vunpack.c.l.b16 %v348
        %v1332 = vunpack.c.h.b16 %v348
        %v1333 = vunpack.c.l.b16 %v349
        %v1334 = vunpack.c.h.b16 %v349
        %v1335 = vunpack.c.l.b16 %v350
        %v1336 = vunpack.c.h.b16 %v350
        %v1337 = vunpack.c.l.b16 %v351
        %v1338 = vunpack.c.h.b16 %v351
        %v1339 = vunpack.c.l.b16 %v352
        %v1340 = vunpack.c.h.b16 %v352
        %v1341 = vunpack.c.l.b16 %v353
        %v1342 = vunpack.c.h.b16 %v353
        %v1343 = vunpack.c.l.b16 %v354
        %v1344 = vunpack.c.h.b16 %v354
        %v1345 = vunpack.c.l.b16 %v355
        %v1346 = vunpack.c.h.b16 %v355
        %v1347 = vunpack.c.l.b16 %v356
        %v1348 = vunpack.c.h.b16 %v356
        %v1349 = vunpack.c.l.b16 %v357
        %v1350 = vunpack.c.h.b16 %v357
        %v1351 = vunpack.c.l.b16 %v358
        %v1352 = vunpack.c.h.b16 %v358
        %v1353 = vunpack.c.l.b16 %v359
        %v1354 = vunpack.c.h.b16 %v359
        %v1355 = vunpack.c.l.b16 %v360
        %v1356 = vunpack.c.h.b16 %v360
        %v1357 = vunpack.c.l.b16 %v361
        %v1358 = vunpack.c.h.b16 %v361
        %v1359 = vunpack.c.l.b16 %v362
        %v1360 = vunpack.c.h.b16 %v362
        %v1361 = vunpack.c.l.b16 %v363
        %v1362 = vunpack.c.h.b16 %v363
        %v1363 = vunpack.c.l.b16 %v364
        %v1364 = vunpack.c.h.b16 %v364
        %v1365 = vunpack.c.l.b16 %v365
        %v1366 = vunpack.c.h.b16 %v365
        %v1367 = vunpack.c.l.b16 %v366
        %v1368 = vunpack.c.h.b16 %v366
        %v1369 = vunpack.c.l.b16 %v367
        %v1370 = vunpack.c.h.b16 %v367
        %v1371 = vunpack.c.l.b16 %v368
        %v1372 = vunpack.c.h.b16 %v368
        %v1373 = vunpack.c.l.b16 %v369
        %v1374 = vunpack.c.h.b16 %v369
        %v1375 = vunpack.c.l.b16 %v370
        %v1376 = vunpack.c.h.b16 %v370
        %v1377 = vunpack.c.l.b16 %v371
        %v1378 = vunpack.c.h.b16 %v371
        %v1379 = vunpack.c.l.b16 %v372
        %v1380 = vunpack.c.h.b16 %v372
        %v1381 = vunpack.c.l.b16 %v373
        %v1382 = vunpack.c.h.b16 %v373
        %v1383 = vunpack.c.l.b16 %v374
        %v1384 = vunpack.c.h.b16 %v374
        %v1385 = vunpack.c.l.b16 %v375
        %v1386 = vunpack.c.h.b16 %v375
        %v1387 = vunpack.c.l.b16 %v376
        %v1388 = vunpack.c.h.b16 %v376
        %v1389 = vunpack.c.l.b16 %v377
        %v1390 = vunpack.c.h.b16 %v377
        %v1391 = vunpack.c.l.b16 %v378
        %v1392 = vunpack.c.h.b16 %v378
        %v1393 = vunpack.c.l.b16 %v379
        %v1394 = vunpack.c.h.b16 %v379
        %v1395 = vunpack.c.l.b16 %v380
        %v1396 = vunpack.c.h.b16 %v380
        %v1397 = vunpack.c.l.b16 %v381
        %v1398 = vunpack.c.h.b16 %v381
        %v1399 = vunpack.c.l.b16 %v382
        %v1400 = vunpack.c.h.b16 %v382
        %v1401 = vunpack.c.l.b16 %v383
        %v1402 = vunpack.c.h.b16 %v383
        %v1403 = vunpack.c.l.b16 %v384
        %v1404 = vunpack.c.h.b16 %v384
        %v1405 = vunpack.c.l.b16 %v385
        %v1406 = vunpack.c.h.b16 %v385
        %v1407 = vunpack.c.l.b16 %v386
        %v1408 = vunpack.c.h.b16 %v386
        %v1409 = vunpack.c.l.b16 %v387
        %v1410 = vunpack.c.h.b16 %v387
        %v1411 = vunpack.c.l.b16 %v388
        %v1412 = vunpack.c.h.b16 %v388
        %v1413 = vunpack.c.l.b16 %v389
        %v1414 = vunpack.c.h.b16 %v389
        %v1415 = vunpack.c.l.b16 %v390
        %v1416 = vunpack.c.h.b16 %v390
        %v1417 = vunpack.c.l.b16 %v391
        %v1418 = vunpack.c.h.b16 %v391
        %v1419 = vunpack.c.l.b16 %v392
        %v1420 = vunpack.c.h.b16 %v392
        %v1421 = vunpack.c.l.b16 %v393
        %v1422 = vunpack.c.h.b16 %v393
        %v1423 = vunpack.c.l.b16 %v394
        %v1424 = vunpack.c.h.b16 %v394
        %v1425 = vunpack.c.l.b16 %v395
        %v1426 = vunpack.c.h.b16 %v395
        %v1427 = vunpack.c.l.b16 %v396
        %v1428 = vunpack.c.h.b16 %v396
        %v1429 = vunpack.c.l.b16 %v397
        %v1430 = vunpack.c.h.b16 %v397
        %v1431 = vunpack.c.l.b16 %v398
        %v1432 = vunpack.c.h.b16 %v398
        %v1433 = vunpack.c.l.b16 %v399
        %v1434 = vunpack.c.h.b16 %v399
        %v1435 = vunpack.c.l.b16 %v400
        %v1436 = vunpack.c.h.b16 %v400
        %v1437 = vunpack.c.l.b16 %v401
        %v1438 = vunpack.c.h.b16 %v401
        %v1439 = vunpack.c.l.b16 %v402
        %v1440 = vunpack.c.h.b16 %v402
        %v1441 = vunpack.c.l.b16 %v403
        %v1442 = vunpack.c.h.b16 %v403
        %v1443 = vunpack.c.l.b16 %v404
        %v1444 = vunpack.c.h.b16 %v404
        %v1445 = vunpack.c.l.b16 %v405
        %v1446 = vunpack.c.h.b16 %v405
        %v1447 = vunpack.c.l.b16 %v406
        %v1448 = vunpack.c.h.b16 %v406
        %v1449 = vunpack.c.l.b16 %v407
        %v1450 = vunpack.c.h.b16 %v407
        %v1451 = vunpack.c.l.b16 %v408
        %v1452 = vunpack.c.h.b16 %v408
        %v1453 = vunpack.c.l.b16 %v409
        %v1454 = vunpack.c.h.b16 %v409
        %v1455 = vunpack.c.l.b16 %v410
        %v1456 = vunpack.c.h.b16 %v410
        %v1457 = vunpack.c.l.b16 %v411
        %v1458 = vunpack.c.h.b16 %v411
        %v1459 = vunpack.c.l.b16 %v412
        %v1460 = vunpack.c.h.b16 %v412
        %v1461 = vunpack.c.l.b16 %v413
        %v1462 = vunpack.c.h.b16 %v413
        %v1463 = vunpack.c.l.b16 %v414
        %v1464 = vunpack.c.h.b16 %v414
        %v1465 = vunpack.c.l.b16 %v415
        %v1466 = vunpack.c.h.b16 %v415
        %v1467 = vunpack.c.l.b16 %v416
        %v1468 = vunpack.c.h.b16 %v416
        %v1469 = vunpack.c.l.b16 %v417
        %v1470 = vunpack.c.h.b16 %v417
        %v1471 = vunpack.c.l.b16 %v418
        %v1472 = vunpack.c.h.b16 %v418
        %v1473 = vunpack.c.l.b16 %v419
        %v1474 = vunpack.c.h.b16 %v419
        %v1475 = vunpack.c.l.b16 %v420
        %v1476 = vunpack.c.h.b16 %v420
        %v1477 = vunpack.c.l.b16 %v421
        %v1478 = vunpack.c.h.b16 %v421
        %v1479 = vunpack.c.l.b16 %v422
        %v1480 = vunpack.c.h.b16 %v422
        %v1481 = vunpack.c.l.b16 %v423
        %v1482 = vunpack.c.h.b16 %v423
        %v1483 = vunpack.c.l.b16 %v424
        %v1484 = vunpack.c.h.b16 %v424
        %v1485 = vunpack.c.l.b16 %v425
        %v1486 = vunpack.c.h.b16 %v425
        %v1487 = vunpack.c.l.b16 %v426
        %v1488 = vunpack.c.h.b16 %v426
        %v1489 = vunpack.c.l.b16 %v427
        %v1490 = vunpack.c.h.b16 %v427
        %v1491 = vunpack.c.l.b16 %v428
        %v1492 = vunpack.c.h.b16 %v428
        %v1493 = vunpack.c.l.b16 %v429
        %v1494 = vunpack.c.h.b16 %v429
        %v1495 = vunpack.c.l.b16 %v430
        %v1496 = vunpack.c.h.b16 %v430
        %v1497 = vunpack.c.l.b16 %v431
        %v1498 = vunpack.c.h.b16 %v431
        %v1499 = vunpack.c.l.b16 %v432
        %v1500 = vunpack.c.h.b16 %v432
        %v1501 = vunpack.c.l.b16 %v433
        %v1502 = vunpack.c.h.b16 %v433
        %v1503 = vunpack.c.l.b16 %v434
        %v1504 = vunpack.c.h.b16 %v434
        %v1505 = vunpack.c.l.b16 %v435
        %v1506 = vunpack.c.h.b16 %v435
        %v1507 = vunpack.c.l.b16 %v436
        %v1508 = vunpack.c.h.b16 %v436
        %v1509 = vunpack.c.l.b16 %v437
        %v1510 = vunpack.c.h.b16 %v437
        %v1511 = vunpack.c.l.b16 %v438
        %v1512 = vunpack.c.h.b16 %v438
        %v1513 = vunpack.c.l.b16 %v439
        %v1514 = vunpack.c.h.b16 %v439
        %v1515 = vunpack.c.l.b16 %v440
        %v1516 = vunpack.c.h.b16 %v440
        %v1517 = vunpack.c.l.b16 %v441
        %v1518 = vunpack.c.h.b16 %v441
        %v1519 = vunpack.c.l.b16 %v442
        %v1520 = vunpack.c.h.b16 %v442
        %v1521 = vunpack.c.l.b16 %v443
        %v1522 = vunpack.c.h.b16 %v443
        %v1523 = vunpack.c.l.b16 %v444
        %v1524 = vunpack.c.h.b16 %v444
        %v1525 = vunpack.c.l.b16 %v445
        %v1526 = vunpack.c.h.b16 %v445
        %v1527 = vunpack.c.l.b16 %v446
        %v1528 = vunpack.c.h.b16 %v446
        %v1529 = vunpack.c.l.b16 %v447
        %v1530 = vunpack.c.h.b16 %v447
        %v1531 = vunpack.c.l.b16 %v448
        %v1532 = vunpack.c.h.b16 %v448
        %v1533 = vunpack.c.l.b16 %v449
        %v1534 = vunpack.c.h.b16 %v449
        %v1535 = vunpack.c.l.b16 %v450
        %v1536 = vunpack.c.h.b16 %v450
        %v1537 = vunpack.c.l.b16 %v451
        %v1538 = vunpack.c.h.b16 %v451
        %v1539 = vunpack.c.l.b16 %v452
        %v1540 = vunpack.c.h.b16 %v452
        %v1541 = vunpack.c.l.b16 %v453
        %v1542 = vunpack.c.h.b16 %v453
        %v1543 = vunpack.c.l.b16 %v454
        %v1544 = vunpack.c.h.b16 %v454
        %v1545 = vunpack.c.l.b16 %v455
        %v1546 = vunpack.c.h.b16 %v455
        %v1547 = vunpack.c.l.b16 %v456
        %v1548 = vunpack.c.h.b16 %v456
        %v1549 = vunpack.c.l.b16 %v457
        %v1550 = vunpack.c.h.b16 %v457
        %v1551 = vunpack.c.l.b16 %v458
        %v1552 = vunpack.c.h.b16 %v458
        %v1553 = vunpack.c.l.b16 %v459
        %v1554 = vunpack.c.h.b16 %v459
        %v1555 = vunpack.c.l.b16 %v460
        %v1556 = vunpack.c.h.b16 %v460
        %v1557 = vunpack.c.l.b16 %v461
        %v1558 = vunpack.c.h.b16 %v461
        %v1559 = vunpack.c.l.b16 %v462
        %v1560 = vunpack.c.h.b16 %v462
        %v1561 = vunpack.c.l.b16 %v463
        %v1562 = vunpack.c.h.b16 %v463
        %v1563 = vunpack.c.l.b16 %v464
        %v1564 = vunpack.c.h.b16 %v464
        %v1565 = vunpack.c.l.b16 %v465
        %v1566 = vunpack.c.h.b16 %v465
        %v1567 = vunpack.c.l.b16 %v466
        %v1568 = vunpack.c.h.b16 %v466
        %v1569 = vunpack.c.l.b16 %v467
        %v1570 = vunpack.c.h.b16 %v467
        %v1571 = vunpack.c.l.b16 %v468
        %v1572 = vunpack.c.h.b16 %v468
        %v1573 = vunpack.c.l.b16 %v469
        %v1574 = vunpack.c.h.b16 %v469
        %v1575 = vunpack.c.l.b16 %v470
        %v1576 = vunpack.c.h.b16 %v470
        %v1577 = vunpack.c.l.b16 %v471
        %v1578 = vunpack.c.h.b16 %v471
        %v1579 = vunpack.c.l.b16 %v472
        %v1580 = vunpack.c.h.b16 %v472
        %v1581 = vunpack.c.l.b16 %v473
        %v1582 = vunpack.c.h.b16 %v473
        %v1583 = vunpack.c.l.b16 %v474
        %v1584 = vunpack.c.h.b16 %v474
        %v1585 = vunpack.c.l.b16 %v475
        %v1586 = vunpack.c.h.b16 %v475
        %v1587 = vunpack.c.l.b16 %v476
        %v1588 = vunpack.c.h.b16 %v476
        %v1589 = vunpack.c.l.b16 %v477
        %v1590 = vunpack.c.h.b16 %v477
        %v1591 = vunpack.c.l.b16 %v478
        %v1592 = vunpack.c.h.b16 %v478
        %v1593 = vunpack.c.l.b16 %v479
        %v1594 = vunpack.c.h.b16 %v479
        %v1595 = vunpack.c.l.b16 %v480
        %v1596 = vunpack.c.h.b16 %v480
        %v1597 = vunpack.c.l.b16 %v481
        %v1598 = vunpack.c.h.b16 %v481
        %v1599 = vunpack.c.l.b16 %v482
        %v1600 = vunpack.c.h.b16 %v482
        %v1601 = vunpack.c.l.b16 %v483
        %v1602 = vunpack.c.h.b16 %v483
        %v1603 = vunpack.c.l.b16 %v484
        %v1604 = vunpack.c.h.b16 %v484
        %v1605 = vunpack.c.l.b16 %v485
        %v1606 = vunpack.c.h.b16 %v485
        %v1607 = vunpack.c.l.b16 %v486
        %v1608 = vunpack.c.h.b16 %v486
        %v1609 = vunpack.c.l.b16 %v487
        %v1610 = vunpack.c.h.b16 %v487
        %v1611 = vunpack.c.l.b16 %v488
        %v1612 = vunpack.c.h.b16 %v488
        %v1613 = vunpack.c.l.b16 %v489
        %v1614 = vunpack.c.h.b16 %v489
        %v1615 = vunpack.c.l.b16 %v490
        %v1616 = vunpack.c.h.b16 %v490
        %v1617 = vunpack.c.l.b16 %v491
        %v1618 = vunpack.c.h.b16 %v491
        %v1619 = vunpack.c.l.b16 %v492
        %v1620 = vunpack.c.h.b16 %v492
        %v1621 = vunpack.c.l.b16 %v493
        %v1622 = vunpack.c.h.b16 %v493
        %v1623 = vunpack.c.l.b16 %v494
        %v1624 = vunpack.c.h.b16 %v494
        %v1625 = vunpack.c.l.b16 %v495
        %v1626 = vunpack.c.h.b16 %v495
        %v1627 = vunpack.c.l.b16 %v496
        %v1628 = vunpack.c.h.b16 %v496
        %v1629 = vunpack.c.l.b16 %v497
        %v1630 = vunpack.c.h.b16 %v497
        %v1631 = vunpack.c.l.b16 %v498
        %v1632 = vunpack.c.h.b16 %v498
        %v1633 = vunpack.c.l.b16 %v499
        %v1634 = vunpack.c.h.b16 %v499
        %v1635 = vunpack.c.l.b16 %v500
        %v1636 = vunpack.c.h.b16 %v500
        %v1637 = vunpack.c.l.b16 %v501
        %v1638 = vunpack.c.h.b16 %v501
        %v1639 = vunpack.c.l.b16 %v502
        %v1640 = vunpack.c.h.b16 %v502
        %v1641 = vunpack.c.l.b16 %v503
        %v1642 = vunpack.c.h.b16 %v503
        %v1643 = vunpack.c.l.b16 %v504
        %v1644 = vunpack.c.h.b16 %v504
        %v1645 = vunpack.c.l.b16 %v505
        %v1646 = vunpack.c.h.b16 %v505
        %v1647 = vunpack.c.l.b16 %v506
        %v1648 = vunpack.c.h.b16 %v506
        %v1649 = vunpack.c.l.b16 %v507
        %v1650 = vunpack.c.h.b16 %v507
        %v1651 = vunpack.c.l.b16 %v508
        %v1652 = vunpack.c.h.b16 %v508
        %v1653 = vunpack.c.l.b16 %v509
        %v1654 = vunpack.c.h.b16 %v509
        %v1655 = vunpack.c.l.b16 %v510
        %v1656 = vunpack.c.h.b16 %v510
        %v1657 = vunpack.c.l.b16 %v511
        %v1658 = vunpack.c.h.b16 %v511
        %v1659 = vunpack.c.l.b16 %v512
        %v1660 = vunpack.c.h.b16 %v512
        %v1661 = vunpack.c.l.b16 %v513
        %v1662 = vunpack.c.h.b16 %v513
        %v1663 = vunpack.c.l.b16 %v514
        %v1664 = vunpack.c.h.b16 %v514
        %v1665 = vunpack.c.l.b16 %v515
        %v1666 = vunpack.c.h.b16 %v515
        %v1667 = vunpack.c.l.b16 %v516
        %v1668 = vunpack.c.h.b16 %v516
        %v1669 = vunpack.c.l.b16 %v517
        %v1670 = vunpack.c.h.b16 %v517
        %v1671 = vunpack.c.l.b16 %v518
        %v1672 = vunpack.c.h.b16 %v518
        %v1673 = vunpack.c.l.b16 %v519
        %v1674 = vunpack.c.h.b16 %v519
        %v1675 = vunpack.c.l.b16 %v520
        %v1676 = vunpack.c.h.b16 %v520
        %v1677 = vunpack.c.l.b16 %v521
        %v1678 = vunpack.c.h.b16 %v521
        %v1679 = vunpack.c.l.b16 %v522
        %v1680 = vunpack.c.h.b16 %v522
        %v1681 = vunpack.c.l.b16 %v523
        %v1682 = vunpack.c.h.b16 %v523
        %v1683 = vunpack.c.l.b16 %v524
        %v1684 = vunpack.c.h.b16 %v524
        %v1685 = vunpack.c.l.b16 %v525
        %v1686 = vunpack.c.h.b16 %v525
        %v1687 = vunpack.c.l.b16 %v526
        %v1688 = vunpack.c.h.b16 %v526
        %v1689 = vunpack.c.l.b16 %v527
        %v1690 = vunpack.c.h.b16 %v527
        %v1691 = vunpack.c.l.b16 %v528
        %v1692 = vunpack.c.h.b16 %v528
        %v1693 = vunpack.c.l.b16 %v529
        %v1694 = vunpack.c.h.b16 %v529
        %v1695 = vunpack.c.l.b16 %v530
        %v1696 = vunpack.c.h.b16 %v530
        %v1697 = vunpack.c.l.b16 %v531
        %v1698 = vunpack.c.h.b16 %v531
        %v1699 = vunpack.c.l.b16 %v532
        %v1700 = vunpack.c.h.b16 %v532
        %v1701 = vunpack.c.l.b16 %v533
        %v1702 = vunpack.c.h.b16 %v533
        %v1703 = vunpack.c.l.b16 %v534
        %v1704 = vunpack.c.h.b16 %v534
        %v1705 = vunpack.c.l.b16 %v535
        %v1706 = vunpack.c.h.b16 %v535
        %v1707 = vunpack.c.l.b16 %v536
        %v1708 = vunpack.c.h.b16 %v536
        %v1709 = vunpack.c.l.b16 %v537
        %v1710 = vunpack.c.h.b16 %v537
        %v1711 = vunpack.c.l.b16 %v538
        %v1712 = vunpack.c.h.b16 %v538
        %v1713 = vunpack.c.l.b16 %v539
        %v1714 = vunpack.c.h.b16 %v539
        %v1715 = vunpack.c.l.b16 %v540
        %v1716 = vunpack.c.h.b16 %v540
        %v1717 = vunpack.c.l.b16 %v541
        %v1718 = vunpack.c.h.b16 %v541
        %v1719 = vunpack.c.l.b16 %v542
        %v1720 = vunpack.c.h.b16 %v542
        %v1721 = vunpack.c.l.b16 %v543
        %v1722 = vunpack.c.h.b16 %v543
        %v1723 = vunpack.c.l.b16 %v544
        %v1724 = vunpack.c.h.b16 %v544
        %v1725 = vunpack.c.l.b16 %v545
        %v1726 = vunpack.c.h.b16 %v545
        %v1727 = vunpack.c.l.b16 %v546
        %v1728 = vunpack.c.h.b16 %v546
        %v1729 = vunpack.c.l.b16 %v547
        %v1730 = vunpack.c.h.b16 %v547
        %v1731 = vunpack.c.l.b16 %v548
        %v1732 = vunpack.c.h.b16 %v548
        %v1733 = vunpack.c.l.b16 %v549
        %v1734 = vunpack.c.h.b16 %v549
        %v1735 = vunpack.c.l.b16 %v550
        %v1736 = vunpack.c.h.b16 %v550
        %v1737 = vunpack.c.l.b16 %v551
        %v1738 = vunpack.c.h.b16 %v551
        %v1739 = vunpack.c.l.b16 %v552
        %v1740 = vunpack.c.h.b16 %v552
        %v1741 = vunpack.c.l.b16 %v553
        %v1742 = vunpack.c.h.b16 %v553
        %v1743 = vunpack.c.l.b16 %v554
        %v1744 = vunpack.c.h.b16 %v554
        %v1745 = vunpack.c.l.b16 %v555
        %v1746 = vunpack.c.h.b16 %v555
        %v1747 = vunpack.c.l.b16 %v556
        %v1748 = vunpack.c.h.b16 %v556
        %v1749 = vunpack.c.l.b16 %v557
        %v1750 = vunpack.c.h.b16 %v557
        %v1751 = vunpack.c.l.b16 %v558
        %v1752 = vunpack.c.h.b16 %v558
        %v1753 = vunpack.c.l.b16 %v559
        %v1754 = vunpack.c.h.b16 %v559
        %v1755 = vunpack.c.l.b16 %v560
        %v1756 = vunpack.c.h.b16 %v560
        %v1757 = vunpack.c.l.b16 %v561
        %v1758 = vunpack.c.h.b16 %v561
        %v1759 = vunpack.c.l.b16 %v562
        %v1760 = vunpack.c.h.b16 %v562
        %v1761 = vunpack.c.l.b16 %v563
        %v1762 = vunpack.c.h.b16 %v563
        %v1763 = vunpack.c.l.b16 %v564
        %v1764 = vunpack.c.h.b16 %v564
        %v1765 = vunpack.c.l.b16 %v565
        %v1766 = vunpack.c.h.b16 %v565
        %v1767 = vunpack.c.l.b16 %v566
        %v1768 = vunpack.c.h.b16 %v566
        %v1769 = vunpack.c.l.b16 %v567
        %v1770 = vunpack.c.h.b16 %v567
        %v1771 = vunpack.c.l.b16 %v568
        %v1772 = vunpack.c.h.b16 %v568
        %v1773 = vunpack.c.l.b16 %v569
        %v1774 = vunpack.c.h.b16 %v569
        %v1775 = vunpack.c.l.b16 %v570
        %v1776 = vunpack.c.h.b16 %v570
        %v1777 = vunpack.c.l.b16 %v571
        %v1778 = vunpack.c.h.b16 %v571
        %v1779 = vunpack.c.l.b16 %v572
        %v1780 = vunpack.c.h.b16 %v572
        %v1781 = vunpack.c.l.b16 %v573
        %v1782 = vunpack.c.h.b16 %v573
        %v1783 = vunpack.c.l.b16 %v574
        %v1784 = vunpack.c.h.b16 %v574
        %v1785 = vunpack.c.l.b16 %v575
        %v1786 = vunpack.c.h.b16 %v575
        %v1787 = vunpack.c.l.b16 %v576
        %v1788 = vunpack.c.h.b16 %v576
        %v1789 = vunpack.c.l.b16 %v577
        %v1790 = vunpack.c.h.b16 %v577
        %v1791 = vunpack.c.l.b16 %v578
        %v1792 = vunpack.c.h.b16 %v578
        %v1793 = vunpack.c.l.b16 %v579
        %v1794 = vunpack.c.h.b16 %v579
        %v1795 = vunpack.c.l.b16 %v580
        %v1796 = vunpack.c.h.b16 %v580
        %v1797 = vunpack.c.l.b16 %v581
        %v1798 = vunpack.c.h.b16 %v581
        %v1799 = vunpack.c.l.b16 %v582
        %v1800 = vunpack.c.h.b16 %v582
        %v1801 = vunpack.c.l.b16 %v583
        %v1802 = vunpack.c.h.b16 %v583
        %v1803 = vunpack.c.l.b16 %v584
        %v1804 = vunpack.c.h.b16 %v584
        %v1805 = vunpack.c.l.b16 %v585
        %v1806 = vunpack.c.h.b16 %v585
        %v1807 = vunpack.c.l.b16 %v586
        %v1808 = vunpack.c.h.b16 %v586
        %v1809 = vunpack.c.l.b16 %v587
        %v1810 = vunpack.c.h.b16 %v587
        %v1811 = vunpack.c.l.b16 %v588
        %v1812 = vunpack.c.h.b16 %v588
        %v1813 = vunpack.c.l.b16 %v589
        %v1814 = vunpack.c.h.b16 %v589
        %v1815 = vunpack.c.l.b16 %v590
        %v1816 = vunpack.c.h.b16 %v590
        %v1817 = vunpack.c.l.b16 %v591
        %v1818 = vunpack.c.h.b16 %v591
        %v1819 = vunpack.c.l.b16 %v592
        %v1820 = vunpack.c.h.b16 %v592
        %v1821 = vunpack.c.l.b16 %v593
        %v1822 = vunpack.c.h.b16 %v593
        %v1823 = vunpack.c.l.b16 %v594
        %v1824 = vunpack.c.h.b16 %v594
        %v1825 = vunpack.c.l.b16 %v595
        %v1826 = vunpack.c.h.b16 %v595
        %v1827 = vunpack.c.l.b16 %v596
        %v1828 = vunpack.c.h.b16 %v596
        %v1829 = vunpack.c.l.b16 %v597
        %v1830 = vunpack.c.h.b16 %v597
        %v1831 = vunpack.c.l.b16 %v598
        %v1832 = vunpack.c.h.b16 %v598
        %v1833 = vunpack.c.l.b16 %v599
        %v1834 = vunpack.c.h.b16 %v599
        %v1835 = vunpack.c.l.b16 %v600
        %v1836 = vunpack.c.h.b16 %v600
        %v1837 = vunpack.c.l.b16 %v601
        %v1838 = vunpack.c.h.b16 %v601
        %v1839 = vunpack.c.l.b16 %v602
        %v1840 = vunpack.c.h.b16 %v602
        %v1841 = vunpack.c.l.b16 %v603
        %v1842 = vunpack.c.h.b16 %v603
        %v1843 = vunpack.c.l.b16 %v604
        %v1844 = vunpack.c.h.b16 %v604
        %v1845 = vunpack.c.l.b16 %v605
        %v1846 = vunpack.c.h.b16 %v605
        %v1847 = vunpack.c.l.b16 %v606
        %v1848 = vunpack.c.h.b16 %v606
        %v1849 = vunpack.c.l.b16 %v607
        %v1850 = vunpack.c.h.b16 %v607
        %v1851 = vunpack.c.l.b16 %v608
        %v1852 = vunpack.c.h.b16 %v608
        %v1853 = vunpack.c.l.b16 %v609
        %v1854 = vunpack.c.h.b16 %v609
        %v1855 = vunpack.c.l.b16 %v610
        %v1856 = vunpack.c.h.b16 %v610
        %v1857 = vunpack.c.l.b16 %v611
        %v1858 = vunpack.c.h.b16 %v611
        %v1859 = vunpack.c.l.b16 %v612
        %v1860 = vunpack.c.h.b16 %v612
        %v1861 = vunpack.c.l.b16 %v613
        %v1862 = vunpack.c.h.b16 %v613
        %v1863 = vunpack.c.l.b16 %v614
        %v1864 = vunpack.c.h.b16 %v614
        %v1865 = vunpack.c.l.b16 %v615
        %v1866 = vunpack.c.h.b16 %v615
        %v1867 = vunpack.c.l.b16 %v616
        %v1868 = vunpack.c.h.b16 %v616
        %v1869 = vunpack.c.l.b16 %v617
        %v1870 = vunpack.c.h.b16 %v617
        %v1871 = vunpack.c.l.b16 %v618
        %v1872 = vunpack.c.h.b16 %v618
        %v1873 = vunpack.c.l.b16 %v619
        %v1874 = vunpack.c.h.b16 %v619
        %v1875 = vunpack.c.l.b16 %v620
        %v1876 = vunpack.c.h.b16 %v620
        %v1877 = vunpack.c.l.b16 %v621
        %v1878 = vunpack.c.h.b16 %v621
        %v1879 = vunpack.c.l.b16 %v622
        %v1880 = vunpack.c.h.b16 %v622
        %v1881 = vunpack.c.l.b16 %v623
        %v1882 = vunpack.c.h.b16 %v623
        %v1883 = vunpack.c.l.b16 %v624
        %v1884 = vunpack.c.h.b16 %v624
        %v1885 = vunpack.c.l.b16 %v625
        %v1886 = vunpack.c.h.b16 %v625
        %v1887 = vunpack.c.l.b16 %v626
        %v1888 = vunpack.c.h.b16 %v626
        %v1889 = vunpack.c.l.b16 %v627
        %v1890 = vunpack.c.h.b16 %v627
        %v1891 = vunpack.c.l.b16 %v628
        %v1892 = vunpack.c.h.b16 %v628
        %v1893 = vunpack.c.l.b16 %v629
        %v1894 = vunpack.c.h.b16 %v629
        %v1895 = vunpack.c.l.b16 %v630
        %v1896 = vunpack.c.h.b16 %v630
        %v1897 = vunpack.c.l.b16 %v631
        %v1898 = vunpack.c.h.b16 %v631
        %v1899 = vunpack.c.l.b16 %v632
        %v1900 = vunpack.c.h.b16 %v632
        %v1901 = vunpack.c.l.b16 %v633
        %v1902 = vunpack.c.h.b16 %v633
        %v1903 = vunpack.c.l.b16 %v634
        %v1904 = vunpack.c.h.b16 %v634
        %v1905 = vunpack.c.l.b16 %v635
        %v1906 = vunpack.c.h.b16 %v635
        %v1907 = vunpack.c.l.b16 %v636
        %v1908 = vunpack.c.h.b16 %v636
        %v1909 = vunpack.c.l.b16 %v637
        %v1910 = vunpack.c.h.b16 %v637
        %v1911 = vunpack.c.l.b16 %v638
        %v1912 = vunpack.c.h.b16 %v638
        %v1913 = vunpack.c.l.b16 %v639
        %v1914 = vunpack.c.h.b16 %v639
        %v1915 = vunpack.c.l.b16 %v640
        %v1916 = vunpack.c.h.b16 %v640
        %v1917 = vunpack.c.l.b16 %v641
        %v1918 = vunpack.c.h.b16 %v641
        %v1919 = vunpack.c.l.b16 %v642
        %v1920 = vunpack.c.h.b16 %v642
        %v1921 = vunpack.c.l.b16 %v643
        %v1922 = vunpack.c.h.b16 %v643
        %v1923 = vunpack.c.l.b16 %v644
        %v1924 = vunpack.c.h.b16 %v644
        %v1925 = vunpack.c.l.b16 %v645
        %v1926 = vunpack.c.h.b16 %v645
        %v1927 = vunpack.c.l.b16 %v646
        %v1928 = vunpack.c.h.b16 %v646
        %v1929 = vunpack.c.l.b16 %v647
        %v1930 = vunpack.c.h.b16 %v647
        %v1931 = vunpack.c.l.b16 %v648
        %v1932 = vunpack.c.h.b16 %v648
        %v1933 = vunpack.c.l.b16 %v649
        %v1934 = vunpack.c.h.b16 %v649
        %v1935 = vunpack.c.l.b16 %v650
        %v1936 = vunpack.c.h.b16 %v650
        %v1937 = vunpack.c.l.b16 %v651
        %v1938 = vunpack.c.h.b16 %v651
        %v1939 = vunpack.c.l.b16 %v652
        %v1940 = vunpack.c.h.b16 %v652
        %v1941 = vunpack.c.l.b16 %v653
        %v1942 = vunpack.c.h.b16 %v653
        %v1943 = vunpack.c.l.b16 %v654
        %v1944 = vunpack.c.h.b16 %v654
        %v1945 = vunpack.c.l.b16 %v655
        %v1946 = vunpack.c.h.b16 %v655
        %v1947 = vunpack.c.l.b16 %v656
        %v1948 = vunpack.c.h.b16 %v656
        %v1949 = vunpack.c.l.b16 %v657
        %v1950 = vunpack.c.h.b16 %v657
        %v1951 = vunpack.c.l.b16 %v658
        %v1952 = vunpack.c.h.b16 %v658
        %v1953 = vunpack.c.l.b16 %v659
        %v1954 = vunpack.c.h.b16 %v659
        %v1955 = vunpack.c.l.b16 %v660
        %v1956 = vunpack.c.h.b16 %v660
        %v1957 = vunpack.c.l.b16 %v661
        %v1958 = vunpack.c.h.b16 %v661
        %v1959 = vunpack.c.l.b16 %v662
        %v1960 = vunpack.c.h.b16 %v662
        %v1961 = vunpack.c.l.b16 %v663
        %v1962 = vunpack.c.h.b16 %v663
        %v1963 = vunpack.c.l.b16 %v664
        %v1964 = vunpack.c.h.b16 %v664
        %v1965 = vunpack.c.l.b16 %v665
        %v1966 = vunpack.c.h.b16 %v665
        %v1967 = vunpack.c.l.b16 %v666
        %v1968 = vunpack.c.h.b16 %v666
        %v1969 = vunpack.c.l.b16 %v667
        %v1970 = vunpack.c.h.b16 %v667
        %v1971 = vunpack.c.l.b16 %v668
        %v1972 = vunpack.c.h.b16 %v668
        %v1973 = vunpack.c.l.b16 %v669
        %v1974 = vunpack.c.h.b16 %v669
        %v1975 = vunpack.c.l.b16 %v670
        %v1976 = vunpack.c.h.b16 %v670
        %v1977 = vunpack.c.l.b16 %v671
        %v1978 = vunpack.c.h.b16 %v671
        %v1979 = vunpack.c.l.b16 %v672
        %v1980 = vunpack.c.h.b16 %v672
        %v1981 = vunpack.c.l.b16 %v673
        %v1982 = vunpack.c.h.b16 %v673
        %v1983 = vunpack.c.l.b16 %v674
        %v1984 = vunpack.c.h.b16 %v674
        %v1985 = vunpack.c.l.b16 %v675
        %v1986 = vunpack.c.h.b16 %v675
        %v1987 = vunpack.c.l.b16 %v676
        %v1988 = vunpack.c.h.b16 %v676
        %v1989 = vunpack.c.l.b16 %v677
        %v1990 = vunpack.c.h.b16 %v677
        %v1991 = vunpack.c.l.b16 %v678
        %v1992 = vunpack.c.h.b16 %v678
        %v1993 = vunpack.c.l.b16 %v679
        %v1994 = vunpack.c.h.b16 %v679
        %v1995 = vunpack.c.l.b16 %v680
        %v1996 = vunpack.c.h.b16 %v680
        %v1997 = vunpack.c.l.b16 %v681
        %v1998 = vunpack.c.h.b16 %v681
        %v1999 = vunpack.c.l.b16 %v682
        %v2000 = vunpack.c.h.b16 %v682
        %v2001 = vunpack.c.l.b16 %v683
        %v2002 = vunpack.c.h.b16 %v683
        %v2003 = vunpack.c.l.b16 %v684
        %v2004 = vunpack.c.h.b16 %v684
        %v2005 = vunpack.c.l.b16 %v685
        %v2006 = vunpack.c.h.b16 %v685
        %v2007 = vunpack.c.l.b16 %v686
        %v2008 = vunpack.c.h.b16 %v686
        %v2009 = vunpack.c.l.b16 %v687
        %v2010 = vunpack.c.h.b16 %v687
        %v2011 = vunpack.c.l.b16 %v688
        %v2012 = vunpack.c.h.b16 %v688
        %v2013 = vunpack.c.l.b16 %v689
        %v2014 = vunpack.c.h.b16 %v689
        %v2015 = vunpack.c.l.b16 %v690
        %v2016 = vunpack.c.h.b16 %v690
        %v2017 = vunpack.c.l.b16 %v691
        %v2018 = vunpack.c.h.b16 %v691
        %v2019 = vunpack.c.l.b16 %v692
        %v2020 = vunpack.c.h.b16 %v692
        %v2021 = vunpack.c.l.b16 %v693
        %v2022 = vunpack.c.h.b16 %v693
        %v2023 = vunpack.c.l.b16 %v694
        %v2024 = vunpack.c.h.b16 %v694
        %v2025 = vunpack.c.l.b16 %v695
        %v2026 = vunpack.c.h.b16 %v695
        %v2027 = vunpack.c.l.b16 %v696
        %v2028 = vunpack.c.h.b16 %v696
        %v2029 = vunpack.c.l.b16 %v697
        %v2030 = vunpack.c.h.b16 %v697
        %v2031 = vunpack.c.l.b16 %v698
        %v2032 = vunpack.c.h.b16 %v698
        %v2033 = vunpack.c.l.b16 %v699
        %v2034 = vunpack.c.h.b16 %v699
        %v2035 = vunpack.c.l.b16 %v700
        %v2036 = vunpack.c.h.b16 %v700
        %v2037 = vunpack.c.l.b16 %v701
        %v2038 = vunpack.c.h.b16 %v701
        %v2039 = vunpack.c.l.b16 %v702
        %v2040 = vunpack.c.h.b16 %v702
        %v2041 = vunpack.c.l.b16 %v703
        %v2042 = vunpack.c.h.b16 %v703
        %v2043 = vunpack.c.l.b16 %v704
        %v2044 = vunpack.c.h.b16 %v704
        %v2045 = vunpack.c.l.b16 %v705
        %v2046 = vunpack.c.h.b16 %v705
        %v2047 = vunpack.c.l.b16 %v706
        %v2048 = vunpack.c.h.b16 %v706
        %v2049 = vunpack.c.l.b16 %v707
        %v2050 = vunpack.c.h.b16 %v707
        %v2051 = vunpack.c.l.b16 %v708
        %v2052 = vunpack.c.h.b16 %v708
        %v2053 = vunpack.c.l.b16 %v709
        %v2054 = vunpack.c.h.b16 %v709
        %v2055 = vunpack.c.l.b16 %v710
        %v2056 = vunpack.c.h.b16 %v710
        %v2057 = vunpack.c.l.b16 %v711
        %v2058 = vunpack.c.h.b16 %v711
        %v2059 = vunpack.c.l.b16 %v712
        %v2060 = vunpack.c.h.b16 %v712
        %v2061 = vunpack.c.l.b16 %v713
        %v2062 = vunpack.c.h.b16 %v713
        %v2063 = vunpack.c.l.b16 %v714
        %v2064 = vunpack.c.h.b16 %v714
        %v2065 = vunpack.c.l.b16 %v715
        %v2066 = vunpack.c.h.b16 %v715
        %v2067 = vunpack.c.l.b16 %v716
        %v2068 = vunpack.c.h.b16 %v716
        %v2069 = vunpack.c.l.b16 %v717
        %v2070 = vunpack.c.h.b16 %v717
        %v2071 = vunpack.c.l.b16 %v718
        %v2072 = vunpack.c.h.b16 %v718
        %v2073 = vunpack.c.l.b16 %v719
        %v2074 = vunpack.c.h.b16 %v719
        %v2075 = vunpack.c.l.b16 %v720
        %v2076 = vunpack.c.h.b16 %v720
        %v2077 = vunpack.c.l.b16 %v721
        %v2078 = vunpack.c.h.b16 %v721
        %v2079 = vunpack.c.l.b16 %v722
        %v2080 = vunpack.c.h.b16 %v722
        %v2081 = vunpack.c.l.b16 %v723
        %v2082 = vunpack.c.h.b16 %v723
        %v2083 = vunpack.c.l.b16 %v724
        %v2084 = vunpack.c.h.b16 %v724
        %v2085 = vunpack.c.l.b16 %v725
        %v2086 = vunpack.c.h.b16 %v725
        %v2087 = vunpack.c.l.b16 %v726
        %v2088 = vunpack.c.h.b16 %v726
        %v2089 = vunpack.c.l.b16 %v727
        %v2090 = vunpack.c.h.b16 %v727
        %v2091 = vunpack.c.l.b16 %v728
        %v2092 = vunpack.c.h.b16 %v728
        %v2093 = vunpack.c.l.b16 %v729
        %v2094 = vunpack.c.h.b16 %v729
        %v2095 = vunpack.c.l.b16 %v730
        %v2096 = vunpack.c.h.b16 %v730
        %v2097 = vpack.c.b16 %v1315, %v1313
        %v2098 = vpack.c.b16 %v1316, %v1314
        %v2099 = vpack.c.b16 %v1319, %v1317
        %v2100 = vpack.c.b16 %v1320, %v1318
        %v2101 = vpack.c.b16 %v1323, %v1321
        %v2102 = vpack.c.b16 %v1324, %v1322
        %v2103 = vpack.c.b16 %v1327, %v1325
        %v2104 = vpack.c.b16 %v1328, %v1326
        %v2105 = vpack.c.b16 %v1331, %v1329
        %v2106 = vpack.c.b16 %v1332, %v1330
        %v2107 = vpack.c.b16 %v1335, %v1333
        %v2108 = vpack.c.b16 %v1336, %v1334
        %v2109 = vpack.c.b16 %v1339, %v1337
        %v2110 = vpack.c.b16 %v1340, %v1338
        %v2111 = vpack.c.b16 %v1343, %v1341
        %v2112 = vpack.c.b16 %v1344, %v1342
        %v2113 = vpack.c.b16 %v1347, %v1345
        %v2114 = vpack.c.b16 %v1348, %v1346
        %v2115 = vpack.c.b16 %v1351, %v1349
        %v2116 = vpack.c.b16 %v1352, %v1350
        %v2117 = vpack.c.b16 %v1355, %v1353
        %v2118 = vpack.c.b16 %v1356, %v1354
        %v2119 = vpack.c.b16 %v1359, %v1357
        %v2120 = vpack.c.b16 %v1360, %v1358
        %v2121 = vpack.c.b16 %v1363, %v1361
        %v2122 = vpack.c.b16 %v1364, %v1362
        %v2123 = vpack.c.b16 %v1367, %v1365
        %v2124 = vpack.c.b16 %v1368, %v1366
        %v2125 = vpack.c.b16 %v1371, %v1369
        %v2126 = vpack.c.b16 %v1372, %v1370
        %v2127 = vpack.c.b16 %v1375, %v1373
        %v2128 = vpack.c.b16 %v1376, %v1374
        %v2129 = vpack.c.b16 %v1379, %v1377
        %v2130 = vpack.c.b16 %v1380, %v1378
        %v2131 = vpack.c.b16 %v1383, %v1381
        %v2132 = vpack.c.b16 %v1384, %v1382
        %v2133 = vpack.c.b16 %v1387, %v1385
        %v2134 = vpack.c.b16 %v1388, %v1386
        %v2135 = vpack.c.b16 %v1391, %v1389
        %v2136 = vpack.c.b16 %v1392, %v1390
        %v2137 = vpack.c.b16 %v1395, %v1393
        %v2138 = vpack.c.b16 %v1396, %v1394
        %v2139 = vpack.c.b16 %v1399, %v1397
        %v2140 = vpack.c.b16 %v1400, %v1398
        %v2141 = vpack.c.b16 %v1403, %v1401
        %v2142 = vpack.c.b16 %v1404, %v1402
        %v2143 = vpack.c.b16 %v1407, %v1405
        %v2144 = vpack.c.b16 %v1408, %v1406
        %v2145 = vpack.c.b16 %v1411, %v1409
        %v2146 = vpack.c.b16 %v1412, %v1410
        %v2147 = vpack.c.b16 %v1415, %v1413
        %v2148 = vpack.c.b16 %v1416, %v1414
        %v2149 = vpack.c.b16 %v1419, %v1417
        %v2150 = vpack.c.b16 %v1420, %v1418
        %v2151 = vpack.c.b16 %v1423, %v1421
        %v2152 = vpack.c.b16 %v1424, %v1422
        %v2153 = vpack.c.b16 %v1427, %v1425
        %v2154 = vpack.c.b16 %v1428, %v1426
        %v2155 = vpack.c.b16 %v1431, %v1429
        %v2156 = vpack.c.b16 %v1432, %v1430
        %v2157 = vpack.c.b16 %v1435, %v1433
        %v2158 = vpack.c.b16 %v1436, %v1434
        %v2159 = vpack.c.b16 %v1439, %v1437
        %v2160 = vpack.c.b16 %v1440, %v1438
        %v2161 = vpack.c.b16 %v1443, %v1441
        %v2162 = vpack.c.b16 %v1444, %v1442
        %v2163 = vpack.c.b16 %v1447, %v1445
        %v2164 = vpack.c.b16 %v1448, %v1446
        %v2165 = vpack.c.b16 %v1451, %v1449
        %v2166 = vpack.c.b16 %v1452, %v1450
        %v2167 = vpack.c.b16 %v1455, %v1453
        %v2168 = vpack.c.b16 %v1456, %v1454
        %v2169 = vpack.c.b16 %v1459, %v1457
        %v2170 = vpack.c.b16 %v1460, %v1458
        %v2171 = vpack.c.b16 %v1463, %v1461
        %v2172 = vpack.c.b16 %v1464, %v1462
        %v2173 = vpack.c.b16 %v1467, %v1465
        %v2174 = vpack.c.b16 %v1468, %v1466
        %v2175 = vpack.c.b16 %v1471, %v1469
        %v2176 = vpack.c.b16 %v1472, %v1470
        %v2177 = vpack.c.b16 %v1475, %v1473
        %v2178 = vpack.c.b16 %v1476, %v1474
        %v2179 = vpack.c.b16 %v1479, %v1477
        %v2180 = vpack.c.b16 %v1480, %v1478
        %v2181 = vpack.c.b16 %v1483, %v1481
        %v2182 = vpack.c.b16 %v1484, %v1482
        %v2183 = vpack.c.b16 %v1487, %v1485
        %v2184 = vpack.c.b16 %v1488, %v1486
        %v2185 = vpack.c.b16 %v1491, %v1489
        %v2186 = vpack.c.b16 %v1492, %v1490
        %v2187 = vpack.c.b16 %v1495, %v1493
        %v2188 = vpack.c.b16 %v1496, %v1494
        %v2189 = vpack.c.b16 %v1499, %v1497
        %v2190 = vpack.c.b16 %v1500, %v1498
        %v2191 = vpack.c.b16 %v1503, %v1501
        %v2192 = vpack.c.b16 %v1504, %v1502
        %v2193 = vpack.c.b16 %v1507, %v1505
        %v2194 = vpack.c.b16 %v1508, %v1506
        %v2195 = vpack.c.b16 %v1511, %v1509
        %v2196 = vpack.c.b16 %v1512, %v1510
        %v2197 = vpack.c.b16 %v1515, %v1513
        %v2198 = vpack.c.b16 %v1516, %v1514
        %v2199 = vpack.c.b16 %v1519, %v1517
        %v2200 = vpack.c.b16 %v1520, %v1518
        %v2201 = vpack.c.b16 %v1523, %v1521
        %v2202 = vpack.c.b16 %v1524, %v1522
        %v2203 = vpack.c.b16 %v1527, %v1525
        %v2204 = vpack.c.b16 %v1528, %v1526
        %v2205 = vpack.c.b16 %v1531, %v1529
        %v2206 = vpack.c.b16 %v1532, %v1530
        %v2207 = vpack.c.b16 %v1535, %v1533
        %v2208 = vpack.c.b16 %v1536, %v1534
        %v2209 = vpack.c.b16 %v1539, %v1537
        %v2210 = vpack.c.b16 %v1540, %v1538
        %v2211 = vpack.c.b16 %v1543, %v1541
        %v2212 = vpack.c.b16 %v1544, %v1542
        %v2213 = vpack.c.b16 %v1547, %v1545
        %v2214 = vpack.c.b16 %v1548, %v1546
        %v2215 = vpack.c.b16 %v1551, %v1549
        %v2216 = vpack.c.b16 %v1552, %v1550
        %v2217 = vpack.c.b16 %v1555, %v1553
        %v2218 = vpack.c.b16 %v1556, %v1554
        %v2219 = vpack.c.b16 %v1559, %v1557
        %v2220 = vpack.c.b16 %v1560, %v1558
        %v2221 = vpack.c.b16 %v1563, %v1561
        %v2222 = vpack.c.b16 %v1564, %v1562
        %v2223 = vpack.c.b16 %v1567, %v1565
        %v2224 = vpack.c.b16 %v1568, %v1566
        %v2225 = vpack.c.b16 %v1571, %v1569
        %v2226 = vpack.c.b16 %v1572, %v1570
        %v2227 = vpack.c.b16 %v1575, %v1573
        %v2228 = vpack.c.b16 %v1576, %v1574
        %v2229 = vpack.c.b16 %v1579, %v1577
        %v2230 = vpack.c.b16 %v1580, %v1578
        %v2231 = vpack.c.b16 %v1583, %v1581
        %v2232 = vpack.c.b16 %v1584, %v1582
        %v2233 = vpack.c.b16 %v1587, %v1585
        %v2234 = vpack.c.b16 %v1588, %v1586
        %v2235 = vpack.c.b16 %v1591, %v1589
        %v2236 = vpack.c.b16 %v1592, %v1590
        %v2237 = vpack.c.b16 %v1595, %v1593
        %v2238 = vpack.c.b16 %v1596, %v1594
        %v2239 = vpack.c.b16 %v1599, %v1597
        %v2240 = vpack.c.b16 %v1600, %v1598
        %v2241 = vpack.c.b16 %v1603, %v1601
        %v2242 = vpack.c.b16 %v1604, %v1602
        %v2243 = vpack.c.b16 %v1607, %v1605
        %v2244 = vpack.c.b16 %v1608, %v1606
        %v2245 = vpack.c.b16 %v1611, %v1609
        %v2246 = vpack.c.b16 %v1612, %v1610
        %v2247 = vpack.c.b16 %v1615, %v1613
        %v2248 = vpack.c.b16 %v1616, %v1614
        %v2249 = vpack.c.b16 %v1619, %v1617
        %v2250 = vpack.c.b16 %v1620, %v1618
        %v2251 = vpack.c.b16 %v1623, %v1621
        %v2252 = vpack.c.b16 %v1624, %v1622
        %v2253 = vpack.c.b16 %v1627, %v1625
        %v2254 = vpack.c.b16 %v1628, %v1626
        %v2255 = vpack.c.b16 %v1631, %v1629
        %v2256 = vpack.c.b16 %v1632, %v1630
        %v2257 = vpack.c.b16 %v1635, %v1633
        %v2258 = vpack.c.b16 %v1636, %v1634
        %v2259 = vpack.c.b16 %v1639, %v1637
        %v2260 = vpack.c.b16 %v1640, %v1638
        %v2261 = vpack.c.b16 %v1643, %v1641
        %v2262 = vpack.c.b16 %v1644, %v1642
        %v2263 = vpack.c.b16 %v1647, %v1645
        %v2264 = vpack.c.b16 %v1648, %v1646
        %v2265 = vpack.c.b16 %v1651, %v1649
        %v2266 = vpack.c.b16 %v1652, %v1650
        %v2267 = vpack.c.b16 %v1655, %v1653
        %v2268 = vpack.c.b16 %v1656, %v1654
        %v2269 = vpack.c.b16 %v1659, %v1657
        %v2270 = vpack.c.b16 %v1660, %v1658
        %v2271 = vpack.c.b16 %v1663, %v1661
        %v2272 = vpack.c.b16 %v1664, %v1662
        %v2273 = vpack.c.b16 %v1667, %v1665
        %v2274 = vpack.c.b16 %v1668, %v1666
        %v2275 = vpack.c.b16 %v1671, %v1669
        %v2276 = vpack.c.b16 %v1672, %v1670
        %v2277 = vpack.c.b16 %v1675, %v1673
        %v2278 = vpack.c.b16 %v1676, %v1674
        %v2279 = vpack.c.b16 %v1679, %v1677
        %v2280 = vpack.c.b16 %v1680, %v1678
        %v2281 = vpack.c.b16 %v1683, %v1681
        %v2282 = vpack.c.b16 %v1684, %v1682
        %v2283 = vpack.c.b16 %v1687, %v1685
        %v2284 = vpack.c.b16 %v1688, %v1686
        %v2285 = vpack.c.b16 %v1691, %v1689
        %v2286 = vpack.c.b16 %v1692, %v1690
        %v2287 = vpack.c.b16 %v1695, %v1693
        %v2288 = vpack.c.b16 %v1696, %v1694
        %v2289 = vpack.c.b16 %v1699, %v1697
        %v2290 = vpack.c.b16 %v1700, %v1698
        %v2291 = vpack.c.b16 %v1703, %v1701
        %v2292 = vpack.c.b16 %v1704, %v1702
        %v2293 = vpack.c.b16 %v1707, %v1705
        %v2294 = vpack.c.b16 %v1708, %v1706
        %v2295 = vpack.c.b16 %v1711, %v1709
        %v2296 = vpack.c.b16 %v1712, %v1710
        %v2297 = vpack.c.b16 %v1715, %v1713
        %v2298 = vpack.c.b16 %v1716, %v1714
        %v2299 = vpack.c.b16 %v1719, %v1717
        %v2300 = vpack.c.b16 %v1720, %v1718
        %v2301 = vpack.c.b16 %v1723, %v1721
        %v2302 = vpack.c.b16 %v1724, %v1722
        %v2303 = vpack.c.b16 %v1727, %v1725
        %v2304 = vpack.c.b16 %v1728, %v1726
        %v2305 = vpack.c.b16 %v1731, %v1729
        %v2306 = vpack.c.b16 %v1732, %v1730
        %v2307 = vpack.c.b16 %v1735, %v1733
        %v2308 = vpack.c.b16 %v1736, %v1734
        %v2309 = vpack.c.b16 %v1739, %v1737
        %v2310 = vpack.c.b16 %v1740, %v1738
        %v2311 = vpack.c.b16 %v1743, %v1741
        %v2312 = vpack.c.b16 %v1744, %v1742
        %v2313 = vpack.c.b16 %v1747, %v1745
        %v2314 = vpack.c.b16 %v1748, %v1746
        %v2315 = vpack.c.b16 %v1751, %v1749
        %v2316 = vpack.c.b16 %v1752, %v1750
        %v2317 = vpack.c.b16 %v1755, %v1753
        %v2318 = vpack.c.b16 %v1756, %v1754
        %v2319 = vpack.c.b16 %v1759, %v1757
        %v2320 = vpack.c.b16 %v1760, %v1758
        %v2321 = vpack.c.b16 %v1763, %v1761
        %v2322 = vpack.c.b16 %v1764, %v1762
        %v2323 = vpack.c.b16 %v1767, %v1765
        %v2324 = vpack.c.b16 %v1768, %v1766
        %v2325 = vpack.c.b16 %v1771, %v1769
        %v2326 = vpack.c.b16 %v1772, %v1770
        %v2327 = vpack.c.b16 %v1775, %v1773
        %v2328 = vpack.c.b16 %v1776, %v1774
        %v2329 = vpack.c.b16 %v1779, %v1777
        %v2330 = vpack.c.b16 %v1780, %v1778
        %v2331 = vpack.c.b16 %v1783, %v1781
        %v2332 = vpack.c.b16 %v1784, %v1782
        %v2333 = vpack.c.b16 %v1787, %v1785
        %v2334 = vpack.c.b16 %v1788, %v1786
        %v2335 = vpack.c.b16 %v1791, %v1789
        %v2336 = vpack.c.b16 %v1792, %v1790
        %v2337 = vpack.c.b16 %v1795, %v1793
        %v2338 = vpack.c.b16 %v1796, %v1794
        %v2339 = vpack.c.b16 %v1799, %v1797
        %v2340 = vpack.c.b16 %v1800, %v1798
        %v2341 = vpack.c.b16 %v1803, %v1801
        %v2342 = vpack.c.b16 %v1804, %v1802
        %v2343 = vpack.c.b16 %v1807, %v1805
        %v2344 = vpack.c.b16 %v1808, %v1806
        %v2345 = vpack.c.b16 %v1811, %v1809
        %v2346 = vpack.c.b16 %v1812, %v1810
        %v2347 = vpack.c.b16 %v1815, %v1813
        %v2348 = vpack.c.b16 %v1816, %v1814
        %v2349 = vpack.c.b16 %v1819, %v1817
        %v2350 = vpack.c.b16 %v1820, %v1818
        %v2351 = vpack.c.b16 %v1823, %v1821
        %v2352 = vpack.c.b16 %v1824, %v1822
        %v2353 = vpack.c.b16 %v1827, %v1825
        %v2354 = vpack.c.b16 %v1828, %v1826
        %v2355 = vpack.c.b16 %v1831, %v1829
        %v2356 = vpack.c.b16 %v1832, %v1830
        %v2357 = vpack.c.b16 %v1835, %v1833
        %v2358 = vpack.c.b16 %v1836, %v1834
        %v2359 = vpack.c.b16 %v1839, %v1837
        %v2360 = vpack.c.b16 %v1840, %v1838
        %v2361 = vpack.c.b16 %v1843, %v1841
        %v2362 = vpack.c.b16 %v1844, %v1842
        %v2363 = vpack.c.b16 %v1847, %v1845
        %v2364 = vpack.c.b16 %v1848, %v1846
        %v2365 = vpack.c.b16 %v1851, %v1849
        %v2366 = vpack.c.b16 %v1852, %v1850
        %v2367 = vpack.c.b16 %v1855, %v1853
        %v2368 = vpack.c.b16 %v1856, %v1854
        %v2369 = vpack.c.b16 %v1859, %v1857
        %v2370 = vpack.c.b16 %v1860, %v1858
        %v2371 = vpack.c.b16 %v1863, %v1861
        %v2372 = vpack.c.b16 %v1864, %v1862
        %v2373 = vpack.c.b16 %v1867, %v1865
        %v2374 = vpack.c.b16 %v1868, %v1866
        %v2375 = vpack.c.b16 %v1871, %v1869
        %v2376 = vpack.c.b16 %v1872, %v1870
        %v2377 = vpack.c.b16 %v1875, %v1873
        %v2378 = vpack.c.b16 %v1876, %v1874
        %v2379 = vpack.c.b16 %v1879, %v1877
        %v2380 = vpack.c.b16 %v1880, %v1878
        %v2381 = vpack.c.b16 %v1883, %v1881
        %v2382 = vpack.c.b16 %v1884, %v1882
        %v2383 = vpack.c.b16 %v1887, %v1885
        %v2384 = vpack.c.b16 %v1888, %v1886
        %v2385 = vpack.c.b16 %v1891, %v1889
        %v2386 = vpack.c.b16 %v1892, %v1890
        %v2387 = vpack.c.b16 %v1895, %v1893
        %v2388 = vpack.c.b16 %v1896, %v1894
        %v2389 = vpack.c.b16 %v1899, %v1897
        %v2390 = vpack.c.b16 %v1900, %v1898
        %v2391 = vpack.c.b16 %v1903, %v1901
        %v2392 = vpack.c.b16 %v1904, %v1902
        %v2393 = vpack.c.b16 %v1907, %v1905
        %v2394 = vpack.c.b16 %v1908, %v1906
        %v2395 = vpack.c.b16 %v1911, %v1909
        %v2396 = vpack.c.b16 %v1912, %v1910
        %v2397 = vpack.c.b16 %v1915, %v1913
        %v2398 = vpack.c.b16 %v1916, %v1914
        %v2399 = vpack.c.b16 %v1919, %v1917
        %v2400 = vpack.c.b16 %v1920, %v1918
        %v2401 = vpack.c.b16 %v1923, %v1921
        %v2402 = vpack.c.b16 %v1924, %v1922
        %v2403 = vpack.c.b16 %v1927, %v1925
        %v2404 = vpack.c.b16 %v1928, %v1926
        %v2405 = vpack.c.b16 %v1931, %v1929
        %v2406 = vpack.c.b16 %v1932, %v1930
        %v2407 = vpack.c.b16 %v1935, %v1933
        %v2408 = vpack.c.b16 %v1936, %v1934
        %v2409 = vpack.c.b16 %v1939, %v1937
        %v2410 = vpack.c.b16 %v1940, %v1938
        %v2411 = vpack.c.b16 %v1943, %v1941
        %v2412 = vpack.c.b16 %v1944, %v1942
        %v2413 = vpack.c.b16 %v1947, %v1945
        %v2414 = vpack.c.b16 %v1948, %v1946
        %v2415 = vpack.c.b16 %v1951, %v1949
        %v2416 = vpack.c.b16 %v1952, %v1950
        %v2417 = vpack.c.b16 %v1955, %v1953
        %v2418 = vpack.c.b16 %v1956, %v1954
        %v2419 = vpack.c.b16 %v1959, %v1957
        %v2420 = vpack.c.b16 %v1960, %v1958
        %v2421 = vpack.c.b16 %v1963, %v1961
        %v2422 = vpack.c.b16 %v1964, %v1962
        %v2423 = vpack.c.b16 %v1967, %v1965
        %v2424 = vpack.c.b16 %v1968, %v1966
        %v2425 = vpack.c.b16 %v1971, %v1969
        %v2426 = vpack.c.b16 %v1972, %v1970
        %v2427 = vpack.c.b16 %v1975, %v1973
        %v2428 = vpack.c.b16 %v1976, %v1974
        %v2429 = vpack.c.b16 %v1979, %v1977
        %v2430 = vpack.c.b16 %v1980, %v1978
        %v2431 = vpack.c.b16 %v1983, %v1981
        %v2432 = vpack.c.b16 %v1984, %v1982
        %v2433 = vpack.c.b16 %v1987, %v1985
        %v2434 = vpack.c.b16 %v1988, %v1986
        %v2435 = vpack.c.b16 %v1991, %v1989
        %v2436 = vpack.c.b16 %v1992, %v1990
        %v2437 = vpack.c.b16 %v1995, %v1993
        %v2438 = vpack.c.b16 %v1996, %v1994
        %v2439 = vpack.c.b16 %v1999, %v1997
        %v2440 = vpack.c.b16 %v2000, %v1998
        %v2441 = vpack.c.b16 %v2003, %v2001
        %v2442 = vpack.c.b16 %v2004, %v2002
        %v2443 = vpack.c.b16 %v2007, %v2005
        %v2444 = vpack.c.b16 %v2008, %v2006
        %v2445 = vpack.c.b16 %v2011, %v2009
        %v2446 = vpack.c.b16 %v2012, %v2010
        %v2447 = vpack.c.b16 %v2015, %v2013
        %v2448 = vpack.c.b16 %v2016, %v2014
        %v2449 = vpack.c.b16 %v2019, %v2017
        %v2450 = vpack.c.b16 %v2020, %v2018
        %v2451 = vpack.c.b16 %v2023, %v2021
        %v2452 = vpack.c.b16 %v2024, %v2022
        %v2453 = vpack.c.b16 %v2027, %v2025
        %v2454 = vpack.c.b16 %v2028, %v2026
        %v2455 = vpack.c.b16 %v2031, %v2029
        %v2456 = vpack.c.b16 %v2032, %v2030
        %v2457 = vpack.c.b16 %v2035, %v2033
        %v2458 = vpack.c.b16 %v2036, %v2034
        %v2459 = vpack.c.b16 %v2039, %v2037
        %v2460 = vpack.c.b16 %v2040, %v2038
        %v2461 = vpack.c.b16 %v2043, %v2041
        %v2462 = vpack.c.b16 %v2044, %v2042
        %v2463 = vpack.c.b16 %v2047, %v2045
        %v2464 = vpack.c.b16 %v2048, %v2046
        %v2465 = vpack.c.b16 %v2051, %v2049
        %v2466 = vpack.c.b16 %v2052, %v2050
        %v2467 = vpack.c.b16 %v2055, %v2053
        %v2468 = vpack.c.b16 %v2056, %v2054
        %v2469 = vpack.c.b16 %v2059, %v2057
        %v2470 = vpack.c.b16 %v2060, %v2058
        %v2471 = vpack.c.b16 %v2063, %v2061
        %v2472 = vpack.c.b16 %v2064, %v2062
        %v2473 = vpack.c.b16 %v2067, %v2065
        %v2474 = vpack.c.b16 %v2068, %v2066
        %v2475 = vpack.c.b16 %v2071, %v2069
        %v2476 = vpack.c.b16 %v2072, %v2070
        %v2477 = vpack.c.b16 %v2075, %v2073
        %v2478 = vpack.c.b16 %v2076, %v2074
        %v2479 = vpack.c.b16 %v2079, %v2077
        %v2480 = vpack.c.b16 %v2080, %v2078
        %v2481 = vpack.c.b16 %v2083, %v2081
        %v2482 = vpack.c.b16 %v2084, %v2082
        %v2483 = vpack.c.b16 %v2087, %v2085
        %v2484 = vpack.c.b16 %v2088, %v2086
        %v2485 = vpack.c.b16 %v2091, %v2089
        %v2486 = vpack.c.b16 %v2092, %v2090
        %v2487 = vpack.c.b16 %v2095, %v2093
        %v2488 = vpack.c.b16 %v2096, %v2094
        %v2882 = vlaneseq
        %v2883 = vshrl.u32 %v2882, 7
        %v2884 = vsub.s32 0, %v2883
        %v2885 = vrot.slane %v731, %v2884
        %v2886 = vlaneseq
        %v2887 = vshrl.u32 %v2886, 7
        %v2888 = vsub.s32 1, %v2887
        %v2889 = vrot.slane %v731, %v2888
        %vm2892 = vcmask 523264
        %v2894 = vsel %vm2892, %v896, 0
        %2896 = vmatprep.subr.bf16.mxu0 %v2098
        %2897 = vmatpush1.bf16.msra.mxu0 %v2097
        %2898 = vmatprep.subr.bf16.mxu0 %v2100
        %2899 = vmatpush1.bf16.msra.mxu0 %v2099
        %2900 = vmatprep.subr.bf16.mxu0 %v2102
        %2901 = vmatpush1.bf16.msra.mxu0 %v2101
        %2902 = vmatprep.subr.bf16.mxu0 %v2104
        %2903 = vmatpush1.bf16.msra.mxu0 %v2103
        %2904 = vmatprep.subr.bf16.mxu0 %v2106
        %2905 = vmatpush1.bf16.msra.mxu0 %v2105
        %2906 = vmatprep.subr.bf16.mxu0 %v2108
        %2907 = vmatpush1.bf16.msra.mxu0 %v2107
        %2908 = vmatprep.subr.bf16.mxu0 %v2110
        %2909 = vmatpush1.bf16.msra.mxu0 %v2109
        %2910 = vmatprep.subr.bf16.mxu0 %v2112
        %2911 = vmatpush1.bf16.msra.mxu0 %v2111
        %2912 = vmatprep.subr.bf16.mxu0 %v2114
        %2913 = vmatpush1.bf16.msra.mxu0 %v2113
        %2914 = vmatprep.subr.bf16.mxu0 %v2116
        %2915 = vmatpush1.bf16.msra.mxu0 %v2115
        %2916 = vmatprep.subr.bf16.mxu0 %v2118
        %2917 = vmatpush1.bf16.msra.mxu0 %v2117
        %2918 = vmatprep.subr.bf16.mxu0 %v2120
        %2919 = vmatpush1.bf16.msra.mxu0 %v2119
        %2920 = vmatprep.subr.bf16.mxu0 %v2122
        %2921 = vmatpush1.bf16.msra.mxu0 %v2121
        %2922 = vmatprep.subr.bf16.mxu0 %v2124
        %2923 = vmatpush1.bf16.msra.mxu0 %v2123
        %2924 = vmatprep.subr.bf16.mxu0 %v2126
        %2925 = vmatpush1.bf16.msra.mxu0 %v2125
        %2926 = vmatprep.subr.bf16.mxu0 %v2128
        %2927 = vmatpush1.bf16.msra.mxu0 %v2127
        %2928 = vmatprep.mubr.bf16.mxu0 %v773
        %2929 = vmatmul.mubr.bf16.gmra.mrb[0].mxu0 %v759
        %v2930 = vpop.f32.mrb[0].mxu0
        %v2931 = vadd.f32 %v2885, %v2930
        %v2932 = vpop.f32.mrb[0].mxu0
        %v2933 = vadd.f32 %v2889, %v2932
        %v2934 = vpop.f32.mrb[0].mxu0
        %v2935 = vpop.f32.mrb[0].mxu0
        %2936 = vdwg.mxu0
        %2937 = vmatprep.subr.bf16.mxu0 %v2130
        %2938 = vmatpush1.bf16.msra.mxu0 %v2129
        %2939 = vmatprep.subr.bf16.mxu0 %v2132
        %2940 = vmatpush1.bf16.msra.mxu0 %v2131
        %2941 = vmatprep.subr.bf16.mxu0 %v2134
        %2942 = vmatpush1.bf16.msra.mxu0 %v2133
        %2943 = vmatprep.subr.bf16.mxu0 %v2136
        %2944 = vmatpush1.bf16.msra.mxu0 %v2135
        %2945 = vmatprep.subr.bf16.mxu0 %v2138
        %2946 = vmatpush1.bf16.msra.mxu0 %v2137
        %2947 = vmatprep.subr.bf16.mxu0 %v2140
        %2948 = vmatpush1.bf16.msra.mxu0 %v2139
        %2949 = vmatprep.subr.bf16.mxu0 %v2142
        %2950 = vmatpush1.bf16.msra.mxu0 %v2141
        %2951 = vmatprep.subr.bf16.mxu0 %v2144
        %2952 = vmatpush1.bf16.msra.mxu0 %v2143
        %2953 = vmatprep.subr.bf16.mxu0 %v2146
        %2954 = vmatpush1.bf16.msra.mxu0 %v2145
        %2955 = vmatprep.subr.bf16.mxu0 %v2148
        %2956 = vmatpush1.bf16.msra.mxu0 %v2147
        %2957 = vmatprep.subr.bf16.mxu0 %v2150
        %2958 = vmatpush1.bf16.msra.mxu0 %v2149
        %2959 = vmatprep.subr.bf16.mxu0 %v2152
        %2960 = vmatpush1.bf16.msra.mxu0 %v2151
        %2961 = vmatprep.subr.bf16.mxu0 %v2154
        %2962 = vmatpush1.bf16.msra.mxu0 %v2153
        %2963 = vmatprep.subr.bf16.mxu0 %v2156
        %2964 = vmatpush1.bf16.msra.mxu0 %v2155
        %2965 = vmatprep.subr.bf16.mxu0 %v2158
        %2966 = vmatpush1.bf16.msra.mxu0 %v2157
        %2967 = vmatprep.subr.bf16.mxu0 %v2160
        %2968 = vmatpush1.bf16.msra.mxu0 %v2159
        %2969 = vmatprep.mubr.bf16.mxu0 %v783
        %2970 = vmatmul.mubr.bf16.gmra.mrb[0].mxu0 %v781
        %v2971 = vpop.f32.mrb[0].mxu0
        %v2972 = vadd.f32 %v2931, %v2971
        %v2973 = vpop.f32.mrb[0].mxu0
        %v2974 = vadd.f32 %v2933, %v2973
        %v2975 = vpop.f32.mrb[0].mxu0
        %v2976 = vpop.f32.mrb[0].mxu0
        %2977 = vdwg.mxu0
        %2978 = vmatprep.subr.bf16.mxu0 %v2162
        %2979 = vmatpush1.bf16.msra.mxu0 %v2161
        %2980 = vmatprep.subr.bf16.mxu0 %v2164
        %2981 = vmatpush1.bf16.msra.mxu0 %v2163
        %2982 = vmatprep.subr.bf16.mxu0 %v2166
        %2983 = vmatpush1.bf16.msra.mxu0 %v2165
        %2984 = vmatprep.subr.bf16.mxu0 %v2168
        %2985 = vmatpush1.bf16.msra.mxu0 %v2167
        %2986 = vmatprep.subr.bf16.mxu0 %v2170
        %2987 = vmatpush1.bf16.msra.mxu0 %v2169
        %2988 = vmatprep.subr.bf16.mxu0 %v2172
        %2989 = vmatpush1.bf16.msra.mxu0 %v2171
        %2990 = vmatprep.subr.bf16.mxu0 %v2174
        %2991 = vmatpush1.bf16.msra.mxu0 %v2173
        %2992 = vmatprep.subr.bf16.mxu0 %v2176
        %2993 = vmatpush1.bf16.msra.mxu0 %v2175
        %2994 = vmatprep.subr.bf16.mxu0 %v2178
        %2995 = vmatpush1.bf16.msra.mxu0 %v2177
        %2996 = vmatprep.subr.bf16.mxu0 %v2180
        %2997 = vmatpush1.bf16.msra.mxu0 %v2179
        %2998 = vmatprep.subr.bf16.mxu0 %v2182
        %2999 = vmatpush1.bf16.msra.mxu0 %v2181
        %3000 = vmatprep.subr.bf16.mxu0 %v2184
        %3001 = vmatpush1.bf16.msra.mxu0 %v2183
        %3002 = vmatprep.subr.bf16.mxu0 %v2186
        %3003 = vmatpush1.bf16.msra.mxu0 %v2185
        %3004 = vmatprep.subr.bf16.mxu0 %v2188
        %3005 = vmatpush1.bf16.msra.mxu0 %v2187
        %3006 = vmatprep.subr.bf16.mxu0 %v2190
        %3007 = vmatpush1.bf16.msra.mxu0 %v2189
        %3008 = vmatprep.subr.bf16.mxu0 %v2192
        %3009 = vmatpush1.bf16.msra.mxu0 %v2191
        %3010 = vmatprep.mubr.bf16.mxu0 %v780
        %3011 = vmatmul.mubr.bf16.gmra.mrb[0].mxu0 %v766
        %v3012 = vpop.f32.mrb[0].mxu0
        %v3013 = vadd.f32 %v2972, %v3012
        %v3014 = vpop.f32.mrb[0].mxu0
        %v3015 = vadd.f32 %v2974, %v3014
        %v3016 = vpop.f32.mrb[0].mxu0
        %v3017 = vpop.f32.mrb[0].mxu0
        %3018 = vdwg.mxu0
        %3019 = vmatprep.subr.bf16.mxu0 %v2194
        %3020 = vmatpush1.bf16.msra.mxu0 %v2193
        %3021 = vmatprep.subr.bf16.mxu0 %v2196
        %3022 = vmatpush1.bf16.msra.mxu0 %v2195
        %3023 = vmatprep.subr.bf16.mxu0 %v2198
        %3024 = vmatpush1.bf16.msra.mxu0 %v2197
        %3025 = vmatprep.subr.bf16.mxu0 %v2200
        %3026 = vmatpush1.bf16.msra.mxu0 %v2199
        %3027 = vmatprep.subr.bf16.mxu0 %v2202
        %3028 = vmatpush1.bf16.msra.mxu0 %v2201
        %3029 = vmatprep.subr.bf16.mxu0 %v2204
        %3030 = vmatpush1.bf16.msra.mxu0 %v2203
        %3031 = vmatprep.subr.bf16.mxu0 %v2206
        %3032 = vmatpush1.bf16.msra.mxu0 %v2205
        %3033 = vmatprep.subr.bf16.mxu0 %v2208
        %3034 = vmatpush1.bf16.msra.mxu0 %v2207
        %3035 = vmatprep.subr.bf16.mxu0 %v2210
        %3036 = vmatpush1.bf16.msra.mxu0 %v2209
        %3037 = vmatprep.subr.bf16.mxu0 %v2212
        %3038 = vmatpush1.bf16.msra.mxu0 %v2211
        %3039 = vmatprep.subr.bf16.mxu0 %v2214
        %3040 = vmatpush1.bf16.msra.mxu0 %v2213
        %3041 = vmatprep.subr.bf16.mxu0 %v2216
        %3042 = vmatpush1.bf16.msra.mxu0 %v2215
        %3043 = vmatprep.subr.bf16.mxu0 %v2218
        %3044 = vmatpush1.bf16.msra.mxu0 %v2217
        %3045 = vmatprep.subr.bf16.mxu0 %v2220
        %3046 = vmatpush1.bf16.msra.mxu0 %v2219
        %3047 = vmatprep.subr.bf16.mxu0 %v2222
        %3048 = vmatpush1.bf16.msra.mxu0 %v2221
        %3049 = vmatprep.subr.bf16.mxu0 %v2224
        %3050 = vmatpush1.bf16.msra.mxu0 %v2223
        %3051 = vmatprep.mubr.bf16.mxu0 %v784
        %3052 = vmatmul.mubr.bf16.gmra.mrb[0].mxu0 %v782
        %v3053 = vpop.f32.mrb[0].mxu0
        %v3054 = vadd.f32 %v3013, %v3053
        %v3055 = vpop.f32.mrb[0].mxu0
        %v3056 = vadd.f32 %v3015, %v3055
        %v3057 = vpop.f32.mrb[0].mxu0
        %v3058 = vpop.f32.mrb[0].mxu0
        %3059 = vdwg.mxu0
        %3060 = vmatprep.subr.bf16.mxu0 %v2226
        %3061 = vmatpush1.bf16.msra.mxu0 %v2225
        %3062 = vmatprep.subr.bf16.mxu0 %v2228
        %3063 = vmatpush1.bf16.msra.mxu0 %v2227
        %3064 = vmatprep.subr.bf16.mxu0 %v2230
        %3065 = vmatpush1.bf16.msra.mxu0 %v2229
        %3066 = vmatprep.subr.bf16.mxu0 %v2232
        %3067 = vmatpush1.bf16.msra.mxu0 %v2231
        %3068 = vmatprep.subr.bf16.mxu0 %v2234
        %3069 = vmatpush1.bf16.msra.mxu0 %v2233
        %3070 = vmatprep.subr.bf16.mxu0 %v2236
        %3071 = vmatpush1.bf16.msra.mxu0 %v2235
        %3072 = vmatprep.subr.bf16.mxu0 %v2238
        %3073 = vmatpush1.bf16.msra.mxu0 %v2237
        %3074 = vmatprep.subr.bf16.mxu0 %v2240
        %3075 = vmatpush1.bf16.msra.mxu0 %v2239
        %3076 = vmatprep.subr.bf16.mxu0 %v2242
        %3077 = vmatpush1.bf16.msra.mxu0 %v2241
        %3078 = vmatprep.subr.bf16.mxu0 %v2244
        %3079 = vmatpush1.bf16.msra.mxu0 %v2243
        %3080 = vmatprep.subr.bf16.mxu0 %v2246
        %3081 = vmatpush1.bf16.msra.mxu0 %v2245
        %3082 = vmatprep.subr.bf16.mxu0 %v2248
        %3083 = vmatpush1.bf16.msra.mxu0 %v2247
        %3084 = vmatprep.subr.bf16.mxu0 %v2250
        %3085 = vmatpush1.bf16.msra.mxu0 %v2249
        %3086 = vmatprep.subr.bf16.mxu0 %v2252
        %3087 = vmatpush1.bf16.msra.mxu0 %v2251
        %3088 = vmatprep.subr.bf16.mxu0 %v2254
        %3089 = vmatpush1.bf16.msra.mxu0 %v2253
        %3090 = vmatprep.subr.bf16.mxu0 %v2256
        %3091 = vmatpush1.bf16.msra.mxu0 %v2255
        %3092 = vmatprep.mubr.bf16.mxu0 %v822
        %3093 = vmatmul.mubr.bf16.gmra.mrb[0].mxu0 %v808
        %v3094 = vpop.f32.mrb[0].mxu0
        %v3095 = vadd.f32 %v3054, %v3094
        %v3096 = vpop.f32.mrb[0].mxu0
        %v3097 = vadd.f32 %v3056, %v3096
        %v3098 = vpop.f32.mrb[0].mxu0
        %v3099 = vpop.f32.mrb[0].mxu0
        %3100 = vdwg.mxu0
        %3101 = vmatprep.subr.bf16.mxu0 %v2258
        %3102 = vmatpush1.bf16.msra.mxu0 %v2257
        %3103 = vmatprep.subr.bf16.mxu0 %v2260
        %3104 = vmatpush1.bf16.msra.mxu0 %v2259
        %3105 = vmatprep.subr.bf16.mxu0 %v2262
        %3106 = vmatpush1.bf16.msra.mxu0 %v2261
        %3107 = vmatprep.subr.bf16.mxu0 %v2264
        %3108 = vmatpush1.bf16.msra.mxu0 %v2263
        %3109 = vmatprep.subr.bf16.mxu0 %v2266
        %3110 = vmatpush1.bf16.msra.mxu0 %v2265
        %3111 = vmatprep.subr.bf16.mxu0 %v2268
        %3112 = vmatpush1.bf16.msra.mxu0 %v2267
        %3113 = vmatprep.subr.bf16.mxu0 %v2270
        %3114 = vmatpush1.bf16.msra.mxu0 %v2269
        %3115 = vmatprep.subr.bf16.mxu0 %v2272
        %3116 = vmatpush1.bf16.msra.mxu0 %v2271
        %3117 = vmatprep.subr.bf16.mxu0 %v2274
        %3118 = vmatpush1.bf16.msra.mxu0 %v2273
        %3119 = vmatprep.subr.bf16.mxu0 %v2276
        %3120 = vmatpush1.bf16.msra.mxu0 %v2275
        %3121 = vmatprep.subr.bf16.mxu0 %v2278
        %3122 = vmatpush1.bf16.msra.mxu0 %v2277
        %3123 = vmatprep.subr.bf16.mxu0 %v2280
        %3124 = vmatpush1.bf16.msra.mxu0 %v2279
        %3125 = vmatprep.subr.bf16.mxu0 %v2282
        %3126 = vmatpush1.bf16.msra.mxu0 %v2281
        %3127 = vmatprep.subr.bf16.mxu0 %v2284
        %3128 = vmatpush1.bf16.msra.mxu0 %v2283
        %3129 = vmatprep.subr.bf16.mxu0 %v2286
        %3130 = vmatpush1.bf16.msra.mxu0 %v2285
        %3131 = vmatprep.subr.bf16.mxu0 %v2288
        %3132 = vmatpush1.bf16.msra.mxu0 %v2287
        %3133 = vmatprep.mubr.bf16.mxu0 %v832
        %3134 = vmatmul.mubr.bf16.gmra.mrb[0].mxu0 %v830
        %v3135 = vpop.f32.mrb[0].mxu0
        %v3136 = vadd.f32 %v3095, %v3135
        %v3137 = vpop.f32.mrb[0].mxu0
        %v3138 = vadd.f32 %v3097, %v3137
        %v3139 = vpop.f32.mrb[0].mxu0
        %v3140 = vpop.f32.mrb[0].mxu0
        %3141 = vdwg.mxu0
        %3142 = vmatprep.subr.bf16.mxu0 %v2290
        %3143 = vmatpush1.bf16.msra.mxu0 %v2289
        %3144 = vmatprep.subr.bf16.mxu0 %v2292
        %3145 = vmatpush1.bf16.msra.mxu0 %v2291
        %3146 = vmatprep.subr.bf16.mxu0 %v2294
        %3147 = vmatpush1.bf16.msra.mxu0 %v2293
        %3148 = vmatprep.subr.bf16.mxu0 %v2296
        %3149 = vmatpush1.bf16.msra.mxu0 %v2295
        %3150 = vmatprep.subr.bf16.mxu0 %v2298
        %3151 = vmatpush1.bf16.msra.mxu0 %v2297
        %3152 = vmatprep.subr.bf16.mxu0 %v2300
        %3153 = vmatpush1.bf16.msra.mxu0 %v2299
        %3154 = vmatprep.subr.bf16.mxu0 %v2302
        %3155 = vmatpush1.bf16.msra.mxu0 %v2301
        %3156 = vmatprep.subr.bf16.mxu0 %v2304
        %3157 = vmatpush1.bf16.msra.mxu0 %v2303
        %3158 = vmatprep.subr.bf16.mxu0 %v2306
        %3159 = vmatpush1.bf16.msra.mxu0 %v2305
        %3160 = vmatprep.subr.bf16.mxu0 %v2308
        %3161 = vmatpush1.bf16.msra.mxu0 %v2307
        %3162 = vmatprep.subr.bf16.mxu0 %v2310
        %3163 = vmatpush1.bf16.msra.mxu0 %v2309
        %3164 = vmatprep.subr.bf16.mxu0 %v2312
        %3165 = vmatpush1.bf16.msra.mxu0 %v2311
        %3166 = vmatprep.subr.bf16.mxu0 %v2314
        %3167 = vmatpush1.bf16.msra.mxu0 %v2313
        %3168 = vmatprep.subr.bf16.mxu0 %v2316
        %3169 = vmatpush1.bf16.msra.mxu0 %v2315
        %3170 = vmatprep.subr.bf16.mxu0 %v2318
        %3171 = vmatpush1.bf16.msra.mxu0 %v2317
        %3172 = vmatprep.subr.bf16.mxu0 %v2320
        %3173 = vmatpush1.bf16.msra.mxu0 %v2319
        %3174 = vmatprep.mubr.bf16.mxu0 %v829
        %3175 = vmatmul.mubr.bf16.gmra.mrb[0].mxu0 %v815
        %v3176 = vpop.f32.mrb[0].mxu0
        %v3177 = vadd.f32 %v3136, %v3176
        %v3178 = vpop.f32.mrb[0].mxu0
        %v3179 = vadd.f32 %v3138, %v3178
        %v3180 = vpop.f32.mrb[0].mxu0
        %v3181 = vpop.f32.mrb[0].mxu0
        %3182 = vdwg.mxu0
        %3183 = vmatprep.subr.bf16.mxu0 %v2322
        %3184 = vmatpush1.bf16.msra.mxu0 %v2321
        %3185 = vmatprep.subr.bf16.mxu0 %v2324
        %3186 = vmatpush1.bf16.msra.mxu0 %v2323
        %3187 = vmatprep.subr.bf16.mxu0 %v2326
        %3188 = vmatpush1.bf16.msra.mxu0 %v2325
        %3189 = vmatprep.subr.bf16.mxu0 %v2328
        %3190 = vmatpush1.bf16.msra.mxu0 %v2327
        %3191 = vmatprep.subr.bf16.mxu0 %v2330
        %3192 = vmatpush1.bf16.msra.mxu0 %v2329
        %3193 = vmatprep.subr.bf16.mxu0 %v2332
        %3194 = vmatpush1.bf16.msra.mxu0 %v2331
        %3195 = vmatprep.subr.bf16.mxu0 %v2334
        %3196 = vmatpush1.bf16.msra.mxu0 %v2333
        %3197 = vmatprep.subr.bf16.mxu0 %v2336
        %3198 = vmatpush1.bf16.msra.mxu0 %v2335
        %3199 = vmatprep.subr.bf16.mxu0 %v2338
        %3200 = vmatpush1.bf16.msra.mxu0 %v2337
        %3201 = vmatprep.subr.bf16.mxu0 %v2340
        %3202 = vmatpush1.bf16.msra.mxu0 %v2339
        %3203 = vmatprep.subr.bf16.mxu0 %v2342
        %3204 = vmatpush1.bf16.msra.mxu0 %v2341
        %3205 = vmatprep.subr.bf16.mxu0 %v2344
        %3206 = vmatpush1.bf16.msra.mxu0 %v2343
        %3207 = vmatprep.subr.bf16.mxu0 %v2346
        %3208 = vmatpush1.bf16.msra.mxu0 %v2345
        %3209 = vmatprep.subr.bf16.mxu0 %v2348
        %3210 = vmatpush1.bf16.msra.mxu0 %v2347
        %3211 = vmatprep.subr.bf16.mxu0 %v2350
        %3212 = vmatpush1.bf16.msra.mxu0 %v2349
        %3213 = vmatprep.subr.bf16.mxu0 %v2352
        %3214 = vmatpush1.bf16.msra.mxu0 %v2351
        %3215 = vmatprep.mubr.bf16.mxu0 %v833
        %3216 = vmatmul.mubr.bf16.gmra.mrb[0].mxu0 %v831
        %v3217 = vpop.f32.mrb[0].mxu0
        %v3218 = vadd.f32 %v3177, %v3217
        %v3219 = vpop.f32.mrb[0].mxu0
        %v3220 = vadd.f32 %v3179, %v3219
        %v3221 = vpop.f32.mrb[0].mxu0
        %v3222 = vpop.f32.mrb[0].mxu0
        %3223 = vdwg.mxu0
        %3224 = vmatprep.subr.bf16.mxu0 %v2354
        %3225 = vmatpush1.bf16.msra.mxu0 %v2353
        %3226 = vmatprep.subr.bf16.mxu0 %v2356
        %3227 = vmatpush1.bf16.msra.mxu0 %v2355
        %3228 = vmatprep.subr.bf16.mxu0 %v2358
        %3229 = vmatpush1.bf16.msra.mxu0 %v2357
        %3230 = vmatprep.subr.bf16.mxu0 %v2360
        %3231 = vmatpush1.bf16.msra.mxu0 %v2359
        %3232 = vmatprep.subr.bf16.mxu0 %v2362
        %3233 = vmatpush1.bf16.msra.mxu0 %v2361
        %3234 = vmatprep.subr.bf16.mxu0 %v2364
        %3235 = vmatpush1.bf16.msra.mxu0 %v2363
        %3236 = vmatprep.subr.bf16.mxu0 %v2366
        %3237 = vmatpush1.bf16.msra.mxu0 %v2365
        %3238 = vmatprep.subr.bf16.mxu0 %v2368
        %3239 = vmatpush1.bf16.msra.mxu0 %v2367
        %3240 = vmatprep.subr.bf16.mxu0 %v2370
        %3241 = vmatpush1.bf16.msra.mxu0 %v2369
        %3242 = vmatprep.subr.bf16.mxu0 %v2372
        %3243 = vmatpush1.bf16.msra.mxu0 %v2371
        %3244 = vmatprep.subr.bf16.mxu0 %v2374
        %3245 = vmatpush1.bf16.msra.mxu0 %v2373
        %3246 = vmatprep.subr.bf16.mxu0 %v2376
        %3247 = vmatpush1.bf16.msra.mxu0 %v2375
        %3248 = vmatprep.subr.bf16.mxu0 %v2378
        %3249 = vmatpush1.bf16.msra.mxu0 %v2377
        %3250 = vmatprep.subr.bf16.mxu0 %v2380
        %3251 = vmatpush1.bf16.msra.mxu0 %v2379
        %3252 = vmatprep.subr.bf16.mxu0 %v2382
        %3253 = vmatpush1.bf16.msra.mxu0 %v2381
        %3254 = vmatprep.subr.bf16.mxu0 %v2384
        %3255 = vmatpush1.bf16.msra.mxu0 %v2383
        %3256 = vmatprep.mubr.bf16.mxu0 %v871
        %3257 = vmatmul.mubr.bf16.gmra.mrb[0].mxu0 %v857
        %v3258 = vpop.f32.mrb[0].mxu0
        %v3259 = vadd.f32 %v3218, %v3258
        %v3260 = vpop.f32.mrb[0].mxu0
        %v3261 = vadd.f32 %v3220, %v3260
        %v3262 = vpop.f32.mrb[0].mxu0
        %v3263 = vpop.f32.mrb[0].mxu0
        %3264 = vdwg.mxu0
        %3265 = vmatprep.subr.bf16.mxu0 %v2386
        %3266 = vmatpush1.bf16.msra.mxu0 %v2385
        %3267 = vmatprep.subr.bf16.mxu0 %v2388
        %3268 = vmatpush1.bf16.msra.mxu0 %v2387
        %3269 = vmatprep.subr.bf16.mxu0 %v2390
        %3270 = vmatpush1.bf16.msra.mxu0 %v2389
        %3271 = vmatprep.subr.bf16.mxu0 %v2392
        %3272 = vmatpush1.bf16.msra.mxu0 %v2391
        %3273 = vmatprep.subr.bf16.mxu0 %v2394
        %3274 = vmatpush1.bf16.msra.mxu0 %v2393
        %3275 = vmatprep.subr.bf16.mxu0 %v2396
        %3276 = vmatpush1.bf16.msra.mxu0 %v2395
        %3277 = vmatprep.subr.bf16.mxu0 %v2398
        %3278 = vmatpush1.bf16.msra.mxu0 %v2397
        %3279 = vmatprep.subr.bf16.mxu0 %v2400
        %3280 = vmatpush1.bf16.msra.mxu0 %v2399
        %3281 = vmatprep.subr.bf16.mxu0 %v2402
        %3282 = vmatpush1.bf16.msra.mxu0 %v2401
        %3283 = vmatprep.subr.bf16.mxu0 %v2404
        %3284 = vmatpush1.bf16.msra.mxu0 %v2403
        %3285 = vmatprep.subr.bf16.mxu0 %v2406
        %3286 = vmatpush1.bf16.msra.mxu0 %v2405
        %3287 = vmatprep.subr.bf16.mxu0 %v2408
        %3288 = vmatpush1.bf16.msra.mxu0 %v2407
        %3289 = vmatprep.subr.bf16.mxu0 %v2410
        %3290 = vmatpush1.bf16.msra.mxu0 %v2409
        %3291 = vmatprep.subr.bf16.mxu0 %v2412
        %3292 = vmatpush1.bf16.msra.mxu0 %v2411
        %3293 = vmatprep.subr.bf16.mxu0 %v2414
        %3294 = vmatpush1.bf16.msra.mxu0 %v2413
        %3295 = vmatprep.subr.bf16.mxu0 %v2416
        %3296 = vmatpush1.bf16.msra.mxu0 %v2415
        %3297 = vmatprep.mubr.bf16.mxu0 %v881
        %3298 = vmatmul.mubr.bf16.gmra.mrb[0].mxu0 %v879
        %v3299 = vpop.f32.mrb[0].mxu0
        %v3300 = vadd.f32 %v3259, %v3299
        %v3301 = vpop.f32.mrb[0].mxu0
        %v3302 = vadd.f32 %v3261, %v3301
        %v3303 = vpop.f32.mrb[0].mxu0
        %v3304 = vpop.f32.mrb[0].mxu0
        %3305 = vdwg.mxu0
        %3306 = vmatprep.subr.bf16.mxu0 %v2418
        %3307 = vmatpush1.bf16.msra.mxu0 %v2417
        %3308 = vmatprep.subr.bf16.mxu0 %v2420
        %3309 = vmatpush1.bf16.msra.mxu0 %v2419
        %3310 = vmatprep.subr.bf16.mxu0 %v2422
        %3311 = vmatpush1.bf16.msra.mxu0 %v2421
        %3312 = vmatprep.subr.bf16.mxu0 %v2424
        %3313 = vmatpush1.bf16.msra.mxu0 %v2423
        %3314 = vmatprep.subr.bf16.mxu0 %v2426
        %3315 = vmatpush1.bf16.msra.mxu0 %v2425
        %3316 = vmatprep.subr.bf16.mxu0 %v2428
        %3317 = vmatpush1.bf16.msra.mxu0 %v2427
        %3318 = vmatprep.subr.bf16.mxu0 %v2430
        %3319 = vmatpush1.bf16.msra.mxu0 %v2429
        %3320 = vmatprep.subr.bf16.mxu0 %v2432
        %3321 = vmatpush1.bf16.msra.mxu0 %v2431
        %3322 = vmatprep.subr.bf16.mxu0 %v2434
        %3323 = vmatpush1.bf16.msra.mxu0 %v2433
        %3324 = vmatprep.subr.bf16.mxu0 %v2436
        %3325 = vmatpush1.bf16.msra.mxu0 %v2435
        %3326 = vmatprep.subr.bf16.mxu0 %v2438
        %3327 = vmatpush1.bf16.msra.mxu0 %v2437
        %3328 = vmatprep.subr.bf16.mxu0 %v2440
        %3329 = vmatpush1.bf16.msra.mxu0 %v2439
        %3330 = vmatprep.subr.bf16.mxu0 %v2442
        %3331 = vmatpush1.bf16.msra.mxu0 %v2441
        %3332 = vmatprep.subr.bf16.mxu0 %v2444
        %3333 = vmatpush1.bf16.msra.mxu0 %v2443
        %3334 = vmatprep.subr.bf16.mxu0 %v2446
        %3335 = vmatpush1.bf16.msra.mxu0 %v2445
        %3336 = vmatprep.subr.bf16.mxu0 %v2448
        %3337 = vmatpush1.bf16.msra.mxu0 %v2447
        %3338 = vmatprep.mubr.bf16.mxu0 %v878
        %3339 = vmatmul.mubr.bf16.gmra.mrb[0].mxu0 %v864
        %v3340 = vpop.f32.mrb[0].mxu0
        %v3341 = vadd.f32 %v3300, %v3340
        %v3342 = vpop.f32.mrb[0].mxu0
        %v3343 = vadd.f32 %v3302, %v3342
        %v3344 = vpop.f32.mrb[0].mxu0
        %v3345 = vpop.f32.mrb[0].mxu0
        %3346 = vdwg.mxu0
        %3347 = vmatprep.subr.bf16.mxu0 %v2450
        %3348 = vmatpush1.bf16.msra.mxu0 %v2449
        %3349 = vmatprep.subr.bf16.mxu0 %v2452
        %3350 = vmatpush1.bf16.msra.mxu0 %v2451
        %3351 = vmatprep.subr.bf16.mxu0 %v2454
        %3352 = vmatpush1.bf16.msra.mxu0 %v2453
        %3353 = vmatprep.subr.bf16.mxu0 %v2456
        %3354 = vmatpush1.bf16.msra.mxu0 %v2455
        %3355 = vmatprep.subr.bf16.mxu0 %v2458
        %3356 = vmatpush1.bf16.msra.mxu0 %v2457
        %3357 = vmatprep.subr.bf16.mxu0 %v2460
        %3358 = vmatpush1.bf16.msra.mxu0 %v2459
        %3359 = vmatprep.subr.bf16.mxu0 %v2462
        %3360 = vmatpush1.bf16.msra.mxu0 %v2461
        %3361 = vmatprep.subr.bf16.mxu0 %v2464
        %3362 = vmatpush1.bf16.msra.mxu0 %v2463
        %3363 = vmatprep.subr.bf16.mxu0 %v2466
        %3364 = vmatpush1.bf16.msra.mxu0 %v2465
        %3365 = vmatprep.subr.bf16.mxu0 %v2468
        %3366 = vmatpush1.bf16.msra.mxu0 %v2467
        %3367 = vmatprep.subr.bf16.mxu0 %v2470
        %3368 = vmatpush1.bf16.msra.mxu0 %v2469
        %3369 = vmatprep.subr.bf16.mxu0 %v2472
        %3370 = vmatpush1.bf16.msra.mxu0 %v2471
        %3371 = vmatprep.subr.bf16.mxu0 %v2474
        %3372 = vmatpush1.bf16.msra.mxu0 %v2473
        %3373 = vmatprep.subr.bf16.mxu0 %v2476
        %3374 = vmatpush1.bf16.msra.mxu0 %v2475
        %3375 = vmatprep.subr.bf16.mxu0 %v2478
        %3376 = vmatpush1.bf16.msra.mxu0 %v2477
        %3377 = vmatprep.subr.bf16.mxu0 %v2480
        %3378 = vmatpush1.bf16.msra.mxu0 %v2479
        %3379 = vmatprep.mubr.bf16.mxu0 %v882
        %3380 = vmatmul.mubr.bf16.gmra.mrb[0].mxu0 %v880
        %v3381 = vpop.f32.mrb[0].mxu0
        %v3382 = vadd.f32 %v3341, %v3381
        %v3383 = vpop.f32.mrb[0].mxu0
        %v3384 = vadd.f32 %v3343, %v3383
        %v3385 = vpop.f32.mrb[0].mxu0
        %v3386 = vpop.f32.mrb[0].mxu0
        %3387 = vdwg.mxu0
        %3388 = vmatprep.subr.bf16.mxu0 %v2482
        %3389 = vmatpush1.bf16.msra.mxu0 %v2481
        %3390 = vmatprep.subr.bf16.mxu0 %v2484
        %3391 = vmatpush1.bf16.msra.mxu0 %v2483
        %3392 = vmatprep.subr.bf16.mxu0 %v2486
        %3393 = vmatpush1.bf16.msra.mxu0 %v2485
        %3394 = vmatprep.subr.bf16.mxu0 %v2488
        %3395 = vmatpush1.bf16.msra.mxu0 %v2487
        %3396 = vmatprep.subr.bf16.mxu0 0
        %3397 = vmatpush1.bf16.msra.mxu0 0
        %3398 = vmatprep.subr.bf16.mxu0 0
        %3399 = vmatpush1.bf16.msra.mxu0 0
        %3400 = vmatprep.subr.bf16.mxu0 0
        %3401 = vmatpush1.bf16.msra.mxu0 0
        %3402 = vmatprep.subr.bf16.mxu0 0
        %3403 = vmatpush1.bf16.msra.mxu0 0
        %3404 = vmatprep.subr.bf16.mxu0 0
        %3405 = vmatpush1.bf16.msra.mxu0 0
        %3406 = vmatprep.subr.bf16.mxu0 0
        %3407 = vmatpush1.bf16.msra.mxu0 0
        %3408 = vmatprep.subr.bf16.mxu0 0
        %3409 = vmatpush1.bf16.msra.mxu0 0
        %3410 = vmatprep.subr.bf16.mxu0 0
        %3411 = vmatpush1.bf16.msra.mxu0 0
        %3412 = vmatprep.subr.bf16.mxu0 0
        %3413 = vmatpush1.bf16.msra.mxu0 0
        %3414 = vmatprep.subr.bf16.mxu0 0
        %3415 = vmatpush1.bf16.msra.mxu0 0
        %3416 = vmatprep.subr.bf16.mxu0 0
        %3417 = vmatpush1.bf16.msra.mxu0 0
        %3418 = vmatprep.subr.bf16.mxu0 0
        %3419 = vmatpush1.bf16.msra.mxu0 0
        %3420 = vmatprep.mubr.bf16.mxu0 0
        %3421 = vmatmul.mubr.bf16.gmra.mrb[0].mxu0 %v2894
        %v3422 = vpop.f32.mrb[0].mxu0
        %v3423 = vadd.f32 %v3382, %v3422
        %v3424 = vpop.f32.mrb[0].mxu0
        %v3425 = vadd.f32 %v3384, %v3424
        %v3426 = vpop.f32.mrb[0].mxu0
        %v3427 = vpop.f32.mrb[0].mxu0
        %3428 = vdwg.mxu0
        %3429 = vst [vmem:[%s310] sm:$0x1] %v3423
        %3430 = vst [vmem:[%s316] sm:$0x1] %v3425
        %v3431 = vld [vmem:[%s329] sm:$0x1]
        %v3432 = vmul.f32 %v3425, 0.5
        %v3433 = vmul.f32 %v3432, 1.442695
        %v3434 = vpow.pop %v3433
        %v3435 = vmul.f32 %v3431, %v3434
        %v3436 = vadd.f32 %v3423, %v3435
        %v3437 = vpack.c.bf16 %v3436, %v3436
        %v3438 = vld [vmem:[%s4] sm:$0xff]
        %v3439 = vld [vmem:[%s4 + $0x8] sm:$0xff]
        %v3440 = vld [vmem:[%s4 + $0x10] sm:$0xff]
        %v3441 = vld [vmem:[%s4 + $0x18] sm:$0xff]
        %v3442 = vld [vmem:[%s4 + $0x20] sm:$0xff]
        %v3443 = vld [vmem:[%s4 + $0x28] sm:$0xff]
        %v3444 = vld [vmem:[%s4 + $0x30] sm:$0xff]
        %v3445 = vld [vmem:[%s4 + $0x38] sm:$0xff]
        %v3446 = vld [vmem:[%s4 + $0x40] sm:$0xff]
        %v3447 = vld [vmem:[%s4 + $0x48] sm:$0xff]
        %v3448 = vld [vmem:[%s4 + $0x50] sm:$0xff]
        %v3449 = vld [vmem:[%s4 + $0x58] sm:$0xff]
        %v3450 = vld [vmem:[%s4 + $0x60] sm:$0xff]
        %v3451 = vld [vmem:[%s4 + $0x68] sm:$0xff]
        %v3452 = vld [vmem:[%s4 + $0x70] sm:$0xff]
        %v3453 = vld [vmem:[%s4 + $0x78] sm:$0xff]
        %v3454 = vld [vmem:[%s4 + $0x80] sm:$0xff]
        %v3455 = vld [vmem:[%s4 + $0x88] sm:$0xff]
        %v3456 = vld [vmem:[%s4 + $0x90] sm:$0xff]
        %v3457 = vld [vmem:[%s4 + $0x98] sm:$0xff]
        %v3458 = vld [vmem:[%s4 + $0xa0] sm:$0xff]
        %v3459 = vld [vmem:[%s4 + $0xa8] sm:$0xff]
        %v3460 = vld [vmem:[%s4 + $0xb0] sm:$0xff]
        %v3461 = vld [vmem:[%s4 + $0xb8] sm:$0xff]
        %v3462 = vld [vmem:[%s4 + $0xc0] sm:$0xff]
        %v3463 = vld [vmem:[%s4 + $0xc8] sm:$0xf]
        %v3464 = vld [vmem:[%s4 + $0xcc] sm:$0xff]
        %v3465 = vld [vmem:[%s4 + $0xd4] sm:$0xff]
        %v3466 = vld [vmem:[%s4 + $0xdc] sm:$0xff]
        %v3467 = vld [vmem:[%s4 + $0xe4] sm:$0xff]
        %v3468 = vld [vmem:[%s4 + $0xec] sm:$0xff]
        %v3469 = vld [vmem:[%s4 + $0xf4] sm:$0xff]
        %v3470 = vld [vmem:[%s4 + $0xfc] sm:$0xff]
        %v3471 = vld [vmem:[%s4 + $0x104] sm:$0xff]
        %v3472 = vld [vmem:[%s4 + $0x10c] sm:$0xff]
        %v3473 = vld [vmem:[%s4 + $0x114] sm:$0xff]
        %v3474 = vld [vmem:[%s4 + $0x11c] sm:$0xff]
        %v3475 = vld [vmem:[%s4 + $0x124] sm:$0xff]
        %v3476 = vld [vmem:[%s4 + $0x12c] sm:$0xff]
        %v3477 = vld [vmem:[%s4 + $0x134] sm:$0xff]
        %v3478 = vld [vmem:[%s4 + $0x13c] sm:$0xff]
        %v3479 = vld [vmem:[%s4 + $0x144] sm:$0xff]
        %v3480 = vld [vmem:[%s4 + $0x14c] sm:$0xff]
        %v3481 = vld [vmem:[%s4 + $0x154] sm:$0xff]
        %v3482 = vld [vmem:[%s4 + $0x15c] sm:$0xff]
        %v3483 = vld [vmem:[%s4 + $0x164] sm:$0xff]
        %v3484 = vld [vmem:[%s4 + $0x16c] sm:$0xff]
        %v3485 = vld [vmem:[%s4 + $0x174] sm:$0xff]
        %v3486 = vld [vmem:[%s4 + $0x17c] sm:$0xff]
        %v3487 = vld [vmem:[%s4 + $0x184] sm:$0xff]
        %v3488 = vld [vmem:[%s4 + $0x18c] sm:$0xff]
        %v3489 = vld [vmem:[%s4 + $0x194] sm:$0xf]
        %v3490 = vld [vmem:[%s4 + $0x198] sm:$0xff]
        %v3491 = vld [vmem:[%s4 + $0x1a0] sm:$0xff]
        %v3492 = vld [vmem:[%s4 + $0x1a8] sm:$0xff]
        %v3493 = vld [vmem:[%s4 + $0x1b0] sm:$0xff]
        %v3494 = vld [vmem:[%s4 + $0x1b8] sm:$0xff]
        %v3495 = vld [vmem:[%s4 + $0x1c0] sm:$0xff]
        %v3496 = vld [vmem:[%s4 + $0x1c8] sm:$0xff]
        %v3497 = vld [vmem:[%s4 + $0x1d0] sm:$0xff]
        %v3498 = vld [vmem:[%s4 + $0x1d8] sm:$0xff]
        %v3499 = vld [vmem:[%s4 + $0x1e0] sm:$0xff]
        %v3500 = vld [vmem:[%s4 + $0x1e8] sm:$0xff]
        %v3501 = vld [vmem:[%s4 + $0x1f0] sm:$0xff]
        %v3502 = vld [vmem:[%s4 + $0x1f8] sm:$0xff]
        %v3503 = vld [vmem:[%s4 + $0x200] sm:$0xff]
        %v3504 = vld [vmem:[%s4 + $0x208] sm:$0xff]
        %v3505 = vld [vmem:[%s4 + $0x210] sm:$0xff]
        %v3506 = vld [vmem:[%s4 + $0x218] sm:$0xff]
        %v3507 = vld [vmem:[%s4 + $0x220] sm:$0xff]
        %v3508 = vld [vmem:[%s4 + $0x228] sm:$0xff]
        %v3509 = vld [vmem:[%s4 + $0x230] sm:$0xff]
        %v3510 = vld [vmem:[%s4 + $0x238] sm:$0xff]
        %v3511 = vld [vmem:[%s4 + $0x240] sm:$0xff]
        %v3512 = vld [vmem:[%s4 + $0x248] sm:$0xff]
        %v3513 = vld [vmem:[%s4 + $0x250] sm:$0xff]
        %v3514 = vld [vmem:[%s4 + $0x258] sm:$0xff]
        %v3515 = vld [vmem:[%s4 + $0x260] sm:$0xf]
        %v3516 = vld [vmem:[%s4 + $0x264] sm:$0xff]
        %v3517 = vld [vmem:[%s4 + $0x26c] sm:$0xff]
        %v3518 = vld [vmem:[%s4 + $0x274] sm:$0xff]
        %v3519 = vld [vmem:[%s4 + $0x27c] sm:$0xff]
        %v3520 = vld [vmem:[%s4 + $0x284] sm:$0xff]
        %v3521 = vld [vmem:[%s4 + $0x28c] sm:$0xff]
        %v3522 = vld [vmem:[%s4 + $0x294] sm:$0xff]
        %v3523 = vld [vmem:[%s4 + $0x29c] sm:$0xff]
        %v3524 = vld [vmem:[%s4 + $0x2a4] sm:$0xff]
        %v3525 = vld [vmem:[%s4 + $0x2ac] sm:$0xff]
        %v3526 = vld [vmem:[%s4 + $0x2b4] sm:$0xff]
        %v3527 = vld [vmem:[%s4 + $0x2bc] sm:$0xff]
        %v3528 = vld [vmem:[%s4 + $0x2c4] sm:$0xff]
        %v3529 = vld [vmem:[%s4 + $0x2cc] sm:$0xff]
        %v3530 = vld [vmem:[%s4 + $0x2d4] sm:$0xff]
        %v3531 = vld [vmem:[%s4 + $0x2dc] sm:$0xff]
        %v3532 = vld [vmem:[%s4 + $0x2e4] sm:$0xff]
        %v3533 = vld [vmem:[%s4 + $0x2ec] sm:$0xff]
        %v3534 = vld [vmem:[%s4 + $0x2f4] sm:$0xff]
        %v3535 = vld [vmem:[%s4 + $0x2fc] sm:$0xff]
        %v3536 = vld [vmem:[%s4 + $0x304] sm:$0xff]
        %v3537 = vld [vmem:[%s4 + $0x30c] sm:$0xff]
        %v3538 = vld [vmem:[%s4 + $0x314] sm:$0xff]
        %v3539 = vld [vmem:[%s4 + $0x31c] sm:$0xff]
        %v3540 = vld [vmem:[%s4 + $0x324] sm:$0xff]
        %v3541 = vld [vmem:[%s4 + $0x32c] sm:$0xf]
        %v3542 = vld [vmem:[%s4 + $0x330] sm:$0xff]
        %v3543 = vld [vmem:[%s4 + $0x338] sm:$0xff]
        %v3544 = vld [vmem:[%s4 + $0x340] sm:$0xff]
        %v3545 = vld [vmem:[%s4 + $0x348] sm:$0xff]
        %v3546 = vld [vmem:[%s4 + $0x350] sm:$0xff]
        %v3547 = vld [vmem:[%s4 + $0x358] sm:$0xff]
        %v3548 = vld [vmem:[%s4 + $0x360] sm:$0xff]
        %v3549 = vld [vmem:[%s4 + $0x368] sm:$0xff]
        %v3550 = vld [vmem:[%s4 + $0x370] sm:$0xff]
        %v3551 = vld [vmem:[%s4 + $0x378] sm:$0xff]
        %v3552 = vld [vmem:[%s4 + $0x380] sm:$0xff]
        %v3553 = vld [vmem:[%s4 + $0x388] sm:$0xff]
        %v3554 = vld [vmem:[%s4 + $0x390] sm:$0xff]
        %v3555 = vld [vmem:[%s4 + $0x398] sm:$0xff]
        %v3556 = vld [vmem:[%s4 + $0x3a0] sm:$0xff]
        %v3557 = vld [vmem:[%s4 + $0x3a8] sm:$0xff]
        %v3558 = vld [vmem:[%s4 + $0x3b0] sm:$0xff]
        %v3559 = vld [vmem:[%s4 + $0x3b8] sm:$0xff]
        %v3560 = vld [vmem:[%s4 + $0x3c0] sm:$0xff]
        %v3561 = vld [vmem:[%s4 + $0x3c8] sm:$0xff]
        %v3562 = vld [vmem:[%s4 + $0x3d0] sm:$0xff]
        %v3563 = vld [vmem:[%s4 + $0x3d8] sm:$0xff]
        %v3564 = vld [vmem:[%s4 + $0x3e0] sm:$0xff]
        %v3565 = vld [vmem:[%s4 + $0x3e8] sm:$0xff]
        %v3566 = vld [vmem:[%s4 + $0x3f0] sm:$0xff]
        %v3567 = vld [vmem:[%s4 + $0x3f8] sm:$0xf]
        %v3568 = vld [vmem:[%s4 + $0x3fc] sm:$0xff]
        %v3569 = vld [vmem:[%s4 + $0x404] sm:$0xff]
        %v3570 = vld [vmem:[%s4 + $0x40c] sm:$0xff]
        %v3571 = vld [vmem:[%s4 + $0x414] sm:$0xff]
        %v3572 = vld [vmem:[%s4 + $0x41c] sm:$0xff]
        %v3573 = vld [vmem:[%s4 + $0x424] sm:$0xff]
        %v3574 = vld [vmem:[%s4 + $0x42c] sm:$0xff]
        %v3575 = vld [vmem:[%s4 + $0x434] sm:$0xff]
        %v3576 = vld [vmem:[%s4 + $0x43c] sm:$0xff]
        %v3577 = vld [vmem:[%s4 + $0x444] sm:$0xff]
        %v3578 = vld [vmem:[%s4 + $0x44c] sm:$0xff]
        %v3579 = vld [vmem:[%s4 + $0x454] sm:$0xff]
        %v3580 = vld [vmem:[%s4 + $0x45c] sm:$0xff]
        %v3581 = vld [vmem:[%s4 + $0x464] sm:$0xff]
        %v3582 = vld [vmem:[%s4 + $0x46c] sm:$0xff]
        %v3583 = vld [vmem:[%s4 + $0x474] sm:$0xff]
        %v3584 = vld [vmem:[%s4 + $0x47c] sm:$0xff]
        %v3585 = vld [vmem:[%s4 + $0x484] sm:$0xff]
        %v3586 = vld [vmem:[%s4 + $0x48c] sm:$0xff]
        %v3587 = vld [vmem:[%s4 + $0x494] sm:$0xff]
        %v3588 = vld [vmem:[%s4 + $0x49c] sm:$0xff]
        %v3589 = vld [vmem:[%s4 + $0x4a4] sm:$0xff]
        %v3590 = vld [vmem:[%s4 + $0x4ac] sm:$0xff]
        %v3591 = vld [vmem:[%s4 + $0x4b4] sm:$0xff]
        %v3592 = vld [vmem:[%s4 + $0x4bc] sm:$0xff]
        %v3593 = vld [vmem:[%s4 + $0x4c4] sm:$0xf]
        %v3594 = vld [vmem:[%s4 + $0x4c8] sm:$0xff]
        %v3595 = vld [vmem:[%s4 + $0x4d0] sm:$0xff]
        %v3596 = vld [vmem:[%s4 + $0x4d8] sm:$0xff]
        %v3597 = vld [vmem:[%s4 + $0x4e0] sm:$0xff]
        %v3598 = vld [vmem:[%s4 + $0x4e8] sm:$0xff]
        %v3599 = vld [vmem:[%s4 + $0x4f0] sm:$0xff]
        %v3600 = vld [vmem:[%s4 + $0x4f8] sm:$0xff]
        %v3601 = vld [vmem:[%s4 + $0x500] sm:$0xff]
        %v3602 = vld [vmem:[%s4 + $0x508] sm:$0xff]
        %v3603 = vld [vmem:[%s4 + $0x510] sm:$0xff]
        %v3604 = vld [vmem:[%s4 + $0x518] sm:$0xff]
        %v3605 = vld [vmem:[%s4 + $0x520] sm:$0xff]
        %v3606 = vld [vmem:[%s4 + $0x528] sm:$0xff]
        %v3607 = vld [vmem:[%s4 + $0x530] sm:$0xff]
        %v3608 = vld [vmem:[%s4 + $0x538] sm:$0xff]
        %v3609 = vld [vmem:[%s4 + $0x540] sm:$0xff]
        %v3610 = vld [vmem:[%s4 + $0x548] sm:$0xff]
        %v3611 = vld [vmem:[%s4 + $0x550] sm:$0xff]
        %v3612 = vld [vmem:[%s4 + $0x558] sm:$0xff]
        %v3613 = vld [vmem:[%s4 + $0x560] sm:$0xff]
        %v3614 = vld [vmem:[%s4 + $0x568] sm:$0xff]
        %v3615 = vld [vmem:[%s4 + $0x570] sm:$0xff]
        %v3616 = vld [vmem:[%s4 + $0x578] sm:$0xff]
        %v3617 = vld [vmem:[%s4 + $0x580] sm:$0xff]
        %v3618 = vld [vmem:[%s4 + $0x588] sm:$0xff]
        %v3619 = vld [vmem:[%s4 + $0x590] sm:$0xf]
        %v3620 = vld [vmem:[%s4 + $0x594] sm:$0xff]
        %v3621 = vld [vmem:[%s4 + $0x59c] sm:$0xff]
        %v3622 = vld [vmem:[%s4 + $0x5a4] sm:$0xff]
        %v3623 = vld [vmem:[%s4 + $0x5ac] sm:$0xff]
        %v3624 = vld [vmem:[%s4 + $0x5b4] sm:$0xff]
        %v3625 = vld [vmem:[%s4 + $0x5bc] sm:$0xff]
        %v3626 = vld [vmem:[%s4 + $0x5c4] sm:$0xff]
        %v3627 = vld [vmem:[%s4 + $0x5cc] sm:$0xff]
        %v3628 = vld [vmem:[%s4 + $0x5d4] sm:$0xff]
        %v3629 = vld [vmem:[%s4 + $0x5dc] sm:$0xff]
        %v3630 = vld [vmem:[%s4 + $0x5e4] sm:$0xff]
        %v3631 = vld [vmem:[%s4 + $0x5ec] sm:$0xff]
        %v3632 = vld [vmem:[%s4 + $0x5f4] sm:$0xff]
        %v3633 = vld [vmem:[%s4 + $0x5fc] sm:$0xff]
        %v3634 = vld [vmem:[%s4 + $0x604] sm:$0xff]
        %v3635 = vld [vmem:[%s4 + $0x60c] sm:$0xff]
        %v3636 = vld [vmem:[%s4 + $0x614] sm:$0xff]
        %v3637 = vld [vmem:[%s4 + $0x61c] sm:$0xff]
        %v3638 = vld [vmem:[%s4 + $0x624] sm:$0xff]
        %v3639 = vld [vmem:[%s4 + $0x62c] sm:$0xff]
        %v3640 = vld [vmem:[%s4 + $0x634] sm:$0xff]
        %v3641 = vld [vmem:[%s4 + $0x63c] sm:$0xff]
        %v3642 = vld [vmem:[%s4 + $0x644] sm:$0xff]
        %v3643 = vld [vmem:[%s4 + $0x64c] sm:$0xff]
        %v3644 = vld [vmem:[%s4 + $0x654] sm:$0xff]
        %v3645 = vld [vmem:[%s4 + $0x65c] sm:$0xf]
        %v3646 = vld [vmem:[%s4 + $0x660] sm:$0xff]
        %v3647 = vld [vmem:[%s4 + $0x668] sm:$0xff]
        %v3648 = vld [vmem:[%s4 + $0x670] sm:$0xff]
        %v3649 = vld [vmem:[%s4 + $0x678] sm:$0xff]
        %v3650 = vld [vmem:[%s4 + $0x680] sm:$0xff]
        %v3651 = vld [vmem:[%s4 + $0x688] sm:$0xff]
        %v3652 = vld [vmem:[%s4 + $0x690] sm:$0xff]
        %v3653 = vld [vmem:[%s4 + $0x698] sm:$0xff]
        %v3654 = vld [vmem:[%s4 + $0x6a0] sm:$0xff]
        %v3655 = vld [vmem:[%s4 + $0x6a8] sm:$0xff]
        %v3656 = vld [vmem:[%s4 + $0x6b0] sm:$0xff]
        %v3657 = vld [vmem:[%s4 + $0x6b8] sm:$0xff]
        %v3658 = vld [vmem:[%s4 + $0x6c0] sm:$0xff]
        %v3659 = vld [vmem:[%s4 + $0x6c8] sm:$0xff]
        %v3660 = vld [vmem:[%s4 + $0x6d0] sm:$0xff]
        %v3661 = vld [vmem:[%s4 + $0x6d8] sm:$0xff]
        %v3662 = vld [vmem:[%s4 + $0x6e0] sm:$0xff]
        %v3663 = vld [vmem:[%s4 + $0x6e8] sm:$0xff]
        %v3664 = vld [vmem:[%s4 + $0x6f0] sm:$0xff]
        %v3665 = vld [vmem:[%s4 + $0x6f8] sm:$0xff]
        %v3666 = vld [vmem:[%s4 + $0x700] sm:$0xff]
        %v3667 = vld [vmem:[%s4 + $0x708] sm:$0xff]
        %v3668 = vld [vmem:[%s4 + $0x710] sm:$0xff]
        %v3669 = vld [vmem:[%s4 + $0x718] sm:$0xff]
        %v3670 = vld [vmem:[%s4 + $0x720] sm:$0xff]
        %v3671 = vld [vmem:[%s4 + $0x728] sm:$0xf]
        %v3672 = vld [vmem:[%s4 + $0x72c] sm:$0xff]
        %v3673 = vld [vmem:[%s4 + $0x734] sm:$0xff]
        %v3674 = vld [vmem:[%s4 + $0x73c] sm:$0xff]
        %v3675 = vld [vmem:[%s4 + $0x744] sm:$0xff]
        %v3676 = vld [vmem:[%s4 + $0x74c] sm:$0xff]
        %v3677 = vld [vmem:[%s4 + $0x754] sm:$0xff]
        %v3678 = vld [vmem:[%s4 + $0x75c] sm:$0xff]
        %v3679 = vld [vmem:[%s4 + $0x764] sm:$0xff]
        %v3680 = vld [vmem:[%s4 + $0x76c] sm:$0xff]
        %v3681 = vld [vmem:[%s4 + $0x774] sm:$0xff]
        %v3682 = vld [vmem:[%s4 + $0x77c] sm:$0xff]
        %v3683 = vld [vmem:[%s4 + $0x784] sm:$0xff]
        %v3684 = vld [vmem:[%s4 + $0x78c] sm:$0xff]
        %v3685 = vld [vmem:[%s4 + $0x794] sm:$0xff]
        %v3686 = vld [vmem:[%s4 + $0x79c] sm:$0xff]
        %v3687 = vld [vmem:[%s4 + $0x7a4] sm:$0xff]
        %v3688 = vld [vmem:[%s4 + $0x7ac] sm:$0xff]
        %v3689 = vld [vmem:[%s4 + $0x7b4] sm:$0xff]
        %v3690 = vld [vmem:[%s4 + $0x7bc] sm:$0xff]
        %v3691 = vld [vmem:[%s4 + $0x7c4] sm:$0xff]
        %v3692 = vld [vmem:[%s4 + $0x7cc] sm:$0xff]
        %v3693 = vld [vmem:[%s4 + $0x7d4] sm:$0xff]
        %v3694 = vld [vmem:[%s4 + $0x7dc] sm:$0xff]
        %v3695 = vld [vmem:[%s4 + $0x7e4] sm:$0xff]
        %v3696 = vld [vmem:[%s4 + $0x7ec] sm:$0xff]
        %v3697 = vld [vmem:[%s4 + $0x7f4] sm:$0xf]
        %v3698 = vld [vmem:[%s4 + $0x7f8] sm:$0xff]
        %v3699 = vld [vmem:[%s4 + $0x800] sm:$0xff]
        %v3700 = vld [vmem:[%s4 + $0x808] sm:$0xff]
        %v3701 = vld [vmem:[%s4 + $0x810] sm:$0xff]
        %v3702 = vld [vmem:[%s4 + $0x818] sm:$0xff]
        %v3703 = vld [vmem:[%s4 + $0x820] sm:$0xff]
        %v3704 = vld [vmem:[%s4 + $0x828] sm:$0xff]
        %v3705 = vld [vmem:[%s4 + $0x830] sm:$0xff]
        %v3706 = vld [vmem:[%s4 + $0x838] sm:$0xff]
        %v3707 = vld [vmem:[%s4 + $0x840] sm:$0xff]
        %v3708 = vld [vmem:[%s4 + $0x848] sm:$0xff]
        %v3709 = vld [vmem:[%s4 + $0x850] sm:$0xff]
        %v3710 = vld [vmem:[%s4 + $0x858] sm:$0xff]
        %v3711 = vld [vmem:[%s4 + $0x860] sm:$0xff]
        %v3712 = vld [vmem:[%s4 + $0x868] sm:$0xff]
        %v3713 = vld [vmem:[%s4 + $0x870] sm:$0xff]
        %v3714 = vld [vmem:[%s4 + $0x878] sm:$0xff]
        %v3715 = vld [vmem:[%s4 + $0x880] sm:$0xff]
        %v3716 = vld [vmem:[%s4 + $0x888] sm:$0xff]
        %v3717 = vld [vmem:[%s4 + $0x890] sm:$0xff]
        %v3718 = vld [vmem:[%s4 + $0x898] sm:$0xff]
        %v3719 = vld [vmem:[%s4 + $0x8a0] sm:$0xff]
        %v3720 = vld [vmem:[%s4 + $0x8a8] sm:$0xff]
        %v3721 = vld [vmem:[%s4 + $0x8b0] sm:$0xff]
        %v3722 = vld [vmem:[%s4 + $0x8b8] sm:$0xff]
        %v3723 = vld [vmem:[%s4 + $0x8c0] sm:$0xf]
        %v3724 = vld [vmem:[%s4 + $0x8c4] sm:$0xff]
        %v3725 = vld [vmem:[%s4 + $0x8cc] sm:$0xff]
        %v3726 = vld [vmem:[%s4 + $0x8d4] sm:$0xff]
        %v3727 = vld [vmem:[%s4 + $0x8dc] sm:$0xff]
        %v3728 = vld [vmem:[%s4 + $0x8e4] sm:$0xff]
        %v3729 = vld [vmem:[%s4 + $0x8ec] sm:$0xff]
        %v3730 = vld [vmem:[%s4 + $0x8f4] sm:$0xff]
        %v3731 = vld [vmem:[%s4 + $0x8fc] sm:$0xff]
        %v3732 = vld [vmem:[%s4 + $0x904] sm:$0xff]
        %v3733 = vld [vmem:[%s4 + $0x90c] sm:$0xff]
        %v3734 = vld [vmem:[%s4 + $0x914] sm:$0xff]
        %v3735 = vld [vmem:[%s4 + $0x91c] sm:$0xff]
        %v3736 = vld [vmem:[%s4 + $0x924] sm:$0xff]
        %v3737 = vld [vmem:[%s4 + $0x92c] sm:$0xff]
        %v3738 = vld [vmem:[%s4 + $0x934] sm:$0xff]
        %v3739 = vld [vmem:[%s4 + $0x93c] sm:$0xff]
        %v3740 = vld [vmem:[%s4 + $0x944] sm:$0xff]
        %v3741 = vld [vmem:[%s4 + $0x94c] sm:$0xff]
        %v3742 = vld [vmem:[%s4 + $0x954] sm:$0xff]
        %v3743 = vld [vmem:[%s4 + $0x95c] sm:$0xff]
        %v3744 = vld [vmem:[%s4 + $0x964] sm:$0xff]
        %v3745 = vld [vmem:[%s4 + $0x96c] sm:$0xff]
        %v3746 = vld [vmem:[%s4 + $0x974] sm:$0xff]
        %v3747 = vld [vmem:[%s4 + $0x97c] sm:$0xff]
        %v3748 = vld [vmem:[%s4 + $0x984] sm:$0xff]
        %v3749 = vld [vmem:[%s4 + $0x98c] sm:$0xf]
        %v3750 = vld [vmem:[%s4 + $0x990] sm:$0xff]
        %v3751 = vld [vmem:[%s4 + $0x998] sm:$0xff]
        %v3752 = vld [vmem:[%s4 + $0x9a0] sm:$0xff]
        %v3753 = vld [vmem:[%s4 + $0x9a8] sm:$0xff]
        %v3754 = vld [vmem:[%s4 + $0x9b0] sm:$0xff]
        %v3755 = vld [vmem:[%s4 + $0x9b8] sm:$0xff]
        %v3756 = vld [vmem:[%s4 + $0x9c0] sm:$0xff]
        %v3757 = vld [vmem:[%s4 + $0x9c8] sm:$0xff]
        %v3758 = vld [vmem:[%s4 + $0x9d0] sm:$0xff]
        %v3759 = vld [vmem:[%s4 + $0x9d8] sm:$0xff]
        %v3760 = vld [vmem:[%s4 + $0x9e0] sm:$0xff]
        %v3761 = vld [vmem:[%s4 + $0x9e8] sm:$0xff]
        %v3762 = vld [vmem:[%s4 + $0x9f0] sm:$0xff]
        %v3763 = vld [vmem:[%s4 + $0x9f8] sm:$0xff]
        %v3764 = vld [vmem:[%s4 + $0xa00] sm:$0xff]
        %v3765 = vld [vmem:[%s4 + $0xa08] sm:$0xff]
        %v3766 = vld [vmem:[%s4 + $0xa10] sm:$0xff]
        %v3767 = vld [vmem:[%s4 + $0xa18] sm:$0xff]
        %v3768 = vld [vmem:[%s4 + $0xa20] sm:$0xff]
        %v3769 = vld [vmem:[%s4 + $0xa28] sm:$0xff]
        %v3770 = vld [vmem:[%s4 + $0xa30] sm:$0xff]
        %v3771 = vld [vmem:[%s4 + $0xa38] sm:$0xff]
        %v3772 = vld [vmem:[%s4 + $0xa40] sm:$0xff]
        %v3773 = vld [vmem:[%s4 + $0xa48] sm:$0xff]
        %v3774 = vld [vmem:[%s4 + $0xa50] sm:$0xff]
        %v3775 = vld [vmem:[%s4 + $0xa58] sm:$0xf]
        %v3776 = vld [vmem:[%s4 + $0xa5c] sm:$0xff]
        %v3777 = vld [vmem:[%s4 + $0xa64] sm:$0xff]
        %v3778 = vld [vmem:[%s4 + $0xa6c] sm:$0xff]
        %v3779 = vld [vmem:[%s4 + $0xa74] sm:$0xff]
        %v3780 = vld [vmem:[%s4 + $0xa7c] sm:$0xff]
        %v3781 = vld [vmem:[%s4 + $0xa84] sm:$0xff]
        %v3782 = vld [vmem:[%s4 + $0xa8c] sm:$0xff]
        %v3783 = vld [vmem:[%s4 + $0xa94] sm:$0xff]
        %v3784 = vld [vmem:[%s4 + $0xa9c] sm:$0xff]
        %v3785 = vld [vmem:[%s4 + $0xaa4] sm:$0xff]
        %v3786 = vld [vmem:[%s4 + $0xaac] sm:$0xff]
        %v3787 = vld [vmem:[%s4 + $0xab4] sm:$0xff]
        %v3788 = vld [vmem:[%s4 + $0xabc] sm:$0xff]
        %v3789 = vld [vmem:[%s4 + $0xac4] sm:$0xff]
        %v3790 = vld [vmem:[%s4 + $0xacc] sm:$0xff]
        %v3791 = vld [vmem:[%s4 + $0xad4] sm:$0xff]
        %v3792 = vld [vmem:[%s4 + $0xadc] sm:$0xff]
        %v3793 = vld [vmem:[%s4 + $0xae4] sm:$0xff]
        %v3794 = vld [vmem:[%s4 + $0xaec] sm:$0xff]
        %v3795 = vld [vmem:[%s4 + $0xaf4] sm:$0xff]
        %v3796 = vld [vmem:[%s4 + $0xafc] sm:$0xff]
        %v3797 = vld [vmem:[%s4 + $0xb04] sm:$0xff]
        %v3798 = vld [vmem:[%s4 + $0xb0c] sm:$0xff]
        %v3799 = vld [vmem:[%s4 + $0xb14] sm:$0xff]
        %v3800 = vld [vmem:[%s4 + $0xb1c] sm:$0xff]
        %v3801 = vld [vmem:[%s4 + $0xb24] sm:$0xf]
        %v3802 = vld [vmem:[%s4 + $0xb28] sm:$0xff]
        %v3803 = vld [vmem:[%s4 + $0xb30] sm:$0xff]
        %v3804 = vld [vmem:[%s4 + $0xb38] sm:$0xff]
        %v3805 = vld [vmem:[%s4 + $0xb40] sm:$0xff]
        %v3806 = vld [vmem:[%s4 + $0xb48] sm:$0xff]
        %v3807 = vld [vmem:[%s4 + $0xb50] sm:$0xff]
        %v3808 = vld [vmem:[%s4 + $0xb58] sm:$0xff]
        %v3809 = vld [vmem:[%s4 + $0xb60] sm:$0xff]
        %v3810 = vld [vmem:[%s4 + $0xb68] sm:$0xff]
        %v3811 = vld [vmem:[%s4 + $0xb70] sm:$0xff]
        %v3812 = vld [vmem:[%s4 + $0xb78] sm:$0xff]
        %v3813 = vld [vmem:[%s4 + $0xb80] sm:$0xff]
        %v3814 = vld [vmem:[%s4 + $0xb88] sm:$0xff]
        %v3815 = vld [vmem:[%s4 + $0xb90] sm:$0xff]
        %v3816 = vld [vmem:[%s4 + $0xb98] sm:$0xff]
        %v3817 = vld [vmem:[%s4 + $0xba0] sm:$0xff]
        %v3818 = vld [vmem:[%s4 + $0xba8] sm:$0xff]
        %v3819 = vld [vmem:[%s4 + $0xbb0] sm:$0xff]
        %v3820 = vld [vmem:[%s4 + $0xbb8] sm:$0xff]
        %v3821 = vld [vmem:[%s4 + $0xbc0] sm:$0xff]
        %v3822 = vld [vmem:[%s4 + $0xbc8] sm:$0xff]
        %v3823 = vld [vmem:[%s4 + $0xbd0] sm:$0xff]
        %v3824 = vld [vmem:[%s4 + $0xbd8] sm:$0xff]
        %v3825 = vld [vmem:[%s4 + $0xbe0] sm:$0xff]
        %v3826 = vld [vmem:[%s4 + $0xbe8] sm:$0xff]
        %v3827 = vld [vmem:[%s4 + $0xbf0] sm:$0xf]
        %v3828 = vld [vmem:[%s4 + $0xbf4] sm:$0xff]
        %v3829 = vld [vmem:[%s4 + $0xbfc] sm:$0xff]
        %v3830 = vld [vmem:[%s4 + $0xc04] sm:$0xff]
        %v3831 = vld [vmem:[%s4 + $0xc0c] sm:$0xff]
        %v3832 = vld [vmem:[%s4 + $0xc14] sm:$0xff]
        %v3833 = vld [vmem:[%s4 + $0xc1c] sm:$0xff]
        %v3834 = vld [vmem:[%s4 + $0xc24] sm:$0xff]
        %v3835 = vld [vmem:[%s4 + $0xc2c] sm:$0xff]
        %v3836 = vld [vmem:[%s4 + $0xc34] sm:$0xff]
        %v3837 = vld [vmem:[%s4 + $0xc3c] sm:$0xff]
        %v3838 = vld [vmem:[%s4 + $0xc44] sm:$0xff]
        %v3839 = vld [vmem:[%s4 + $0xc4c] sm:$0xff]
        %v3840 = vld [vmem:[%s4 + $0xc54] sm:$0xff]
        %v3841 = vld [vmem:[%s4 + $0xc5c] sm:$0xff]
        %v3842 = vld [vmem:[%s4 + $0xc64] sm:$0xff]
        %v3843 = vld [vmem:[%s4 + $0xc6c] sm:$0xff]
        %v3844 = vld [vmem:[%s4 + $0xc74] sm:$0xff]
        %v3845 = vld [vmem:[%s4 + $0xc7c] sm:$0xff]
        %v3846 = vld [vmem:[%s4 + $0xc84] sm:$0xff]
        %v3847 = vld [vmem:[%s4 + $0xc8c] sm:$0xff]
        %v3848 = vld [vmem:[%s4 + $0xc94] sm:$0xff]
        %v3849 = vld [vmem:[%s4 + $0xc9c] sm:$0xff]
        %v3850 = vld [vmem:[%s4 + $0xca4] sm:$0xff]
        %v3851 = vld [vmem:[%s4 + $0xcac] sm:$0xff]
        %v3852 = vld [vmem:[%s4 + $0xcb4] sm:$0xff]
        %v3853 = vld [vmem:[%s4 + $0xcbc] sm:$0xf]
        %v3854 = vld [vmem:[%s5] sm:$0xff]
        %v3855 = vld [vmem:[%s5 + $0x8] sm:$0xff]
        %v3856 = vld [vmem:[%s5 + $0x10] sm:$0xff]
        %v3857 = vld [vmem:[%s5 + $0x18] sm:$0xff]
        %v3858 = vld [vmem:[%s5 + $0x20] sm:$0xff]
        %v3859 = vld [vmem:[%s5 + $0x28] sm:$0xff]
        %v3860 = vld [vmem:[%s5 + $0x30] sm:$0x7]
        %v4277 = vunpack.c.l.b16 %v3438
        %v4278 = vunpack.c.h.b16 %v3438
        %v4279 = vunpack.c.l.b16 %v3439
        %v4280 = vunpack.c.h.b16 %v3439
        %v4281 = vunpack.c.l.b16 %v3440
        %v4282 = vunpack.c.h.b16 %v3440
        %v4283 = vunpack.c.l.b16 %v3441
        %v4284 = vunpack.c.h.b16 %v3441
        %v4285 = vunpack.c.l.b16 %v3442
        %v4286 = vunpack.c.h.b16 %v3442
        %v4287 = vunpack.c.l.b16 %v3443
        %v4288 = vunpack.c.h.b16 %v3443
        %v4289 = vunpack.c.l.b16 %v3444
        %v4290 = vunpack.c.h.b16 %v3444
        %v4291 = vunpack.c.l.b16 %v3445
        %v4292 = vunpack.c.h.b16 %v3445
        %v4293 = vunpack.c.l.b16 %v3446
        %v4294 = vunpack.c.h.b16 %v3446
        %v4295 = vunpack.c.l.b16 %v3447
        %v4296 = vunpack.c.h.b16 %v3447
        %v4297 = vunpack.c.l.b16 %v3448
        %v4298 = vunpack.c.h.b16 %v3448
        %v4299 = vunpack.c.l.b16 %v3449
        %v4300 = vunpack.c.h.b16 %v3449
        %v4301 = vunpack.c.l.b16 %v3450
        %v4302 = vunpack.c.h.b16 %v3450
        %v4303 = vunpack.c.l.b16 %v3451
        %v4304 = vunpack.c.h.b16 %v3451
        %v4305 = vunpack.c.l.b16 %v3452
        %v4306 = vunpack.c.h.b16 %v3452
        %v4307 = vunpack.c.l.b16 %v3453
        %v4308 = vunpack.c.h.b16 %v3453
        %v4309 = vunpack.c.l.b16 %v3454
        %v4310 = vunpack.c.h.b16 %v3454
        %v4311 = vunpack.c.l.b16 %v3455
        %v4312 = vunpack.c.h.b16 %v3455
        %v4313 = vunpack.c.l.b16 %v3456
        %v4314 = vunpack.c.h.b16 %v3456
        %v4315 = vunpack.c.l.b16 %v3457
        %v4316 = vunpack.c.h.b16 %v3457
        %v4317 = vunpack.c.l.b16 %v3458
        %v4318 = vunpack.c.h.b16 %v3458
        %v4319 = vunpack.c.l.b16 %v3459
        %v4320 = vunpack.c.h.b16 %v3459
        %v4321 = vunpack.c.l.b16 %v3460
        %v4322 = vunpack.c.h.b16 %v3460
        %v4323 = vunpack.c.l.b16 %v3461
        %v4324 = vunpack.c.h.b16 %v3461
        %v4325 = vunpack.c.l.b16 %v3462
        %v4326 = vunpack.c.h.b16 %v3462
        %v4327 = vunpack.c.l.b16 %v3463
        %v4328 = vunpack.c.l.b16 %v3464
        %v4329 = vunpack.c.h.b16 %v3464
        %v4330 = vunpack.c.l.b16 %v3465
        %v4331 = vunpack.c.h.b16 %v3465
        %v4332 = vunpack.c.l.b16 %v3466
        %v4333 = vunpack.c.h.b16 %v3466
        %v4334 = vunpack.c.l.b16 %v3467
        %v4335 = vunpack.c.h.b16 %v3467
        %v4336 = vunpack.c.l.b16 %v3468
        %v4337 = vunpack.c.h.b16 %v3468
        %v4338 = vunpack.c.l.b16 %v3469
        %v4339 = vunpack.c.h.b16 %v3469
        %v4340 = vunpack.c.l.b16 %v3470
        %v4341 = vunpack.c.h.b16 %v3470
        %v4342 = vunpack.c.l.b16 %v3471
        %v4343 = vunpack.c.h.b16 %v3471
        %v4344 = vunpack.c.l.b16 %v3472
        %v4345 = vunpack.c.h.b16 %v3472
        %v4346 = vunpack.c.l.b16 %v3473
        %v4347 = vunpack.c.h.b16 %v3473
        %v4348 = vunpack.c.l.b16 %v3474
        %v4349 = vunpack.c.h.b16 %v3474
        %v4350 = vunpack.c.l.b16 %v3475
        %v4351 = vunpack.c.h.b16 %v3475
        %v4352 = vunpack.c.l.b16 %v3476
        %v4353 = vunpack.c.h.b16 %v3476
        %v4354 = vunpack.c.l.b16 %v3477
        %v4355 = vunpack.c.h.b16 %v3477
        %v4356 = vunpack.c.l.b16 %v3478
        %v4357 = vunpack.c.h.b16 %v3478
        %v4358 = vunpack.c.l.b16 %v3479
        %v4359 = vunpack.c.h.b16 %v3479
        %v4360 = vunpack.c.l.b16 %v3480
        %v4361 = vunpack.c.h.b16 %v3480
        %v4362 = vunpack.c.l.b16 %v3481
        %v4363 = vunpack.c.h.b16 %v3481
        %v4364 = vunpack.c.l.b16 %v3482
        %v4365 = vunpack.c.h.b16 %v3482
        %v4366 = vunpack.c.l.b16 %v3483
        %v4367 = vunpack.c.h.b16 %v3483
        %v4368 = vunpack.c.l.b16 %v3484
        %v4369 = vunpack.c.h.b16 %v3484
        %v4370 = vunpack.c.l.b16 %v3485
        %v4371 = vunpack.c.h.b16 %v3485
        %v4372 = vunpack.c.l.b16 %v3486
        %v4373 = vunpack.c.h.b16 %v3486
        %v4374 = vunpack.c.l.b16 %v3487
        %v4375 = vunpack.c.h.b16 %v3487
        %v4376 = vunpack.c.l.b16 %v3488
        %v4377 = vunpack.c.h.b16 %v3488
        %v4378 = vunpack.c.l.b16 %v3489
        %v4379 = vunpack.c.l.b16 %v3490
        %v4380 = vunpack.c.h.b16 %v3490
        %v4381 = vunpack.c.l.b16 %v3491
        %v4382 = vunpack.c.h.b16 %v3491
        %v4383 = vunpack.c.l.b16 %v3492
        %v4384 = vunpack.c.h.b16 %v3492
        %v4385 = vunpack.c.l.b16 %v3493
        %v4386 = vunpack.c.h.b16 %v3493
        %v4387 = vunpack.c.l.b16 %v3494
        %v4388 = vunpack.c.h.b16 %v3494
        %v4389 = vunpack.c.l.b16 %v3495
        %v4390 = vunpack.c.h.b16 %v3495
        %v4391 = vunpack.c.l.b16 %v3496
        %v4392 = vunpack.c.h.b16 %v3496
        %v4393 = vunpack.c.l.b16 %v3497
        %v4394 = vunpack.c.h.b16 %v3497
        %v4395 = vunpack.c.l.b16 %v3498
        %v4396 = vunpack.c.h.b16 %v3498
        %v4397 = vunpack.c.l.b16 %v3499
        %v4398 = vunpack.c.h.b16 %v3499
        %v4399 = vunpack.c.l.b16 %v3500
        %v4400 = vunpack.c.h.b16 %v3500
        %v4401 = vunpack.c.l.b16 %v3501
        %v4402 = vunpack.c.h.b16 %v3501
        %v4403 = vunpack.c.l.b16 %v3502
        %v4404 = vunpack.c.h.b16 %v3502
        %v4405 = vunpack.c.l.b16 %v3503
        %v4406 = vunpack.c.h.b16 %v3503
        %v4407 = vunpack.c.l.b16 %v3504
        %v4408 = vunpack.c.h.b16 %v3504
        %v4409 = vunpack.c.l.b16 %v3505
        %v4410 = vunpack.c.h.b16 %v3505
        %v4411 = vunpack.c.l.b16 %v3506
        %v4412 = vunpack.c.h.b16 %v3506
        %v4413 = vunpack.c.l.b16 %v3507
        %v4414 = vunpack.c.h.b16 %v3507
        %v4415 = vunpack.c.l.b16 %v3508
        %v4416 = vunpack.c.h.b16 %v3508
        %v4417 = vunpack.c.l.b16 %v3509
        %v4418 = vunpack.c.h.b16 %v3509
        %v4419 = vunpack.c.l.b16 %v3510
        %v4420 = vunpack.c.h.b16 %v3510
        %v4421 = vunpack.c.l.b16 %v3511
        %v4422 = vunpack.c.h.b16 %v3511
        %v4423 = vunpack.c.l.b16 %v3512
        %v4424 = vunpack.c.h.b16 %v3512
        %v4425 = vunpack.c.l.b16 %v3513
        %v4426 = vunpack.c.h.b16 %v3513
        %v4427 = vunpack.c.l.b16 %v3514
        %v4428 = vunpack.c.h.b16 %v3514
        %v4429 = vunpack.c.l.b16 %v3515
        %v4430 = vunpack.c.l.b16 %v3516
        %v4431 = vunpack.c.h.b16 %v3516
        %v4432 = vunpack.c.l.b16 %v3517
        %v4433 = vunpack.c.h.b16 %v3517
        %v4434 = vunpack.c.l.b16 %v3518
        %v4435 = vunpack.c.h.b16 %v3518
        %v4436 = vunpack.c.l.b16 %v3519
        %v4437 = vunpack.c.h.b16 %v3519
        %v4438 = vunpack.c.l.b16 %v3520
        %v4439 = vunpack.c.h.b16 %v3520
        %v4440 = vunpack.c.l.b16 %v3521
        %v4441 = vunpack.c.h.b16 %v3521
        %v4442 = vunpack.c.l.b16 %v3522
        %v4443 = vunpack.c.h.b16 %v3522
        %v4444 = vunpack.c.l.b16 %v3523
        %v4445 = vunpack.c.h.b16 %v3523
        %v4446 = vunpack.c.l.b16 %v3524
        %v4447 = vunpack.c.h.b16 %v3524
        %v4448 = vunpack.c.l.b16 %v3525
        %v4449 = vunpack.c.h.b16 %v3525
        %v4450 = vunpack.c.l.b16 %v3526
        %v4451 = vunpack.c.h.b16 %v3526
        %v4452 = vunpack.c.l.b16 %v3527
        %v4453 = vunpack.c.h.b16 %v3527
        %v4454 = vunpack.c.l.b16 %v3528
        %v4455 = vunpack.c.h.b16 %v3528
        %v4456 = vunpack.c.l.b16 %v3529
        %v4457 = vunpack.c.h.b16 %v3529
        %v4458 = vunpack.c.l.b16 %v3530
        %v4459 = vunpack.c.h.b16 %v3530
        %v4460 = vunpack.c.l.b16 %v3531
        %v4461 = vunpack.c.h.b16 %v3531
        %v4462 = vunpack.c.l.b16 %v3532
        %v4463 = vunpack.c.h.b16 %v3532
        %v4464 = vunpack.c.l.b16 %v3533
        %v4465 = vunpack.c.h.b16 %v3533
        %v4466 = vunpack.c.l.b16 %v3534
        %v4467 = vunpack.c.h.b16 %v3534
        %v4468 = vunpack.c.l.b16 %v3535
        %v4469 = vunpack.c.h.b16 %v3535
        %v4470 = vunpack.c.l.b16 %v3536
        %v4471 = vunpack.c.h.b16 %v3536
        %v4472 = vunpack.c.l.b16 %v3537
        %v4473 = vunpack.c.h.b16 %v3537
        %v4474 = vunpack.c.l.b16 %v3538
        %v4475 = vunpack.c.h.b16 %v3538
        %v4476 = vunpack.c.l.b16 %v3539
        %v4477 = vunpack.c.h.b16 %v3539
        %v4478 = vunpack.c.l.b16 %v3540
        %v4479 = vunpack.c.h.b16 %v3540
        %v4480 = vunpack.c.l.b16 %v3541
        %v4481 = vunpack.c.l.b16 %v3542
        %v4482 = vunpack.c.h.b16 %v3542
        %v4483 = vunpack.c.l.b16 %v3543
        %v4484 = vunpack.c.h.b16 %v3543
        %v4485 = vunpack.c.l.b16 %v3544
        %v4486 = vunpack.c.h.b16 %v3544
        %v4487 = vunpack.c.l.b16 %v3545
        %v4488 = vunpack.c.h.b16 %v3545
        %v4489 = vunpack.c.l.b16 %v3546
        %v4490 = vunpack.c.h.b16 %v3546
        %v4491 = vunpack.c.l.b16 %v3547
        %v4492 = vunpack.c.h.b16 %v3547
        %v4493 = vunpack.c.l.b16 %v3548
        %v4494 = vunpack.c.h.b16 %v3548
        %v4495 = vunpack.c.l.b16 %v3549
        %v4496 = vunpack.c.h.b16 %v3549
        %v4497 = vunpack.c.l.b16 %v3550
        %v4498 = vunpack.c.h.b16 %v3550
        %v4499 = vunpack.c.l.b16 %v3551
        %v4500 = vunpack.c.h.b16 %v3551
        %v4501 = vunpack.c.l.b16 %v3552
        %v4502 = vunpack.c.h.b16 %v3552
        %v4503 = vunpack.c.l.b16 %v3553
        %v4504 = vunpack.c.h.b16 %v3553
        %v4505 = vunpack.c.l.b16 %v3554
        %v4506 = vunpack.c.h.b16 %v3554
        %v4507 = vunpack.c.l.b16 %v3555
        %v4508 = vunpack.c.h.b16 %v3555
        %v4509 = vunpack.c.l.b16 %v3556
        %v4510 = vunpack.c.h.b16 %v3556
        %v4511 = vunpack.c.l.b16 %v3557
        %v4512 = vunpack.c.h.b16 %v3557
        %v4513 = vunpack.c.l.b16 %v3558
        %v4514 = vunpack.c.h.b16 %v3558
        %v4515 = vunpack.c.l.b16 %v3559
        %v4516 = vunpack.c.h.b16 %v3559
        %v4517 = vunpack.c.l.b16 %v3560
        %v4518 = vunpack.c.h.b16 %v3560
        %v4519 = vunpack.c.l.b16 %v3561
        %v4520 = vunpack.c.h.b16 %v3561
        %v4521 = vunpack.c.l.b16 %v3562
        %v4522 = vunpack.c.h.b16 %v3562
        %v4523 = vunpack.c.l.b16 %v3563
        %v4524 = vunpack.c.h.b16 %v3563
        %v4525 = vunpack.c.l.b16 %v3564
        %v4526 = vunpack.c.h.b16 %v3564
        %v4527 = vunpack.c.l.b16 %v3565
        %v4528 = vunpack.c.h.b16 %v3565
        %v4529 = vunpack.c.l.b16 %v3566
        %v4530 = vunpack.c.h.b16 %v3566
        %v4531 = vunpack.c.l.b16 %v3567
        %v4532 = vunpack.c.l.b16 %v3568
        %v4533 = vunpack.c.h.b16 %v3568
        %v4534 = vunpack.c.l.b16 %v3569
        %v4535 = vunpack.c.h.b16 %v3569
        %v4536 = vunpack.c.l.b16 %v3570
        %v4537 = vunpack.c.h.b16 %v3570
        %v4538 = vunpack.c.l.b16 %v3571
        %v4539 = vunpack.c.h.b16 %v3571
        %v4540 = vunpack.c.l.b16 %v3572
        %v4541 = vunpack.c.h.b16 %v3572
        %v4542 = vunpack.c.l.b16 %v3573
        %v4543 = vunpack.c.h.b16 %v3573
        %v4544 = vunpack.c.l.b16 %v3574
        %v4545 = vunpack.c.h.b16 %v3574
        %v4546 = vunpack.c.l.b16 %v3575
        %v4547 = vunpack.c.h.b16 %v3575
        %v4548 = vunpack.c.l.b16 %v3576
        %v4549 = vunpack.c.h.b16 %v3576
        %v4550 = vunpack.c.l.b16 %v3577
        %v4551 = vunpack.c.h.b16 %v3577
        %v4552 = vunpack.c.l.b16 %v3578
        %v4553 = vunpack.c.h.b16 %v3578
        %v4554 = vunpack.c.l.b16 %v3579
        %v4555 = vunpack.c.h.b16 %v3579
        %v4556 = vunpack.c.l.b16 %v3580
        %v4557 = vunpack.c.h.b16 %v3580
        %v4558 = vunpack.c.l.b16 %v3581
        %v4559 = vunpack.c.h.b16 %v3581
        %v4560 = vunpack.c.l.b16 %v3582
        %v4561 = vunpack.c.h.b16 %v3582
        %v4562 = vunpack.c.l.b16 %v3583
        %v4563 = vunpack.c.h.b16 %v3583
        %v4564 = vunpack.c.l.b16 %v3584
        %v4565 = vunpack.c.h.b16 %v3584
        %v4566 = vunpack.c.l.b16 %v3585
        %v4567 = vunpack.c.h.b16 %v3585
        %v4568 = vunpack.c.l.b16 %v3586
        %v4569 = vunpack.c.h.b16 %v3586
        %v4570 = vunpack.c.l.b16 %v3587
        %v4571 = vunpack.c.h.b16 %v3587
        %v4572 = vunpack.c.l.b16 %v3588
        %v4573 = vunpack.c.h.b16 %v3588
        %v4574 = vunpack.c.l.b16 %v3589
        %v4575 = vunpack.c.h.b16 %v3589
        %v4576 = vunpack.c.l.b16 %v3590
        %v4577 = vunpack.c.h.b16 %v3590
        %v4578 = vunpack.c.l.b16 %v3591
        %v4579 = vunpack.c.h.b16 %v3591
        %v4580 = vunpack.c.l.b16 %v3592
        %v4581 = vunpack.c.h.b16 %v3592
        %v4582 = vunpack.c.l.b16 %v3593
        %v4583 = vunpack.c.l.b16 %v3594
        %v4584 = vunpack.c.h.b16 %v3594
        %v4585 = vunpack.c.l.b16 %v3595
        %v4586 = vunpack.c.h.b16 %v3595
        %v4587 = vunpack.c.l.b16 %v3596
        %v4588 = vunpack.c.h.b16 %v3596
        %v4589 = vunpack.c.l.b16 %v3597
        %v4590 = vunpack.c.h.b16 %v3597
        %v4591 = vunpack.c.l.b16 %v3598
        %v4592 = vunpack.c.h.b16 %v3598
        %v4593 = vunpack.c.l.b16 %v3599
        %v4594 = vunpack.c.h.b16 %v3599
        %v4595 = vunpack.c.l.b16 %v3600
        %v4596 = vunpack.c.h.b16 %v3600
        %v4597 = vunpack.c.l.b16 %v3601
        %v4598 = vunpack.c.h.b16 %v3601
        %v4599 = vunpack.c.l.b16 %v3602
        %v4600 = vunpack.c.h.b16 %v3602
        %v4601 = vunpack.c.l.b16 %v3603
        %v4602 = vunpack.c.h.b16 %v3603
        %v4603 = vunpack.c.l.b16 %v3604
        %v4604 = vunpack.c.h.b16 %v3604
        %v4605 = vunpack.c.l.b16 %v3605
        %v4606 = vunpack.c.h.b16 %v3605
        %v4607 = vunpack.c.l.b16 %v3606
        %v4608 = vunpack.c.h.b16 %v3606
        %v4609 = vunpack.c.l.b16 %v3607
        %v4610 = vunpack.c.h.b16 %v3607
        %v4611 = vunpack.c.l.b16 %v3608
        %v4612 = vunpack.c.h.b16 %v3608
        %v4613 = vunpack.c.l.b16 %v3609
        %v4614 = vunpack.c.h.b16 %v3609
        %v4615 = vunpack.c.l.b16 %v3610
        %v4616 = vunpack.c.h.b16 %v3610
        %v4617 = vunpack.c.l.b16 %v3611
        %v4618 = vunpack.c.h.b16 %v3611
        %v4619 = vunpack.c.l.b16 %v3612
        %v4620 = vunpack.c.h.b16 %v3612
        %v4621 = vunpack.c.l.b16 %v3613
        %v4622 = vunpack.c.h.b16 %v3613
        %v4623 = vunpack.c.l.b16 %v3614
        %v4624 = vunpack.c.h.b16 %v3614
        %v4625 = vunpack.c.l.b16 %v3615
        %v4626 = vunpack.c.h.b16 %v3615
        %v4627 = vunpack.c.l.b16 %v3616
        %v4628 = vunpack.c.h.b16 %v3616
        %v4629 = vunpack.c.l.b16 %v3617
        %v4630 = vunpack.c.h.b16 %v3617
        %v4631 = vunpack.c.l.b16 %v3618
        %v4632 = vunpack.c.h.b16 %v3618
        %v4633 = vunpack.c.l.b16 %v3619
        %v4634 = vunpack.c.l.b16 %v3620
        %v4635 = vunpack.c.h.b16 %v3620
        %v4636 = vunpack.c.l.b16 %v3621
        %v4637 = vunpack.c.h.b16 %v3621
        %v4638 = vunpack.c.l.b16 %v3622
        %v4639 = vunpack.c.h.b16 %v3622
        %v4640 = vunpack.c.l.b16 %v3623
        %v4641 = vunpack.c.h.b16 %v3623
        %v4642 = vunpack.c.l.b16 %v3624
        %v4643 = vunpack.c.h.b16 %v3624
        %v4644 = vunpack.c.l.b16 %v3625
        %v4645 = vunpack.c.h.b16 %v3625
        %v4646 = vunpack.c.l.b16 %v3626
        %v4647 = vunpack.c.h.b16 %v3626
        %v4648 = vunpack.c.l.b16 %v3627
        %v4649 = vunpack.c.h.b16 %v3627
        %v4650 = vunpack.c.l.b16 %v3628
        %v4651 = vunpack.c.h.b16 %v3628
        %v4652 = vunpack.c.l.b16 %v3629
        %v4653 = vunpack.c.h.b16 %v3629
        %v4654 = vunpack.c.l.b16 %v3630
        %v4655 = vunpack.c.h.b16 %v3630
        %v4656 = vunpack.c.l.b16 %v3631
        %v4657 = vunpack.c.h.b16 %v3631
        %v4658 = vunpack.c.l.b16 %v3632
        %v4659 = vunpack.c.h.b16 %v3632
        %v4660 = vunpack.c.l.b16 %v3633
        %v4661 = vunpack.c.h.b16 %v3633
        %v4662 = vunpack.c.l.b16 %v3634
        %v4663 = vunpack.c.h.b16 %v3634
        %v4664 = vunpack.c.l.b16 %v3635
        %v4665 = vunpack.c.h.b16 %v3635
        %v4666 = vunpack.c.l.b16 %v3636
        %v4667 = vunpack.c.h.b16 %v3636
        %v4668 = vunpack.c.l.b16 %v3637
        %v4669 = vunpack.c.h.b16 %v3637
        %v4670 = vunpack.c.l.b16 %v3638
        %v4671 = vunpack.c.h.b16 %v3638
        %v4672 = vunpack.c.l.b16 %v3639
        %v4673 = vunpack.c.h.b16 %v3639
        %v4674 = vunpack.c.l.b16 %v3640
        %v4675 = vunpack.c.h.b16 %v3640
        %v4676 = vunpack.c.l.b16 %v3641
        %v4677 = vunpack.c.h.b16 %v3641
        %v4678 = vunpack.c.l.b16 %v3642
        %v4679 = vunpack.c.h.b16 %v3642
        %v4680 = vunpack.c.l.b16 %v3643
        %v4681 = vunpack.c.h.b16 %v3643
        %v4682 = vunpack.c.l.b16 %v3644
        %v4683 = vunpack.c.h.b16 %v3644
        %v4684 = vunpack.c.l.b16 %v3645
        %v4685 = vunpack.c.l.b16 %v3646
        %v4686 = vunpack.c.h.b16 %v3646
        %v4687 = vunpack.c.l.b16 %v3647
        %v4688 = vunpack.c.h.b16 %v3647
        %v4689 = vunpack.c.l.b16 %v3648
        %v4690 = vunpack.c.h.b16 %v3648
        %v4691 = vunpack.c.l.b16 %v3649
        %v4692 = vunpack.c.h.b16 %v3649
        %v4693 = vunpack.c.l.b16 %v3650
        %v4694 = vunpack.c.h.b16 %v3650
        %v4695 = vunpack.c.l.b16 %v3651
        %v4696 = vunpack.c.h.b16 %v3651
        %v4697 = vunpack.c.l.b16 %v3652
        %v4698 = vunpack.c.h.b16 %v3652
        %v4699 = vunpack.c.l.b16 %v3653
        %v4700 = vunpack.c.h.b16 %v3653
        %v4701 = vunpack.c.l.b16 %v3654
        %v4702 = vunpack.c.h.b16 %v3654
        %v4703 = vunpack.c.l.b16 %v3655
        %v4704 = vunpack.c.h.b16 %v3655
        %v4705 = vunpack.c.l.b16 %v3656
        %v4706 = vunpack.c.h.b16 %v3656
        %v4707 = vunpack.c.l.b16 %v3657
        %v4708 = vunpack.c.h.b16 %v3657
        %v4709 = vunpack.c.l.b16 %v3658
        %v4710 = vunpack.c.h.b16 %v3658
        %v4711 = vunpack.c.l.b16 %v3659
        %v4712 = vunpack.c.h.b16 %v3659
        %v4713 = vunpack.c.l.b16 %v3660
        %v4714 = vunpack.c.h.b16 %v3660
        %v4715 = vunpack.c.l.b16 %v3661
        %v4716 = vunpack.c.h.b16 %v3661
        %v4717 = vunpack.c.l.b16 %v3662
        %v4718 = vunpack.c.h.b16 %v3662
        %v4719 = vunpack.c.l.b16 %v3663
        %v4720 = vunpack.c.h.b16 %v3663
        %v4721 = vunpack.c.l.b16 %v3664
        %v4722 = vunpack.c.h.b16 %v3664
        %v4723 = vunpack.c.l.b16 %v3665
        %v4724 = vunpack.c.h.b16 %v3665
        %v4725 = vunpack.c.l.b16 %v3666
        %v4726 = vunpack.c.h.b16 %v3666
        %v4727 = vunpack.c.l.b16 %v3667
        %v4728 = vunpack.c.h.b16 %v3667
        %v4729 = vunpack.c.l.b16 %v3668
        %v4730 = vunpack.c.h.b16 %v3668
        %v4731 = vunpack.c.l.b16 %v3669
        %v4732 = vunpack.c.h.b16 %v3669
        %v4733 = vunpack.c.l.b16 %v3670
        %v4734 = vunpack.c.h.b16 %v3670
        %v4735 = vunpack.c.l.b16 %v3671
        %v4736 = vunpack.c.l.b16 %v3672
        %v4737 = vunpack.c.h.b16 %v3672
        %v4738 = vunpack.c.l.b16 %v3673
        %v4739 = vunpack.c.h.b16 %v3673
        %v4740 = vunpack.c.l.b16 %v3674
        %v4741 = vunpack.c.h.b16 %v3674
        %v4742 = vunpack.c.l.b16 %v3675
        %v4743 = vunpack.c.h.b16 %v3675
        %v4744 = vunpack.c.l.b16 %v3676
        %v4745 = vunpack.c.h.b16 %v3676
        %v4746 = vunpack.c.l.b16 %v3677
        %v4747 = vunpack.c.h.b16 %v3677
        %v4748 = vunpack.c.l.b16 %v3678
        %v4749 = vunpack.c.h.b16 %v3678
        %v4750 = vunpack.c.l.b16 %v3679
        %v4751 = vunpack.c.h.b16 %v3679
        %v4752 = vunpack.c.l.b16 %v3680
        %v4753 = vunpack.c.h.b16 %v3680
        %v4754 = vunpack.c.l.b16 %v3681
        %v4755 = vunpack.c.h.b16 %v3681
        %v4756 = vunpack.c.l.b16 %v3682
        %v4757 = vunpack.c.h.b16 %v3682
        %v4758 = vunpack.c.l.b16 %v3683
        %v4759 = vunpack.c.h.b16 %v3683
        %v4760 = vunpack.c.l.b16 %v3684
        %v4761 = vunpack.c.h.b16 %v3684
        %v4762 = vunpack.c.l.b16 %v3685
        %v4763 = vunpack.c.h.b16 %v3685
        %v4764 = vunpack.c.l.b16 %v3686
        %v4765 = vunpack.c.h.b16 %v3686
        %v4766 = vunpack.c.l.b16 %v3687
        %v4767 = vunpack.c.h.b16 %v3687
        %v4768 = vunpack.c.l.b16 %v3688
        %v4769 = vunpack.c.h.b16 %v3688
        %v4770 = vunpack.c.l.b16 %v3689
        %v4771 = vunpack.c.h.b16 %v3689
        %v4772 = vunpack.c.l.b16 %v3690
        %v4773 = vunpack.c.h.b16 %v3690
        %v4774 = vunpack.c.l.b16 %v3691
        %v4775 = vunpack.c.h.b16 %v3691
        %v4776 = vunpack.c.l.b16 %v3692
        %v4777 = vunpack.c.h.b16 %v3692
        %v4778 = vunpack.c.l.b16 %v3693
        %v4779 = vunpack.c.h.b16 %v3693
        %v4780 = vunpack.c.l.b16 %v3694
        %v4781 = vunpack.c.h.b16 %v3694
        %v4782 = vunpack.c.l.b16 %v3695
        %v4783 = vunpack.c.h.b16 %v3695
        %v4784 = vunpack.c.l.b16 %v3696
        %v4785 = vunpack.c.h.b16 %v3696
        %v4786 = vunpack.c.l.b16 %v3697
        %v4787 = vunpack.c.l.b16 %v3698
        %v4788 = vunpack.c.h.b16 %v3698
        %v4789 = vunpack.c.l.b16 %v3699
        %v4790 = vunpack.c.h.b16 %v3699
        %v4791 = vunpack.c.l.b16 %v3700
        %v4792 = vunpack.c.h.b16 %v3700
        %v4793 = vunpack.c.l.b16 %v3701
        %v4794 = vunpack.c.h.b16 %v3701
        %v4795 = vunpack.c.l.b16 %v3702
        %v4796 = vunpack.c.h.b16 %v3702
        %v4797 = vunpack.c.l.b16 %v3703
        %v4798 = vunpack.c.h.b16 %v3703
        %v4799 = vunpack.c.l.b16 %v3704
        %v4800 = vunpack.c.h.b16 %v3704
        %v4801 = vunpack.c.l.b16 %v3705
        %v4802 = vunpack.c.h.b16 %v3705
        %v4803 = vunpack.c.l.b16 %v3706
        %v4804 = vunpack.c.h.b16 %v3706
        %v4805 = vunpack.c.l.b16 %v3707
        %v4806 = vunpack.c.h.b16 %v3707
        %v4807 = vunpack.c.l.b16 %v3708
        %v4808 = vunpack.c.h.b16 %v3708
        %v4809 = vunpack.c.l.b16 %v3709
        %v4810 = vunpack.c.h.b16 %v3709
        %v4811 = vunpack.c.l.b16 %v3710
        %v4812 = vunpack.c.h.b16 %v3710
        %v4813 = vunpack.c.l.b16 %v3711
        %v4814 = vunpack.c.h.b16 %v3711
        %v4815 = vunpack.c.l.b16 %v3712
        %v4816 = vunpack.c.h.b16 %v3712
        %v4817 = vunpack.c.l.b16 %v3713
        %v4818 = vunpack.c.h.b16 %v3713
        %v4819 = vunpack.c.l.b16 %v3714
        %v4820 = vunpack.c.h.b16 %v3714
        %v4821 = vunpack.c.l.b16 %v3715
        %v4822 = vunpack.c.h.b16 %v3715
        %v4823 = vunpack.c.l.b16 %v3716
        %v4824 = vunpack.c.h.b16 %v3716
        %v4825 = vunpack.c.l.b16 %v3717
        %v4826 = vunpack.c.h.b16 %v3717
        %v4827 = vunpack.c.l.b16 %v3718
        %v4828 = vunpack.c.h.b16 %v3718
        %v4829 = vunpack.c.l.b16 %v3719
        %v4830 = vunpack.c.h.b16 %v3719
        %v4831 = vunpack.c.l.b16 %v3720
        %v4832 = vunpack.c.h.b16 %v3720
        %v4833 = vunpack.c.l.b16 %v3721
        %v4834 = vunpack.c.h.b16 %v3721
        %v4835 = vunpack.c.l.b16 %v3722
        %v4836 = vunpack.c.h.b16 %v3722
        %v4837 = vunpack.c.l.b16 %v3723
        %v4838 = vunpack.c.l.b16 %v3724
        %v4839 = vunpack.c.h.b16 %v3724
        %v4840 = vunpack.c.l.b16 %v3725
        %v4841 = vunpack.c.h.b16 %v3725
        %v4842 = vunpack.c.l.b16 %v3726
        %v4843 = vunpack.c.h.b16 %v3726
        %v4844 = vunpack.c.l.b16 %v3727
        %v4845 = vunpack.c.h.b16 %v3727
        %v4846 = vunpack.c.l.b16 %v3728
        %v4847 = vunpack.c.h.b16 %v3728
        %v4848 = vunpack.c.l.b16 %v3729
        %v4849 = vunpack.c.h.b16 %v3729
        %v4850 = vunpack.c.l.b16 %v3730
        %v4851 = vunpack.c.h.b16 %v3730
        %v4852 = vunpack.c.l.b16 %v3731
        %v4853 = vunpack.c.h.b16 %v3731
        %v4854 = vunpack.c.l.b16 %v3732
        %v4855 = vunpack.c.h.b16 %v3732
        %v4856 = vunpack.c.l.b16 %v3733
        %v4857 = vunpack.c.h.b16 %v3733
        %v4858 = vunpack.c.l.b16 %v3734
        %v4859 = vunpack.c.h.b16 %v3734
        %v4860 = vunpack.c.l.b16 %v3735
        %v4861 = vunpack.c.h.b16 %v3735
        %v4862 = vunpack.c.l.b16 %v3736
        %v4863 = vunpack.c.h.b16 %v3736
        %v4864 = vunpack.c.l.b16 %v3737
        %v4865 = vunpack.c.h.b16 %v3737
        %v4866 = vunpack.c.l.b16 %v3738
        %v4867 = vunpack.c.h.b16 %v3738
        %v4868 = vunpack.c.l.b16 %v3739
        %v4869 = vunpack.c.h.b16 %v3739
        %v4870 = vunpack.c.l.b16 %v3740
        %v4871 = vunpack.c.h.b16 %v3740
        %v4872 = vunpack.c.l.b16 %v3741
        %v4873 = vunpack.c.h.b16 %v3741
        %v4874 = vunpack.c.l.b16 %v3742
        %v4875 = vunpack.c.h.b16 %v3742
        %v4876 = vunpack.c.l.b16 %v3743
        %v4877 = vunpack.c.h.b16 %v3743
        %v4878 = vunpack.c.l.b16 %v3744
        %v4879 = vunpack.c.h.b16 %v3744
        %v4880 = vunpack.c.l.b16 %v3745
        %v4881 = vunpack.c.h.b16 %v3745
        %v4882 = vunpack.c.l.b16 %v3746
        %v4883 = vunpack.c.h.b16 %v3746
        %v4884 = vunpack.c.l.b16 %v3747
        %v4885 = vunpack.c.h.b16 %v3747
        %v4886 = vunpack.c.l.b16 %v3748
        %v4887 = vunpack.c.h.b16 %v3748
        %v4888 = vunpack.c.l.b16 %v3749
        %v4889 = vunpack.c.l.b16 %v3750
        %v4890 = vunpack.c.h.b16 %v3750
        %v4891 = vunpack.c.l.b16 %v3751
        %v4892 = vunpack.c.h.b16 %v3751
        %v4893 = vunpack.c.l.b16 %v3752
        %v4894 = vunpack.c.h.b16 %v3752
        %v4895 = vunpack.c.l.b16 %v3753
        %v4896 = vunpack.c.h.b16 %v3753
        %v4897 = vunpack.c.l.b16 %v3754
        %v4898 = vunpack.c.h.b16 %v3754
        %v4899 = vunpack.c.l.b16 %v3755
        %v4900 = vunpack.c.h.b16 %v3755
        %v4901 = vunpack.c.l.b16 %v3756
        %v4902 = vunpack.c.h.b16 %v3756
        %v4903 = vunpack.c.l.b16 %v3757
        %v4904 = vunpack.c.h.b16 %v3757
        %v4905 = vunpack.c.l.b16 %v3758
        %v4906 = vunpack.c.h.b16 %v3758
        %v4907 = vunpack.c.l.b16 %v3759
        %v4908 = vunpack.c.h.b16 %v3759
        %v4909 = vunpack.c.l.b16 %v3760
        %v4910 = vunpack.c.h.b16 %v3760
        %v4911 = vunpack.c.l.b16 %v3761
        %v4912 = vunpack.c.h.b16 %v3761
        %v4913 = vunpack.c.l.b16 %v3762
        %v4914 = vunpack.c.h.b16 %v3762
        %v4915 = vunpack.c.l.b16 %v3763
        %v4916 = vunpack.c.h.b16 %v3763
        %v4917 = vunpack.c.l.b16 %v3764
        %v4918 = vunpack.c.h.b16 %v3764
        %v4919 = vunpack.c.l.b16 %v3765
        %v4920 = vunpack.c.h.b16 %v3765
        %v4921 = vunpack.c.l.b16 %v3766
        %v4922 = vunpack.c.h.b16 %v3766
        %v4923 = vunpack.c.l.b16 %v3767
        %v4924 = vunpack.c.h.b16 %v3767
        %v4925 = vunpack.c.l.b16 %v3768
        %v4926 = vunpack.c.h.b16 %v3768
        %v4927 = vunpack.c.l.b16 %v3769
        %v4928 = vunpack.c.h.b16 %v3769
        %v4929 = vunpack.c.l.b16 %v3770
        %v4930 = vunpack.c.h.b16 %v3770
        %v4931 = vunpack.c.l.b16 %v3771
        %v4932 = vunpack.c.h.b16 %v3771
        %v4933 = vunpack.c.l.b16 %v3772
        %v4934 = vunpack.c.h.b16 %v3772
        %v4935 = vunpack.c.l.b16 %v3773
        %v4936 = vunpack.c.h.b16 %v3773
        %v4937 = vunpack.c.l.b16 %v3774
        %v4938 = vunpack.c.h.b16 %v3774
        %v4939 = vunpack.c.l.b16 %v3775
        %v4940 = vunpack.c.l.b16 %v3776
        %v4941 = vunpack.c.h.b16 %v3776
        %v4942 = vunpack.c.l.b16 %v3777
        %v4943 = vunpack.c.h.b16 %v3777
        %v4944 = vunpack.c.l.b16 %v3778
        %v4945 = vunpack.c.h.b16 %v3778
        %v4946 = vunpack.c.l.b16 %v3779
        %v4947 = vunpack.c.h.b16 %v3779
        %v4948 = vunpack.c.l.b16 %v3780
        %v4949 = vunpack.c.h.b16 %v3780
        %v4950 = vunpack.c.l.b16 %v3781
        %v4951 = vunpack.c.h.b16 %v3781
        %v4952 = vunpack.c.l.b16 %v3782
        %v4953 = vunpack.c.h.b16 %v3782
        %v4954 = vunpack.c.l.b16 %v3783
        %v4955 = vunpack.c.h.b16 %v3783
        %v4956 = vunpack.c.l.b16 %v3784
        %v4957 = vunpack.c.h.b16 %v3784
        %v4958 = vunpack.c.l.b16 %v3785
        %v4959 = vunpack.c.h.b16 %v3785
        %v4960 = vunpack.c.l.b16 %v3786
        %v4961 = vunpack.c.h.b16 %v3786
        %v4962 = vunpack.c.l.b16 %v3787
        %v4963 = vunpack.c.h.b16 %v3787
        %v4964 = vunpack.c.l.b16 %v3788
        %v4965 = vunpack.c.h.b16 %v3788
        %v4966 = vunpack.c.l.b16 %v3789
        %v4967 = vunpack.c.h.b16 %v3789
        %v4968 = vunpack.c.l.b16 %v3790
        %v4969 = vunpack.c.h.b16 %v3790
        %v4970 = vunpack.c.l.b16 %v3791
        %v4971 = vunpack.c.h.b16 %v3791
        %v4972 = vunpack.c.l.b16 %v3792
        %v4973 = vunpack.c.h.b16 %v3792
        %v4974 = vunpack.c.l.b16 %v3793
        %v4975 = vunpack.c.h.b16 %v3793
        %v4976 = vunpack.c.l.b16 %v3794
        %v4977 = vunpack.c.h.b16 %v3794
        %v4978 = vunpack.c.l.b16 %v3795
        %v4979 = vunpack.c.h.b16 %v3795
        %v4980 = vunpack.c.l.b16 %v3796
        %v4981 = vunpack.c.h.b16 %v3796
        %v4982 = vunpack.c.l.b16 %v3797
        %v4983 = vunpack.c.h.b16 %v3797
        %v4984 = vunpack.c.l.b16 %v3798
        %v4985 = vunpack.c.h.b16 %v3798
        %v4986 = vunpack.c.l.b16 %v3799
        %v4987 = vunpack.c.h.b16 %v3799
        %v4988 = vunpack.c.l.b16 %v3800
        %v4989 = vunpack.c.h.b16 %v3800
        %v4990 = vunpack.c.l.b16 %v3801
        %v4991 = vunpack.c.l.b16 %v3802
        %v4992 = vunpack.c.h.b16 %v3802
        %v4993 = vunpack.c.l.b16 %v3803
        %v4994 = vunpack.c.h.b16 %v3803
        %v4995 = vunpack.c.l.b16 %v3804
        %v4996 = vunpack.c.h.b16 %v3804
        %v4997 = vunpack.c.l.b16 %v3805
        %v4998 = vunpack.c.h.b16 %v3805
        %v4999 = vunpack.c.l.b16 %v3806
        %v5000 = vunpack.c.h.b16 %v3806
        %v5001 = vunpack.c.l.b16 %v3807
        %v5002 = vunpack.c.h.b16 %v3807
        %v5003 = vunpack.c.l.b16 %v3808
        %v5004 = vunpack.c.h.b16 %v3808
        %v5005 = vunpack.c.l.b16 %v3809
        %v5006 = vunpack.c.h.b16 %v3809
        %v5007 = vunpack.c.l.b16 %v3810
        %v5008 = vunpack.c.h.b16 %v3810
        %v5009 = vunpack.c.l.b16 %v3811
        %v5010 = vunpack.c.h.b16 %v3811
        %v5011 = vunpack.c.l.b16 %v3812
        %v5012 = vunpack.c.h.b16 %v3812
        %v5013 = vunpack.c.l.b16 %v3813
        %v5014 = vunpack.c.h.b16 %v3813
        %v5015 = vunpack.c.l.b16 %v3814
        %v5016 = vunpack.c.h.b16 %v3814
        %v5017 = vunpack.c.l.b16 %v3815
        %v5018 = vunpack.c.h.b16 %v3815
        %v5019 = vunpack.c.l.b16 %v3816
        %v5020 = vunpack.c.h.b16 %v3816
        %v5021 = vunpack.c.l.b16 %v3817
        %v5022 = vunpack.c.h.b16 %v3817
        %v5023 = vunpack.c.l.b16 %v3818
        %v5024 = vunpack.c.h.b16 %v3818
        %v5025 = vunpack.c.l.b16 %v3819
        %v5026 = vunpack.c.h.b16 %v3819
        %v5027 = vunpack.c.l.b16 %v3820
        %v5028 = vunpack.c.h.b16 %v3820
        %v5029 = vunpack.c.l.b16 %v3821
        %v5030 = vunpack.c.h.b16 %v3821
        %v5031 = vunpack.c.l.b16 %v3822
        %v5032 = vunpack.c.h.b16 %v3822
        %v5033 = vunpack.c.l.b16 %v3823
        %v5034 = vunpack.c.h.b16 %v3823
        %v5035 = vunpack.c.l.b16 %v3824
        %v5036 = vunpack.c.h.b16 %v3824
        %v5037 = vunpack.c.l.b16 %v3825
        %v5038 = vunpack.c.h.b16 %v3825
        %v5039 = vunpack.c.l.b16 %v3826
        %v5040 = vunpack.c.h.b16 %v3826
        %v5041 = vunpack.c.l.b16 %v3827
        %v5042 = vunpack.c.l.b16 %v3828
        %v5043 = vunpack.c.h.b16 %v3828
        %v5044 = vunpack.c.l.b16 %v3829
        %v5045 = vunpack.c.h.b16 %v3829
        %v5046 = vunpack.c.l.b16 %v3830
        %v5047 = vunpack.c.h.b16 %v3830
        %v5048 = vunpack.c.l.b16 %v3831
        %v5049 = vunpack.c.h.b16 %v3831
        %v5050 = vunpack.c.l.b16 %v3832
        %v5051 = vunpack.c.h.b16 %v3832
        %v5052 = vunpack.c.l.b16 %v3833
        %v5053 = vunpack.c.h.b16 %v3833
        %v5054 = vunpack.c.l.b16 %v3834
        %v5055 = vunpack.c.h.b16 %v3834
        %v5056 = vunpack.c.l.b16 %v3835
        %v5057 = vunpack.c.h.b16 %v3835
        %v5058 = vunpack.c.l.b16 %v3836
        %v5059 = vunpack.c.h.b16 %v3836
        %v5060 = vunpack.c.l.b16 %v3837
        %v5061 = vunpack.c.h.b16 %v3837
        %v5062 = vunpack.c.l.b16 %v3838
        %v5063 = vunpack.c.h.b16 %v3838
        %v5064 = vunpack.c.l.b16 %v3839
        %v5065 = vunpack.c.h.b16 %v3839
        %v5066 = vunpack.c.l.b16 %v3840
        %v5067 = vunpack.c.h.b16 %v3840
        %v5068 = vunpack.c.l.b16 %v3841
        %v5069 = vunpack.c.h.b16 %v3841
        %v5070 = vunpack.c.l.b16 %v3842
        %v5071 = vunpack.c.h.b16 %v3842
        %v5072 = vunpack.c.l.b16 %v3843
        %v5073 = vunpack.c.h.b16 %v3843
        %v5074 = vunpack.c.l.b16 %v3844
        %v5075 = vunpack.c.h.b16 %v3844
        %v5076 = vunpack.c.l.b16 %v3845
        %v5077 = vunpack.c.h.b16 %v3845
        %v5078 = vunpack.c.l.b16 %v3846
        %v5079 = vunpack.c.h.b16 %v3846
        %v5080 = vunpack.c.l.b16 %v3847
        %v5081 = vunpack.c.h.b16 %v3847
        %v5082 = vunpack.c.l.b16 %v3848
        %v5083 = vunpack.c.h.b16 %v3848
        %v5084 = vunpack.c.l.b16 %v3849
        %v5085 = vunpack.c.h.b16 %v3849
        %v5086 = vunpack.c.l.b16 %v3850
        %v5087 = vunpack.c.h.b16 %v3850
        %v5088 = vunpack.c.l.b16 %v3851
        %v5089 = vunpack.c.h.b16 %v3851
        %v5090 = vunpack.c.l.b16 %v3852
        %v5091 = vunpack.c.h.b16 %v3852
        %v5092 = vunpack.c.l.b16 %v3853
        %v5093 = vpack.c.b16 %v4328, %v4277
        %v5094 = vpack.c.b16 %v4329, %v4278
        %v5095 = vpack.c.b16 %v4330, %v4279
        %v5096 = vpack.c.b16 %v4331, %v4280
        %v5097 = vpack.c.b16 %v4332, %v4281
        %v5098 = vpack.c.b16 %v4333, %v4282
        %v5099 = vpack.c.b16 %v4334, %v4283
        %v5100 = vpack.c.b16 %v4335, %v4284
        %v5101 = vpack.c.b16 %v4336, %v4285
        %v5102 = vpack.c.b16 %v4337, %v4286
        %v5103 = vpack.c.b16 %v4338, %v4287
        %v5104 = vpack.c.b16 %v4339, %v4288
        %v5105 = vpack.c.b16 %v4340, %v4289
        %v5106 = vpack.c.b16 %v4341, %v4290
        %v5107 = vpack.c.b16 %v4342, %v4291
        %v5108 = vpack.c.b16 %v4343, %v4292
        %v5109 = vpack.c.b16 %v4344, %v4293
        %v5110 = vpack.c.b16 %v4345, %v4294
        %v5111 = vpack.c.b16 %v4346, %v4295
        %v5112 = vpack.c.b16 %v4347, %v4296
        %v5113 = vpack.c.b16 %v4348, %v4297
        %v5114 = vpack.c.b16 %v4349, %v4298
        %v5115 = vpack.c.b16 %v4350, %v4299
        %v5116 = vpack.c.b16 %v4351, %v4300
        %v5117 = vpack.c.b16 %v4352, %v4301
        %v5118 = vpack.c.b16 %v4353, %v4302
        %v5119 = vpack.c.b16 %v4354, %v4303
        %v5120 = vpack.c.b16 %v4355, %v4304
        %v5121 = vpack.c.b16 %v4356, %v4305
        %v5122 = vpack.c.b16 %v4357, %v4306
        %v5123 = vpack.c.b16 %v4358, %v4307
        %v5124 = vpack.c.b16 %v4359, %v4308
        %v5125 = vpack.c.b16 %v4360, %v4309
        %v5126 = vpack.c.b16 %v4361, %v4310
        %v5127 = vpack.c.b16 %v4362, %v4311
        %v5128 = vpack.c.b16 %v4363, %v4312
        %v5129 = vpack.c.b16 %v4364, %v4313
        %v5130 = vpack.c.b16 %v4365, %v4314
        %v5131 = vpack.c.b16 %v4366, %v4315
        %v5132 = vpack.c.b16 %v4367, %v4316
        %v5133 = vpack.c.b16 %v4368, %v4317
        %v5134 = vpack.c.b16 %v4369, %v4318
        %v5135 = vpack.c.b16 %v4370, %v4319
        %v5136 = vpack.c.b16 %v4371, %v4320
        %v5137 = vpack.c.b16 %v4372, %v4321
        %v5138 = vpack.c.b16 %v4373, %v4322
        %v5139 = vpack.c.b16 %v4374, %v4323
        %v5140 = vpack.c.b16 %v4375, %v4324
        %v5141 = vpack.c.b16 %v4376, %v4325
        %v5142 = vpack.c.b16 %v4377, %v4326
        %v5143 = vpack.c.b16 %v4378, %v4327
        %v5144 = vpack.c.b16 %v4430, %v4379
        %v5145 = vpack.c.b16 %v4431, %v4380
        %v5146 = vpack.c.b16 %v4432, %v4381
        %v5147 = vpack.c.b16 %v4433, %v4382
        %v5148 = vpack.c.b16 %v4434, %v4383
        %v5149 = vpack.c.b16 %v4435, %v4384
        %v5150 = vpack.c.b16 %v4436, %v4385
        %v5151 = vpack.c.b16 %v4437, %v4386
        %v5152 = vpack.c.b16 %v4438, %v4387
        %v5153 = vpack.c.b16 %v4439, %v4388
        %v5154 = vpack.c.b16 %v4440, %v4389
        %v5155 = vpack.c.b16 %v4441, %v4390
        %v5156 = vpack.c.b16 %v4442, %v4391
        %v5157 = vpack.c.b16 %v4443, %v4392
        %v5158 = vpack.c.b16 %v4444, %v4393
        %v5159 = vpack.c.b16 %v4445, %v4394
        %v5160 = vpack.c.b16 %v4446, %v4395
        %v5161 = vpack.c.b16 %v4447, %v4396
        %v5162 = vpack.c.b16 %v4448, %v4397
        %v5163 = vpack.c.b16 %v4449, %v4398
        %v5164 = vpack.c.b16 %v4450, %v4399
        %v5165 = vpack.c.b16 %v4451, %v4400
        %v5166 = vpack.c.b16 %v4452, %v4401
        %v5167 = vpack.c.b16 %v4453, %v4402
        %v5168 = vpack.c.b16 %v4454, %v4403
        %v5169 = vpack.c.b16 %v4455, %v4404
        %v5170 = vpack.c.b16 %v4456, %v4405
        %v5171 = vpack.c.b16 %v4457, %v4406
        %v5172 = vpack.c.b16 %v4458, %v4407
        %v5173 = vpack.c.b16 %v4459, %v4408
        %v5174 = vpack.c.b16 %v4460, %v4409
        %v5175 = vpack.c.b16 %v4461, %v4410
        %v5176 = vpack.c.b16 %v4462, %v4411
        %v5177 = vpack.c.b16 %v4463, %v4412
        %v5178 = vpack.c.b16 %v4464, %v4413
        %v5179 = vpack.c.b16 %v4465, %v4414
        %v5180 = vpack.c.b16 %v4466, %v4415
        %v5181 = vpack.c.b16 %v4467, %v4416
        %v5182 = vpack.c.b16 %v4468, %v4417
        %v5183 = vpack.c.b16 %v4469, %v4418
        %v5184 = vpack.c.b16 %v4470, %v4419
        %v5185 = vpack.c.b16 %v4471, %v4420
        %v5186 = vpack.c.b16 %v4472, %v4421
        %v5187 = vpack.c.b16 %v4473, %v4422
        %v5188 = vpack.c.b16 %v4474, %v4423
        %v5189 = vpack.c.b16 %v4475, %v4424
        %v5190 = vpack.c.b16 %v4476, %v4425
        %v5191 = vpack.c.b16 %v4477, %v4426
        %v5192 = vpack.c.b16 %v4478, %v4427
        %v5193 = vpack.c.b16 %v4479, %v4428
        %v5194 = vpack.c.b16 %v4480, %v4429
        %v5195 = vpack.c.b16 %v4532, %v4481
        %v5196 = vpack.c.b16 %v4533, %v4482
        %v5197 = vpack.c.b16 %v4534, %v4483
        %v5198 = vpack.c.b16 %v4535, %v4484
        %v5199 = vpack.c.b16 %v4536, %v4485
        %v5200 = vpack.c.b16 %v4537, %v4486
        %v5201 = vpack.c.b16 %v4538, %v4487
        %v5202 = vpack.c.b16 %v4539, %v4488
        %v5203 = vpack.c.b16 %v4540, %v4489
        %v5204 = vpack.c.b16 %v4541, %v4490
        %v5205 = vpack.c.b16 %v4542, %v4491
        %v5206 = vpack.c.b16 %v4543, %v4492
        %v5207 = vpack.c.b16 %v4544, %v4493
        %v5208 = vpack.c.b16 %v4545, %v4494
        %v5209 = vpack.c.b16 %v4546, %v4495
        %v5210 = vpack.c.b16 %v4547, %v4496
        %v5211 = vpack.c.b16 %v4548, %v4497
        %v5212 = vpack.c.b16 %v4549, %v4498
        %v5213 = vpack.c.b16 %v4550, %v4499
        %v5214 = vpack.c.b16 %v4551, %v4500
        %v5215 = vpack.c.b16 %v4552, %v4501
        %v5216 = vpack.c.b16 %v4553, %v4502
        %v5217 = vpack.c.b16 %v4554, %v4503
        %v5218 = vpack.c.b16 %v4555, %v4504
        %v5219 = vpack.c.b16 %v4556, %v4505
        %v5220 = vpack.c.b16 %v4557, %v4506
        %v5221 = vpack.c.b16 %v4558, %v4507
        %v5222 = vpack.c.b16 %v4559, %v4508
        %v5223 = vpack.c.b16 %v4560, %v4509
        %v5224 = vpack.c.b16 %v4561, %v4510
        %v5225 = vpack.c.b16 %v4562, %v4511
        %v5226 = vpack.c.b16 %v4563, %v4512
        %v5227 = vpack.c.b16 %v4564, %v4513
        %v5228 = vpack.c.b16 %v4565, %v4514
        %v5229 = vpack.c.b16 %v4566, %v4515
        %v5230 = vpack.c.b16 %v4567, %v4516
        %v5231 = vpack.c.b16 %v4568, %v4517
        %v5232 = vpack.c.b16 %v4569, %v4518
        %v5233 = vpack.c.b16 %v4570, %v4519
        %v5234 = vpack.c.b16 %v4571, %v4520
        %v5235 = vpack.c.b16 %v4572, %v4521
        %v5236 = vpack.c.b16 %v4573, %v4522
        %v5237 = vpack.c.b16 %v4574, %v4523
        %v5238 = vpack.c.b16 %v4575, %v4524
        %v5239 = vpack.c.b16 %v4576, %v4525
        %v5240 = vpack.c.b16 %v4577, %v4526
        %v5241 = vpack.c.b16 %v4578, %v4527
        %v5242 = vpack.c.b16 %v4579, %v4528
        %v5243 = vpack.c.b16 %v4580, %v4529
        %v5244 = vpack.c.b16 %v4581, %v4530
        %v5245 = vpack.c.b16 %v4582, %v4531
        %v5246 = vpack.c.b16 %v4634, %v4583
        %v5247 = vpack.c.b16 %v4635, %v4584
        %v5248 = vpack.c.b16 %v4636, %v4585
        %v5249 = vpack.c.b16 %v4637, %v4586
        %v5250 = vpack.c.b16 %v4638, %v4587
        %v5251 = vpack.c.b16 %v4639, %v4588
        %v5252 = vpack.c.b16 %v4640, %v4589
        %v5253 = vpack.c.b16 %v4641, %v4590
        %v5254 = vpack.c.b16 %v4642, %v4591
        %v5255 = vpack.c.b16 %v4643, %v4592
        %v5256 = vpack.c.b16 %v4644, %v4593
        %v5257 = vpack.c.b16 %v4645, %v4594
        %v5258 = vpack.c.b16 %v4646, %v4595
        %v5259 = vpack.c.b16 %v4647, %v4596
        %v5260 = vpack.c.b16 %v4648, %v4597
        %v5261 = vpack.c.b16 %v4649, %v4598
        %v5262 = vpack.c.b16 %v4650, %v4599
        %v5263 = vpack.c.b16 %v4651, %v4600
        %v5264 = vpack.c.b16 %v4652, %v4601
        %v5265 = vpack.c.b16 %v4653, %v4602
        %v5266 = vpack.c.b16 %v4654, %v4603
        %v5267 = vpack.c.b16 %v4655, %v4604
        %v5268 = vpack.c.b16 %v4656, %v4605
        %v5269 = vpack.c.b16 %v4657, %v4606
        %v5270 = vpack.c.b16 %v4658, %v4607
        %v5271 = vpack.c.b16 %v4659, %v4608
        %v5272 = vpack.c.b16 %v4660, %v4609
        %v5273 = vpack.c.b16 %v4661, %v4610
        %v5274 = vpack.c.b16 %v4662, %v4611
        %v5275 = vpack.c.b16 %v4663, %v4612
        %v5276 = vpack.c.b16 %v4664, %v4613
        %v5277 = vpack.c.b16 %v4665, %v4614
        %v5278 = vpack.c.b16 %v4666, %v4615
        %v5279 = vpack.c.b16 %v4667, %v4616
        %v5280 = vpack.c.b16 %v4668, %v4617
        %v5281 = vpack.c.b16 %v4669, %v4618
        %v5282 = vpack.c.b16 %v4670, %v4619
        %v5283 = vpack.c.b16 %v4671, %v4620
        %v5284 = vpack.c.b16 %v4672, %v4621
        %v5285 = vpack.c.b16 %v4673, %v4622
        %v5286 = vpack.c.b16 %v4674, %v4623
        %v5287 = vpack.c.b16 %v4675, %v4624
        %v5288 = vpack.c.b16 %v4676, %v4625
        %v5289 = vpack.c.b16 %v4677, %v4626
        %v5290 = vpack.c.b16 %v4678, %v4627
        %v5291 = vpack.c.b16 %v4679, %v4628
        %v5292 = vpack.c.b16 %v4680, %v4629
        %v5293 = vpack.c.b16 %v4681, %v4630
        %v5294 = vpack.c.b16 %v4682, %v4631
        %v5295 = vpack.c.b16 %v4683, %v4632
        %v5296 = vpack.c.b16 %v4684, %v4633
        %v5297 = vpack.c.b16 %v4736, %v4685
        %v5298 = vpack.c.b16 %v4737, %v4686
        %v5299 = vpack.c.b16 %v4738, %v4687
        %v5300 = vpack.c.b16 %v4739, %v4688
        %v5301 = vpack.c.b16 %v4740, %v4689
        %v5302 = vpack.c.b16 %v4741, %v4690
        %v5303 = vpack.c.b16 %v4742, %v4691
        %v5304 = vpack.c.b16 %v4743, %v4692
        %v5305 = vpack.c.b16 %v4744, %v4693
        %v5306 = vpack.c.b16 %v4745, %v4694
        %v5307 = vpack.c.b16 %v4746, %v4695
        %v5308 = vpack.c.b16 %v4747, %v4696
        %v5309 = vpack.c.b16 %v4748, %v4697
        %v5310 = vpack.c.b16 %v4749, %v4698
        %v5311 = vpack.c.b16 %v4750, %v4699
        %v5312 = vpack.c.b16 %v4751, %v4700
        %v5313 = vpack.c.b16 %v4752, %v4701
        %v5314 = vpack.c.b16 %v4753, %v4702
        %v5315 = vpack.c.b16 %v4754, %v4703
        %v5316 = vpack.c.b16 %v4755, %v4704
        %v5317 = vpack.c.b16 %v4756, %v4705
        %v5318 = vpack.c.b16 %v4757, %v4706
        %v5319 = vpack.c.b16 %v4758, %v4707
        %v5320 = vpack.c.b16 %v4759, %v4708
        %v5321 = vpack.c.b16 %v4760, %v4709
        %v5322 = vpack.c.b16 %v4761, %v4710
        %v5323 = vpack.c.b16 %v4762, %v4711
        %v5324 = vpack.c.b16 %v4763, %v4712
        %v5325 = vpack.c.b16 %v4764, %v4713
        %v5326 = vpack.c.b16 %v4765, %v4714
        %v5327 = vpack.c.b16 %v4766, %v4715
        %v5328 = vpack.c.b16 %v4767, %v4716
        %v5329 = vpack.c.b16 %v4768, %v4717
        %v5330 = vpack.c.b16 %v4769, %v4718
        %v5331 = vpack.c.b16 %v4770, %v4719
        %v5332 = vpack.c.b16 %v4771, %v4720
        %v5333 = vpack.c.b16 %v4772, %v4721
        %v5334 = vpack.c.b16 %v4773, %v4722
        %v5335 = vpack.c.b16 %v4774, %v4723
        %v5336 = vpack.c.b16 %v4775, %v4724
        %v5337 = vpack.c.b16 %v4776, %v4725
        %v5338 = vpack.c.b16 %v4777, %v4726
        %v5339 = vpack.c.b16 %v4778, %v4727
        %v5340 = vpack.c.b16 %v4779, %v4728
        %v5341 = vpack.c.b16 %v4780, %v4729
        %v5342 = vpack.c.b16 %v4781, %v4730
        %v5343 = vpack.c.b16 %v4782, %v4731
        %v5344 = vpack.c.b16 %v4783, %v4732
        %v5345 = vpack.c.b16 %v4784, %v4733
        %v5346 = vpack.c.b16 %v4785, %v4734
        %v5347 = vpack.c.b16 %v4786, %v4735
        %v5348 = vpack.c.b16 %v4838, %v4787
        %v5349 = vpack.c.b16 %v4839, %v4788
        %v5350 = vpack.c.b16 %v4840, %v4789
        %v5351 = vpack.c.b16 %v4841, %v4790
        %v5352 = vpack.c.b16 %v4842, %v4791
        %v5353 = vpack.c.b16 %v4843, %v4792
        %v5354 = vpack.c.b16 %v4844, %v4793
        %v5355 = vpack.c.b16 %v4845, %v4794
        %v5356 = vpack.c.b16 %v4846, %v4795
        %v5357 = vpack.c.b16 %v4847, %v4796
        %v5358 = vpack.c.b16 %v4848, %v4797
        %v5359 = vpack.c.b16 %v4849, %v4798
        %v5360 = vpack.c.b16 %v4850, %v4799
        %v5361 = vpack.c.b16 %v4851, %v4800
        %v5362 = vpack.c.b16 %v4852, %v4801
        %v5363 = vpack.c.b16 %v4853, %v4802
        %v5364 = vpack.c.b16 %v4854, %v4803
        %v5365 = vpack.c.b16 %v4855, %v4804
        %v5366 = vpack.c.b16 %v4856, %v4805
        %v5367 = vpack.c.b16 %v4857, %v4806
        %v5368 = vpack.c.b16 %v4858, %v4807
        %v5369 = vpack.c.b16 %v4859, %v4808
        %v5370 = vpack.c.b16 %v4860, %v4809
        %v5371 = vpack.c.b16 %v4861, %v4810
        %v5372 = vpack.c.b16 %v4862, %v4811
        %v5373 = vpack.c.b16 %v4863, %v4812
        %v5374 = vpack.c.b16 %v4864, %v4813
        %v5375 = vpack.c.b16 %v4865, %v4814
        %v5376 = vpack.c.b16 %v4866, %v4815
        %v5377 = vpack.c.b16 %v4867, %v4816
        %v5378 = vpack.c.b16 %v4868, %v4817
        %v5379 = vpack.c.b16 %v4869, %v4818
        %v5380 = vpack.c.b16 %v4870, %v4819
        %v5381 = vpack.c.b16 %v4871, %v4820
        %v5382 = vpack.c.b16 %v4872, %v4821
        %v5383 = vpack.c.b16 %v4873, %v4822
        %v5384 = vpack.c.b16 %v4874, %v4823
        %v5385 = vpack.c.b16 %v4875, %v4824
        %v5386 = vpack.c.b16 %v4876, %v4825
        %v5387 = vpack.c.b16 %v4877, %v4826
        %v5388 = vpack.c.b16 %v4878, %v4827
        %v5389 = vpack.c.b16 %v4879, %v4828
        %v5390 = vpack.c.b16 %v4880, %v4829
        %v5391 = vpack.c.b16 %v4881, %v4830
        %v5392 = vpack.c.b16 %v4882, %v4831
        %v5393 = vpack.c.b16 %v4883, %v4832
        %v5394 = vpack.c.b16 %v4884, %v4833
        %v5395 = vpack.c.b16 %v4885, %v4834
        %v5396 = vpack.c.b16 %v4886, %v4835
        %v5397 = vpack.c.b16 %v4887, %v4836
        %v5398 = vpack.c.b16 %v4888, %v4837
        %v5399 = vpack.c.b16 %v4940, %v4889
        %v5400 = vpack.c.b16 %v4941, %v4890
        %v5401 = vpack.c.b16 %v4942, %v4891
        %v5402 = vpack.c.b16 %v4943, %v4892
        %v5403 = vpack.c.b16 %v4944, %v4893
        %v5404 = vpack.c.b16 %v4945, %v4894
        %v5405 = vpack.c.b16 %v4946, %v4895
        %v5406 = vpack.c.b16 %v4947, %v4896
        %v5407 = vpack.c.b16 %v4948, %v4897
        %v5408 = vpack.c.b16 %v4949, %v4898
        %v5409 = vpack.c.b16 %v4950, %v4899
        %v5410 = vpack.c.b16 %v4951, %v4900
        %v5411 = vpack.c.b16 %v4952, %v4901
        %v5412 = vpack.c.b16 %v4953, %v4902
        %v5413 = vpack.c.b16 %v4954, %v4903
        %v5414 = vpack.c.b16 %v4955, %v4904
        %v5415 = vpack.c.b16 %v4956, %v4905
        %v5416 = vpack.c.b16 %v4957, %v4906
        %v5417 = vpack.c.b16 %v4958, %v4907
        %v5418 = vpack.c.b16 %v4959, %v4908
        %v5419 = vpack.c.b16 %v4960, %v4909
        %v5420 = vpack.c.b16 %v4961, %v4910
        %v5421 = vpack.c.b16 %v4962, %v4911
        %v5422 = vpack.c.b16 %v4963, %v4912
        %v5423 = vpack.c.b16 %v4964, %v4913
        %v5424 = vpack.c.b16 %v4965, %v4914
        %v5425 = vpack.c.b16 %v4966, %v4915
        %v5426 = vpack.c.b16 %v4967, %v4916
        %v5427 = vpack.c.b16 %v4968, %v4917
        %v5428 = vpack.c.b16 %v4969, %v4918
        %v5429 = vpack.c.b16 %v4970, %v4919
        %v5430 = vpack.c.b16 %v4971, %v4920
        %v5431 = vpack.c.b16 %v4972, %v4921
        %v5432 = vpack.c.b16 %v4973, %v4922
        %v5433 = vpack.c.b16 %v4974, %v4923
        %v5434 = vpack.c.b16 %v4975, %v4924
        %v5435 = vpack.c.b16 %v4976, %v4925
        %v5436 = vpack.c.b16 %v4977, %v4926
        %v5437 = vpack.c.b16 %v4978, %v4927
        %v5438 = vpack.c.b16 %v4979, %v4928
        %v5439 = vpack.c.b16 %v4980, %v4929
        %v5440 = vpack.c.b16 %v4981, %v4930
        %v5441 = vpack.c.b16 %v4982, %v4931
        %v5442 = vpack.c.b16 %v4983, %v4932
        %v5443 = vpack.c.b16 %v4984, %v4933
        %v5444 = vpack.c.b16 %v4985, %v4934
        %v5445 = vpack.c.b16 %v4986, %v4935
        %v5446 = vpack.c.b16 %v4987, %v4936
        %v5447 = vpack.c.b16 %v4988, %v4937
        %v5448 = vpack.c.b16 %v4989, %v4938
        %v5449 = vpack.c.b16 %v4990, %v4939
        %v5450 = vpack.c.b16 %v5042, %v4991
        %v5451 = vpack.c.b16 %v5043, %v4992
        %v5452 = vpack.c.b16 %v5044, %v4993
        %v5453 = vpack.c.b16 %v5045, %v4994
        %v5454 = vpack.c.b16 %v5046, %v4995
        %v5455 = vpack.c.b16 %v5047, %v4996
        %v5456 = vpack.c.b16 %v5048, %v4997
        %v5457 = vpack.c.b16 %v5049, %v4998
        %v5458 = vpack.c.b16 %v5050, %v4999
        %v5459 = vpack.c.b16 %v5051, %v5000
        %v5460 = vpack.c.b16 %v5052, %v5001
        %v5461 = vpack.c.b16 %v5053, %v5002
        %v5462 = vpack.c.b16 %v5054, %v5003
        %v5463 = vpack.c.b16 %v5055, %v5004
        %v5464 = vpack.c.b16 %v5056, %v5005
        %v5465 = vpack.c.b16 %v5057, %v5006
        %v5466 = vpack.c.b16 %v5058, %v5007
        %v5467 = vpack.c.b16 %v5059, %v5008
        %v5468 = vpack.c.b16 %v5060, %v5009
        %v5469 = vpack.c.b16 %v5061, %v5010
        %v5470 = vpack.c.b16 %v5062, %v5011
        %v5471 = vpack.c.b16 %v5063, %v5012
        %v5472 = vpack.c.b16 %v5064, %v5013
        %v5473 = vpack.c.b16 %v5065, %v5014
        %v5474 = vpack.c.b16 %v5066, %v5015
        %v5475 = vpack.c.b16 %v5067, %v5016
        %v5476 = vpack.c.b16 %v5068, %v5017
        %v5477 = vpack.c.b16 %v5069, %v5018
        %v5478 = vpack.c.b16 %v5070, %v5019
        %v5479 = vpack.c.b16 %v5071, %v5020
        %v5480 = vpack.c.b16 %v5072, %v5021
        %v5481 = vpack.c.b16 %v5073, %v5022
        %v5482 = vpack.c.b16 %v5074, %v5023
        %v5483 = vpack.c.b16 %v5075, %v5024
        %v5484 = vpack.c.b16 %v5076, %v5025
        %v5485 = vpack.c.b16 %v5077, %v5026
        %v5486 = vpack.c.b16 %v5078, %v5027
        %v5487 = vpack.c.b16 %v5079, %v5028
        %v5488 = vpack.c.b16 %v5080, %v5029
        %v5489 = vpack.c.b16 %v5081, %v5030
        %v5490 = vpack.c.b16 %v5082, %v5031
        %v5491 = vpack.c.b16 %v5083, %v5032
        %v5492 = vpack.c.b16 %v5084, %v5033
        %v5493 = vpack.c.b16 %v5085, %v5034
        %v5494 = vpack.c.b16 %v5086, %v5035
        %v5495 = vpack.c.b16 %v5087, %v5036
        %v5496 = vpack.c.b16 %v5088, %v5037
        %v5497 = vpack.c.b16 %v5089, %v5038
        %v5498 = vpack.c.b16 %v5090, %v5039
        %v5499 = vpack.c.b16 %v5091, %v5040
        %v5500 = vpack.c.b16 %v5092, %v5041
        %v5916 = vlaneseq
        %v5917 = vshrl.u32 %v5916, 7
        %v5918 = vsub.s32 0, %v5917
        %v5919 = vrot.slane %v3854, %v5918
        %v5920 = vlaneseq
        %v5921 = vshrl.u32 %v5920, 7
        %v5922 = vsub.s32 1, %v5921
        %v5923 = vrot.slane %v3854, %v5922
        %v5924 = vlaneseq
        %v5925 = vshrl.u32 %v5924, 7
        %v5926 = vsub.s32 2, %v5925
        %v5927 = vrot.slane %v3854, %v5926
        %v5928 = vlaneseq
        %v5929 = vshrl.u32 %v5928, 7
        %v5930 = vsub.s32 3, %v5929
        %v5931 = vrot.slane %v3854, %v5930
        %v5932 = vlaneseq
        %v5933 = vshrl.u32 %v5932, 7
        %v5934 = vsub.s32 4, %v5933
        %v5935 = vrot.slane %v3854, %v5934
        %v5936 = vlaneseq
        %v5937 = vshrl.u32 %v5936, 7
        %v5938 = vsub.s32 5, %v5937
        %v5939 = vrot.slane %v3854, %v5938
        %v5940 = vlaneseq
        %v5941 = vshrl.u32 %v5940, 7
        %v5942 = vsub.s32 6, %v5941
        %v5943 = vrot.slane %v3854, %v5942
        %v5944 = vlaneseq
        %v5945 = vshrl.u32 %v5944, 7
        %v5946 = vsub.s32 7, %v5945
        %v5947 = vrot.slane %v3854, %v5946
        %v5948 = vlaneseq
        %v5949 = vshrl.u32 %v5948, 7
        %v5950 = vsub.s32 0, %v5949
        %v5951 = vrot.slane %v3855, %v5950
        %v5952 = vlaneseq
        %v5953 = vshrl.u32 %v5952, 7
        %v5954 = vsub.s32 1, %v5953
        %v5955 = vrot.slane %v3855, %v5954
        %v5956 = vlaneseq
        %v5957 = vshrl.u32 %v5956, 7
        %v5958 = vsub.s32 2, %v5957
        %v5959 = vrot.slane %v3855, %v5958
        %v5960 = vlaneseq
        %v5961 = vshrl.u32 %v5960, 7
        %v5962 = vsub.s32 3, %v5961
        %v5963 = vrot.slane %v3855, %v5962
        %v5964 = vlaneseq
        %v5965 = vshrl.u32 %v5964, 7
        %v5966 = vsub.s32 4, %v5965
        %v5967 = vrot.slane %v3855, %v5966
        %v5968 = vlaneseq
        %v5969 = vshrl.u32 %v5968, 7
        %v5970 = vsub.s32 5, %v5969
        %v5971 = vrot.slane %v3855, %v5970
        %v5972 = vlaneseq
        %v5973 = vshrl.u32 %v5972, 7
        %v5974 = vsub.s32 6, %v5973
        %v5975 = vrot.slane %v3855, %v5974
        %v5976 = vlaneseq
        %v5977 = vshrl.u32 %v5976, 7
        %v5978 = vsub.s32 7, %v5977
        %v5979 = vrot.slane %v3855, %v5978
        %v5980 = vlaneseq
        %v5981 = vshrl.u32 %v5980, 7
        %v5982 = vsub.s32 0, %v5981
        %v5983 = vrot.slane %v3856, %v5982
        %v5984 = vlaneseq
        %v5985 = vshrl.u32 %v5984, 7
        %v5986 = vsub.s32 1, %v5985
        %v5987 = vrot.slane %v3856, %v5986
        %v5988 = vlaneseq
        %v5989 = vshrl.u32 %v5988, 7
        %v5990 = vsub.s32 2, %v5989
        %v5991 = vrot.slane %v3856, %v5990
        %v5992 = vlaneseq
        %v5993 = vshrl.u32 %v5992, 7
        %v5994 = vsub.s32 3, %v5993
        %v5995 = vrot.slane %v3856, %v5994
        %v5996 = vlaneseq
        %v5997 = vshrl.u32 %v5996, 7
        %v5998 = vsub.s32 4, %v5997
        %v5999 = vrot.slane %v3856, %v5998
        %v6000 = vlaneseq
        %v6001 = vshrl.u32 %v6000, 7
        %v6002 = vsub.s32 5, %v6001
        %v6003 = vrot.slane %v3856, %v6002
        %v6004 = vlaneseq
        %v6005 = vshrl.u32 %v6004, 7
        %v6006 = vsub.s32 6, %v6005
        %v6007 = vrot.slane %v3856, %v6006
        %v6008 = vlaneseq
        %v6009 = vshrl.u32 %v6008, 7
        %v6010 = vsub.s32 7, %v6009
        %v6011 = vrot.slane %v3856, %v6010
        %v6012 = vlaneseq
        %v6013 = vshrl.u32 %v6012, 7
        %v6014 = vsub.s32 0, %v6013
        %v6015 = vrot.slane %v3857, %v6014
        %v6016 = vlaneseq
        %v6017 = vshrl.u32 %v6016, 7
        %v6018 = vsub.s32 1, %v6017
        %v6019 = vrot.slane %v3857, %v6018
        %v6020 = vlaneseq
        %v6021 = vshrl.u32 %v6020, 7
        %v6022 = vsub.s32 2, %v6021
        %v6023 = vrot.slane %v3857, %v6022
        %v6024 = vlaneseq
        %v6025 = vshrl.u32 %v6024, 7
        %v6026 = vsub.s32 3, %v6025
        %v6027 = vrot.slane %v3857, %v6026
        %v6028 = vlaneseq
        %v6029 = vshrl.u32 %v6028, 7
        %v6030 = vsub.s32 4, %v6029
        %v6031 = vrot.slane %v3857, %v6030
        %v6032 = vlaneseq
        %v6033 = vshrl.u32 %v6032, 7
        %v6034 = vsub.s32 5, %v6033
        %v6035 = vrot.slane %v3857, %v6034
        %v6036 = vlaneseq
        %v6037 = vshrl.u32 %v6036, 7
        %v6038 = vsub.s32 6, %v6037
        %v6039 = vrot.slane %v3857, %v6038
        %v6040 = vlaneseq
        %v6041 = vshrl.u32 %v6040, 7
        %v6042 = vsub.s32 7, %v6041
        %v6043 = vrot.slane %v3857, %v6042
        %v6044 = vlaneseq
        %v6045 = vshrl.u32 %v6044, 7
        %v6046 = vsub.s32 0, %v6045
        %v6047 = vrot.slane %v3858, %v6046
        %v6048 = vlaneseq
        %v6049 = vshrl.u32 %v6048, 7
        %v6050 = vsub.s32 1, %v6049
        %v6051 = vrot.slane %v3858, %v6050
        %v6052 = vlaneseq
        %v6053 = vshrl.u32 %v6052, 7
        %v6054 = vsub.s32 2, %v6053
        %v6055 = vrot.slane %v3858, %v6054
        %v6056 = vlaneseq
        %v6057 = vshrl.u32 %v6056, 7
        %v6058 = vsub.s32 3, %v6057
        %v6059 = vrot.slane %v3858, %v6058
        %v6060 = vlaneseq
        %v6061 = vshrl.u32 %v6060, 7
        %v6062 = vsub.s32 4, %v6061
        %v6063 = vrot.slane %v3858, %v6062
        %v6064 = vlaneseq
        %v6065 = vshrl.u32 %v6064, 7
        %v6066 = vsub.s32 5, %v6065
        %v6067 = vrot.slane %v3858, %v6066
        %v6068 = vlaneseq
        %v6069 = vshrl.u32 %v6068, 7
        %v6070 = vsub.s32 6, %v6069
        %v6071 = vrot.slane %v3858, %v6070
        %v6072 = vlaneseq
        %v6073 = vshrl.u32 %v6072, 7
        %v6074 = vsub.s32 7, %v6073
        %v6075 = vrot.slane %v3858, %v6074
        %v6076 = vlaneseq
        %v6077 = vshrl.u32 %v6076, 7
        %v6078 = vsub.s32 0, %v6077
        %v6079 = vrot.slane %v3859, %v6078
        %v6080 = vlaneseq
        %v6081 = vshrl.u32 %v6080, 7
        %v6082 = vsub.s32 1, %v6081
        %v6083 = vrot.slane %v3859, %v6082
        %v6084 = vlaneseq
        %v6085 = vshrl.u32 %v6084, 7
        %v6086 = vsub.s32 2, %v6085
        %v6087 = vrot.slane %v3859, %v6086
        %v6088 = vlaneseq
        %v6089 = vshrl.u32 %v6088, 7
        %v6090 = vsub.s32 3, %v6089
        %v6091 = vrot.slane %v3859, %v6090
        %v6092 = vlaneseq
        %v6093 = vshrl.u32 %v6092, 7
        %v6094 = vsub.s32 4, %v6093
        %v6095 = vrot.slane %v3859, %v6094
        %v6096 = vlaneseq
        %v6097 = vshrl.u32 %v6096, 7
        %v6098 = vsub.s32 5, %v6097
        %v6099 = vrot.slane %v3859, %v6098
        %v6100 = vlaneseq
        %v6101 = vshrl.u32 %v6100, 7
        %v6102 = vsub.s32 6, %v6101
        %v6103 = vrot.slane %v3859, %v6102
        %v6104 = vlaneseq
        %v6105 = vshrl.u32 %v6104, 7
        %v6106 = vsub.s32 7, %v6105
        %v6107 = vrot.slane %v3859, %v6106
        %v6108 = vlaneseq
        %v6109 = vshrl.u32 %v6108, 7
        %v6110 = vsub.s32 0, %v6109
        %v6111 = vrot.slane %v3860, %v6110
        %v6112 = vlaneseq
        %v6113 = vshrl.u32 %v6112, 7
        %v6114 = vsub.s32 1, %v6113
        %v6115 = vrot.slane %v3860, %v6114
        %v6116 = vlaneseq
        %v6117 = vshrl.u32 %v6116, 7
        %v6118 = vsub.s32 2, %v6117
        %v6119 = vrot.slane %v3860, %v6118
        %6171 = vmatprep.subr.bf16.mxu0 %v5094
        %6172 = vmatpush1.bf16.msra.mxu0 %v5093
        %6173 = vmatprep.subr.bf16.mxu0 %v5145
        %6174 = vmatpush1.bf16.msra.mxu0 %v5144
        %6175 = vmatprep.subr.bf16.mxu0 %v5196
        %6176 = vmatpush1.bf16.msra.mxu0 %v5195
        %6177 = vmatprep.subr.bf16.mxu0 %v5247
        %6178 = vmatpush1.bf16.msra.mxu0 %v5246
        %6179 = vmatprep.subr.bf16.mxu0 %v5298
        %6180 = vmatpush1.bf16.msra.mxu0 %v5297
        %6181 = vmatprep.subr.bf16.mxu0 %v5349
        %6182 = vmatpush1.bf16.msra.mxu0 %v5348
        %6183 = vmatprep.subr.bf16.mxu0 %v5400
        %6184 = vmatpush1.bf16.msra.mxu0 %v5399
        %6185 = vmatprep.subr.bf16.mxu0 %v5451
        %6186 = vmatpush1.bf16.msra.mxu0 %v5450
        %6187 = vmatprep.subr.bf16.mxu0 0
        %6188 = vmatpush1.bf16.msra.mxu0 0
        %6189 = vmatprep.subr.bf16.mxu0 0
        %6190 = vmatpush1.bf16.msra.mxu0 0
        %6191 = vmatprep.subr.bf16.mxu0 0
        %6192 = vmatpush1.bf16.msra.mxu0 0
        %6193 = vmatprep.subr.bf16.mxu0 0
        %6194 = vmatpush1.bf16.msra.mxu0 0
        %6195 = vmatprep.subr.bf16.mxu0 0
        %6196 = vmatpush1.bf16.msra.mxu0 0
        %6197 = vmatprep.subr.bf16.mxu0 0
        %6198 = vmatpush1.bf16.msra.mxu0 0
        %6199 = vmatprep.subr.bf16.mxu0 0
        %6200 = vmatpush1.bf16.msra.mxu0 0
        %6201 = vmatprep.subr.bf16.mxu0 0
        %6202 = vmatpush1.bf16.msra.mxu0 0
        %6203 = vmatprep.mubr.bf16.mxu0 0
        %6204 = vmatmul.mubr.bf16.gmra.mrb[0].mxu0 %v3437
        %v6205 = vpop.f32.mrb[0].mxu0
        %v6206 = vadd.f32 %v5919, %v6205
        %v6207 = vpop.f32.mrb[0].mxu0
        %v6208 = vadd.f32 %v5923, %v6207
        %v6209 = vpop.f32.mrb[0].mxu0
        %v6210 = vpop.f32.mrb[0].mxu0
        %6211 = vdwg.mxu0
        %6212 = vmatprep.subr.bf16.mxu0 %v5096
        %6213 = vmatpush1.bf16.msra.mxu0 %v5095
        %6214 = vmatprep.subr.bf16.mxu0 %v5147
        %6215 = vmatpush1.bf16.msra.mxu0 %v5146
        %6216 = vmatprep.subr.bf16.mxu0 %v5198
        %6217 = vmatpush1.bf16.msra.mxu0 %v5197
        %6218 = vmatprep.subr.bf16.mxu0 %v5249
        %6219 = vmatpush1.bf16.msra.mxu0 %v5248
        %6220 = vmatprep.subr.bf16.mxu0 %v5300
        %6221 = vmatpush1.bf16.msra.mxu0 %v5299
        %6222 = vmatprep.subr.bf16.mxu0 %v5351
        %6223 = vmatpush1.bf16.msra.mxu0 %v5350
        %6224 = vmatprep.subr.bf16.mxu0 %v5402
        %6225 = vmatpush1.bf16.msra.mxu0 %v5401
        %6226 = vmatprep.subr.bf16.mxu0 %v5453
        %6227 = vmatpush1.bf16.msra.mxu0 %v5452
        %6228 = vmatprep.subr.bf16.mxu0 0
        %6229 = vmatpush1.bf16.msra.mxu0 0
        %6230 = vmatprep.subr.bf16.mxu0 0
        %6231 = vmatpush1.bf16.msra.mxu0 0
        %6232 = vmatprep.subr.bf16.mxu0 0
        %6233 = vmatpush1.bf16.msra.mxu0 0
        %6234 = vmatprep.subr.bf16.mxu0 0
        %6235 = vmatpush1.bf16.msra.mxu0 0
        %6236 = vmatprep.subr.bf16.mxu0 0
        %6237 = vmatpush1.bf16.msra.mxu0 0
        %6238 = vmatprep.subr.bf16.mxu0 0
        %6239 = vmatpush1.bf16.msra.mxu0 0
        %6240 = vmatprep.subr.bf16.mxu0 0
        %6241 = vmatpush1.bf16.msra.mxu0 0
        %6242 = vmatprep.subr.bf16.mxu0 0
        %6243 = vmatpush1.bf16.msra.mxu0 0
        %6244 = vmatprep.mubr.bf16.mxu0 0
        %6245 = vmatmul.mubr.bf16.gmra.mrb[0].mxu0 %v3437
        %v6246 = vpop.f32.mrb[0].mxu0
        %v6247 = vadd.f32 %v5927, %v6246
        %v6248 = vpop.f32.mrb[0].mxu0
        %v6249 = vadd.f32 %v5931, %v6248
        %v6250 = vpop.f32.mrb[0].mxu0
        %v6251 = vpop.f32.mrb[0].mxu0
        %6252 = vdwg.mxu0
        %6253 = vmatprep.subr.bf16.mxu0 %v5098
        %6254 = vmatpush1.bf16.msra.mxu0 %v5097
        %6255 = vmatprep.subr.bf16.mxu0 %v5149
        %6256 = vmatpush1.bf16.msra.mxu0 %v5148
        %6257 = vmatprep.subr.bf16.mxu0 %v5200
        %6258 = vmatpush1.bf16.msra.mxu0 %v5199
        %6259 = vmatprep.subr.bf16.mxu0 %v5251
        %6260 = vmatpush1.bf16.msra.mxu0 %v5250
        %6261 = vmatprep.subr.bf16.mxu0 %v5302
        %6262 = vmatpush1.bf16.msra.mxu0 %v5301
        %6263 = vmatprep.subr.bf16.mxu0 %v5353
        %6264 = vmatpush1.bf16.msra.mxu0 %v5352
        %6265 = vmatprep.subr.bf16.mxu0 %v5404
        %6266 = vmatpush1.bf16.msra.mxu0 %v5403
        %6267 = vmatprep.subr.bf16.mxu0 %v5455
        %6268 = vmatpush1.bf16.msra.mxu0 %v5454
        %6269 = vmatprep.subr.bf16.mxu0 0
        %6270 = vmatpush1.bf16.msra.mxu0 0
        %6271 = vmatprep.subr.bf16.mxu0 0
        %6272 = vmatpush1.bf16.msra.mxu0 0
        %6273 = vmatprep.subr.bf16.mxu0 0
        %6274 = vmatpush1.bf16.msra.mxu0 0
        %6275 = vmatprep.subr.bf16.mxu0 0
        %6276 = vmatpush1.bf16.msra.mxu0 0
        %6277 = vmatprep.subr.bf16.mxu0 0
        %6278 = vmatpush1.bf16.msra.mxu0 0
        %6279 = vmatprep.subr.bf16.mxu0 0
        %6280 = vmatpush1.bf16.msra.mxu0 0
        %6281 = vmatprep.subr.bf16.mxu0 0
        %6282 = vmatpush1.bf16.msra.mxu0 0
        %6283 = vmatprep.subr.bf16.mxu0 0
        %6284 = vmatpush1.bf16.msra.mxu0 0
        %6285 = vmatprep.mubr.bf16.mxu0 0
        %6286 = vmatmul.mubr.bf16.gmra.mrb[0].mxu0 %v3437
        %v6287 = vpop.f32.mrb[0].mxu0
        %v6288 = vadd.f32 %v5935, %v6287
        %v6289 = vpop.f32.mrb[0].mxu0
        %v6290 = vadd.f32 %v5939, %v6289
        %v6291 = vpop.f32.mrb[0].mxu0
        %v6292 = vpop.f32.mrb[0].mxu0
        %6293 = vdwg.mxu0
        %6294 = vmatprep.subr.bf16.mxu0 %v5100
        %6295 = vmatpush1.bf16.msra.mxu0 %v5099
        %6296 = vmatprep.subr.bf16.mxu0 %v5151
        %6297 = vmatpush1.bf16.msra.mxu0 %v5150
        %6298 = vmatprep.subr.bf16.mxu0 %v5202
        %6299 = vmatpush1.bf16.msra.mxu0 %v5201
        %6300 = vmatprep.subr.bf16.mxu0 %v5253
        %6301 = vmatpush1.bf16.msra.mxu0 %v5252
        %6302 = vmatprep.subr.bf16.mxu0 %v5304
        %6303 = vmatpush1.bf16.msra.mxu0 %v5303
        %6304 = vmatprep.subr.bf16.mxu0 %v5355
        %6305 = vmatpush1.bf16.msra.mxu0 %v5354
        %6306 = vmatprep.subr.bf16.mxu0 %v5406
        %6307 = vmatpush1.bf16.msra.mxu0 %v5405
        %6308 = vmatprep.subr.bf16.mxu0 %v5457
        %6309 = vmatpush1.bf16.msra.mxu0 %v5456
        %6310 = vmatprep.subr.bf16.mxu0 0
        %6311 = vmatpush1.bf16.msra.mxu0 0
        %6312 = vmatprep.subr.bf16.mxu0 0
        %6313 = vmatpush1.bf16.msra.mxu0 0
        %6314 = vmatprep.subr.bf16.mxu0 0
        %6315 = vmatpush1.bf16.msra.mxu0 0
        %6316 = vmatprep.subr.bf16.mxu0 0
        %6317 = vmatpush1.bf16.msra.mxu0 0
        %6318 = vmatprep.subr.bf16.mxu0 0
        %6319 = vmatpush1.bf16.msra.mxu0 0
        %6320 = vmatprep.subr.bf16.mxu0 0
        %6321 = vmatpush1.bf16.msra.mxu0 0
        %6322 = vmatprep.subr.bf16.mxu0 0
        %6323 = vmatpush1.bf16.msra.mxu0 0
        %6324 = vmatprep.subr.bf16.mxu0 0
        %6325 = vmatpush1.bf16.msra.mxu0 0
        %6326 = vmatprep.mubr.bf16.mxu0 0
        %6327 = vmatmul.mubr.bf16.gmra.mrb[0].mxu0 %v3437
        %v6328 = vpop.f32.mrb[0].mxu0
        %v6329 = vadd.f32 %v5943, %v6328
        %v6330 = vpop.f32.mrb[0].mxu0
        %v6331 = vadd.f32 %v5947, %v6330
        %v6332 = vpop.f32.mrb[0].mxu0
        %v6333 = vpop.f32.mrb[0].mxu0
        %6334 = vdwg.mxu0
        %6335 = vmatprep.subr.bf16.mxu0 %v5102
        %6336 = vmatpush1.bf16.msra.mxu0 %v5101
        %6337 = vmatprep.subr.bf16.mxu0 %v5153
        %6338 = vmatpush1.bf16.msra.mxu0 %v5152
        %6339 = vmatprep.subr.bf16.mxu0 %v5204
        %6340 = vmatpush1.bf16.msra.mxu0 %v5203
        %6341 = vmatprep.subr.bf16.mxu0 %v5255
        %6342 = vmatpush1.bf16.msra.mxu0 %v5254
        %6343 = vmatprep.subr.bf16.mxu0 %v5306
        %6344 = vmatpush1.bf16.msra.mxu0 %v5305
        %6345 = vmatprep.subr.bf16.mxu0 %v5357
        %6346 = vmatpush1.bf16.msra.mxu0 %v5356
        %6347 = vmatprep.subr.bf16.mxu0 %v5408
        %6348 = vmatpush1.bf16.msra.mxu0 %v5407
        %6349 = vmatprep.subr.bf16.mxu0 %v5459
        %6350 = vmatpush1.bf16.msra.mxu0 %v5458
        %6351 = vmatprep.subr.bf16.mxu0 0
        %6352 = vmatpush1.bf16.msra.mxu0 0
        %6353 = vmatprep.subr.bf16.mxu0 0
        %6354 = vmatpush1.bf16.msra.mxu0 0
        %6355 = vmatprep.subr.bf16.mxu0 0
        %6356 = vmatpush1.bf16.msra.mxu0 0
        %6357 = vmatprep.subr.bf16.mxu0 0
        %6358 = vmatpush1.bf16.msra.mxu0 0
        %6359 = vmatprep.subr.bf16.mxu0 0
        %6360 = vmatpush1.bf16.msra.mxu0 0
        %6361 = vmatprep.subr.bf16.mxu0 0
        %6362 = vmatpush1.bf16.msra.mxu0 0
        %6363 = vmatprep.subr.bf16.mxu0 0
        %6364 = vmatpush1.bf16.msra.mxu0 0
        %6365 = vmatprep.subr.bf16.mxu0 0
        %6366 = vmatpush1.bf16.msra.mxu0 0
        %6367 = vmatprep.mubr.bf16.mxu0 0
        %6368 = vmatmul.mubr.bf16.gmra.mrb[0].mxu0 %v3437
        %v6369 = vpop.f32.mrb[0].mxu0
        %v6370 = vadd.f32 %v5951, %v6369
        %v6371 = vpop.f32.mrb[0].mxu0
        %v6372 = vadd.f32 %v5955, %v6371
        %v6373 = vpop.f32.mrb[0].mxu0
        %v6374 = vpop.f32.mrb[0].mxu0
        %6375 = vdwg.mxu0
        %6376 = vmatprep.subr.bf16.mxu0 %v5104
        %6377 = vmatpush1.bf16.msra.mxu0 %v5103
        %6378 = vmatprep.subr.bf16.mxu0 %v5155
        %6379 = vmatpush1.bf16.msra.mxu0 %v5154
        %6380 = vmatprep.subr.bf16.mxu0 %v5206
        %6381 = vmatpush1.bf16.msra.mxu0 %v5205
        %6382 = vmatprep.subr.bf16.mxu0 %v5257
        %6383 = vmatpush1.bf16.msra.mxu0 %v5256
        %6384 = vmatprep.subr.bf16.mxu0 %v5308
        %6385 = vmatpush1.bf16.msra.mxu0 %v5307
        %6386 = vmatprep.subr.bf16.mxu0 %v5359
        %6387 = vmatpush1.bf16.msra.mxu0 %v5358
        %6388 = vmatprep.subr.bf16.mxu0 %v5410
        %6389 = vmatpush1.bf16.msra.mxu0 %v5409
        %6390 = vmatprep.subr.bf16.mxu0 %v5461
        %6391 = vmatpush1.bf16.msra.mxu0 %v5460
        %6392 = vmatprep.subr.bf16.mxu0 0
        %6393 = vmatpush1.bf16.msra.mxu0 0
        %6394 = vmatprep.subr.bf16.mxu0 0
        %6395 = vmatpush1.bf16.msra.mxu0 0
        %6396 = vmatprep.subr.bf16.mxu0 0
        %6397 = vmatpush1.bf16.msra.mxu0 0
        %6398 = vmatprep.subr.bf16.mxu0 0
        %6399 = vmatpush1.bf16.msra.mxu0 0
        %6400 = vmatprep.subr.bf16.mxu0 0
        %6401 = vmatpush1.bf16.msra.mxu0 0
        %6402 = vmatprep.subr.bf16.mxu0 0
        %6403 = vmatpush1.bf16.msra.mxu0 0
        %6404 = vmatprep.subr.bf16.mxu0 0
        %6405 = vmatpush1.bf16.msra.mxu0 0
        %6406 = vmatprep.subr.bf16.mxu0 0
        %6407 = vmatpush1.bf16.msra.mxu0 0
        %6408 = vmatprep.mubr.bf16.mxu0 0
        %6409 = vmatmul.mubr.bf16.gmra.mrb[0].mxu0 %v3437
        %v6410 = vpop.f32.mrb[0].mxu0
        %v6411 = vadd.f32 %v5959, %v6410
        %v6412 = vpop.f32.mrb[0].mxu0
        %v6413 = vadd.f32 %v5963, %v6412
        %v6414 = vpop.f32.mrb[0].mxu0
        %v6415 = vpop.f32.mrb[0].mxu0
        %6416 = vdwg.mxu0
        %6417 = vmatprep.subr.bf16.mxu0 %v5106
        %6418 = vmatpush1.bf16.msra.mxu0 %v5105
        %6419 = vmatprep.subr.bf16.mxu0 %v5157
        %6420 = vmatpush1.bf16.msra.mxu0 %v5156
        %6421 = vmatprep.subr.bf16.mxu0 %v5208
        %6422 = vmatpush1.bf16.msra.mxu0 %v5207
        %6423 = vmatprep.subr.bf16.mxu0 %v5259
        %6424 = vmatpush1.bf16.msra.mxu0 %v5258
        %6425 = vmatprep.subr.bf16.mxu0 %v5310
        %6426 = vmatpush1.bf16.msra.mxu0 %v5309
        %6427 = vmatprep.subr.bf16.mxu0 %v5361
        %6428 = vmatpush1.bf16.msra.mxu0 %v5360
        %6429 = vmatprep.subr.bf16.mxu0 %v5412
        %6430 = vmatpush1.bf16.msra.mxu0 %v5411
        %6431 = vmatprep.subr.bf16.mxu0 %v5463
        %6432 = vmatpush1.bf16.msra.mxu0 %v5462
        %6433 = vmatprep.subr.bf16.mxu0 0
        %6434 = vmatpush1.bf16.msra.mxu0 0
        %6435 = vmatprep.subr.bf16.mxu0 0
        %6436 = vmatpush1.bf16.msra.mxu0 0
        %6437 = vmatprep.subr.bf16.mxu0 0
        %6438 = vmatpush1.bf16.msra.mxu0 0
        %6439 = vmatprep.subr.bf16.mxu0 0
        %6440 = vmatpush1.bf16.msra.mxu0 0
        %6441 = vmatprep.subr.bf16.mxu0 0
        %6442 = vmatpush1.bf16.msra.mxu0 0
        %6443 = vmatprep.subr.bf16.mxu0 0
        %6444 = vmatpush1.bf16.msra.mxu0 0
        %6445 = vmatprep.subr.bf16.mxu0 0
        %6446 = vmatpush1.bf16.msra.mxu0 0
        %6447 = vmatprep.subr.bf16.mxu0 0
        %6448 = vmatpush1.bf16.msra.mxu0 0
        %6449 = vmatprep.mubr.bf16.mxu0 0
        %6450 = vmatmul.mubr.bf16.gmra.mrb[0].mxu0 %v3437
        %v6451 = vpop.f32.mrb[0].mxu0
        %v6452 = vadd.f32 %v5967, %v6451
        %v6453 = vpop.f32.mrb[0].mxu0
        %v6454 = vadd.f32 %v5971, %v6453
        %v6455 = vpop.f32.mrb[0].mxu0
        %v6456 = vpop.f32.mrb[0].mxu0
        %6457 = vdwg.mxu0
        %6458 = vmatprep.subr.bf16.mxu0 %v5108
        %6459 = vmatpush1.bf16.msra.mxu0 %v5107
        %6460 = vmatprep.subr.bf16.mxu0 %v5159
        %6461 = vmatpush1.bf16.msra.mxu0 %v5158
        %6462 = vmatprep.subr.bf16.mxu0 %v5210
        %6463 = vmatpush1.bf16.msra.mxu0 %v5209
        %6464 = vmatprep.subr.bf16.mxu0 %v5261
        %6465 = vmatpush1.bf16.msra.mxu0 %v5260
        %6466 = vmatprep.subr.bf16.mxu0 %v5312
        %6467 = vmatpush1.bf16.msra.mxu0 %v5311
        %6468 = vmatprep.subr.bf16.mxu0 %v5363
        %6469 = vmatpush1.bf16.msra.mxu0 %v5362
        %6470 = vmatprep.subr.bf16.mxu0 %v5414
        %6471 = vmatpush1.bf16.msra.mxu0 %v5413
        %6472 = vmatprep.subr.bf16.mxu0 %v5465
        %6473 = vmatpush1.bf16.msra.mxu0 %v5464
        %6474 = vmatprep.subr.bf16.mxu0 0
        %6475 = vmatpush1.bf16.msra.mxu0 0
        %6476 = vmatprep.subr.bf16.mxu0 0
        %6477 = vmatpush1.bf16.msra.mxu0 0
        %6478 = vmatprep.subr.bf16.mxu0 0
        %6479 = vmatpush1.bf16.msra.mxu0 0
        %6480 = vmatprep.subr.bf16.mxu0 0
        %6481 = vmatpush1.bf16.msra.mxu0 0
        %6482 = vmatprep.subr.bf16.mxu0 0
        %6483 = vmatpush1.bf16.msra.mxu0 0
        %6484 = vmatprep.subr.bf16.mxu0 0
        %6485 = vmatpush1.bf16.msra.mxu0 0
        %6486 = vmatprep.subr.bf16.mxu0 0
        %6487 = vmatpush1.bf16.msra.mxu0 0
        %6488 = vmatprep.subr.bf16.mxu0 0
        %6489 = vmatpush1.bf16.msra.mxu0 0
        %6490 = vmatprep.mubr.bf16.mxu0 0
        %6491 = vmatmul.mubr.bf16.gmra.mrb[0].mxu0 %v3437
        %v6492 = vpop.f32.mrb[0].mxu0
        %v6493 = vadd.f32 %v5975, %v6492
        %v6494 = vpop.f32.mrb[0].mxu0
        %v6495 = vadd.f32 %v5979, %v6494
        %v6496 = vpop.f32.mrb[0].mxu0
        %v6497 = vpop.f32.mrb[0].mxu0
        %6498 = vdwg.mxu0
        %6499 = vmatprep.subr.bf16.mxu0 %v5110
        %6500 = vmatpush1.bf16.msra.mxu0 %v5109
        %6501 = vmatprep.subr.bf16.mxu0 %v5161
        %6502 = vmatpush1.bf16.msra.mxu0 %v5160
        %6503 = vmatprep.subr.bf16.mxu0 %v5212
        %6504 = vmatpush1.bf16.msra.mxu0 %v5211
        %6505 = vmatprep.subr.bf16.mxu0 %v5263
        %6506 = vmatpush1.bf16.msra.mxu0 %v5262
        %6507 = vmatprep.subr.bf16.mxu0 %v5314
        %6508 = vmatpush1.bf16.msra.mxu0 %v5313
        %6509 = vmatprep.subr.bf16.mxu0 %v5365
        %6510 = vmatpush1.bf16.msra.mxu0 %v5364
        %6511 = vmatprep.subr.bf16.mxu0 %v5416
        %6512 = vmatpush1.bf16.msra.mxu0 %v5415
        %6513 = vmatprep.subr.bf16.mxu0 %v5467
        %6514 = vmatpush1.bf16.msra.mxu0 %v5466
        %6515 = vmatprep.subr.bf16.mxu0 0
        %6516 = vmatpush1.bf16.msra.mxu0 0
        %6517 = vmatprep.subr.bf16.mxu0 0
        %6518 = vmatpush1.bf16.msra.mxu0 0
        %6519 = vmatprep.subr.bf16.mxu0 0
        %6520 = vmatpush1.bf16.msra.mxu0 0
        %6521 = vmatprep.subr.bf16.mxu0 0
        %6522 = vmatpush1.bf16.msra.mxu0 0
        %6523 = vmatprep.subr.bf16.mxu0 0
        %6524 = vmatpush1.bf16.msra.mxu0 0
        %6525 = vmatprep.subr.bf16.mxu0 0
        %6526 = vmatpush1.bf16.msra.mxu0 0
        %6527 = vmatprep.subr.bf16.mxu0 0
        %6528 = vmatpush1.bf16.msra.mxu0 0
        %6529 = vmatprep.subr.bf16.mxu0 0
        %6530 = vmatpush1.bf16.msra.mxu0 0
        %6531 = vmatprep.mubr.bf16.mxu0 0
        %6532 = vmatmul.mubr.bf16.gmra.mrb[0].mxu0 %v3437
        %v6533 = vpop.f32.mrb[0].mxu0
        %v6534 = vadd.f32 %v5983, %v6533
        %v6535 = vpop.f32.mrb[0].mxu0
        %v6536 = vadd.f32 %v5987, %v6535
        %v6537 = vpop.f32.mrb[0].mxu0
        %v6538 = vpop.f32.mrb[0].mxu0
        %6539 = vdwg.mxu0
        %6540 = vmatprep.subr.bf16.mxu0 %v5112
        %6541 = vmatpush1.bf16.msra.mxu0 %v5111
        %6542 = vmatprep.subr.bf16.mxu0 %v5163
        %6543 = vmatpush1.bf16.msra.mxu0 %v5162
        %6544 = vmatprep.subr.bf16.mxu0 %v5214
        %6545 = vmatpush1.bf16.msra.mxu0 %v5213
        %6546 = vmatprep.subr.bf16.mxu0 %v5265
        %6547 = vmatpush1.bf16.msra.mxu0 %v5264
        %6548 = vmatprep.subr.bf16.mxu0 %v5316
        %6549 = vmatpush1.bf16.msra.mxu0 %v5315
        %6550 = vmatprep.subr.bf16.mxu0 %v5367
        %6551 = vmatpush1.bf16.msra.mxu0 %v5366
        %6552 = vmatprep.subr.bf16.mxu0 %v5418
        %6553 = vmatpush1.bf16.msra.mxu0 %v5417
        %6554 = vmatprep.subr.bf16.mxu0 %v5469
        %6555 = vmatpush1.bf16.msra.mxu0 %v5468
        %6556 = vmatprep.subr.bf16.mxu0 0
        %6557 = vmatpush1.bf16.msra.mxu0 0
        %6558 = vmatprep.subr.bf16.mxu0 0
        %6559 = vmatpush1.bf16.msra.mxu0 0
        %6560 = vmatprep.subr.bf16.mxu0 0
        %6561 = vmatpush1.bf16.msra.mxu0 0
        %6562 = vmatprep.subr.bf16.mxu0 0
        %6563 = vmatpush1.bf16.msra.mxu0 0
        %6564 = vmatprep.subr.bf16.mxu0 0
        %6565 = vmatpush1.bf16.msra.mxu0 0
        %6566 = vmatprep.subr.bf16.mxu0 0
        %6567 = vmatpush1.bf16.msra.mxu0 0
        %6568 = vmatprep.subr.bf16.mxu0 0
        %6569 = vmatpush1.bf16.msra.mxu0 0
        %6570 = vmatprep.subr.bf16.mxu0 0
        %6571 = vmatpush1.bf16.msra.mxu0 0
        %6572 = vmatprep.mubr.bf16.mxu0 0
        %6573 = vmatmul.mubr.bf16.gmra.mrb[0].mxu0 %v3437
        %v6574 = vpop.f32.mrb[0].mxu0
        %v6575 = vadd.f32 %v5991, %v6574
        %v6576 = vpop.f32.mrb[0].mxu0
        %v6577 = vadd.f32 %v5995, %v6576
        %v6578 = vpop.f32.mrb[0].mxu0
        %v6579 = vpop.f32.mrb[0].mxu0
        %6580 = vdwg.mxu0
        %6581 = vmatprep.subr.bf16.mxu0 %v5114
        %6582 = vmatpush1.bf16.msra.mxu0 %v5113
        %6583 = vmatprep.subr.bf16.mxu0 %v5165
        %6584 = vmatpush1.bf16.msra.mxu0 %v5164
        %6585 = vmatprep.subr.bf16.mxu0 %v5216
        %6586 = vmatpush1.bf16.msra.mxu0 %v5215
        %6587 = vmatprep.subr.bf16.mxu0 %v5267
        %6588 = vmatpush1.bf16.msra.mxu0 %v5266
        %6589 = vmatprep.subr.bf16.mxu0 %v5318
        %6590 = vmatpush1.bf16.msra.mxu0 %v5317
        %6591 = vmatprep.subr.bf16.mxu0 %v5369
        %6592 = vmatpush1.bf16.msra.mxu0 %v5368
        %6593 = vmatprep.subr.bf16.mxu0 %v5420
        %6594 = vmatpush1.bf16.msra.mxu0 %v5419
        %6595 = vmatprep.subr.bf16.mxu0 %v5471
        %6596 = vmatpush1.bf16.msra.mxu0 %v5470
        %6597 = vmatprep.subr.bf16.mxu0 0
        %6598 = vmatpush1.bf16.msra.mxu0 0
        %6599 = vmatprep.subr.bf16.mxu0 0
        %6600 = vmatpush1.bf16.msra.mxu0 0
        %6601 = vmatprep.subr.bf16.mxu0 0
        %6602 = vmatpush1.bf16.msra.mxu0 0
        %6603 = vmatprep.subr.bf16.mxu0 0
        %6604 = vmatpush1.bf16.msra.mxu0 0
        %6605 = vmatprep.subr.bf16.mxu0 0
        %6606 = vmatpush1.bf16.msra.mxu0 0
        %6607 = vmatprep.subr.bf16.mxu0 0
        %6608 = vmatpush1.bf16.msra.mxu0 0
        %6609 = vmatprep.subr.bf16.mxu0 0
        %6610 = vmatpush1.bf16.msra.mxu0 0
        %6611 = vmatprep.subr.bf16.mxu0 0
        %6612 = vmatpush1.bf16.msra.mxu0 0
        %6613 = vmatprep.mubr.bf16.mxu0 0
        %6614 = vmatmul.mubr.bf16.gmra.mrb[0].mxu0 %v3437
        %v6615 = vpop.f32.mrb[0].mxu0
        %v6616 = vadd.f32 %v5999, %v6615
        %v6617 = vpop.f32.mrb[0].mxu0
        %v6618 = vadd.f32 %v6003, %v6617
        %v6619 = vpop.f32.mrb[0].mxu0
        %v6620 = vpop.f32.mrb[0].mxu0
        %6621 = vdwg.mxu0
        %6622 = vmatprep.subr.bf16.mxu0 %v5116
        %6623 = vmatpush1.bf16.msra.mxu0 %v5115
        %6624 = vmatprep.subr.bf16.mxu0 %v5167
        %6625 = vmatpush1.bf16.msra.mxu0 %v5166
        %6626 = vmatprep.subr.bf16.mxu0 %v5218
        %6627 = vmatpush1.bf16.msra.mxu0 %v5217
        %6628 = vmatprep.subr.bf16.mxu0 %v5269
        %6629 = vmatpush1.bf16.msra.mxu0 %v5268
        %6630 = vmatprep.subr.bf16.mxu0 %v5320
        %6631 = vmatpush1.bf16.msra.mxu0 %v5319
        %6632 = vmatprep.subr.bf16.mxu0 %v5371
        %6633 = vmatpush1.bf16.msra.mxu0 %v5370
        %6634 = vmatprep.subr.bf16.mxu0 %v5422
        %6635 = vmatpush1.bf16.msra.mxu0 %v5421
        %6636 = vmatprep.subr.bf16.mxu0 %v5473
        %6637 = vmatpush1.bf16.msra.mxu0 %v5472
        %6638 = vmatprep.subr.bf16.mxu0 0
        %6639 = vmatpush1.bf16.msra.mxu0 0
        %6640 = vmatprep.subr.bf16.mxu0 0
        %6641 = vmatpush1.bf16.msra.mxu0 0
        %6642 = vmatprep.subr.bf16.mxu0 0
        %6643 = vmatpush1.bf16.msra.mxu0 0
        %6644 = vmatprep.subr.bf16.mxu0 0
        %6645 = vmatpush1.bf16.msra.mxu0 0
        %6646 = vmatprep.subr.bf16.mxu0 0
        %6647 = vmatpush1.bf16.msra.mxu0 0
        %6648 = vmatprep.subr.bf16.mxu0 0
        %6649 = vmatpush1.bf16.msra.mxu0 0
        %6650 = vmatprep.subr.bf16.mxu0 0
        %6651 = vmatpush1.bf16.msra.mxu0 0
        %6652 = vmatprep.subr.bf16.mxu0 0
        %6653 = vmatpush1.bf16.msra.mxu0 0
        %6654 = vmatprep.mubr.bf16.mxu0 0
        %6655 = vmatmul.mubr.bf16.gmra.mrb[0].mxu0 %v3437
        %v6656 = vpop.f32.mrb[0].mxu0
        %v6657 = vadd.f32 %v6007, %v6656
        %v6658 = vpop.f32.mrb[0].mxu0
        %v6659 = vadd.f32 %v6011, %v6658
        %v6660 = vpop.f32.mrb[0].mxu0
        %v6661 = vpop.f32.mrb[0].mxu0
        %6662 = vdwg.mxu0
        %6663 = vmatprep.subr.bf16.mxu0 %v5118
        %6664 = vmatpush1.bf16.msra.mxu0 %v5117
        %6665 = vmatprep.subr.bf16.mxu0 %v5169
        %6666 = vmatpush1.bf16.msra.mxu0 %v5168
        %6667 = vmatprep.subr.bf16.mxu0 %v5220
        %6668 = vmatpush1.bf16.msra.mxu0 %v5219
        %6669 = vmatprep.subr.bf16.mxu0 %v5271
        %6670 = vmatpush1.bf16.msra.mxu0 %v5270
        %6671 = vmatprep.subr.bf16.mxu0 %v5322
        %6672 = vmatpush1.bf16.msra.mxu0 %v5321
        %6673 = vmatprep.subr.bf16.mxu0 %v5373
        %6674 = vmatpush1.bf16.msra.mxu0 %v5372
        %6675 = vmatprep.subr.bf16.mxu0 %v5424
        %6676 = vmatpush1.bf16.msra.mxu0 %v5423
        %6677 = vmatprep.subr.bf16.mxu0 %v5475
        %6678 = vmatpush1.bf16.msra.mxu0 %v5474
        %6679 = vmatprep.subr.bf16.mxu0 0
        %6680 = vmatpush1.bf16.msra.mxu0 0
        %6681 = vmatprep.subr.bf16.mxu0 0
        %6682 = vmatpush1.bf16.msra.mxu0 0
        %6683 = vmatprep.subr.bf16.mxu0 0
        %6684 = vmatpush1.bf16.msra.mxu0 0
        %6685 = vmatprep.subr.bf16.mxu0 0
        %6686 = vmatpush1.bf16.msra.mxu0 0
        %6687 = vmatprep.subr.bf16.mxu0 0
        %6688 = vmatpush1.bf16.msra.mxu0 0
        %6689 = vmatprep.subr.bf16.mxu0 0
        %6690 = vmatpush1.bf16.msra.mxu0 0
        %6691 = vmatprep.subr.bf16.mxu0 0
        %6692 = vmatpush1.bf16.msra.mxu0 0
        %6693 = vmatprep.subr.bf16.mxu0 0
        %6694 = vmatpush1.bf16.msra.mxu0 0
        %6695 = vmatprep.mubr.bf16.mxu0 0
        %6696 = vmatmul.mubr.bf16.gmra.mrb[0].mxu0 %v3437
        %v6697 = vpop.f32.mrb[0].mxu0
        %v6698 = vadd.f32 %v6015, %v6697
        %v6699 = vpop.f32.mrb[0].mxu0
        %v6700 = vadd.f32 %v6019, %v6699
        %v6701 = vpop.f32.mrb[0].mxu0
        %v6702 = vpop.f32.mrb[0].mxu0
        %6703 = vdwg.mxu0
        %6704 = vmatprep.subr.bf16.mxu0 %v5120
        %6705 = vmatpush1.bf16.msra.mxu0 %v5119
        %6706 = vmatprep.subr.bf16.mxu0 %v5171
        %6707 = vmatpush1.bf16.msra.mxu0 %v5170
        %6708 = vmatprep.subr.bf16.mxu0 %v5222
        %6709 = vmatpush1.bf16.msra.mxu0 %v5221
        %6710 = vmatprep.subr.bf16.mxu0 %v5273
        %6711 = vmatpush1.bf16.msra.mxu0 %v5272
        %6712 = vmatprep.subr.bf16.mxu0 %v5324
        %6713 = vmatpush1.bf16.msra.mxu0 %v5323
        %6714 = vmatprep.subr.bf16.mxu0 %v5375
        %6715 = vmatpush1.bf16.msra.mxu0 %v5374
        %6716 = vmatprep.subr.bf16.mxu0 %v5426
        %6717 = vmatpush1.bf16.msra.mxu0 %v5425
        %6718 = vmatprep.subr.bf16.mxu0 %v5477
        %6719 = vmatpush1.bf16.msra.mxu0 %v5476
        %6720 = vmatprep.subr.bf16.mxu0 0
        %6721 = vmatpush1.bf16.msra.mxu0 0
        %6722 = vmatprep.subr.bf16.mxu0 0
        %6723 = vmatpush1.bf16.msra.mxu0 0
        %6724 = vmatprep.subr.bf16.mxu0 0
        %6725 = vmatpush1.bf16.msra.mxu0 0
        %6726 = vmatprep.subr.bf16.mxu0 0
        %6727 = vmatpush1.bf16.msra.mxu0 0
        %6728 = vmatprep.subr.bf16.mxu0 0
        %6729 = vmatpush1.bf16.msra.mxu0 0
        %6730 = vmatprep.subr.bf16.mxu0 0
        %6731 = vmatpush1.bf16.msra.mxu0 0
        %6732 = vmatprep.subr.bf16.mxu0 0
        %6733 = vmatpush1.bf16.msra.mxu0 0
        %6734 = vmatprep.subr.bf16.mxu0 0
        %6735 = vmatpush1.bf16.msra.mxu0 0
        %6736 = vmatprep.mubr.bf16.mxu0 0
        %6737 = vmatmul.mubr.bf16.gmra.mrb[0].mxu0 %v3437
        %v6738 = vpop.f32.mrb[0].mxu0
        %v6739 = vadd.f32 %v6023, %v6738
        %v6740 = vpop.f32.mrb[0].mxu0
        %v6741 = vadd.f32 %v6027, %v6740
        %v6742 = vpop.f32.mrb[0].mxu0
        %v6743 = vpop.f32.mrb[0].mxu0
        %6744 = vdwg.mxu0
        %6745 = vmatprep.subr.bf16.mxu0 %v5122
        %6746 = vmatpush1.bf16.msra.mxu0 %v5121
        %6747 = vmatprep.subr.bf16.mxu0 %v5173
        %6748 = vmatpush1.bf16.msra.mxu0 %v5172
        %6749 = vmatprep.subr.bf16.mxu0 %v5224
        %6750 = vmatpush1.bf16.msra.mxu0 %v5223
        %6751 = vmatprep.subr.bf16.mxu0 %v5275
        %6752 = vmatpush1.bf16.msra.mxu0 %v5274
        %6753 = vmatprep.subr.bf16.mxu0 %v5326
        %6754 = vmatpush1.bf16.msra.mxu0 %v5325
        %6755 = vmatprep.subr.bf16.mxu0 %v5377
        %6756 = vmatpush1.bf16.msra.mxu0 %v5376
        %6757 = vmatprep.subr.bf16.mxu0 %v5428
        %6758 = vmatpush1.bf16.msra.mxu0 %v5427
        %6759 = vmatprep.subr.bf16.mxu0 %v5479
        %6760 = vmatpush1.bf16.msra.mxu0 %v5478
        %6761 = vmatprep.subr.bf16.mxu0 0
        %6762 = vmatpush1.bf16.msra.mxu0 0
        %6763 = vmatprep.subr.bf16.mxu0 0
        %6764 = vmatpush1.bf16.msra.mxu0 0
        %6765 = vmatprep.subr.bf16.mxu0 0
        %6766 = vmatpush1.bf16.msra.mxu0 0
        %6767 = vmatprep.subr.bf16.mxu0 0
        %6768 = vmatpush1.bf16.msra.mxu0 0
        %6769 = vmatprep.subr.bf16.mxu0 0
        %6770 = vmatpush1.bf16.msra.mxu0 0
        %6771 = vmatprep.subr.bf16.mxu0 0
        %6772 = vmatpush1.bf16.msra.mxu0 0
        %6773 = vmatprep.subr.bf16.mxu0 0
        %6774 = vmatpush1.bf16.msra.mxu0 0
        %6775 = vmatprep.subr.bf16.mxu0 0
        %6776 = vmatpush1.bf16.msra.mxu0 0
        %6777 = vmatprep.mubr.bf16.mxu0 0
        %6778 = vmatmul.mubr.bf16.gmra.mrb[0].mxu0 %v3437
        %v6779 = vpop.f32.mrb[0].mxu0
        %v6780 = vadd.f32 %v6031, %v6779
        %v6781 = vpop.f32.mrb[0].mxu0
        %v6782 = vadd.f32 %v6035, %v6781
        %v6783 = vpop.f32.mrb[0].mxu0
        %v6784 = vpop.f32.mrb[0].mxu0
        %6785 = vdwg.mxu0
        %6786 = vmatprep.subr.bf16.mxu0 %v5124
        %6787 = vmatpush1.bf16.msra.mxu0 %v5123
        %6788 = vmatprep.subr.bf16.mxu0 %v5175
        %6789 = vmatpush1.bf16.msra.mxu0 %v5174
        %6790 = vmatprep.subr.bf16.mxu0 %v5226
        %6791 = vmatpush1.bf16.msra.mxu0 %v5225
        %6792 = vmatprep.subr.bf16.mxu0 %v5277
        %6793 = vmatpush1.bf16.msra.mxu0 %v5276
        %6794 = vmatprep.subr.bf16.mxu0 %v5328
        %6795 = vmatpush1.bf16.msra.mxu0 %v5327
        %6796 = vmatprep.subr.bf16.mxu0 %v5379
        %6797 = vmatpush1.bf16.msra.mxu0 %v5378
        %6798 = vmatprep.subr.bf16.mxu0 %v5430
        %6799 = vmatpush1.bf16.msra.mxu0 %v5429
        %6800 = vmatprep.subr.bf16.mxu0 %v5481
        %6801 = vmatpush1.bf16.msra.mxu0 %v5480
        %6802 = vmatprep.subr.bf16.mxu0 0
        %6803 = vmatpush1.bf16.msra.mxu0 0
        %6804 = vmatprep.subr.bf16.mxu0 0
        %6805 = vmatpush1.bf16.msra.mxu0 0
        %6806 = vmatprep.subr.bf16.mxu0 0
        %6807 = vmatpush1.bf16.msra.mxu0 0
        %6808 = vmatprep.subr.bf16.mxu0 0
        %6809 = vmatpush1.bf16.msra.mxu0 0
        %6810 = vmatprep.subr.bf16.mxu0 0
        %6811 = vmatpush1.bf16.msra.mxu0 0
        %6812 = vmatprep.subr.bf16.mxu0 0
        %6813 = vmatpush1.bf16.msra.mxu0 0
        %6814 = vmatprep.subr.bf16.mxu0 0
        %6815 = vmatpush1.bf16.msra.mxu0 0
        %6816 = vmatprep.subr.bf16.mxu0 0
        %6817 = vmatpush1.bf16.msra.mxu0 0
        %6818 = vmatprep.mubr.bf16.mxu0 0
        %6819 = vmatmul.mubr.bf16.gmra.mrb[0].mxu0 %v3437
        %v6820 = vpop.f32.mrb[0].mxu0
        %v6821 = vadd.f32 %v6039, %v6820
        %v6822 = vpop.f32.mrb[0].mxu0
        %v6823 = vadd.f32 %v6043, %v6822
        %v6824 = vpop.f32.mrb[0].mxu0
        %v6825 = vpop.f32.mrb[0].mxu0
        %6826 = vdwg.mxu0
        %6827 = vmatprep.subr.bf16.mxu0 %v5126
        %6828 = vmatpush1.bf16.msra.mxu0 %v5125
        %6829 = vmatprep.subr.bf16.mxu0 %v5177
        %6830 = vmatpush1.bf16.msra.mxu0 %v5176
        %6831 = vmatprep.subr.bf16.mxu0 %v5228
        %6832 = vmatpush1.bf16.msra.mxu0 %v5227
        %6833 = vmatprep.subr.bf16.mxu0 %v5279
        %6834 = vmatpush1.bf16.msra.mxu0 %v5278
        %6835 = vmatprep.subr.bf16.mxu0 %v5330
        %6836 = vmatpush1.bf16.msra.mxu0 %v5329
        %6837 = vmatprep.subr.bf16.mxu0 %v5381
        %6838 = vmatpush1.bf16.msra.mxu0 %v5380
        %6839 = vmatprep.subr.bf16.mxu0 %v5432
        %6840 = vmatpush1.bf16.msra.mxu0 %v5431
        %6841 = vmatprep.subr.bf16.mxu0 %v5483
        %6842 = vmatpush1.bf16.msra.mxu0 %v5482
        %6843 = vmatprep.subr.bf16.mxu0 0
        %6844 = vmatpush1.bf16.msra.mxu0 0
        %6845 = vmatprep.subr.bf16.mxu0 0
        %6846 = vmatpush1.bf16.msra.mxu0 0
        %6847 = vmatprep.subr.bf16.mxu0 0
        %6848 = vmatpush1.bf16.msra.mxu0 0
        %6849 = vmatprep.subr.bf16.mxu0 0
        %6850 = vmatpush1.bf16.msra.mxu0 0
        %6851 = vmatprep.subr.bf16.mxu0 0
        %6852 = vmatpush1.bf16.msra.mxu0 0
        %6853 = vmatprep.subr.bf16.mxu0 0
        %6854 = vmatpush1.bf16.msra.mxu0 0
        %6855 = vmatprep.subr.bf16.mxu0 0
        %6856 = vmatpush1.bf16.msra.mxu0 0
        %6857 = vmatprep.subr.bf16.mxu0 0
        %6858 = vmatpush1.bf16.msra.mxu0 0
        %6859 = vmatprep.mubr.bf16.mxu0 0
        %6860 = vmatmul.mubr.bf16.gmra.mrb[0].mxu0 %v3437
        %v6861 = vpop.f32.mrb[0].mxu0
        %v6862 = vadd.f32 %v6047, %v6861
        %v6863 = vpop.f32.mrb[0].mxu0
        %v6864 = vadd.f32 %v6051, %v6863
        %v6865 = vpop.f32.mrb[0].mxu0
        %v6866 = vpop.f32.mrb[0].mxu0
        %6867 = vdwg.mxu0
        %6868 = vmatprep.subr.bf16.mxu0 %v5128
        %6869 = vmatpush1.bf16.msra.mxu0 %v5127
        %6870 = vmatprep.subr.bf16.mxu0 %v5179
        %6871 = vmatpush1.bf16.msra.mxu0 %v5178
        %6872 = vmatprep.subr.bf16.mxu0 %v5230
        %6873 = vmatpush1.bf16.msra.mxu0 %v5229
        %6874 = vmatprep.subr.bf16.mxu0 %v5281
        %6875 = vmatpush1.bf16.msra.mxu0 %v5280
        %6876 = vmatprep.subr.bf16.mxu0 %v5332
        %6877 = vmatpush1.bf16.msra.mxu0 %v5331
        %6878 = vmatprep.subr.bf16.mxu0 %v5383
        %6879 = vmatpush1.bf16.msra.mxu0 %v5382
        %6880 = vmatprep.subr.bf16.mxu0 %v5434
        %6881 = vmatpush1.bf16.msra.mxu0 %v5433
        %6882 = vmatprep.subr.bf16.mxu0 %v5485
        %6883 = vmatpush1.bf16.msra.mxu0 %v5484
        %6884 = vmatprep.subr.bf16.mxu0 0
        %6885 = vmatpush1.bf16.msra.mxu0 0
        %6886 = vmatprep.subr.bf16.mxu0 0
        %6887 = vmatpush1.bf16.msra.mxu0 0
        %6888 = vmatprep.subr.bf16.mxu0 0
        %6889 = vmatpush1.bf16.msra.mxu0 0
        %6890 = vmatprep.subr.bf16.mxu0 0
        %6891 = vmatpush1.bf16.msra.mxu0 0
        %6892 = vmatprep.subr.bf16.mxu0 0
        %6893 = vmatpush1.bf16.msra.mxu0 0
        %6894 = vmatprep.subr.bf16.mxu0 0
        %6895 = vmatpush1.bf16.msra.mxu0 0
        %6896 = vmatprep.subr.bf16.mxu0 0
        %6897 = vmatpush1.bf16.msra.mxu0 0
        %6898 = vmatprep.subr.bf16.mxu0 0
        %6899 = vmatpush1.bf16.msra.mxu0 0
        %6900 = vmatprep.mubr.bf16.mxu0 0
        %6901 = vmatmul.mubr.bf16.gmra.mrb[0].mxu0 %v3437
        %v6902 = vpop.f32.mrb[0].mxu0
        %v6903 = vadd.f32 %v6055, %v6902
        %v6904 = vpop.f32.mrb[0].mxu0
        %v6905 = vadd.f32 %v6059, %v6904
        %v6906 = vpop.f32.mrb[0].mxu0
        %v6907 = vpop.f32.mrb[0].mxu0
        %6908 = vdwg.mxu0
        %6909 = vmatprep.subr.bf16.mxu0 %v5130
        %6910 = vmatpush1.bf16.msra.mxu0 %v5129
        %6911 = vmatprep.subr.bf16.mxu0 %v5181
        %6912 = vmatpush1.bf16.msra.mxu0 %v5180
        %6913 = vmatprep.subr.bf16.mxu0 %v5232
        %6914 = vmatpush1.bf16.msra.mxu0 %v5231
        %6915 = vmatprep.subr.bf16.mxu0 %v5283
        %6916 = vmatpush1.bf16.msra.mxu0 %v5282
        %6917 = vmatprep.subr.bf16.mxu0 %v5334
        %6918 = vmatpush1.bf16.msra.mxu0 %v5333
        %6919 = vmatprep.subr.bf16.mxu0 %v5385
        %6920 = vmatpush1.bf16.msra.mxu0 %v5384
        %6921 = vmatprep.subr.bf16.mxu0 %v5436
        %6922 = vmatpush1.bf16.msra.mxu0 %v5435
        %6923 = vmatprep.subr.bf16.mxu0 %v5487
        %6924 = vmatpush1.bf16.msra.mxu0 %v5486
        %6925 = vmatprep.subr.bf16.mxu0 0
        %6926 = vmatpush1.bf16.msra.mxu0 0
        %6927 = vmatprep.subr.bf16.mxu0 0
        %6928 = vmatpush1.bf16.msra.mxu0 0
        %6929 = vmatprep.subr.bf16.mxu0 0
        %6930 = vmatpush1.bf16.msra.mxu0 0
        %6931 = vmatprep.subr.bf16.mxu0 0
        %6932 = vmatpush1.bf16.msra.mxu0 0
        %6933 = vmatprep.subr.bf16.mxu0 0
        %6934 = vmatpush1.bf16.msra.mxu0 0
        %6935 = vmatprep.subr.bf16.mxu0 0
        %6936 = vmatpush1.bf16.msra.mxu0 0
        %6937 = vmatprep.subr.bf16.mxu0 0
        %6938 = vmatpush1.bf16.msra.mxu0 0
        %6939 = vmatprep.subr.bf16.mxu0 0
        %6940 = vmatpush1.bf16.msra.mxu0 0
        %6941 = vmatprep.mubr.bf16.mxu0 0
        %6942 = vmatmul.mubr.bf16.gmra.mrb[0].mxu0 %v3437
        %v6943 = vpop.f32.mrb[0].mxu0
        %v6944 = vadd.f32 %v6063, %v6943
        %v6945 = vpop.f32.mrb[0].mxu0
        %v6946 = vadd.f32 %v6067, %v6945
        %v6947 = vpop.f32.mrb[0].mxu0
        %v6948 = vpop.f32.mrb[0].mxu0
        %6949 = vdwg.mxu0
        %6950 = vmatprep.subr.bf16.mxu0 %v5132
        %6951 = vmatpush1.bf16.msra.mxu0 %v5131
        %6952 = vmatprep.subr.bf16.mxu0 %v5183
        %6953 = vmatpush1.bf16.msra.mxu0 %v5182
        %6954 = vmatprep.subr.bf16.mxu0 %v5234
        %6955 = vmatpush1.bf16.msra.mxu0 %v5233
        %6956 = vmatprep.subr.bf16.mxu0 %v5285
        %6957 = vmatpush1.bf16.msra.mxu0 %v5284
        %6958 = vmatprep.subr.bf16.mxu0 %v5336
        %6959 = vmatpush1.bf16.msra.mxu0 %v5335
        %6960 = vmatprep.subr.bf16.mxu0 %v5387
        %6961 = vmatpush1.bf16.msra.mxu0 %v5386
        %6962 = vmatprep.subr.bf16.mxu0 %v5438
        %6963 = vmatpush1.bf16.msra.mxu0 %v5437
        %6964 = vmatprep.subr.bf16.mxu0 %v5489
        %6965 = vmatpush1.bf16.msra.mxu0 %v5488
        %6966 = vmatprep.subr.bf16.mxu0 0
        %6967 = vmatpush1.bf16.msra.mxu0 0
        %6968 = vmatprep.subr.bf16.mxu0 0
        %6969 = vmatpush1.bf16.msra.mxu0 0
        %6970 = vmatprep.subr.bf16.mxu0 0
        %6971 = vmatpush1.bf16.msra.mxu0 0
        %6972 = vmatprep.subr.bf16.mxu0 0
        %6973 = vmatpush1.bf16.msra.mxu0 0
        %6974 = vmatprep.subr.bf16.mxu0 0
        %6975 = vmatpush1.bf16.msra.mxu0 0
        %6976 = vmatprep.subr.bf16.mxu0 0
        %6977 = vmatpush1.bf16.msra.mxu0 0
        %6978 = vmatprep.subr.bf16.mxu0 0
        %6979 = vmatpush1.bf16.msra.mxu0 0
        %6980 = vmatprep.subr.bf16.mxu0 0
        %6981 = vmatpush1.bf16.msra.mxu0 0
        %6982 = vmatprep.mubr.bf16.mxu0 0
        %6983 = vmatmul.mubr.bf16.gmra.mrb[0].mxu0 %v3437
        %v6984 = vpop.f32.mrb[0].mxu0
        %v6985 = vadd.f32 %v6071, %v6984
        %v6986 = vpop.f32.mrb[0].mxu0
        %v6987 = vadd.f32 %v6075, %v6986
        %v6988 = vpop.f32.mrb[0].mxu0
        %v6989 = vpop.f32.mrb[0].mxu0
        %6990 = vdwg.mxu0
        %6991 = vmatprep.subr.bf16.mxu0 %v5134
        %6992 = vmatpush1.bf16.msra.mxu0 %v5133
        %6993 = vmatprep.subr.bf16.mxu0 %v5185
        %6994 = vmatpush1.bf16.msra.mxu0 %v5184
        %6995 = vmatprep.subr.bf16.mxu0 %v5236
        %6996 = vmatpush1.bf16.msra.mxu0 %v5235
        %6997 = vmatprep.subr.bf16.mxu0 %v5287
        %6998 = vmatpush1.bf16.msra.mxu0 %v5286
        %6999 = vmatprep.subr.bf16.mxu0 %v5338
        %7000 = vmatpush1.bf16.msra.mxu0 %v5337
        %7001 = vmatprep.subr.bf16.mxu0 %v5389
        %7002 = vmatpush1.bf16.msra.mxu0 %v5388
        %7003 = vmatprep.subr.bf16.mxu0 %v5440
        %7004 = vmatpush1.bf16.msra.mxu0 %v5439
        %7005 = vmatprep.subr.bf16.mxu0 %v5491
        %7006 = vmatpush1.bf16.msra.mxu0 %v5490
        %7007 = vmatprep.subr.bf16.mxu0 0
        %7008 = vmatpush1.bf16.msra.mxu0 0
        %7009 = vmatprep.subr.bf16.mxu0 0
        %7010 = vmatpush1.bf16.msra.mxu0 0
        %7011 = vmatprep.subr.bf16.mxu0 0
        %7012 = vmatpush1.bf16.msra.mxu0 0
        %7013 = vmatprep.subr.bf16.mxu0 0
        %7014 = vmatpush1.bf16.msra.mxu0 0
        %7015 = vmatprep.subr.bf16.mxu0 0
        %7016 = vmatpush1.bf16.msra.mxu0 0
        %7017 = vmatprep.subr.bf16.mxu0 0
        %7018 = vmatpush1.bf16.msra.mxu0 0
        %7019 = vmatprep.subr.bf16.mxu0 0
        %7020 = vmatpush1.bf16.msra.mxu0 0
        %7021 = vmatprep.subr.bf16.mxu0 0
        %7022 = vmatpush1.bf16.msra.mxu0 0
        %7023 = vmatprep.mubr.bf16.mxu0 0
        %7024 = vmatmul.mubr.bf16.gmra.mrb[0].mxu0 %v3437
        %v7025 = vpop.f32.mrb[0].mxu0
        %v7026 = vadd.f32 %v6079, %v7025
        %v7027 = vpop.f32.mrb[0].mxu0
        %v7028 = vadd.f32 %v6083, %v7027
        %v7029 = vpop.f32.mrb[0].mxu0
        %v7030 = vpop.f32.mrb[0].mxu0
        %7031 = vdwg.mxu0
        %7032 = vmatprep.subr.bf16.mxu0 %v5136
        %7033 = vmatpush1.bf16.msra.mxu0 %v5135
        %7034 = vmatprep.subr.bf16.mxu0 %v5187
        %7035 = vmatpush1.bf16.msra.mxu0 %v5186
        %7036 = vmatprep.subr.bf16.mxu0 %v5238
        %7037 = vmatpush1.bf16.msra.mxu0 %v5237
        %7038 = vmatprep.subr.bf16.mxu0 %v5289
        %7039 = vmatpush1.bf16.msra.mxu0 %v5288
        %7040 = vmatprep.subr.bf16.mxu0 %v5340
        %7041 = vmatpush1.bf16.msra.mxu0 %v5339
        %7042 = vmatprep.subr.bf16.mxu0 %v5391
        %7043 = vmatpush1.bf16.msra.mxu0 %v5390
        %7044 = vmatprep.subr.bf16.mxu0 %v5442
        %7045 = vmatpush1.bf16.msra.mxu0 %v5441
        %7046 = vmatprep.subr.bf16.mxu0 %v5493
        %7047 = vmatpush1.bf16.msra.mxu0 %v5492
        %7048 = vmatprep.subr.bf16.mxu0 0
        %7049 = vmatpush1.bf16.msra.mxu0 0
        %7050 = vmatprep.subr.bf16.mxu0 0
        %7051 = vmatpush1.bf16.msra.mxu0 0
        %7052 = vmatprep.subr.bf16.mxu0 0
        %7053 = vmatpush1.bf16.msra.mxu0 0
        %7054 = vmatprep.subr.bf16.mxu0 0
        %7055 = vmatpush1.bf16.msra.mxu0 0
        %7056 = vmatprep.subr.bf16.mxu0 0
        %7057 = vmatpush1.bf16.msra.mxu0 0
        %7058 = vmatprep.subr.bf16.mxu0 0
        %7059 = vmatpush1.bf16.msra.mxu0 0
        %7060 = vmatprep.subr.bf16.mxu0 0
        %7061 = vmatpush1.bf16.msra.mxu0 0
        %7062 = vmatprep.subr.bf16.mxu0 0
        %7063 = vmatpush1.bf16.msra.mxu0 0
        %7064 = vmatprep.mubr.bf16.mxu0 0
        %7065 = vmatmul.mubr.bf16.gmra.mrb[0].mxu0 %v3437
        %v7066 = vpop.f32.mrb[0].mxu0
        %v7067 = vadd.f32 %v6087, %v7066
        %v7068 = vpop.f32.mrb[0].mxu0
        %v7069 = vadd.f32 %v6091, %v7068
        %v7070 = vpop.f32.mrb[0].mxu0
        %v7071 = vpop.f32.mrb[0].mxu0
        %7072 = vdwg.mxu0
        %7073 = vmatprep.subr.bf16.mxu0 %v5138
        %7074 = vmatpush1.bf16.msra.mxu0 %v5137
        %7075 = vmatprep.subr.bf16.mxu0 %v5189
        %7076 = vmatpush1.bf16.msra.mxu0 %v5188
        %7077 = vmatprep.subr.bf16.mxu0 %v5240
        %7078 = vmatpush1.bf16.msra.mxu0 %v5239
        %7079 = vmatprep.subr.bf16.mxu0 %v5291
        %7080 = vmatpush1.bf16.msra.mxu0 %v5290
        %7081 = vmatprep.subr.bf16.mxu0 %v5342
        %7082 = vmatpush1.bf16.msra.mxu0 %v5341
        %7083 = vmatprep.subr.bf16.mxu0 %v5393
        %7084 = vmatpush1.bf16.msra.mxu0 %v5392
        %7085 = vmatprep.subr.bf16.mxu0 %v5444
        %7086 = vmatpush1.bf16.msra.mxu0 %v5443
        %7087 = vmatprep.subr.bf16.mxu0 %v5495
        %7088 = vmatpush1.bf16.msra.mxu0 %v5494
        %7089 = vmatprep.subr.bf16.mxu0 0
        %7090 = vmatpush1.bf16.msra.mxu0 0
        %7091 = vmatprep.subr.bf16.mxu0 0
        %7092 = vmatpush1.bf16.msra.mxu0 0
        %7093 = vmatprep.subr.bf16.mxu0 0
        %7094 = vmatpush1.bf16.msra.mxu0 0
        %7095 = vmatprep.subr.bf16.mxu0 0
        %7096 = vmatpush1.bf16.msra.mxu0 0
        %7097 = vmatprep.subr.bf16.mxu0 0
        %7098 = vmatpush1.bf16.msra.mxu0 0
        %7099 = vmatprep.subr.bf16.mxu0 0
        %7100 = vmatpush1.bf16.msra.mxu0 0
        %7101 = vmatprep.subr.bf16.mxu0 0
        %7102 = vmatpush1.bf16.msra.mxu0 0
        %7103 = vmatprep.subr.bf16.mxu0 0
        %7104 = vmatpush1.bf16.msra.mxu0 0
        %7105 = vmatprep.mubr.bf16.mxu0 0
        %7106 = vmatmul.mubr.bf16.gmra.mrb[0].mxu0 %v3437
        %v7107 = vpop.f32.mrb[0].mxu0
        %v7108 = vadd.f32 %v6095, %v7107
        %v7109 = vpop.f32.mrb[0].mxu0
        %v7110 = vadd.f32 %v6099, %v7109
        %v7111 = vpop.f32.mrb[0].mxu0
        %v7112 = vpop.f32.mrb[0].mxu0
        %7113 = vdwg.mxu0
        %7114 = vmatprep.subr.bf16.mxu0 %v5140
        %7115 = vmatpush1.bf16.msra.mxu0 %v5139
        %7116 = vmatprep.subr.bf16.mxu0 %v5191
        %7117 = vmatpush1.bf16.msra.mxu0 %v5190
        %7118 = vmatprep.subr.bf16.mxu0 %v5242
        %7119 = vmatpush1.bf16.msra.mxu0 %v5241
        %7120 = vmatprep.subr.bf16.mxu0 %v5293
        %7121 = vmatpush1.bf16.msra.mxu0 %v5292
        %7122 = vmatprep.subr.bf16.mxu0 %v5344
        %7123 = vmatpush1.bf16.msra.mxu0 %v5343
        %7124 = vmatprep.subr.bf16.mxu0 %v5395
        %7125 = vmatpush1.bf16.msra.mxu0 %v5394
        %7126 = vmatprep.subr.bf16.mxu0 %v5446
        %7127 = vmatpush1.bf16.msra.mxu0 %v5445
        %7128 = vmatprep.subr.bf16.mxu0 %v5497
        %7129 = vmatpush1.bf16.msra.mxu0 %v5496
        %7130 = vmatprep.subr.bf16.mxu0 0
        %7131 = vmatpush1.bf16.msra.mxu0 0
        %7132 = vmatprep.subr.bf16.mxu0 0
        %7133 = vmatpush1.bf16.msra.mxu0 0
        %7134 = vmatprep.subr.bf16.mxu0 0
        %7135 = vmatpush1.bf16.msra.mxu0 0
        %7136 = vmatprep.subr.bf16.mxu0 0
        %7137 = vmatpush1.bf16.msra.mxu0 0
        %7138 = vmatprep.subr.bf16.mxu0 0
        %7139 = vmatpush1.bf16.msra.mxu0 0
        %7140 = vmatprep.subr.bf16.mxu0 0
        %7141 = vmatpush1.bf16.msra.mxu0 0
        %7142 = vmatprep.subr.bf16.mxu0 0
        %7143 = vmatpush1.bf16.msra.mxu0 0
        %7144 = vmatprep.subr.bf16.mxu0 0
        %7145 = vmatpush1.bf16.msra.mxu0 0
        %7146 = vmatprep.mubr.bf16.mxu0 0
        %7147 = vmatmul.mubr.bf16.gmra.mrb[0].mxu0 %v3437
        %v7148 = vpop.f32.mrb[0].mxu0
        %v7149 = vadd.f32 %v6103, %v7148
        %v7150 = vpop.f32.mrb[0].mxu0
        %v7151 = vadd.f32 %v6107, %v7150
        %v7152 = vpop.f32.mrb[0].mxu0
        %v7153 = vpop.f32.mrb[0].mxu0
        %7154 = vdwg.mxu0
        %7155 = vmatprep.subr.bf16.mxu0 %v5142
        %7156 = vmatpush1.bf16.msra.mxu0 %v5141
        %7157 = vmatprep.subr.bf16.mxu0 %v5193
        %7158 = vmatpush1.bf16.msra.mxu0 %v5192
        %7159 = vmatprep.subr.bf16.mxu0 %v5244
        %7160 = vmatpush1.bf16.msra.mxu0 %v5243
        %7161 = vmatprep.subr.bf16.mxu0 %v5295
        %7162 = vmatpush1.bf16.msra.mxu0 %v5294
        %7163 = vmatprep.subr.bf16.mxu0 %v5346
        %7164 = vmatpush1.bf16.msra.mxu0 %v5345
        %7165 = vmatprep.subr.bf16.mxu0 %v5397
        %7166 = vmatpush1.bf16.msra.mxu0 %v5396
        %7167 = vmatprep.subr.bf16.mxu0 %v5448
        %7168 = vmatpush1.bf16.msra.mxu0 %v5447
        %7169 = vmatprep.subr.bf16.mxu0 %v5499
        %7170 = vmatpush1.bf16.msra.mxu0 %v5498
        %7171 = vmatprep.subr.bf16.mxu0 0
        %7172 = vmatpush1.bf16.msra.mxu0 0
        %7173 = vmatprep.subr.bf16.mxu0 0
        %7174 = vmatpush1.bf16.msra.mxu0 0
        %7175 = vmatprep.subr.bf16.mxu0 0
        %7176 = vmatpush1.bf16.msra.mxu0 0
        %7177 = vmatprep.subr.bf16.mxu0 0
        %7178 = vmatpush1.bf16.msra.mxu0 0
        %7179 = vmatprep.subr.bf16.mxu0 0
        %7180 = vmatpush1.bf16.msra.mxu0 0
        %7181 = vmatprep.subr.bf16.mxu0 0
        %7182 = vmatpush1.bf16.msra.mxu0 0
        %7183 = vmatprep.subr.bf16.mxu0 0
        %7184 = vmatpush1.bf16.msra.mxu0 0
        %7185 = vmatprep.subr.bf16.mxu0 0
        %7186 = vmatpush1.bf16.msra.mxu0 0
        %7187 = vmatprep.mubr.bf16.mxu0 0
        %7188 = vmatmul.mubr.bf16.gmra.mrb[0].mxu0 %v3437
        %v7189 = vpop.f32.mrb[0].mxu0
        %v7190 = vadd.f32 %v6111, %v7189
        %v7191 = vpop.f32.mrb[0].mxu0
        %v7192 = vadd.f32 %v6115, %v7191
        %v7193 = vpop.f32.mrb[0].mxu0
        %v7194 = vpop.f32.mrb[0].mxu0
        %7195 = vdwg.mxu0
        %7196 = vmatprep.subr.bf16.mxu0 0
        %7197 = vmatpush1.bf16.msra.mxu0 %v5143
        %7198 = vmatprep.subr.bf16.mxu0 0
        %7199 = vmatpush1.bf16.msra.mxu0 %v5194
        %7200 = vmatprep.subr.bf16.mxu0 0
        %7201 = vmatpush1.bf16.msra.mxu0 %v5245
        %7202 = vmatprep.subr.bf16.mxu0 0
        %7203 = vmatpush1.bf16.msra.mxu0 %v5296
        %7204 = vmatprep.subr.bf16.mxu0 0
        %7205 = vmatpush1.bf16.msra.mxu0 %v5347
        %7206 = vmatprep.subr.bf16.mxu0 0
        %7207 = vmatpush1.bf16.msra.mxu0 %v5398
        %7208 = vmatprep.subr.bf16.mxu0 0
        %7209 = vmatpush1.bf16.msra.mxu0 %v5449
        %7210 = vmatprep.subr.bf16.mxu0 0
        %7211 = vmatpush1.bf16.msra.mxu0 %v5500
        %7212 = vmatprep.subr.bf16.mxu0 0
        %7213 = vmatpush1.bf16.msra.mxu0 0
        %7214 = vmatprep.subr.bf16.mxu0 0
        %7215 = vmatpush1.bf16.msra.mxu0 0
        %7216 = vmatprep.subr.bf16.mxu0 0
        %7217 = vmatpush1.bf16.msra.mxu0 0
        %7218 = vmatprep.subr.bf16.mxu0 0
        %7219 = vmatpush1.bf16.msra.mxu0 0
        %7220 = vmatprep.subr.bf16.mxu0 0
        %7221 = vmatpush1.bf16.msra.mxu0 0
        %7222 = vmatprep.subr.bf16.mxu0 0
        %7223 = vmatpush1.bf16.msra.mxu0 0
        %7224 = vmatprep.subr.bf16.mxu0 0
        %7225 = vmatpush1.bf16.msra.mxu0 0
        %7226 = vmatprep.subr.bf16.mxu0 0
        %7227 = vmatpush1.bf16.msra.mxu0 0
        %7228 = vmatprep.mubr.bf16.mxu0 0
        %7229 = vmatmul.mubr.bf16.gmra.mrb[0].mxu0 %v3437
        %v7230 = vpop.f32.mrb[0].mxu0
        %v7231 = vadd.f32 %v6119, %v7230
        %v7232 = vpop.f32.mrb[0].mxu0
        %v7233 = vpop.f32.mrb[0].mxu0
        %v7234 = vpop.f32.mrb[0].mxu0
        %7235 = vdwg.mxu0
        %v7236 = vpack.c.bf16 %v6206, %v6206
        %v7237 = vpack.c.bf16 %v6208, %v6208
        %v7238 = vpack.c.bf16 %v6247, %v6247
        %v7239 = vpack.c.bf16 %v6249, %v6249
        %v7240 = vpack.c.bf16 %v6288, %v6288
        %v7241 = vpack.c.bf16 %v6290, %v6290
        %v7242 = vpack.c.bf16 %v6329, %v6329
        %v7243 = vpack.c.bf16 %v6331, %v6331
        %v7244 = vpack.c.bf16 %v6370, %v6370
        %v7245 = vpack.c.bf16 %v6372, %v6372
        %v7246 = vpack.c.bf16 %v6411, %v6411
        %v7247 = vpack.c.bf16 %v6413, %v6413
        %v7248 = vpack.c.bf16 %v6452, %v6452
        %v7249 = vpack.c.bf16 %v6454, %v6454
        %v7250 = vpack.c.bf16 %v6493, %v6493
        %v7251 = vpack.c.bf16 %v6495, %v6495
        %v7252 = vpack.c.bf16 %v6534, %v6534
        %v7253 = vpack.c.bf16 %v6536, %v6536
        %v7254 = vpack.c.bf16 %v6575, %v6575
        %v7255 = vpack.c.bf16 %v6577, %v6577
        %v7256 = vpack.c.bf16 %v6616, %v6616
        %v7257 = vpack.c.bf16 %v6618, %v6618
        %v7258 = vpack.c.bf16 %v6657, %v6657
        %v7259 = vpack.c.bf16 %v6659, %v6659
        %v7260 = vpack.c.bf16 %v6698, %v6698
        %v7261 = vpack.c.bf16 %v6700, %v6700
        %v7262 = vpack.c.bf16 %v6739, %v6739
        %v7263 = vpack.c.bf16 %v6741, %v6741
        %v7264 = vpack.c.bf16 %v6780, %v6780
        %v7265 = vpack.c.bf16 %v6782, %v6782
        %v7266 = vpack.c.bf16 %v6821, %v6821
        %v7267 = vpack.c.bf16 %v6823, %v6823
        %v7268 = vpack.c.bf16 %v6862, %v6862
        %v7269 = vpack.c.bf16 %v6864, %v6864
        %v7270 = vpack.c.bf16 %v6903, %v6903
        %v7271 = vpack.c.bf16 %v6905, %v6905
        %v7272 = vpack.c.bf16 %v6944, %v6944
        %v7273 = vpack.c.bf16 %v6946, %v6946
        %v7274 = vpack.c.bf16 %v6985, %v6985
        %v7275 = vpack.c.bf16 %v6987, %v6987
        %v7276 = vpack.c.bf16 %v7026, %v7026
        %v7277 = vpack.c.bf16 %v7028, %v7028
        %v7278 = vpack.c.bf16 %v7067, %v7067
        %v7279 = vpack.c.bf16 %v7069, %v7069
        %v7280 = vpack.c.bf16 %v7108, %v7108
        %v7281 = vpack.c.bf16 %v7110, %v7110
        %v7282 = vpack.c.bf16 %v7149, %v7149
        %v7283 = vpack.c.bf16 %v7151, %v7151
        %v7284 = vpack.c.bf16 %v7190, %v7190
        %v7285 = vpack.c.bf16 %v7192, %v7192
        %v7286 = vpack.c.bf16 %v7231, %v7231
        %v7338 = vcombine.low %v7236, %v7237
        %v7339 = vcombine.low %v7238, %v7239
        %v7340 = vcombine.low %v7240, %v7241
        %v7341 = vcombine.low %v7242, %v7243
        %v7343 = vunpack.c.l.s4 1966171168
        %v7344 = vunpack.c.0.s8 %v7343
        %v7345 = vlaneseq
        %v7346 = vshrl.u32 %v7345, 7
        %v7347 = vsub.s32 %v7344, %v7346
        %v7348 = vrot.slane %v7338, %v7347
        %v7350 = vunpack.c.l.s4 1966171168
        %v7351 = vunpack.c.0.s8 %v7350
        %v7352 = vlaneseq
        %v7353 = vshrl.u32 %v7352, 7
        %v7354 = vsub.s32 %v7351, %v7353
        %v7355 = vrot.slane %v7339, %v7354
        %v7357 = vunpack.c.l.s4 1966171168
        %v7358 = vunpack.c.0.s8 %v7357
        %v7359 = vlaneseq
        %v7360 = vshrl.u32 %v7359, 7
        %v7361 = vsub.s32 %v7358, %v7360
        %v7362 = vrot.slane %v7340, %v7361
        %v7364 = vunpack.c.l.s4 1966171168
        %v7365 = vunpack.c.0.s8 %v7364
        %v7366 = vlaneseq
        %v7367 = vshrl.u32 %v7366, 7
        %v7368 = vsub.s32 %v7365, %v7367
        %v7369 = vrot.slane %v7341, %v7368
        %v7370 = vcombine.low %v7348, %v7355
        %v7371 = vcombine.low %v7362, %v7369
        %v7373 = vunpack.c.l.s4 1966171168
        %v7374 = vunpack.c.0.s8 %v7373
        %v7375 = vlaneseq
        %v7376 = vshrl.u32 %v7375, 7
        %v7377 = vsub.s32 %v7374, %v7376
        %v7378 = vrot.slane %v7370, %v7377
        %v7380 = vunpack.c.l.s4 1966171168
        %v7381 = vunpack.c.0.s8 %v7380
        %v7382 = vlaneseq
        %v7383 = vshrl.u32 %v7382, 7
        %v7384 = vsub.s32 %v7381, %v7383
        %v7385 = vrot.slane %v7371, %v7384
        %v7386 = vcombine.low %v7378, %v7385
        %v7387 = vcombine.low %v7244, %v7245
        %v7388 = vcombine.low %v7246, %v7247
        %v7389 = vcombine.low %v7248, %v7249
        %v7390 = vcombine.low %v7250, %v7251
        %v7392 = vunpack.c.l.s4 1966171168
        %v7393 = vunpack.c.0.s8 %v7392
        %v7394 = vlaneseq
        %v7395 = vshrl.u32 %v7394, 7
        %v7396 = vsub.s32 %v7393, %v7395
        %v7397 = vrot.slane %v7387, %v7396
        %v7399 = vunpack.c.l.s4 1966171168
        %v7400 = vunpack.c.0.s8 %v7399
        %v7401 = vlaneseq
        %v7402 = vshrl.u32 %v7401, 7
        %v7403 = vsub.s32 %v7400, %v7402
        %v7404 = vrot.slane %v7388, %v7403
        %v7406 = vunpack.c.l.s4 1966171168
        %v7407 = vunpack.c.0.s8 %v7406
        %v7408 = vlaneseq
        %v7409 = vshrl.u32 %v7408, 7
        %v7410 = vsub.s32 %v7407, %v7409
        %v7411 = vrot.slane %v7389, %v7410
        %v7413 = vunpack.c.l.s4 1966171168
        %v7414 = vunpack.c.0.s8 %v7413
        %v7415 = vlaneseq
        %v7416 = vshrl.u32 %v7415, 7
        %v7417 = vsub.s32 %v7414, %v7416
        %v7418 = vrot.slane %v7390, %v7417
        %v7419 = vcombine.low %v7397, %v7404
        %v7420 = vcombine.low %v7411, %v7418
        %v7422 = vunpack.c.l.s4 1966171168
        %v7423 = vunpack.c.0.s8 %v7422
        %v7424 = vlaneseq
        %v7425 = vshrl.u32 %v7424, 7
        %v7426 = vsub.s32 %v7423, %v7425
        %v7427 = vrot.slane %v7419, %v7426
        %v7429 = vunpack.c.l.s4 1966171168
        %v7430 = vunpack.c.0.s8 %v7429
        %v7431 = vlaneseq
        %v7432 = vshrl.u32 %v7431, 7
        %v7433 = vsub.s32 %v7430, %v7432
        %v7434 = vrot.slane %v7420, %v7433
        %v7435 = vcombine.low %v7427, %v7434
        %v7436 = vcombine.low %v7252, %v7253
        %v7437 = vcombine.low %v7254, %v7255
        %v7438 = vcombine.low %v7256, %v7257
        %v7439 = vcombine.low %v7258, %v7259
        %v7441 = vunpack.c.l.s4 1966171168
        %v7442 = vunpack.c.0.s8 %v7441
        %v7443 = vlaneseq
        %v7444 = vshrl.u32 %v7443, 7
        %v7445 = vsub.s32 %v7442, %v7444
        %v7446 = vrot.slane %v7436, %v7445
        %v7448 = vunpack.c.l.s4 1966171168
        %v7449 = vunpack.c.0.s8 %v7448
        %v7450 = vlaneseq
        %v7451 = vshrl.u32 %v7450, 7
        %v7452 = vsub.s32 %v7449, %v7451
        %v7453 = vrot.slane %v7437, %v7452
        %v7455 = vunpack.c.l.s4 1966171168
        %v7456 = vunpack.c.0.s8 %v7455
        %v7457 = vlaneseq
        %v7458 = vshrl.u32 %v7457, 7
        %v7459 = vsub.s32 %v7456, %v7458
        %v7460 = vrot.slane %v7438, %v7459
        %v7462 = vunpack.c.l.s4 1966171168
        %v7463 = vunpack.c.0.s8 %v7462
        %v7464 = vlaneseq
        %v7465 = vshrl.u32 %v7464, 7
        %v7466 = vsub.s32 %v7463, %v7465
        %v7467 = vrot.slane %v7439, %v7466
        %v7468 = vcombine.low %v7446, %v7453
        %v7469 = vcombine.low %v7460, %v7467
        %v7471 = vunpack.c.l.s4 1966171168
        %v7472 = vunpack.c.0.s8 %v7471
        %v7473 = vlaneseq
        %v7474 = vshrl.u32 %v7473, 7
        %v7475 = vsub.s32 %v7472, %v7474
        %v7476 = vrot.slane %v7468, %v7475
        %v7478 = vunpack.c.l.s4 1966171168
        %v7479 = vunpack.c.0.s8 %v7478
        %v7480 = vlaneseq
        %v7481 = vshrl.u32 %v7480, 7
        %v7482 = vsub.s32 %v7479, %v7481
        %v7483 = vrot.slane %v7469, %v7482
        %v7484 = vcombine.low %v7476, %v7483
        %v7485 = vcombine.low %v7260, %v7261
        %v7486 = vcombine.low %v7262, %v7263
        %v7487 = vcombine.low %v7264, %v7265
        %v7488 = vcombine.low %v7266, %v7267
        %v7490 = vunpack.c.l.s4 1966171168
        %v7491 = vunpack.c.0.s8 %v7490
        %v7492 = vlaneseq
        %v7493 = vshrl.u32 %v7492, 7
        %v7494 = vsub.s32 %v7491, %v7493
        %v7495 = vrot.slane %v7485, %v7494
        %v7497 = vunpack.c.l.s4 1966171168
        %v7498 = vunpack.c.0.s8 %v7497
        %v7499 = vlaneseq
        %v7500 = vshrl.u32 %v7499, 7
        %v7501 = vsub.s32 %v7498, %v7500
        %v7502 = vrot.slane %v7486, %v7501
        %v7504 = vunpack.c.l.s4 1966171168
        %v7505 = vunpack.c.0.s8 %v7504
        %v7506 = vlaneseq
        %v7507 = vshrl.u32 %v7506, 7
        %v7508 = vsub.s32 %v7505, %v7507
        %v7509 = vrot.slane %v7487, %v7508
        %v7511 = vunpack.c.l.s4 1966171168
        %v7512 = vunpack.c.0.s8 %v7511
        %v7513 = vlaneseq
        %v7514 = vshrl.u32 %v7513, 7
        %v7515 = vsub.s32 %v7512, %v7514
        %v7516 = vrot.slane %v7488, %v7515
        %v7517 = vcombine.low %v7495, %v7502
        %v7518 = vcombine.low %v7509, %v7516
        %v7520 = vunpack.c.l.s4 1966171168
        %v7521 = vunpack.c.0.s8 %v7520
        %v7522 = vlaneseq
        %v7523 = vshrl.u32 %v7522, 7
        %v7524 = vsub.s32 %v7521, %v7523
        %v7525 = vrot.slane %v7517, %v7524
        %v7527 = vunpack.c.l.s4 1966171168
        %v7528 = vunpack.c.0.s8 %v7527
        %v7529 = vlaneseq
        %v7530 = vshrl.u32 %v7529, 7
        %v7531 = vsub.s32 %v7528, %v7530
        %v7532 = vrot.slane %v7518, %v7531
        %v7533 = vcombine.low %v7525, %v7532
        %v7534 = vcombine.low %v7268, %v7269
        %v7535 = vcombine.low %v7270, %v7271
        %v7536 = vcombine.low %v7272, %v7273
        %v7537 = vcombine.low %v7274, %v7275
        %v7539 = vunpack.c.l.s4 1966171168
        %v7540 = vunpack.c.0.s8 %v7539
        %v7541 = vlaneseq
        %v7542 = vshrl.u32 %v7541, 7
        %v7543 = vsub.s32 %v7540, %v7542
        %v7544 = vrot.slane %v7534, %v7543
        %v7546 = vunpack.c.l.s4 1966171168
        %v7547 = vunpack.c.0.s8 %v7546
        %v7548 = vlaneseq
        %v7549 = vshrl.u32 %v7548, 7
        %v7550 = vsub.s32 %v7547, %v7549
        %v7551 = vrot.slane %v7535, %v7550
        %v7553 = vunpack.c.l.s4 1966171168
        %v7554 = vunpack.c.0.s8 %v7553
        %v7555 = vlaneseq
        %v7556 = vshrl.u32 %v7555, 7
        %v7557 = vsub.s32 %v7554, %v7556
        %v7558 = vrot.slane %v7536, %v7557
        %v7560 = vunpack.c.l.s4 1966171168
        %v7561 = vunpack.c.0.s8 %v7560
        %v7562 = vlaneseq
        %v7563 = vshrl.u32 %v7562, 7
        %v7564 = vsub.s32 %v7561, %v7563
        %v7565 = vrot.slane %v7537, %v7564
        %v7566 = vcombine.low %v7544, %v7551
        %v7567 = vcombine.low %v7558, %v7565
        %v7569 = vunpack.c.l.s4 1966171168
        %v7570 = vunpack.c.0.s8 %v7569
        %v7571 = vlaneseq
        %v7572 = vshrl.u32 %v7571, 7
        %v7573 = vsub.s32 %v7570, %v7572
        %v7574 = vrot.slane %v7566, %v7573
        %v7576 = vunpack.c.l.s4 1966171168
        %v7577 = vunpack.c.0.s8 %v7576
        %v7578 = vlaneseq
        %v7579 = vshrl.u32 %v7578, 7
        %v7580 = vsub.s32 %v7577, %v7579
        %v7581 = vrot.slane %v7567, %v7580
        %v7582 = vcombine.low %v7574, %v7581
        %v7583 = vcombine.low %v7276, %v7277
        %v7584 = vcombine.low %v7278, %v7279
        %v7585 = vcombine.low %v7280, %v7281
        %v7586 = vcombine.low %v7282, %v7283
        %v7588 = vunpack.c.l.s4 1966171168
        %v7589 = vunpack.c.0.s8 %v7588
        %v7590 = vlaneseq
        %v7591 = vshrl.u32 %v7590, 7
        %v7592 = vsub.s32 %v7589, %v7591
        %v7593 = vrot.slane %v7583, %v7592
        %v7595 = vunpack.c.l.s4 1966171168
        %v7596 = vunpack.c.0.s8 %v7595
        %v7597 = vlaneseq
        %v7598 = vshrl.u32 %v7597, 7
        %v7599 = vsub.s32 %v7596, %v7598
        %v7600 = vrot.slane %v7584, %v7599
        %v7602 = vunpack.c.l.s4 1966171168
        %v7603 = vunpack.c.0.s8 %v7602
        %v7604 = vlaneseq
        %v7605 = vshrl.u32 %v7604, 7
        %v7606 = vsub.s32 %v7603, %v7605
        %v7607 = vrot.slane %v7585, %v7606
        %v7609 = vunpack.c.l.s4 1966171168
        %v7610 = vunpack.c.0.s8 %v7609
        %v7611 = vlaneseq
        %v7612 = vshrl.u32 %v7611, 7
        %v7613 = vsub.s32 %v7610, %v7612
        %v7614 = vrot.slane %v7586, %v7613
        %v7615 = vcombine.low %v7593, %v7600
        %v7616 = vcombine.low %v7607, %v7614
        %v7618 = vunpack.c.l.s4 1966171168
        %v7619 = vunpack.c.0.s8 %v7618
        %v7620 = vlaneseq
        %v7621 = vshrl.u32 %v7620, 7
        %v7622 = vsub.s32 %v7619, %v7621
        %v7623 = vrot.slane %v7615, %v7622
        %v7625 = vunpack.c.l.s4 1966171168
        %v7626 = vunpack.c.0.s8 %v7625
        %v7627 = vlaneseq
        %v7628 = vshrl.u32 %v7627, 7
        %v7629 = vsub.s32 %v7626, %v7628
        %v7630 = vrot.slane %v7616, %v7629
        %v7631 = vcombine.low %v7623, %v7630
        %v7632 = vcombine.low %v7284, %v7285
        %v7634 = vunpack.c.l.s4 1966171168
        %v7635 = vunpack.c.0.s8 %v7634
        %v7636 = vlaneseq
        %v7637 = vshrl.u32 %v7636, 7
        %v7638 = vsub.s32 %v7635, %v7637
        %v7639 = vrot.slane %v7632, %v7638
        %v7641 = vunpack.c.l.s4 1966171168
        %v7642 = vunpack.c.0.s8 %v7641
        %v7643 = vlaneseq
        %v7644 = vshrl.u32 %v7643, 7
        %v7645 = vsub.s32 %v7642, %v7644
        %v7646 = vrot.slane %v7286, %v7645
        %v7647 = vcombine.low %v7639, %v7646
        %v7649 = vunpack.c.l.s4 1966171168
        %v7650 = vunpack.c.0.s8 %v7649
        %v7651 = vlaneseq
        %v7652 = vshrl.u32 %v7651, 7
        %v7653 = vsub.s32 %v7650, %v7652
        %v7654 = vrot.slane %v7647, %v7653
        %vm7662 = vcmask 1040384
        %vm7663 = vsmask.f32 256
        %vm7664 = vmand %vm7662, %vm7663
        %vm7665 = vcmask 1041409
        %vm7666 = vsmask.f32 1280
        %vm7667 = vmand %vm7665, %vm7666
        %vm7668 = vmor %vm7667, %vm7664
        %vm7669 = vcmask 1042434
        %vm7670 = vsmask.f32 2304
        %vm7671 = vmand %vm7669, %vm7670
        %vm7672 = vmor %vm7671, %vm7668
        %vm7673 = vcmask 1043459
        %vm7674 = vsmask.f32 3328
        %vm7675 = vmand %vm7673, %vm7674
        %vm7676 = vmor %vm7675, %vm7672
        %vm7677 = vcmask 1044484
        %vm7678 = vsmask.f32 4352
        %vm7679 = vmand %vm7677, %vm7678
        %vm7680 = vmor %vm7679, %vm7676
        %vm7681 = vcmask 1045509
        %vm7682 = vsmask.f32 5376
        %vm7683 = vmand %vm7681, %vm7682
        %vm7684 = vmor %vm7683, %vm7680
        %vm7685 = vcmask 1046534
        %vm7686 = vsmask.f32 6400
        %vm7687 = vmand %vm7685, %vm7686
        %vm7688 = vmor %vm7687, %vm7684
        %vm7689 = vcmask 1047559
        %vm7690 = vsmask.f32 7424
        %vm7691 = vmand %vm7689, %vm7690
        %vm7692 = vmor %vm7691, %vm7688
        %v7693 = vld [vmem:[%s333] sm:$0xff]
        %v7694 = vsel %vm7692, %v7386, %v7693
        %7695 = vst [vmem:[%s333] sm:$0xff] %v7694
        %v7696 = vld [vmem:[%s333 + $0x8] sm:$0xff]
        %v7697 = vsel %vm7692, %v7435, %v7696
        %7698 = vst [vmem:[%s333 + $0x8] sm:$0xff] %v7697
        %v7699 = vld [vmem:[%s333 + $0x10] sm:$0xff]
        %v7700 = vsel %vm7692, %v7484, %v7699
        %7701 = vst [vmem:[%s333 + $0x10] sm:$0xff] %v7700
        %v7702 = vld [vmem:[%s333 + $0x18] sm:$0xff]
        %v7703 = vsel %vm7692, %v7533, %v7702
        %7704 = vst [vmem:[%s333 + $0x18] sm:$0xff] %v7703
        %v7705 = vld [vmem:[%s333 + $0x20] sm:$0xff]
        %v7706 = vsel %vm7692, %v7582, %v7705
        %7707 = vst [vmem:[%s333 + $0x20] sm:$0xff] %v7706
        %v7708 = vld [vmem:[%s333 + $0x28] sm:$0xff]
        %v7709 = vsel %vm7692, %v7631, %v7708
        %7710 = vst [vmem:[%s333 + $0x28] sm:$0xff] %v7709
        %vm7711 = vcmask 518146
        %vm7712 = vmand %vm7711, %vm7670
        %vm7713 = vmor %vm7712, %vm7668
        %v7714 = vld [vmem:[%s333 + $0x30] sm:$0x7]
        %v7715 = vsel %vm7713, %v7654, %v7714
        %7716 = vst [vmem:[%s333 + $0x30] sm:$0x7] %v7715
        %s7717 = sand.u32 %s170, 1
        %s7718 = scalar_lea.sflag [#allocation3], %s7717
        %s7719 = sand.u32 %s170, 1
        %s7720 = scalar_lea.vmem [#allocation2], %s7719
        %s7721 = sand.u32 %s196, 1
        %s7722 = scalar_lea.sflag [#allocation5], %s7721
        %s7723 = sand.u32 %s196, 1
        %s7724 = scalar_lea.vmem [#allocation4], %s7723
        %p7725 = scmp.lt.s32.totalorder %s26, 1
        %s7726 = scalar_select %p7725, %s26, 1
        %s7727 = smul.addr %s7726, 51
        %s7728 = scalar_lea.vmem %s8, %s7727
        // Predicated region
        $region45: #{vae_conv_forward.4} parent=43 // pred_check
          %p7729 = pneg %p180
        $region46: #{vae_conv_forward.4} parent=43 // pred_check_branch
          %7731 = sbr.rel (%p7729) target = $region48
        $region47: #{vae_conv_forward.4} parent=43 // pred_region
          %s7733 = ssub.s32 16, 16
          %7734 = vsyncadd %s7718, %s7733
          %s7735 = smul.addr %s26, 16
          %s7736 = scalar_lea.hbm %s6, %s7735
          %s7738 = sshll.u32 %s7720, 4
          %s7739 = int_to_ptr.vmem [resolvable:$true] %s7738
          %7741 = dma.vmem_to_hbm [thread:$0]  %s7739, 16, %s7736, %s7718
        $region48: #{vae_conv_forward.4} parent=43 // pred_fallthru
          _
        // Predicated region
        $region49: #{vae_conv_forward.4} parent=43 // pred_check
          %p7742 = pneg %p206
        $region50: #{vae_conv_forward.4} parent=43 // pred_check_branch
          %7744 = sbr.rel (%p7742) target = $region52
        $region51: #{vae_conv_forward.4} parent=43 // pred_region
          %s7746 = ssub.s32 16, 16
          %7747 = vsyncadd %s7722, %s7746
          %s7748 = smul.addr %s26, 16
          %s7749 = scalar_lea.hbm %s7, %s7748
          %s7751 = sshll.u32 %s7724, 4
          %s7752 = int_to_ptr.vmem [resolvable:$true] %s7751
          %7754 = dma.vmem_to_hbm [thread:$0]  %s7752, 16, %s7749, %s7722
        $region52: #{vae_conv_forward.4} parent=43 // pred_fallthru
          _
        // Predicated region
        $region53: #{vae_conv_forward.4} parent=43 // pred_check
          %p7755 = pneg %p232
        $region54: #{vae_conv_forward.4} parent=43 // pred_check_branch
          %7757 = sbr.rel (%p7755) target = $region56
        $region55: #{vae_conv_forward.4} parent=43 // pred_region
          _
        $region56: #{vae_conv_forward.4} parent=43 // pred_fallthru
          _
      $region44: #{vae_conv_forward.4} parent=5 // pred_fallthru
        _
      %p7758 = scmp.le.s32.totalorder 2, %s21
      // Predicated region
      $region57: #{vae_conv_forward.4} parent=5 // pred_check
        %p7759 = pneg %p7758
      $region58: #{vae_conv_forward.4} parent=5 // pred_check_branch
        %7761 = sbr.rel (%p7759) target = $region60
      $region59: #{vae_conv_forward.4} parent=5 // pred_region
        %s7762 = ssub.s32 %s21, 2
        // Predicated region
        $region61: #{vae_conv_forward.4} parent=59 // pred_check
          %p7763 = pneg %p186
        $region62: #{vae_conv_forward.4} parent=59 // pred_check_branch
          %7765 = sbr.rel (%p7763) target = $region64
        $region63: #{vae_conv_forward.4} parent=59 // pred_region
          %s7766 = sand.u32 %s171, 1
          %s7767 = scalar_lea.sflag [#allocation3], %s7766
          %s7768 = sand.u32 %s171, 1
          %s7769 = scalar_lea.vmem [#allocation2], %s7768
          %7770 = dma.done %s7767, 16
        $region64: #{vae_conv_forward.4} parent=59 // pred_fallthru
          _
        // Predicated region
        $region65: #{vae_conv_forward.4} parent=59 // pred_check
          %p7771 = pneg %p212
        $region66: #{vae_conv_forward.4} parent=59 // pred_check_branch
          %7773 = sbr.rel (%p7771) target = $region68
        $region67: #{vae_conv_forward.4} parent=59 // pred_region
          %s7774 = sand.u32 %s197, 1
          %s7775 = scalar_lea.sflag [#allocation5], %s7774
          %s7776 = sand.u32 %s197, 1
          %s7777 = scalar_lea.vmem [#allocation4], %s7776
          %7778 = dma.done %s7775, 16
        $region68: #{vae_conv_forward.4} parent=59 // pred_fallthru
          _
        // Predicated region
        $region69: #{vae_conv_forward.4} parent=59 // pred_check
          %p7779 = pneg %p238
        $region70: #{vae_conv_forward.4} parent=59 // pred_check_branch
          %7781 = sbr.rel (%p7779) target = $region72
        $region71: #{vae_conv_forward.4} parent=59 // pred_region
          %p7782 = scmp.lt.s32.totalorder %s27, 1
          %s7783 = scalar_select %p7782, %s27, 1
          %s7784 = smul.addr %s7783, 51
          %s7785 = scalar_lea.vmem %s8, %s7784
        $region72: #{vae_conv_forward.4} parent=59 // pred_fallthru
          _
      $region60: #{vae_conv_forward.4} parent=5 // pred_fallthru
        _
    $region6: #{vae_conv_forward.4} parent=1 // loop_footer
      %s25 = sadd.s32 1, %s21
    $region7: #{vae_conv_forward.4} parent=1 // loop_footer_branch
      %20 = sbr.rel target = $region3
    $region8: #{vae_conv_forward.4} parent=1 // loop_exit
      _
    %7786 = vsyncpa [#allocation3], 1
    %s7787 = scalar_lea.sflag [#allocation3], 1
    %7788 = vsyncpa %s7787, 1
    %7789 = vsyncpa [#allocation5], 1
    %s7790 = scalar_lea.sflag [#allocation5], 1
    %7791 = vsyncpa %s7790, 1

</llo_original>
